<compile_context>
chip_gen: v7x
topology: tpu7x:2x2x1
jax: 0.10.0
libtpu: 0.0.40
codegen_flags: <defaults>
</compile_context>

<pallas_src>
import functools

import jax
import jax.numpy as jnp
from jax.experimental import pallas as pl
from jax.experimental.pallas import tpu as pltpu


def _round_up(x, m):
    return (x + m - 1) // m * m


# ---------------------------------------------------------------------------
# Pallas kernel: tiled matmul with fused bias + InstanceNorm + act + skip
# ---------------------------------------------------------------------------
def _mm_fused_kernel(*refs, act, inorm, has_skip, n_batch, eps):
    if has_skip:
        x_ref, w_ref, b_ref, skip_ref, o_ref, acc_ref = refs
    else:
        x_ref, w_ref, b_ref, o_ref, acc_ref = refs
        skip_ref = None

    @pl.when(pl.program_id(2) == 0)
    def _():
        acc_ref[...] = jnp.zeros_like(acc_ref)

    acc_ref[...] += jnp.dot(x_ref[...], w_ref[...],
                            preferred_element_type=jnp.float32)

    @pl.when(pl.program_id(2) == pl.num_programs(2) - 1)
    def _():
        y = acc_ref[...] + b_ref[...]                     # f32 epilogue
        if inorm:
            tm, tn = y.shape
            hw = tm // n_batch
            y3 = y.reshape(n_batch, hw, tn)               # (N, OH*OW, Ct)
            mean = jnp.mean(y3, axis=1, keepdims=True)
            cen = y3 - mean
            var = jnp.mean(cen * cen, axis=1, keepdims=True)   # biased var
            y = (cen * jax.lax.rsqrt(var + eps)).reshape(tm, tn)
        if act == "relu":
            y = jnp.maximum(y, 0.0)
        elif act == "tanh":
            y = jnp.tanh(y)
        if has_skip:
            y = y + skip_ref[...].astype(jnp.float32)
        o_ref[...] = y.astype(o_ref.dtype)


def matmul_fused(x, w_pad, b_pad, *, n_out, act=None, inorm=False, skip=None,
                 n_batch=1, out_dtype=jnp.bfloat16, eps=1e-5):
    """o = epilogue(x @ w + b); x:(M,Kp) bf16, w:(Kp,Np) bf16, b:(1,Np) f32.

    Epilogue (finalize step only): optional InstanceNorm over the per-sample
    spatial rows, optional ReLU/Tanh, optional residual skip add.
    """
    M, Kp = x.shape
    Kp2, Np = w_pad.shape
    assert Kp == Kp2 and Np % 128 == 0 and Kp % 128 == 0

    Mp = _round_up(M, 16)
    if Mp != M:
        x = jnp.pad(x, ((0, Mp - M), (0, 0)))

    if inorm:
        # Per-instance stats need the whole M (= N*OH*OW) extent in one tile.
        assert Mp == M and M % n_batch == 0, "IN fusion requires unpadded M"
        tm = Mp
    else:
        tm = Mp if Mp <= 256 else next(c for c in (256, 128, 64, 32, 16)
                                       if Mp % c == 0)
    tn = 128
    tk = Kp if Kp <= 2048 else next(c for c in (2048, 1024, 512, 256, 128)
                                    if Kp % c == 0)

    inputs = [x, w_pad, b_pad]
    in_specs = [
        pl.BlockSpec((tm, tk), lambda i, j, k: (i, k)),
        pl.BlockSpec((tk, tn), lambda i, j, k: (k, j)),
        pl.BlockSpec((1, tn), lambda i, j, k: (0, j)),
    ]
    has_skip = skip is not None
    if has_skip:
        Ms, Cs = skip.shape
        skip_p = jnp.pad(skip, ((0, Mp - Ms), (0, Np - Cs)))
        inputs.append(skip_p)
        in_specs.append(pl.BlockSpec((tm, tn), lambda i, j, k: (i, j)))

    kernel = functools.partial(_mm_fused_kernel, act=act, inorm=inorm,
                               has_skip=has_skip, n_batch=n_batch, eps=eps)
    out = pl.pallas_call(
        kernel,
        out_shape=jax.ShapeDtypeStruct((Mp, Np), out_dtype),
        grid=(Mp // tm, Np // tn, Kp // tk),
        in_specs=in_specs,
        out_specs=pl.BlockSpec((tm, tn), lambda i, j, k: (i, j)),
        scratch_shapes=[pltpu.VMEM((tm, tn), jnp.float32)],
        compiler_params=pltpu.CompilerParams(
            dimension_semantics=("parallel", "parallel", "arbitrary"),
            vmem_limit_bytes=32 * 1024 * 1024),
        cost_estimate=pl.CostEstimate(
            flops=2 * Mp * Np * Kp,
            transcendentals=Mp * Np if act == "tanh" else 0,
            bytes_accessed=(Mp * Kp + Kp * Np) * 2
                           + Mp * Np * jnp.dtype(out_dtype).itemsize),
    )(*inputs)
    return out[:M, :n_out]


# ---------------------------------------------------------------------------
# Glue: patch extraction + conv / conv-transpose wrappers
# ---------------------------------------------------------------------------
def _im2col(x_nhwc, kh, kw, stride, pad, k_pad_to):
    """bf16 patch extraction, K zero-padded to the prepared weight's Kp."""
    N, H, W, C = x_nhwc.shape
    xp = jnp.pad(x_nhwc, ((0, 0), (pad, pad), (pad, pad), (0, 0)))
    OH = (H + 2 * pad - kh) // stride + 1
    OW = (W + 2 * pad - kw) // stride + 1
    cols = []
    for i in range(kh):
        for j in range(kw):
            cols.append(xp[:, i:i + stride * OH:stride,
                           j:j + stride * OW:stride, :])
    patches = jnp.stack(cols, axis=3)                 # (N, OH, OW, KH*KW, C)
    patches = patches.reshape(N * OH * OW, kh * kw * C)
    K = kh * kw * C
    if k_pad_to > K:
        patches = jnp.pad(patches, ((0, 0), (0, k_pad_to - K)))
    return patches, OH, OW
    # TODO(synk): avoid materializing im2col patches in HBM by adding a
    # KH*KW "arbitrary" grid axis whose index_map selects shifted input tiles.


def conv2d(x_nhwc, prep, stride, pad, act=None, inorm=False, skip=None,
           out_dtype=jnp.bfloat16):
    kh, kw, oc = prep["kh"], prep["kw"], prep["oc"]
    N = x_nhwc.shape[0]
    patches, OH, OW = _im2col(x_nhwc, kh, kw, stride, pad, prep["w"].shape[0])
    skip_mat = None if skip is None else skip.reshape(N * OH * OW, -1)
    out = matmul_fused(patches, prep["w"], prep["b"], n_out=oc, act=act,
                       inorm=inorm, skip=skip_mat, n_batch=N,
                       out_dtype=out_dtype)
    return out.reshape(N, OH, OW, oc)


def conv_transpose2d(x_nhwc, prep, stride, pad, act=None, inorm=False,
                     out_dtype=jnp.bfloat16):
    """ConvTranspose2d == zero-dilated input, pad k-1-p, ordinary conv with
    the (already prepared) flipped / transposed kernel. output_padding = 0."""
    # TODO(synk): output_padding != 0 is not supported by this construction.
    N, H, W, C = x_nhwc.shape
    kh = prep["kh"]
    HD, WD = (H - 1) * stride + 1, (W - 1) * stride + 1
    xd = jnp.zeros((N, HD, WD, C), x_nhwc.dtype)
    xd = xd.at[:, ::stride, ::stride, :].set(x_nhwc)
    return conv2d(xd, prep, stride=1, pad=kh - 1 - pad, act=act, inorm=inorm,
                  out_dtype=out_dtype)


# ---------------------------------------------------------------------------
# Parameter init (PyTorch-like layouts) + one-time weight preparation
# ---------------------------------------------------------------------------
def _uniform_init(key, shape, fan_in):
    bound = 1.0 / (fan_in ** 0.5)
    return jax.random.uniform(key, shape, jnp.float32, -bound, bound)


def init_params(key, input_nc, output_nc):
    keys = iter(jax.random.split(key, 40))

    def conv_wb(ic, oc, k):                     # Conv2d: weight (OC, IC, K, K)
        fan_in = ic * k * k
        return (_uniform_init(next(keys), (oc, ic, k, k), fan_in),
                _uniform_init(next(keys), (oc,), fan_in))

    def convT_wb(ic, oc, k):                    # ConvT: weight (IC, OC, K, K)
        fan_in = oc * k * k
        return (_uniform_init(next(keys), (ic, oc, k, k), fan_in),
                _uniform_init(next(keys), (oc,), fan_in))

    return {
        "c1": conv_wb(input_nc, 64, 4),
        "c2": conv_wb(64, 128, 4),
        "res": [(conv_wb(128, 128, 3), conv_wb(128, 128, 3)) for _ in range(6)],
        "u1": convT_wb(128, 64, 4),
        "u2": convT_wb(64, output_nc, 4),
    }


def _prep_conv(w_oihw, b):
    """OIHW conv weight -> pre-padded bf16 (Kp, Np) matmul weight + f32 bias."""
    OC, IC, KH, KW = w_oihw.shape
    K = KH * KW * IC
    Kp, Np = _round_up(K, 128), _round_up(OC, 128)
    w_mat = jnp.transpose(w_oihw, (2, 3, 1, 0)).reshape(K, OC)   # (kh,kw,ic,oc)
    w_pad = jnp.pad(w_mat, ((0, Kp - K), (0, Np - OC))).astype(jnp.bfloat16)
    b_pad = jnp.pad(b.astype(jnp.float32), (0, Np - OC)).reshape(1, Np)
    return {"w": w_pad, "b": b_pad, "kh": KH, "kw": KW, "oc": OC}


def _prep_convT(w_iohw, b):
    # flip spatial dims and swap in/out channels -> ordinary OIHW conv weight
    w_conv = jnp.transpose(w_iohw[:, :, ::-1, ::-1], (1, 0, 2, 3))
    return _prep_conv(w_conv, b)


def prepare_params(params):
    """One-time transform of raw (PyTorch-layout) params into pre-padded bf16
    matmul operands.  Hoisted out of the per-call forward path."""
    return {
        "c1": _prep_conv(*params["c1"]),
        "c2": _prep_conv(*params["c2"]),
        "res": [(_prep_conv(*p1), _prep_conv(*p2)) for (p1, p2) in params["res"]],
        "u1": _prep_convT(*params["u1"]),
        "u2": _prep_convT(*params["u2"]),
    }


# ---------------------------------------------------------------------------
# Generator forward (matches the PyTorch nn.Sequential exactly)
# ---------------------------------------------------------------------------
def generator_forward(x_nchw, prep):
    x = jnp.transpose(x_nchw, (0, 2, 3, 1)).astype(jnp.bfloat16)   # NCHW->NHWC

    x = conv2d(x, prep["c1"], stride=2, pad=1, act="relu")          # Conv+ReLU
    x = conv2d(x, prep["c2"], stride=2, pad=1, act="relu",          # Conv+IN+ReLU
               inorm=True)

    for (p1, p2) in prep["res"]:                                    # 6 ResidualBlocks
        y = conv2d(x, p1, stride=1, pad=1, act="relu", inorm=True)  # Conv+IN+ReLU
        x = conv2d(y, p2, stride=1, pad=1, act=None, inorm=True,    # Conv+IN + skip
                   skip=x)

    x = conv_transpose2d(x, prep["u1"], stride=2, pad=1,            # ConvT+IN+ReLU
                         act="relu", inorm=True)
    x = conv_transpose2d(x, prep["u2"], stride=2, pad=1,            # ConvT+Tanh
                         act="tanh", out_dtype=jnp.float32)

    return jnp.transpose(x, (0, 3, 1, 2))                           # NHWC->NCHW


if __name__ == "__main__":
    key = jax.random.PRNGKey(0)
    k_in, k_par = jax.random.split(key)

    input_nc, output_nc = 4, 3
    x = jax.random.normal(k_in, (2, input_nc, 16, 16), jnp.float32)   # NCHW
    params = init_params(k_par, input_nc, output_nc)
    prep = prepare_params(params)          # one-time weight padding / bf16 cast

    fwd = jax.jit(lambda inp: generator_forward(inp, prep))
    out = jax.block_until_ready(fwd(x))

    assert out.shape == (2, output_nc, 16, 16), out.shape
    assert bool(jnp.all(jnp.isfinite(out)))
    print("KERNEL_OK")
</pallas_src>

<mosaic_0001>
module attributes {stable_mosaic.version = 11 : i64} {
  func.func @_mm_fused_kernel(%arg0: i32, %arg1: i32, %arg2: i32, %arg3: memref<128x128xbf16, #tpu.memory_space<vmem>>, %arg4: memref<128x128xbf16, #tpu.memory_space<vmem>>, %arg5: memref<1x128xf32, #tpu.memory_space<vmem>>, %arg6: memref<128x128xbf16, #tpu.memory_space<vmem>>, %arg7: memref<128x128xf32, #tpu.memory_space<vmem>>) attributes {dimension_semantics = [#tpu.dimension_semantics<parallel>, #tpu.dimension_semantics<parallel>, #tpu.dimension_semantics<arbitrary>], iteration_bounds = array<i64: 1, 1, 1>, scalar_prefetch = 0 : i64, scratch_operands = 1 : i64, tpu.core_type = #tpu.core_type<tc>, window_params = [{transform_indices = @transform_0, window_bounds = array<i64: 128, 128>}, {transform_indices = @transform_1, window_bounds = array<i64: 128, 128>}, {transform_indices = @transform_2, window_bounds = array<i64: 1, 128>}, {transform_indices = @transform_3, window_bounds = array<i64: 128, 128>}]} {
    %c0_i32 = arith.constant 0 : i32
    %0 = arith.cmpi eq, %arg2, %c0_i32 : i32
    %1 = arith.extui %0 : i1 to i32
    %c0_i32_0 = arith.constant 0 : i32
    %2 = arith.cmpi ne, %1, %c0_i32_0 : i32
    scf.if %2 {
      %cst_10 = arith.constant 0.000000e+00 : f32
      %12 = vector.broadcast %cst_10 : f32 to vector<128x128xf32>
      %c0_11 = arith.constant 0 : index
      %c0_12 = arith.constant 0 : index
      %13 = vector.load %arg7[%c0_11, %c0_12] : memref<128x128xf32, #tpu.memory_space<vmem>>, vector<128x128xf32>
      tpu.vector_store %arg7[%c0_11, %c0_12], %12 {strides = array<i32>} : memref<128x128xf32, #tpu.memory_space<vmem>>, vector<128x128xf32>,
    } else {
    }
    %c0 = arith.constant 0 : index
    %c0_1 = arith.constant 0 : index
    %3 = vector.load %arg7[%c0, %c0_1] : memref<128x128xf32, #tpu.memory_space<vmem>>, vector<128x128xf32>
    %c0_2 = arith.constant 0 : index
    %c0_3 = arith.constant 0 : index
    %4 = vector.load %arg3[%c0_2, %c0_3] : memref<128x128xbf16, #tpu.memory_space<vmem>>, vector<128x128xbf16>
    %c0_4 = arith.constant 0 : index
    %c0_5 = arith.constant 0 : index
    %5 = vector.load %arg4[%c0_4, %c0_5] : memref<128x128xbf16, #tpu.memory_space<vmem>>, vector<128x128xbf16>
    %cst = arith.constant dense<0.000000e+00> : vector<128x128xf32>
    %6 = tpu.matmul %4, %5, %cst {dimension_numbers = #tpu.dot_dimension_numbers<[1], [0], [0], [1], [0, 0, 1, 1], [], []>} : vector<128x128xbf16>, vector<128x128xbf16>, vector<128x128xf32> -> vector<128x128xf32>
    %7 = arith.addf %3, %6 : vector<128x128xf32>
    %c0_6 = arith.constant 0 : index
    %c0_7 = arith.constant 0 : index
    %8 = vector.load %arg7[%c0_6, %c0_7] : memref<128x128xf32, #tpu.memory_space<vmem>>, vector<128x128xf32>
    tpu.vector_store %arg7[%c0_6, %c0_7], %7 {strides = array<i32>} : memref<128x128xf32, #tpu.memory_space<vmem>>, vector<128x128xf32>,
    %c0_i32_8 = arith.constant 0 : i32
    %9 = arith.cmpi eq, %arg2, %c0_i32_8 : i32
    %10 = arith.extui %9 : i1 to i32
    %c0_i32_9 = arith.constant 0 : i32
    %11 = arith.cmpi ne, %10, %c0_i32_9 : i32
    scf.if %11 {
      %c0_10 = arith.constant 0 : index
      %c0_11 = arith.constant 0 : index
      %12 = vector.load %arg7[%c0_10, %c0_11] : memref<128x128xf32, #tpu.memory_space<vmem>>, vector<128x128xf32>
      %c0_12 = arith.constant 0 : index
      %c0_13 = arith.constant 0 : index
      %13 = vector.load %arg5[%c0_12, %c0_13] : memref<1x128xf32, #tpu.memory_space<vmem>>, vector<1x128xf32>
      %14 = vector.broadcast %13 : vector<1x128xf32> to vector<128x128xf32>
      %15 = arith.addf %12, %14 : vector<128x128xf32>
      %cst_14 = arith.constant 0.000000e+00 : f32
      %16 = vector.broadcast %cst_14 : f32 to vector<128x128xf32>
      %17 = arith.maximumf %15, %16 : vector<128x128xf32>
      %18 = arith.truncf %17 : vector<128x128xf32> to vector<128x128xbf16>
      %c0_15 = arith.constant 0 : index
      %c0_16 = arith.constant 0 : index
      %19 = vector.load %arg6[%c0_15, %c0_16] : memref<128x128xbf16, #tpu.memory_space<vmem>>, vector<128x128xbf16>
      tpu.vector_store %arg6[%c0_15, %c0_16], %18 {strides = array<i32>} : memref<128x128xbf16, #tpu.memory_space<vmem>>, vector<128x128xbf16>,
    } else {
    }
    return
  }
  func.func @transform_0(%arg0: i32, %arg1: i32, %arg2: i32) -> (i32, i32) {
    %c0_i32 = arith.constant 0 : i32
    return %arg0, %arg2 : i32, i32
  }
  func.func @transform_1(%arg0: i32, %arg1: i32, %arg2: i32) -> (i32, i32) {
    %c0_i32 = arith.constant 0 : i32
    return %arg2, %arg1 : i32, i32
  }
  func.func @transform_2(%arg0: i32, %arg1: i32, %arg2: i32) -> (i32, i32) {
    %c0_i32 = arith.constant 0 : i32
    %c0_i32_0 = arith.constant 0 : i32
    return %c0_i32, %arg1 : i32, i32
  }
  func.func @transform_3(%arg0: i32, %arg1: i32, %arg2: i32) -> (i32, i32) {
    %c0_i32 = arith.constant 0 : i32
    return %arg0, %arg1 : i32, i32
  }
}

module attributes {stable_mosaic.version = 11 : i64} {
  func.func @_mm_fused_kernel(%arg0: i32, %arg1: i32, %arg2: i32, %arg3: memref<32x1024xbf16, #tpu.memory_space<vmem>>, %arg4: memref<1024x128xbf16, #tpu.memory_space<vmem>>, %arg5: memref<1x128xf32, #tpu.memory_space<vmem>>, %arg6: memref<32x128xbf16, #tpu.memory_space<vmem>>, %arg7: memref<32x128xf32, #tpu.memory_space<vmem>>) attributes {dimension_semantics = [#tpu.dimension_semantics<parallel>, #tpu.dimension_semantics<parallel>, #tpu.dimension_semantics<arbitrary>], iteration_bounds = array<i64: 1, 1, 1>, scalar_prefetch = 0 : i64, scratch_operands = 1 : i64, tpu.core_type = #tpu.core_type<tc>, window_params = [{transform_indices = @transform_0, window_bounds = array<i64: 32, 1024>}, {transform_indices = @transform_1, window_bounds = array<i64: 1024, 128>}, {transform_indices = @transform_2, window_bounds = array<i64: 1, 128>}, {transform_indices = @transform_3, window_bounds = array<i64: 32, 128>}]} {
    %c0_i32 = arith.constant 0 : i32
    %0 = arith.cmpi eq, %arg2, %c0_i32 : i32
    %1 = arith.extui %0 : i1 to i32
    %c0_i32_0 = arith.constant 0 : i32
    %2 = arith.cmpi ne, %1, %c0_i32_0 : i32
    scf.if %2 {
      %cst_10 = arith.constant 0.000000e+00 : f32
      %12 = vector.broadcast %cst_10 : f32 to vector<32x128xf32>
      %c0_11 = arith.constant 0 : index
      %c0_12 = arith.constant 0 : index
      %13 = vector.load %arg7[%c0_11, %c0_12] : memref<32x128xf32, #tpu.memory_space<vmem>>, vector<32x128xf32>
      tpu.vector_store %arg7[%c0_11, %c0_12], %12 {strides = array<i32>} : memref<32x128xf32, #tpu.memory_space<vmem>>, vector<32x128xf32>,
    } else {
    }
    %c0 = arith.constant 0 : index
    %c0_1 = arith.constant 0 : index
    %3 = vector.load %arg7[%c0, %c0_1] : memref<32x128xf32, #tpu.memory_space<vmem>>, vector<32x128xf32>
    %c0_2 = arith.constant 0 : index
    %c0_3 = arith.constant 0 : index
    %4 = vector.load %arg3[%c0_2, %c0_3] : memref<32x1024xbf16, #tpu.memory_space<vmem>>, vector<32x1024xbf16>
    %c0_4 = arith.constant 0 : index
    %c0_5 = arith.constant 0 : index
    %5 = vector.load %arg4[%c0_4, %c0_5] : memref<1024x128xbf16, #tpu.memory_space<vmem>>, vector<1024x128xbf16>
    %cst = arith.constant dense<0.000000e+00> : vector<32x128xf32>
    %6 = tpu.matmul %4, %5, %cst {dimension_numbers = #tpu.dot_dimension_numbers<[1], [0], [0], [1], [0, 0, 1, 1], [], []>} : vector<32x1024xbf16>, vector<1024x128xbf16>, vector<32x128xf32> -> vector<32x128xf32>
    %7 = arith.addf %3, %6 : vector<32x128xf32>
    %c0_6 = arith.constant 0 : index
    %c0_7 = arith.constant 0 : index
    %8 = vector.load %arg7[%c0_6, %c0_7] : memref<32x128xf32, #tpu.memory_space<vmem>>, vector<32x128xf32>
    tpu.vector_store %arg7[%c0_6, %c0_7], %7 {strides = array<i32>} : memref<32x128xf32, #tpu.memory_space<vmem>>, vector<32x128xf32>,
    %c0_i32_8 = arith.constant 0 : i32
    %9 = arith.cmpi eq, %arg2, %c0_i32_8 : i32
    %10 = arith.extui %9 : i1 to i32
    %c0_i32_9 = arith.constant 0 : i32
    %11 = arith.cmpi ne, %10, %c0_i32_9 : i32
    scf.if %11 {
      %c0_10 = arith.constant 0 : index
      %c0_11 = arith.constant 0 : index
      %12 = vector.load %arg7[%c0_10, %c0_11] : memref<32x128xf32, #tpu.memory_space<vmem>>, vector<32x128xf32>
      %c0_12 = arith.constant 0 : index
      %c0_13 = arith.constant 0 : index
      %13 = vector.load %arg5[%c0_12, %c0_13] : memref<1x128xf32, #tpu.memory_space<vmem>>, vector<1x128xf32>
      %14 = vector.broadcast %13 : vector<1x128xf32> to vector<32x128xf32>
      %15 = arith.addf %12, %14 : vector<32x128xf32>
      %16 = vector.shape_cast %15 : vector<32x128xf32> to vector<2x16x128xf32>
      %cst_14 = arith.constant dense<0.000000e+00> : vector<2x128xf32>
      %17 = vector.multi_reduction <add>, %16, %cst_14 [1] : vector<2x16x128xf32> to vector<2x128xf32>
      %18 = vector.shape_cast %17 : vector<2x128xf32> to vector<2x1x128xf32>
      %cst_15 = arith.constant 1.600000e+01 : f32
      %19 = vector.broadcast %cst_15 : f32 to vector<2x1x128xf32>
      %20 = arith.divf %18, %19 : vector<2x1x128xf32>
      %21 = vector.broadcast %20 : vector<2x1x128xf32> to vector<2x16x128xf32>
      %22 = arith.subf %16, %21 : vector<2x16x128xf32>
      %23 = arith.mulf %22, %22 : vector<2x16x128xf32>
      %cst_16 = arith.constant dense<0.000000e+00> : vector<2x128xf32>
      %24 = vector.multi_reduction <add>, %23, %cst_16 [1] : vector<2x16x128xf32> to vector<2x128xf32>
      %25 = vector.shape_cast %24 : vector<2x128xf32> to vector<2x1x128xf32>
      %cst_17 = arith.constant 1.600000e+01 : f32
      %26 = vector.broadcast %cst_17 : f32 to vector<2x1x128xf32>
      %27 = arith.divf %25, %26 : vector<2x1x128xf32>
      %cst_18 = arith.constant 9.99999974E-6 : f32
      %28 = vector.broadcast %cst_18 : f32 to vector<2x1x128xf32>
      %29 = arith.addf %27, %28 : vector<2x1x128xf32>
      %30 = math.rsqrt %29 : vector<2x1x128xf32>
      %31 = vector.broadcast %30 : vector<2x1x128xf32> to vector<2x16x128xf32>
      %32 = arith.mulf %22, %31 : vector<2x16x128xf32>
      %33 = vector.shape_cast %32 : vector<2x16x128xf32> to vector<32x128xf32>
      %cst_19 = arith.constant 0.000000e+00 : f32
      %34 = vector.broadcast %cst_19 : f32 to vector<32x128xf32>
      %35 = arith.maximumf %33, %34 : vector<32x128xf32>
      %36 = arith.truncf %35 : vector<32x128xf32> to vector<32x128xbf16>
      %c0_20 = arith.constant 0 : index
      %c0_21 = arith.constant 0 : index
      %37 = vector.load %arg6[%c0_20, %c0_21] : memref<32x128xbf16, #tpu.memory_space<vmem>>, vector<32x128xbf16>
      tpu.vector_store %arg6[%c0_20, %c0_21], %36 {strides = array<i32>} : memref<32x128xbf16, #tpu.memory_space<vmem>>, vector<32x128xbf16>,
    } else {
    }
    return
  }
  func.func @transform_0(%arg0: i32, %arg1: i32, %arg2: i32) -> (i32, i32) {
    %c0_i32 = arith.constant 0 : i32
    return %arg0, %arg2 : i32, i32
  }
  func.func @transform_1(%arg0: i32, %arg1: i32, %arg2: i32) -> (i32, i32) {
    %c0_i32 = arith.constant 0 : i32
    return %arg2, %arg1 : i32, i32
  }
  func.func @transform_2(%arg0: i32, %arg1: i32, %arg2: i32) -> (i32, i32) {
    %c0_i32 = arith.constant 0 : i32
    %c0_i32_0 = arith.constant 0 : i32
    return %c0_i32, %arg1 : i32, i32
  }
  func.func @transform_3(%arg0: i32, %arg1: i32, %arg2: i32) -> (i32, i32) {
    %c0_i32 = arith.constant 0 : i32
    return %arg0, %arg1 : i32, i32
  }
}

module attributes {stable_mosaic.version = 11 : i64} {
  func.func @_mm_fused_kernel(%arg0: i32, %arg1: i32, %arg2: i32, %arg3: memref<32x1152xbf16, #tpu.memory_space<vmem>>, %arg4: memref<1152x128xbf16, #tpu.memory_space<vmem>>, %arg5: memref<1x128xf32, #tpu.memory_space<vmem>>, %arg6: memref<32x128xbf16, #tpu.memory_space<vmem>>, %arg7: memref<32x128xbf16, #tpu.memory_space<vmem>>, %arg8: memref<32x128xf32, #tpu.memory_space<vmem>>) attributes {dimension_semantics = [#tpu.dimension_semantics<parallel>, #tpu.dimension_semantics<parallel>, #tpu.dimension_semantics<arbitrary>], iteration_bounds = array<i64: 1, 1, 1>, scalar_prefetch = 0 : i64, scratch_operands = 1 : i64, tpu.core_type = #tpu.core_type<tc>, window_params = [{transform_indices = @transform_0, window_bounds = array<i64: 32, 1152>}, {transform_indices = @transform_1, window_bounds = array<i64: 1152, 128>}, {transform_indices = @transform_2, window_bounds = array<i64: 1, 128>}, {transform_indices = @transform_3, window_bounds = array<i64: 32, 128>}, {transform_indices = @transform_4, window_bounds = array<i64: 32, 128>}]} {
    %c0_i32 = arith.constant 0 : i32
    %0 = arith.cmpi eq, %arg2, %c0_i32 : i32
    %1 = arith.extui %0 : i1 to i32
    %c0_i32_0 = arith.constant 0 : i32
    %2 = arith.cmpi ne, %1, %c0_i32_0 : i32
    scf.if %2 {
      %cst_10 = arith.constant 0.000000e+00 : f32
      %12 = vector.broadcast %cst_10 : f32 to vector<32x128xf32>
      %c0_11 = arith.constant 0 : index
      %c0_12 = arith.constant 0 : index
      %13 = vector.load %arg8[%c0_11, %c0_12] : memref<32x128xf32, #tpu.memory_space<vmem>>, vector<32x128xf32>
      tpu.vector_store %arg8[%c0_11, %c0_12], %12 {strides = array<i32>} : memref<32x128xf32, #tpu.memory_space<vmem>>, vector<32x128xf32>,
    } else {
    }
    %c0 = arith.constant 0 : index
    %c0_1 = arith.constant 0 : index
    %3 = vector.load %arg8[%c0, %c0_1] : memref<32x128xf32, #tpu.memory_space<vmem>>, vector<32x128xf32>
    %c0_2 = arith.constant 0 : index
    %c0_3 = arith.constant 0 : index
    %4 = vector.load %arg3[%c0_2, %c0_3] : memref<32x1152xbf16, #tpu.memory_space<vmem>>, vector<32x1152xbf16>
    %c0_4 = arith.constant 0 : index
    %c0_5 = arith.constant 0 : index
    %5 = vector.load %arg4[%c0_4, %c0_5] : memref<1152x128xbf16, #tpu.memory_space<vmem>>, vector<1152x128xbf16>
    %cst = arith.constant dense<0.000000e+00> : vector<32x128xf32>
    %6 = tpu.matmul %4, %5, %cst {dimension_numbers = #tpu.dot_dimension_numbers<[1], [0], [0], [1], [0, 0, 1, 1], [], []>} : vector<32x1152xbf16>, vector<1152x128xbf16>, vector<32x128xf32> -> vector<32x128xf32>
    %7 = arith.addf %3, %6 : vector<32x128xf32>
    %c0_6 = arith.constant 0 : index
    %c0_7 = arith.constant 0 : index
    %8 = vector.load %arg8[%c0_6, %c0_7] : memref<32x128xf32, #tpu.memory_space<vmem>>, vector<32x128xf32>
    tpu.vector_store %arg8[%c0_6, %c0_7], %7 {strides = array<i32>} : memref<32x128xf32, #tpu.memory_space<vmem>>, vector<32x128xf32>,
    %c0_i32_8 = arith.constant 0 : i32
    %9 = arith.cmpi eq, %arg2, %c0_i32_8 : i32
    %10 = arith.extui %9 : i1 to i32
    %c0_i32_9 = arith.constant 0 : i32
    %11 = arith.cmpi ne, %10, %c0_i32_9 : i32
    scf.if %11 {
      %c0_10 = arith.constant 0 : index
      %c0_11 = arith.constant 0 : index
      %12 = vector.load %arg8[%c0_10, %c0_11] : memref<32x128xf32, #tpu.memory_space<vmem>>, vector<32x128xf32>
      %c0_12 = arith.constant 0 : index
      %c0_13 = arith.constant 0 : index
      %13 = vector.load %arg5[%c0_12, %c0_13] : memref<1x128xf32, #tpu.memory_space<vmem>>, vector<1x128xf32>
      %14 = vector.broadcast %13 : vector<1x128xf32> to vector<32x128xf32>
      %15 = arith.addf %12, %14 : vector<32x128xf32>
      %16 = vector.shape_cast %15 : vector<32x128xf32> to vector<2x16x128xf32>
      %cst_14 = arith.constant dense<0.000000e+00> : vector<2x128xf32>
      %17 = vector.multi_reduction <add>, %16, %cst_14 [1] : vector<2x16x128xf32> to vector<2x128xf32>
      %18 = vector.shape_cast %17 : vector<2x128xf32> to vector<2x1x128xf32>
      %cst_15 = arith.constant 1.600000e+01 : f32
      %19 = vector.broadcast %cst_15 : f32 to vector<2x1x128xf32>
      %20 = arith.divf %18, %19 : vector<2x1x128xf32>
      %21 = vector.broadcast %20 : vector<2x1x128xf32> to vector<2x16x128xf32>
      %22 = arith.subf %16, %21 : vector<2x16x128xf32>
      %23 = arith.mulf %22, %22 : vector<2x16x128xf32>
      %cst_16 = arith.constant dense<0.000000e+00> : vector<2x128xf32>
      %24 = vector.multi_reduction <add>, %23, %cst_16 [1] : vector<2x16x128xf32> to vector<2x128xf32>
      %25 = vector.shape_cast %24 : vector<2x128xf32> to vector<2x1x128xf32>
      %cst_17 = arith.constant 1.600000e+01 : f32
      %26 = vector.broadcast %cst_17 : f32 to vector<2x1x128xf32>
      %27 = arith.divf %25, %26 : vector<2x1x128xf32>
      %cst_18 = arith.constant 9.99999974E-6 : f32
      %28 = vector.broadcast %cst_18 : f32 to vector<2x1x128xf32>
      %29 = arith.addf %27, %28 : vector<2x1x128xf32>
      %30 = math.rsqrt %29 : vector<2x1x128xf32>
      %31 = vector.broadcast %30 : vector<2x1x128xf32> to vector<2x16x128xf32>
      %32 = arith.mulf %22, %31 : vector<2x16x128xf32>
      %33 = vector.shape_cast %32 : vector<2x16x128xf32> to vector<32x128xf32>
      %c0_19 = arith.constant 0 : index
      %c0_20 = arith.constant 0 : index
      %34 = vector.load %arg6[%c0_19, %c0_20] : memref<32x128xbf16, #tpu.memory_space<vmem>>, vector<32x128xbf16>
      %35 = arith.extf %34 : vector<32x128xbf16> to vector<32x128xf32>
      %36 = arith.addf %33, %35 : vector<32x128xf32>
      %37 = arith.truncf %36 : vector<32x128xf32> to vector<32x128xbf16>
      %c0_21 = arith.constant 0 : index
      %c0_22 = arith.constant 0 : index
      %38 = vector.load %arg7[%c0_21, %c0_22] : memref<32x128xbf16, #tpu.memory_space<vmem>>, vector<32x128xbf16>
      tpu.vector_store %arg7[%c0_21, %c0_22], %37 {strides = array<i32>} : memref<32x128xbf16, #tpu.memory_space<vmem>>, vector<32x128xbf16>,
    } else {
    }
    return
  }
  func.func @transform_0(%arg0: i32, %arg1: i32, %arg2: i32) -> (i32, i32) {
    %c0_i32 = arith.constant 0 : i32
    return %arg0, %arg2 : i32, i32
  }
  func.func @transform_1(%arg0: i32, %arg1: i32, %arg2: i32) -> (i32, i32) {
    %c0_i32 = arith.constant 0 : i32
    return %arg2, %arg1 : i32, i32
  }
  func.func @transform_2(%arg0: i32, %arg1: i32, %arg2: i32) -> (i32, i32) {
    %c0_i32 = arith.constant 0 : i32
    %c0_i32_0 = arith.constant 0 : i32
    return %c0_i32, %arg1 : i32, i32
  }
  func.func @transform_3(%arg0: i32, %arg1: i32, %arg2: i32) -> (i32, i32) {
    %c0_i32 = arith.constant 0 : i32
    return %arg0, %arg1 : i32, i32
  }
  func.func @transform_4(%arg0: i32, %arg1: i32, %arg2: i32) -> (i32, i32) {
    %c0_i32 = arith.constant 0 : i32
    return %arg0, %arg1 : i32, i32
  }
}

module attributes {stable_mosaic.version = 11 : i64} {
  func.func @_mm_fused_kernel(%arg0: i32, %arg1: i32, %arg2: i32, %arg3: memref<32x1152xbf16, #tpu.memory_space<vmem>>, %arg4: memref<1152x128xbf16, #tpu.memory_space<vmem>>, %arg5: memref<1x128xf32, #tpu.memory_space<vmem>>, %arg6: memref<32x128xbf16, #tpu.memory_space<vmem>>, %arg7: memref<32x128xf32, #tpu.memory_space<vmem>>) attributes {dimension_semantics = [#tpu.dimension_semantics<parallel>, #tpu.dimension_semantics<parallel>, #tpu.dimension_semantics<arbitrary>], iteration_bounds = array<i64: 1, 1, 1>, scalar_prefetch = 0 : i64, scratch_operands = 1 : i64, tpu.core_type = #tpu.core_type<tc>, window_params = [{transform_indices = @transform_0, window_bounds = array<i64: 32, 1152>}, {transform_indices = @transform_1, window_bounds = array<i64: 1152, 128>}, {transform_indices = @transform_2, window_bounds = array<i64: 1, 128>}, {transform_indices = @transform_3, window_bounds = array<i64: 32, 128>}]} {
    %c0_i32 = arith.constant 0 : i32
    %0 = arith.cmpi eq, %arg2, %c0_i32 : i32
    %1 = arith.extui %0 : i1 to i32
    %c0_i32_0 = arith.constant 0 : i32
    %2 = arith.cmpi ne, %1, %c0_i32_0 : i32
    scf.if %2 {
      %cst_10 = arith.constant 0.000000e+00 : f32
      %12 = vector.broadcast %cst_10 : f32 to vector<32x128xf32>
      %c0_11 = arith.constant 0 : index
      %c0_12 = arith.constant 0 : index
      %13 = vector.load %arg7[%c0_11, %c0_12] : memref<32x128xf32, #tpu.memory_space<vmem>>, vector<32x128xf32>
      tpu.vector_store %arg7[%c0_11, %c0_12], %12 {strides = array<i32>} : memref<32x128xf32, #tpu.memory_space<vmem>>, vector<32x128xf32>,
    } else {
    }
    %c0 = arith.constant 0 : index
    %c0_1 = arith.constant 0 : index
    %3 = vector.load %arg7[%c0, %c0_1] : memref<32x128xf32, #tpu.memory_space<vmem>>, vector<32x128xf32>
    %c0_2 = arith.constant 0 : index
    %c0_3 = arith.constant 0 : index
    %4 = vector.load %arg3[%c0_2, %c0_3] : memref<32x1152xbf16, #tpu.memory_space<vmem>>, vector<32x1152xbf16>
    %c0_4 = arith.constant 0 : index
    %c0_5 = arith.constant 0 : index
    %5 = vector.load %arg4[%c0_4, %c0_5] : memref<1152x128xbf16, #tpu.memory_space<vmem>>, vector<1152x128xbf16>
    %cst = arith.constant dense<0.000000e+00> : vector<32x128xf32>
    %6 = tpu.matmul %4, %5, %cst {dimension_numbers = #tpu.dot_dimension_numbers<[1], [0], [0], [1], [0, 0, 1, 1], [], []>} : vector<32x1152xbf16>, vector<1152x128xbf16>, vector<32x128xf32> -> vector<32x128xf32>
    %7 = arith.addf %3, %6 : vector<32x128xf32>
    %c0_6 = arith.constant 0 : index
    %c0_7 = arith.constant 0 : index
    %8 = vector.load %arg7[%c0_6, %c0_7] : memref<32x128xf32, #tpu.memory_space<vmem>>, vector<32x128xf32>
    tpu.vector_store %arg7[%c0_6, %c0_7], %7 {strides = array<i32>} : memref<32x128xf32, #tpu.memory_space<vmem>>, vector<32x128xf32>,
    %c0_i32_8 = arith.constant 0 : i32
    %9 = arith.cmpi eq, %arg2, %c0_i32_8 : i32
    %10 = arith.extui %9 : i1 to i32
    %c0_i32_9 = arith.constant 0 : i32
    %11 = arith.cmpi ne, %10, %c0_i32_9 : i32
    scf.if %11 {
      %c0_10 = arith.constant 0 : index
      %c0_11 = arith.constant 0 : index
      %12 = vector.load %arg7[%c0_10, %c0_11] : memref<32x128xf32, #tpu.memory_space<vmem>>, vector<32x128xf32>
      %c0_12 = arith.constant 0 : index
      %c0_13 = arith.constant 0 : index
      %13 = vector.load %arg5[%c0_12, %c0_13] : memref<1x128xf32, #tpu.memory_space<vmem>>, vector<1x128xf32>
      %14 = vector.broadcast %13 : vector<1x128xf32> to vector<32x128xf32>
      %15 = arith.addf %12, %14 : vector<32x128xf32>
      %16 = vector.shape_cast %15 : vector<32x128xf32> to vector<2x16x128xf32>
      %cst_14 = arith.constant dense<0.000000e+00> : vector<2x128xf32>
      %17 = vector.multi_reduction <add>, %16, %cst_14 [1] : vector<2x16x128xf32> to vector<2x128xf32>
      %18 = vector.shape_cast %17 : vector<2x128xf32> to vector<2x1x128xf32>
      %cst_15 = arith.constant 1.600000e+01 : f32
      %19 = vector.broadcast %cst_15 : f32 to vector<2x1x128xf32>
      %20 = arith.divf %18, %19 : vector<2x1x128xf32>
      %21 = vector.broadcast %20 : vector<2x1x128xf32> to vector<2x16x128xf32>
      %22 = arith.subf %16, %21 : vector<2x16x128xf32>
      %23 = arith.mulf %22, %22 : vector<2x16x128xf32>
      %cst_16 = arith.constant dense<0.000000e+00> : vector<2x128xf32>
      %24 = vector.multi_reduction <add>, %23, %cst_16 [1] : vector<2x16x128xf32> to vector<2x128xf32>
      %25 = vector.shape_cast %24 : vector<2x128xf32> to vector<2x1x128xf32>
      %cst_17 = arith.constant 1.600000e+01 : f32
      %26 = vector.broadcast %cst_17 : f32 to vector<2x1x128xf32>
      %27 = arith.divf %25, %26 : vector<2x1x128xf32>
      %cst_18 = arith.constant 9.99999974E-6 : f32
      %28 = vector.broadcast %cst_18 : f32 to vector<2x1x128xf32>
      %29 = arith.addf %27, %28 : vector<2x1x128xf32>
      %30 = math.rsqrt %29 : vector<2x1x128xf32>
      %31 = vector.broadcast %30 : vector<2x1x128xf32> to vector<2x16x128xf32>
      %32 = arith.mulf %22, %31 : vector<2x16x128xf32>
      %33 = vector.shape_cast %32 : vector<2x16x128xf32> to vector<32x128xf32>
      %cst_19 = arith.constant 0.000000e+00 : f32
      %34 = vector.broadcast %cst_19 : f32 to vector<32x128xf32>
      %35 = arith.maximumf %33, %34 : vector<32x128xf32>
      %36 = arith.truncf %35 : vector<32x128xf32> to vector<32x128xbf16>
      %c0_20 = arith.constant 0 : index
      %c0_21 = arith.constant 0 : index
      %37 = vector.load %arg6[%c0_20, %c0_21] : memref<32x128xbf16, #tpu.memory_space<vmem>>, vector<32x128xbf16>
      tpu.vector_store %arg6[%c0_20, %c0_21], %36 {strides = array<i32>} : memref<32x128xbf16, #tpu.memory_space<vmem>>, vector<32x128xbf16>,
    } else {
    }
    return
  }
  func.func @transform_0(%arg0: i32, %arg1: i32, %arg2: i32) -> (i32, i32) {
    %c0_i32 = arith.constant 0 : i32
    return %arg0, %arg2 : i32, i32
  }
  func.func @transform_1(%arg0: i32, %arg1: i32, %arg2: i32) -> (i32, i32) {
    %c0_i32 = arith.constant 0 : i32
    return %arg2, %arg1 : i32, i32
  }
  func.func @transform_2(%arg0: i32, %arg1: i32, %arg2: i32) -> (i32, i32) {
    %c0_i32 = arith.constant 0 : i32
    %c0_i32_0 = arith.constant 0 : i32
    return %c0_i32, %arg1 : i32, i32
  }
  func.func @transform_3(%arg0: i32, %arg1: i32, %arg2: i32) -> (i32, i32) {
    %c0_i32 = arith.constant 0 : i32
    return %arg0, %arg1 : i32, i32
  }
}

module attributes {stable_mosaic.version = 11 : i64} {
  func.func @_mm_fused_kernel(%arg0: i32, %arg1: i32, %arg2: i32, %arg3: memref<128x2048xbf16, #tpu.memory_space<vmem>>, %arg4: memref<2048x128xbf16, #tpu.memory_space<vmem>>, %arg5: memref<1x128xf32, #tpu.memory_space<vmem>>, %arg6: memref<128x128xbf16, #tpu.memory_space<vmem>>, %arg7: memref<128x128xf32, #tpu.memory_space<vmem>>) attributes {dimension_semantics = [#tpu.dimension_semantics<parallel>, #tpu.dimension_semantics<parallel>, #tpu.dimension_semantics<arbitrary>], iteration_bounds = array<i64: 1, 1, 1>, scalar_prefetch = 0 : i64, scratch_operands = 1 : i64, tpu.core_type = #tpu.core_type<tc>, window_params = [{transform_indices = @transform_0, window_bounds = array<i64: 128, 2048>}, {transform_indices = @transform_1, window_bounds = array<i64: 2048, 128>}, {transform_indices = @transform_2, window_bounds = array<i64: 1, 128>}, {transform_indices = @transform_3, window_bounds = array<i64: 128, 128>}]} {
    %c0_i32 = arith.constant 0 : i32
    %0 = arith.cmpi eq, %arg2, %c0_i32 : i32
    %1 = arith.extui %0 : i1 to i32
    %c0_i32_0 = arith.constant 0 : i32
    %2 = arith.cmpi ne, %1, %c0_i32_0 : i32
    scf.if %2 {
      %cst_10 = arith.constant 0.000000e+00 : f32
      %12 = vector.broadcast %cst_10 : f32 to vector<128x128xf32>
      %c0_11 = arith.constant 0 : index
      %c0_12 = arith.constant 0 : index
      %13 = vector.load %arg7[%c0_11, %c0_12] : memref<128x128xf32, #tpu.memory_space<vmem>>, vector<128x128xf32>
      tpu.vector_store %arg7[%c0_11, %c0_12], %12 {strides = array<i32>} : memref<128x128xf32, #tpu.memory_space<vmem>>, vector<128x128xf32>,
    } else {
    }
    %c0 = arith.constant 0 : index
    %c0_1 = arith.constant 0 : index
    %3 = vector.load %arg7[%c0, %c0_1] : memref<128x128xf32, #tpu.memory_space<vmem>>, vector<128x128xf32>
    %c0_2 = arith.constant 0 : index
    %c0_3 = arith.constant 0 : index
    %4 = vector.load %arg3[%c0_2, %c0_3] : memref<128x2048xbf16, #tpu.memory_space<vmem>>, vector<128x2048xbf16>
    %c0_4 = arith.constant 0 : index
    %c0_5 = arith.constant 0 : index
    %5 = vector.load %arg4[%c0_4, %c0_5] : memref<2048x128xbf16, #tpu.memory_space<vmem>>, vector<2048x128xbf16>
    %cst = arith.constant dense<0.000000e+00> : vector<128x128xf32>
    %6 = tpu.matmul %4, %5, %cst {dimension_numbers = #tpu.dot_dimension_numbers<[1], [0], [0], [1], [0, 0, 1, 1], [], []>} : vector<128x2048xbf16>, vector<2048x128xbf16>, vector<128x128xf32> -> vector<128x128xf32>
    %7 = arith.addf %3, %6 : vector<128x128xf32>
    %c0_6 = arith.constant 0 : index
    %c0_7 = arith.constant 0 : index
    %8 = vector.load %arg7[%c0_6, %c0_7] : memref<128x128xf32, #tpu.memory_space<vmem>>, vector<128x128xf32>
    tpu.vector_store %arg7[%c0_6, %c0_7], %7 {strides = array<i32>} : memref<128x128xf32, #tpu.memory_space<vmem>>, vector<128x128xf32>,
    %c0_i32_8 = arith.constant 0 : i32
    %9 = arith.cmpi eq, %arg2, %c0_i32_8 : i32
    %10 = arith.extui %9 : i1 to i32
    %c0_i32_9 = arith.constant 0 : i32
    %11 = arith.cmpi ne, %10, %c0_i32_9 : i32
    scf.if %11 {
      %c0_10 = arith.constant 0 : index
      %c0_11 = arith.constant 0 : index
      %12 = vector.load %arg7[%c0_10, %c0_11] : memref<128x128xf32, #tpu.memory_space<vmem>>, vector<128x128xf32>
      %c0_12 = arith.constant 0 : index
      %c0_13 = arith.constant 0 : index
      %13 = vector.load %arg5[%c0_12, %c0_13] : memref<1x128xf32, #tpu.memory_space<vmem>>, vector<1x128xf32>
      %14 = vector.broadcast %13 : vector<1x128xf32> to vector<128x128xf32>
      %15 = arith.addf %12, %14 : vector<128x128xf32>
      %16 = vector.shape_cast %15 : vector<128x128xf32> to vector<2x64x128xf32>
      %cst_14 = arith.constant dense<0.000000e+00> : vector<2x128xf32>
      %17 = vector.multi_reduction <add>, %16, %cst_14 [1] : vector<2x64x128xf32> to vector<2x128xf32>
      %18 = vector.shape_cast %17 : vector<2x128xf32> to vector<2x1x128xf32>
      %cst_15 = arith.constant 6.400000e+01 : f32
      %19 = vector.broadcast %cst_15 : f32 to vector<2x1x128xf32>
      %20 = arith.divf %18, %19 : vector<2x1x128xf32>
      %21 = vector.broadcast %20 : vector<2x1x128xf32> to vector<2x64x128xf32>
      %22 = arith.subf %16, %21 : vector<2x64x128xf32>
      %23 = arith.mulf %22, %22 : vector<2x64x128xf32>
      %cst_16 = arith.constant dense<0.000000e+00> : vector<2x128xf32>
      %24 = vector.multi_reduction <add>, %23, %cst_16 [1] : vector<2x64x128xf32> to vector<2x128xf32>
      %25 = vector.shape_cast %24 : vector<2x128xf32> to vector<2x1x128xf32>
      %cst_17 = arith.constant 6.400000e+01 : f32
      %26 = vector.broadcast %cst_17 : f32 to vector<2x1x128xf32>
      %27 = arith.divf %25, %26 : vector<2x1x128xf32>
      %cst_18 = arith.constant 9.99999974E-6 : f32
      %28 = vector.broadcast %cst_18 : f32 to vector<2x1x128xf32>
      %29 = arith.addf %27, %28 : vector<2x1x128xf32>
      %30 = math.rsqrt %29 : vector<2x1x128xf32>
      %31 = vector.broadcast %30 : vector<2x1x128xf32> to vector<2x64x128xf32>
      %32 = arith.mulf %22, %31 : vector<2x64x128xf32>
      %33 = vector.shape_cast %32 : vector<2x64x128xf32> to vector<128x128xf32>
      %cst_19 = arith.constant 0.000000e+00 : f32
      %34 = vector.broadcast %cst_19 : f32 to vector<128x128xf32>
      %35 = arith.maximumf %33, %34 : vector<128x128xf32>
      %36 = arith.truncf %35 : vector<128x128xf32> to vector<128x128xbf16>
      %c0_20 = arith.constant 0 : index
      %c0_21 = arith.constant 0 : index
      %37 = vector.load %arg6[%c0_20, %c0_21] : memref<128x128xbf16, #tpu.memory_space<vmem>>, vector<128x128xbf16>
      tpu.vector_store %arg6[%c0_20, %c0_21], %36 {strides = array<i32>} : memref<128x128xbf16, #tpu.memory_space<vmem>>, vector<128x128xbf16>,
    } else {
    }
    return
  }
  func.func @transform_0(%arg0: i32, %arg1: i32, %arg2: i32) -> (i32, i32) {
    %c0_i32 = arith.constant 0 : i32
    return %arg0, %arg2 : i32, i32
  }
  func.func @transform_1(%arg0: i32, %arg1: i32, %arg2: i32) -> (i32, i32) {
    %c0_i32 = arith.constant 0 : i32
    return %arg2, %arg1 : i32, i32
  }
  func.func @transform_2(%arg0: i32, %arg1: i32, %arg2: i32) -> (i32, i32) {
    %c0_i32 = arith.constant 0 : i32
    %c0_i32_0 = arith.constant 0 : i32
    return %c0_i32, %arg1 : i32, i32
  }
  func.func @transform_3(%arg0: i32, %arg1: i32, %arg2: i32) -> (i32, i32) {
    %c0_i32 = arith.constant 0 : i32
    return %arg0, %arg1 : i32, i32
  }
}

module attributes {stable_mosaic.version = 11 : i64} {
  func.func @_mm_fused_kernel(%arg0: i32, %arg1: i32, %arg2: i32, %arg3: memref<256x1024xbf16, #tpu.memory_space<vmem>>, %arg4: memref<1024x128xbf16, #tpu.memory_space<vmem>>, %arg5: memref<1x128xf32, #tpu.memory_space<vmem>>, %arg6: memref<256x128xf32, #tpu.memory_space<vmem>>, %arg7: memref<256x128xf32, #tpu.memory_space<vmem>>) attributes {dimension_semantics = [#tpu.dimension_semantics<parallel>, #tpu.dimension_semantics<parallel>, #tpu.dimension_semantics<arbitrary>], iteration_bounds = array<i64: 2, 1, 1>, scalar_prefetch = 0 : i64, scratch_operands = 1 : i64, tpu.core_type = #tpu.core_type<tc>, window_params = [{transform_indices = @transform_0, window_bounds = array<i64: 256, 1024>}, {transform_indices = @transform_1, window_bounds = array<i64: 1024, 128>}, {transform_indices = @transform_2, window_bounds = array<i64: 1, 128>}, {transform_indices = @transform_3, window_bounds = array<i64: 256, 128>}]} {
    %c0_i32 = arith.constant 0 : i32
    %0 = arith.cmpi eq, %arg2, %c0_i32 : i32
    %1 = arith.extui %0 : i1 to i32
    %c0_i32_0 = arith.constant 0 : i32
    %2 = arith.cmpi ne, %1, %c0_i32_0 : i32
    scf.if %2 {
      %cst_10 = arith.constant 0.000000e+00 : f32
      %12 = vector.broadcast %cst_10 : f32 to vector<256x128xf32>
      %c0_11 = arith.constant 0 : index
      %c0_12 = arith.constant 0 : index
      %13 = vector.load %arg7[%c0_11, %c0_12] : memref<256x128xf32, #tpu.memory_space<vmem>>, vector<256x128xf32>
      tpu.vector_store %arg7[%c0_11, %c0_12], %12 {strides = array<i32>} : memref<256x128xf32, #tpu.memory_space<vmem>>, vector<256x128xf32>,
    } else {
    }
    %c0 = arith.constant 0 : index
    %c0_1 = arith.constant 0 : index
    %3 = vector.load %arg7[%c0, %c0_1] : memref<256x128xf32, #tpu.memory_space<vmem>>, vector<256x128xf32>
    %c0_2 = arith.constant 0 : index
    %c0_3 = arith.constant 0 : index
    %4 = vector.load %arg3[%c0_2, %c0_3] : memref<256x1024xbf16, #tpu.memory_space<vmem>>, vector<256x1024xbf16>
    %c0_4 = arith.constant 0 : index
    %c0_5 = arith.constant 0 : index
    %5 = vector.load %arg4[%c0_4, %c0_5] : memref<1024x128xbf16, #tpu.memory_space<vmem>>, vector<1024x128xbf16>
    %cst = arith.constant dense<0.000000e+00> : vector<256x128xf32>
    %6 = tpu.matmul %4, %5, %cst {dimension_numbers = #tpu.dot_dimension_numbers<[1], [0], [0], [1], [0, 0, 1, 1], [], []>} : vector<256x1024xbf16>, vector<1024x128xbf16>, vector<256x128xf32> -> vector<256x128xf32>
    %7 = arith.addf %3, %6 : vector<256x128xf32>
    %c0_6 = arith.constant 0 : index
    %c0_7 = arith.constant 0 : index
    %8 = vector.load %arg7[%c0_6, %c0_7] : memref<256x128xf32, #tpu.memory_space<vmem>>, vector<256x128xf32>
    tpu.vector_store %arg7[%c0_6, %c0_7], %7 {strides = array<i32>} : memref<256x128xf32, #tpu.memory_space<vmem>>, vector<256x128xf32>,
    %c0_i32_8 = arith.constant 0 : i32
    %9 = arith.cmpi eq, %arg2, %c0_i32_8 : i32
    %10 = arith.extui %9 : i1 to i32
    %c0_i32_9 = arith.constant 0 : i32
    %11 = arith.cmpi ne, %10, %c0_i32_9 : i32
    scf.if %11 {
      %c0_10 = arith.constant 0 : index
      %c0_11 = arith.constant 0 : index
      %12 = vector.load %arg7[%c0_10, %c0_11] : memref<256x128xf32, #tpu.memory_space<vmem>>, vector<256x128xf32>
      %c0_12 = arith.constant 0 : index
      %c0_13 = arith.constant 0 : index
      %13 = vector.load %arg5[%c0_12, %c0_13] : memref<1x128xf32, #tpu.memory_space<vmem>>, vector<1x128xf32>
      %14 = vector.broadcast %13 : vector<1x128xf32> to vector<256x128xf32>
      %15 = arith.addf %12, %14 : vector<256x128xf32>
      %16 = math.tanh %15 : vector<256x128xf32>
      %c0_14 = arith.constant 0 : index
      %c0_15 = arith.constant 0 : index
      %17 = vector.load %arg6[%c0_14, %c0_15] : memref<256x128xf32, #tpu.memory_space<vmem>>, vector<256x128xf32>
      tpu.vector_store %arg6[%c0_14, %c0_15], %16 {strides = array<i32>} : memref<256x128xf32, #tpu.memory_space<vmem>>, vector<256x128xf32>,
    } else {
    }
    return
  }
  func.func @transform_0(%arg0: i32, %arg1: i32, %arg2: i32) -> (i32, i32) {
    %c0_i32 = arith.constant 0 : i32
    return %arg0, %arg2 : i32, i32
  }
  func.func @transform_1(%arg0: i32, %arg1: i32, %arg2: i32) -> (i32, i32) {
    %c0_i32 = arith.constant 0 : i32
    return %arg2, %arg1 : i32, i32
  }
  func.func @transform_2(%arg0: i32, %arg1: i32, %arg2: i32) -> (i32, i32) {
    %c0_i32 = arith.constant 0 : i32
    %c0_i32_0 = arith.constant 0 : i32
    return %c0_i32, %arg1 : i32, i32
  }
  func.func @transform_3(%arg0: i32, %arg1: i32, %arg2: i32) -> (i32, i32) {
    %c0_i32 = arith.constant 0 : i32
    return %arg0, %arg1 : i32, i32
  }
}

</mosaic_0001>

<llo_original>
// kernel: _lambda_.16
$region0: #{_lambda_.16}
  #allocation0 [shape = 'u32[]', space=smem, size = 0x4, offset = 0x4, fixed_abs, tag = 'smem constant byte address 0x4 - core index']
  #allocation1 [shape = 'u32[144,128]{1,0:T(1,128)}', space=vmem, size = 0x12000, scoped, tag = 'internal scratch']
  #allocation2 [shape = 'f32[128,128]{1,0:T(8,128)}', space=vmem, size = 0x10000, scoped, tag = 'scratch operand']
  %s0 = inlined_call_operand.vmem [shape: bf16[128,128], index: 0, kind: input, shape index: {}]
  %s1 = inlined_call_operand.vmem [shape: bf16[128,128], index: 1, kind: input, shape index: {}]
  %s2 = inlined_call_operand.vmem [shape: f32[1,128], index: 2, kind: input, shape index: {}]
  %s3 = inlined_call_operand.vmem [shape: bf16[128,128], index: 3, kind: output, shape index: {}]
  %s4 = sld [smem:[#allocation0]]
  $region30: #{_lambda_.16} parent=0
    _
  %s6 = ssub.s32 1, %s4
  %s7 = scalar_select 0, %s6, %s4
  // Predicated region
  $region2: #{_lambda_.16} parent=0 // pred_check
    _
  $region3: #{_lambda_.16} parent=0 // pred_check_branch
    %9 = sbr.rel (0) target = $region5
  $region4: #{_lambda_.16} parent=0 // pred_region
    _
  $region5: #{_lambda_.16} parent=0 // pred_fallthru
    _
  // Predicated region
  $region6: #{_lambda_.16} parent=0 // pred_check
    _
  $region7: #{_lambda_.16} parent=0 // pred_check_branch
    %11 = sbr.rel (0) target = $region9
  $region8: #{_lambda_.16} parent=0 // pred_region
    _
  $region9: #{_lambda_.16} parent=0 // pred_fallthru
    _
  // Predicated region
  $region10: #{_lambda_.16} parent=0 // pred_check
    _
  $region11: #{_lambda_.16} parent=0 // pred_check_branch
    %13 = sbr.rel (0) target = $region13
  $region12: #{_lambda_.16} parent=0 // pred_region
    _
  $region13: #{_lambda_.16} parent=0 // pred_fallthru
    _
  %p15 = scmp.eq.s32.totalorder 0, 0
  // Predicated region
  $region14: #{_lambda_.16} parent=0 // pred_check
    %p16 = pneg %p15
  $region15: #{_lambda_.16} parent=0 // pred_check_branch
    %18 = sbr.rel (%p16) target = $region17
  $region16: #{_lambda_.16} parent=0 // pred_region
    %19 = vst [vmem:[#allocation2] sm:$0xff] 0.0
    %20 = vst [vmem:[#allocation2 + $0x8] sm:$0xff] 0.0
    %21 = vst [vmem:[#allocation2 + $0x10] sm:$0xff] 0.0
    %22 = vst [vmem:[#allocation2 + $0x18] sm:$0xff] 0.0
    %23 = vst [vmem:[#allocation2 + $0x20] sm:$0xff] 0.0
    %24 = vst [vmem:[#allocation2 + $0x28] sm:$0xff] 0.0
    %25 = vst [vmem:[#allocation2 + $0x30] sm:$0xff] 0.0
    %26 = vst [vmem:[#allocation2 + $0x38] sm:$0xff] 0.0
    %27 = vst [vmem:[#allocation2 + $0x40] sm:$0xff] 0.0
    %28 = vst [vmem:[#allocation2 + $0x48] sm:$0xff] 0.0
    %29 = vst [vmem:[#allocation2 + $0x50] sm:$0xff] 0.0
    %30 = vst [vmem:[#allocation2 + $0x58] sm:$0xff] 0.0
    %31 = vst [vmem:[#allocation2 + $0x60] sm:$0xff] 0.0
    %32 = vst [vmem:[#allocation2 + $0x68] sm:$0xff] 0.0
    %33 = vst [vmem:[#allocation2 + $0x70] sm:$0xff] 0.0
    %34 = vst [vmem:[#allocation2 + $0x78] sm:$0xff] 0.0
  $region17: #{_lambda_.16} parent=0 // pred_fallthru
    _
  %v35 = vld [vmem:[#allocation2] sm:$0xff]
  %v36 = vld [vmem:[#allocation2 + $0x8] sm:$0xff]
  %v37 = vld [vmem:[#allocation2 + $0x10] sm:$0xff]
  %v38 = vld [vmem:[#allocation2 + $0x18] sm:$0xff]
  %v39 = vld [vmem:[#allocation2 + $0x20] sm:$0xff]
  %v40 = vld [vmem:[#allocation2 + $0x28] sm:$0xff]
  %v41 = vld [vmem:[#allocation2 + $0x30] sm:$0xff]
  %v42 = vld [vmem:[#allocation2 + $0x38] sm:$0xff]
  %v43 = vld [vmem:[#allocation2 + $0x40] sm:$0xff]
  %v44 = vld [vmem:[#allocation2 + $0x48] sm:$0xff]
  %v45 = vld [vmem:[#allocation2 + $0x50] sm:$0xff]
  %v46 = vld [vmem:[#allocation2 + $0x58] sm:$0xff]
  %v47 = vld [vmem:[#allocation2 + $0x60] sm:$0xff]
  %v48 = vld [vmem:[#allocation2 + $0x68] sm:$0xff]
  %v49 = vld [vmem:[#allocation2 + $0x70] sm:$0xff]
  %v50 = vld [vmem:[#allocation2 + $0x78] sm:$0xff]
  %v51 = vld [vmem:[%s0] sm:$0xf]
  %v52 = vld [vmem:[%s0 + $0x4] sm:$0xf]
  %v53 = vld [vmem:[%s0 + $0x8] sm:$0xf]
  %v54 = vld [vmem:[%s0 + $0xc] sm:$0xf]
  %v55 = vld [vmem:[%s0 + $0x10] sm:$0xf]
  %v56 = vld [vmem:[%s0 + $0x14] sm:$0xf]
  %v57 = vld [vmem:[%s0 + $0x18] sm:$0xf]
  %v58 = vld [vmem:[%s0 + $0x1c] sm:$0xf]
  %v59 = vld [vmem:[%s0 + $0x20] sm:$0xf]
  %v60 = vld [vmem:[%s0 + $0x24] sm:$0xf]
  %v61 = vld [vmem:[%s0 + $0x28] sm:$0xf]
  %v62 = vld [vmem:[%s0 + $0x2c] sm:$0xf]
  %v63 = vld [vmem:[%s0 + $0x30] sm:$0xf]
  %v64 = vld [vmem:[%s0 + $0x34] sm:$0xf]
  %v65 = vld [vmem:[%s0 + $0x38] sm:$0xf]
  %v66 = vld [vmem:[%s0 + $0x3c] sm:$0xf]
  %v67 = vld [vmem:[%s1] sm:$0xf]
  %v68 = vld [vmem:[%s1 + $0x4] sm:$0xf]
  %v69 = vld [vmem:[%s1 + $0x8] sm:$0xf]
  %v70 = vld [vmem:[%s1 + $0xc] sm:$0xf]
  %v71 = vld [vmem:[%s1 + $0x10] sm:$0xf]
  %v72 = vld [vmem:[%s1 + $0x14] sm:$0xf]
  %v73 = vld [vmem:[%s1 + $0x18] sm:$0xf]
  %v74 = vld [vmem:[%s1 + $0x1c] sm:$0xf]
  %v75 = vld [vmem:[%s1 + $0x20] sm:$0xf]
  %v76 = vld [vmem:[%s1 + $0x24] sm:$0xf]
  %v77 = vld [vmem:[%s1 + $0x28] sm:$0xf]
  %v78 = vld [vmem:[%s1 + $0x2c] sm:$0xf]
  %v79 = vld [vmem:[%s1 + $0x30] sm:$0xf]
  %v80 = vld [vmem:[%s1 + $0x34] sm:$0xf]
  %v81 = vld [vmem:[%s1 + $0x38] sm:$0xf]
  %v82 = vld [vmem:[%s1 + $0x3c] sm:$0xf]
  %v99 = vunpack.c.l.b16 %v51
  %v100 = vunpack.c.l.b16 %v52
  %v101 = vunpack.c.l.b16 %v53
  %v102 = vunpack.c.l.b16 %v54
  %v103 = vunpack.c.l.b16 %v55
  %v104 = vunpack.c.l.b16 %v56
  %v105 = vunpack.c.l.b16 %v57
  %v106 = vunpack.c.l.b16 %v58
  %v107 = vunpack.c.l.b16 %v59
  %v108 = vunpack.c.l.b16 %v60
  %v109 = vunpack.c.l.b16 %v61
  %v110 = vunpack.c.l.b16 %v62
  %v111 = vunpack.c.l.b16 %v63
  %v112 = vunpack.c.l.b16 %v64
  %v113 = vunpack.c.l.b16 %v65
  %v114 = vunpack.c.l.b16 %v66
  %v115 = vpack.c.b16 %v100, %v99
  %v116 = vpack.c.b16 %v102, %v101
  %v117 = vpack.c.b16 %v104, %v103
  %v118 = vpack.c.b16 %v106, %v105
  %v119 = vpack.c.b16 %v108, %v107
  %v120 = vpack.c.b16 %v110, %v109
  %v121 = vpack.c.b16 %v112, %v111
  %v122 = vpack.c.b16 %v114, %v113
  %v147 = vunpack.c.l.b16 %v67
  %v148 = vunpack.c.l.b16 %v68
  %v149 = vunpack.c.l.b16 %v69
  %v150 = vunpack.c.l.b16 %v70
  %v151 = vunpack.c.l.b16 %v71
  %v152 = vunpack.c.l.b16 %v72
  %v153 = vunpack.c.l.b16 %v73
  %v154 = vunpack.c.l.b16 %v74
  %v155 = vunpack.c.l.b16 %v75
  %v156 = vunpack.c.l.b16 %v76
  %v157 = vunpack.c.l.b16 %v77
  %v158 = vunpack.c.l.b16 %v78
  %v159 = vunpack.c.l.b16 %v79
  %v160 = vunpack.c.l.b16 %v80
  %v161 = vunpack.c.l.b16 %v81
  %v162 = vunpack.c.l.b16 %v82
  %v163 = vpack.c.b16 %v148, %v147
  %v164 = vpack.c.b16 %v150, %v149
  %v165 = vpack.c.b16 %v152, %v151
  %v166 = vpack.c.b16 %v154, %v153
  %v167 = vpack.c.b16 %v156, %v155
  %v168 = vpack.c.b16 %v158, %v157
  %v169 = vpack.c.b16 %v160, %v159
  %v170 = vpack.c.b16 %v162, %v161
  %179 = vmatprep.subr.bf16.mxu0 0
  %180 = vmatpush1.bf16.msra.mxu0 %v163
  %181 = vmatprep.subr.bf16.mxu0 0
  %182 = vmatpush1.bf16.msra.mxu0 %v164
  %183 = vmatprep.subr.bf16.mxu0 0
  %184 = vmatpush1.bf16.msra.mxu0 %v165
  %185 = vmatprep.subr.bf16.mxu0 0
  %186 = vmatpush1.bf16.msra.mxu0 %v166
  %187 = vmatprep.subr.bf16.mxu0 0
  %188 = vmatpush1.bf16.msra.mxu0 %v167
  %189 = vmatprep.subr.bf16.mxu0 0
  %190 = vmatpush1.bf16.msra.mxu0 %v168
  %191 = vmatprep.subr.bf16.mxu0 0
  %192 = vmatpush1.bf16.msra.mxu0 %v169
  %193 = vmatprep.subr.bf16.mxu0 0
  %194 = vmatpush1.bf16.msra.mxu0 %v170
  %195 = vmatprep.subr.bf16.mxu0 0
  %196 = vmatpush1.bf16.msra.mxu0 0
  %197 = vmatprep.subr.bf16.mxu0 0
  %198 = vmatpush1.bf16.msra.mxu0 0
  %199 = vmatprep.subr.bf16.mxu0 0
  %200 = vmatpush1.bf16.msra.mxu0 0
  %201 = vmatprep.subr.bf16.mxu0 0
  %202 = vmatpush1.bf16.msra.mxu0 0
  %203 = vmatprep.subr.bf16.mxu0 0
  %204 = vmatpush1.bf16.msra.mxu0 0
  %205 = vmatprep.subr.bf16.mxu0 0
  %206 = vmatpush1.bf16.msra.mxu0 0
  %207 = vmatprep.subr.bf16.mxu0 0
  %208 = vmatpush1.bf16.msra.mxu0 0
  %209 = vmatprep.subr.bf16.mxu0 0
  %210 = vmatpush1.bf16.msra.mxu0 0
  %211 = vmatprep.mubr.bf16.mxu0 0
  %212 = vmatmul.mubr.bf16.gmra.mrb[0].mxu0 %v115
  %v213 = vpop.f32.mrb[0].mxu0
  %v214 = vadd.f32 0.0, %v213
  %v215 = vpop.f32.mrb[0].mxu0
  %v216 = vpop.f32.mrb[0].mxu0
  %v217 = vadd.f32 0.0, %v216
  %v218 = vpop.f32.mrb[0].mxu0
  %219 = vmatprep.mubr.bf16.mxu0 0
  %220 = vmatmul.mubr.bf16.gmra.mrb[0].mxu0 %v116
  %v221 = vpop.f32.mrb[0].mxu0
  %v222 = vadd.f32 0.0, %v221
  %v223 = vpop.f32.mrb[0].mxu0
  %v224 = vpop.f32.mrb[0].mxu0
  %v225 = vadd.f32 0.0, %v224
  %v226 = vpop.f32.mrb[0].mxu0
  %227 = vmatprep.mubr.bf16.mxu0 0
  %228 = vmatmul.mubr.bf16.gmra.mrb[0].mxu0 %v117
  %v229 = vpop.f32.mrb[0].mxu0
  %v230 = vadd.f32 0.0, %v229
  %v231 = vpop.f32.mrb[0].mxu0
  %v232 = vpop.f32.mrb[0].mxu0
  %v233 = vadd.f32 0.0, %v232
  %v234 = vpop.f32.mrb[0].mxu0
  %235 = vmatprep.mubr.bf16.mxu0 0
  %236 = vmatmul.mubr.bf16.gmra.mrb[0].mxu0 %v118
  %v237 = vpop.f32.mrb[0].mxu0
  %v238 = vadd.f32 0.0, %v237
  %v239 = vpop.f32.mrb[0].mxu0
  %v240 = vpop.f32.mrb[0].mxu0
  %v241 = vadd.f32 0.0, %v240
  %v242 = vpop.f32.mrb[0].mxu0
  %243 = vmatprep.mubr.bf16.mxu0 0
  %244 = vmatmul.mubr.bf16.gmra.mrb[0].mxu0 %v119
  %v245 = vpop.f32.mrb[0].mxu0
  %v246 = vadd.f32 0.0, %v245
  %v247 = vpop.f32.mrb[0].mxu0
  %v248 = vpop.f32.mrb[0].mxu0
  %v249 = vadd.f32 0.0, %v248
  %v250 = vpop.f32.mrb[0].mxu0
  %251 = vmatprep.mubr.bf16.mxu0 0
  %252 = vmatmul.mubr.bf16.gmra.mrb[0].mxu0 %v120
  %v253 = vpop.f32.mrb[0].mxu0
  %v254 = vadd.f32 0.0, %v253
  %v255 = vpop.f32.mrb[0].mxu0
  %v256 = vpop.f32.mrb[0].mxu0
  %v257 = vadd.f32 0.0, %v256
  %v258 = vpop.f32.mrb[0].mxu0
  %259 = vmatprep.mubr.bf16.mxu0 0
  %260 = vmatmul.mubr.bf16.gmra.mrb[0].mxu0 %v121
  %v261 = vpop.f32.mrb[0].mxu0
  %v262 = vadd.f32 0.0, %v261
  %v263 = vpop.f32.mrb[0].mxu0
  %v264 = vpop.f32.mrb[0].mxu0
  %v265 = vadd.f32 0.0, %v264
  %v266 = vpop.f32.mrb[0].mxu0
  %267 = vmatprep.mubr.bf16.mxu0 0
  %268 = vmatmul.mubr.bf16.gmra.mrb[0].mxu0 %v122
  %v269 = vpop.f32.mrb[0].mxu0
  %v270 = vadd.f32 0.0, %v269
  %v271 = vpop.f32.mrb[0].mxu0
  %v272 = vpop.f32.mrb[0].mxu0
  %v273 = vadd.f32 0.0, %v272
  %v274 = vpop.f32.mrb[0].mxu0
  %275 = vdwg.mxu0
  %v276 = vadd.f32 %v35, %v214
  %v277 = vadd.f32 %v36, %v217
  %v278 = vadd.f32 %v37, %v222
  %v279 = vadd.f32 %v38, %v225
  %v280 = vadd.f32 %v39, %v230
  %v281 = vadd.f32 %v40, %v233
  %v282 = vadd.f32 %v41, %v238
  %v283 = vadd.f32 %v42, %v241
  %v284 = vadd.f32 %v43, %v246
  %v285 = vadd.f32 %v44, %v249
  %v286 = vadd.f32 %v45, %v254
  %v287 = vadd.f32 %v46, %v257
  %v288 = vadd.f32 %v47, %v262
  %v289 = vadd.f32 %v48, %v265
  %v290 = vadd.f32 %v49, %v270
  %v291 = vadd.f32 %v50, %v273
  %292 = vst [vmem:[#allocation2] sm:$0xff] %v276
  %293 = vst [vmem:[#allocation2 + $0x8] sm:$0xff] %v277
  %294 = vst [vmem:[#allocation2 + $0x10] sm:$0xff] %v278
  %295 = vst [vmem:[#allocation2 + $0x18] sm:$0xff] %v279
  %296 = vst [vmem:[#allocation2 + $0x20] sm:$0xff] %v280
  %297 = vst [vmem:[#allocation2 + $0x28] sm:$0xff] %v281
  %298 = vst [vmem:[#allocation2 + $0x30] sm:$0xff] %v282
  %299 = vst [vmem:[#allocation2 + $0x38] sm:$0xff] %v283
  %300 = vst [vmem:[#allocation2 + $0x40] sm:$0xff] %v284
  %301 = vst [vmem:[#allocation2 + $0x48] sm:$0xff] %v285
  %302 = vst [vmem:[#allocation2 + $0x50] sm:$0xff] %v286
  %303 = vst [vmem:[#allocation2 + $0x58] sm:$0xff] %v287
  %304 = vst [vmem:[#allocation2 + $0x60] sm:$0xff] %v288
  %305 = vst [vmem:[#allocation2 + $0x68] sm:$0xff] %v289
  %306 = vst [vmem:[#allocation2 + $0x70] sm:$0xff] %v290
  %307 = vst [vmem:[#allocation2 + $0x78] sm:$0xff] %v291
  // Predicated region
  $region18: #{_lambda_.16} parent=0 // pred_check
    %p308 = pneg %p15
  $region19: #{_lambda_.16} parent=0 // pred_check_branch
    %310 = sbr.rel (%p308) target = $region21
  $region20: #{_lambda_.16} parent=0 // pred_region
    %v311 = vld [vmem:[#allocation2] sm:$0xff]
    %v312 = vld [vmem:[#allocation2 + $0x8] sm:$0xff]
    %v313 = vld [vmem:[#allocation2 + $0x10] sm:$0xff]
    %v314 = vld [vmem:[#allocation2 + $0x18] sm:$0xff]
    %v315 = vld [vmem:[#allocation2 + $0x20] sm:$0xff]
    %v316 = vld [vmem:[#allocation2 + $0x28] sm:$0xff]
    %v317 = vld [vmem:[#allocation2 + $0x30] sm:$0xff]
    %v318 = vld [vmem:[#allocation2 + $0x38] sm:$0xff]
    %v319 = vld [vmem:[#allocation2 + $0x40] sm:$0xff]
    %v320 = vld [vmem:[#allocation2 + $0x48] sm:$0xff]
    %v321 = vld [vmem:[#allocation2 + $0x50] sm:$0xff]
    %v322 = vld [vmem:[#allocation2 + $0x58] sm:$0xff]
    %v323 = vld [vmem:[#allocation2 + $0x60] sm:$0xff]
    %v324 = vld [vmem:[#allocation2 + $0x68] sm:$0xff]
    %v325 = vld [vmem:[#allocation2 + $0x70] sm:$0xff]
    %v326 = vld [vmem:[#allocation2 + $0x78] sm:$0xff]
    %v327 = vld [vmem:[%s2] sm:$0x1]
    %v329 = vlaneseq
    %v330 = vshrl.u32 %v329, 7
    %v331 = vsub.s32 0, %v330
    %v332 = vrot.slane %v327, %v331
    %v334 = vadd.f32 %v311, %v332
    %v335 = vadd.f32 %v312, %v332
    %v336 = vadd.f32 %v313, %v332
    %v337 = vadd.f32 %v314, %v332
    %v338 = vadd.f32 %v315, %v332
    %v339 = vadd.f32 %v316, %v332
    %v340 = vadd.f32 %v317, %v332
    %v341 = vadd.f32 %v318, %v332
    %v342 = vadd.f32 %v319, %v332
    %v343 = vadd.f32 %v320, %v332
    %v344 = vadd.f32 %v321, %v332
    %v345 = vadd.f32 %v322, %v332
    %v346 = vadd.f32 %v323, %v332
    %v347 = vadd.f32 %v324, %v332
    %v348 = vadd.f32 %v325, %v332
    %v349 = vadd.f32 %v326, %v332
    %v350 = vmax.f32 %v334, 0.0
    %v351 = vmax.f32 %v335, 0.0
    %v352 = vmax.f32 %v336, 0.0
    %v353 = vmax.f32 %v337, 0.0
    %v354 = vmax.f32 %v338, 0.0
    %v355 = vmax.f32 %v339, 0.0
    %v356 = vmax.f32 %v340, 0.0
    %v357 = vmax.f32 %v341, 0.0
    %v358 = vmax.f32 %v342, 0.0
    %v359 = vmax.f32 %v343, 0.0
    %v360 = vmax.f32 %v344, 0.0
    %v361 = vmax.f32 %v345, 0.0
    %v362 = vmax.f32 %v346, 0.0
    %v363 = vmax.f32 %v347, 0.0
    %v364 = vmax.f32 %v348, 0.0
    %v365 = vmax.f32 %v349, 0.0
    %v366 = vpack.c.bf16 %v351, %v350
    %v367 = vpack.c.bf16 %v353, %v352
    %v368 = vpack.c.bf16 %v355, %v354
    %v369 = vpack.c.bf16 %v357, %v356
    %v370 = vpack.c.bf16 %v359, %v358
    %v371 = vpack.c.bf16 %v361, %v360
    %v372 = vpack.c.bf16 %v363, %v362
    %v373 = vpack.c.bf16 %v365, %v364
    %v382 = vunpack.c.l.b16 %v366
    %v383 = vunpack.c.h.b16 %v366
    %v384 = vunpack.c.l.b16 %v367
    %v385 = vunpack.c.h.b16 %v367
    %v386 = vunpack.c.l.b16 %v368
    %v387 = vunpack.c.h.b16 %v368
    %v388 = vunpack.c.l.b16 %v369
    %v389 = vunpack.c.h.b16 %v369
    %v390 = vunpack.c.l.b16 %v370
    %v391 = vunpack.c.h.b16 %v370
    %v392 = vunpack.c.l.b16 %v371
    %v393 = vunpack.c.h.b16 %v371
    %v394 = vunpack.c.l.b16 %v372
    %v395 = vunpack.c.h.b16 %v372
    %v396 = vunpack.c.l.b16 %v373
    %v397 = vunpack.c.h.b16 %v373
    %v398 = vpack.c.b16 %v382, %v382
    %v399 = vpack.c.b16 %v383, %v383
    %v400 = vpack.c.b16 %v384, %v384
    %v401 = vpack.c.b16 %v385, %v385
    %v402 = vpack.c.b16 %v386, %v386
    %v403 = vpack.c.b16 %v387, %v387
    %v404 = vpack.c.b16 %v388, %v388
    %v405 = vpack.c.b16 %v389, %v389
    %v406 = vpack.c.b16 %v390, %v390
    %v407 = vpack.c.b16 %v391, %v391
    %v408 = vpack.c.b16 %v392, %v392
    %v409 = vpack.c.b16 %v393, %v393
    %v410 = vpack.c.b16 %v394, %v394
    %v411 = vpack.c.b16 %v395, %v395
    %v412 = vpack.c.b16 %v396, %v396
    %v413 = vpack.c.b16 %v397, %v397
    %430 = vst [vmem:[%s3] sm:$0xf] %v398
    %431 = vst [vmem:[%s3 + $0x4] sm:$0xf] %v399
    %432 = vst [vmem:[%s3 + $0x8] sm:$0xf] %v400
    %433 = vst [vmem:[%s3 + $0xc] sm:$0xf] %v401
    %434 = vst [vmem:[%s3 + $0x10] sm:$0xf] %v402
    %435 = vst [vmem:[%s3 + $0x14] sm:$0xf] %v403
    %436 = vst [vmem:[%s3 + $0x18] sm:$0xf] %v404
    %437 = vst [vmem:[%s3 + $0x1c] sm:$0xf] %v405
    %438 = vst [vmem:[%s3 + $0x20] sm:$0xf] %v406
    %439 = vst [vmem:[%s3 + $0x24] sm:$0xf] %v407
    %440 = vst [vmem:[%s3 + $0x28] sm:$0xf] %v408
    %441 = vst [vmem:[%s3 + $0x2c] sm:$0xf] %v409
    %442 = vst [vmem:[%s3 + $0x30] sm:$0xf] %v410
    %443 = vst [vmem:[%s3 + $0x34] sm:$0xf] %v411
    %444 = vst [vmem:[%s3 + $0x38] sm:$0xf] %v412
    %445 = vst [vmem:[%s3 + $0x3c] sm:$0xf] %v413
  $region21: #{_lambda_.16} parent=0 // pred_fallthru
    _
  // Predicated region
  $region22: #{_lambda_.16} parent=0 // pred_check
    _
  $region23: #{_lambda_.16} parent=0 // pred_check_branch
    %447 = sbr.rel (0) target = $region25
  $region24: #{_lambda_.16} parent=0 // pred_region
    _
  $region25: #{_lambda_.16} parent=0 // pred_fallthru
    _
  // Predicated region
  $region26: #{_lambda_.16} parent=0 // pred_check
    _
  $region27: #{_lambda_.16} parent=0 // pred_check_branch
    %449 = sbr.rel (0) target = $region29
  $region28: #{_lambda_.16} parent=0 // pred_region
    _
  $region29: #{_lambda_.16} parent=0 // pred_fallthru
    _

// kernel: _lambda_.17
$region0: #{_lambda_.17}
  #allocation0 [shape = 'u32[]', space=smem, size = 0x4, offset = 0x4, fixed_abs, tag = 'smem constant byte address 0x4 - core index']
  #allocation1 [shape = 'u32[144,128]{1,0:T(1,128)}', space=vmem, size = 0x12000, scoped, tag = 'internal scratch']
  #allocation2 [shape = 'f32[32,128]{1,0:T(8,128)}', space=vmem, size = 0x4000, scoped, tag = 'scratch operand']
  %s0 = inlined_call_operand.vmem [shape: bf16[32,1024], index: 0, kind: input, shape index: {}]
  %s1 = inlined_call_operand.vmem [shape: bf16[1024,128], index: 1, kind: input, shape index: {}]
  %s2 = inlined_call_operand.vmem [shape: f32[1,128], index: 2, kind: input, shape index: {}]
  %s3 = inlined_call_operand.vmem [shape: bf16[32,128], index: 3, kind: output, shape index: {}]
  %s4 = sld [smem:[#allocation0]]
  $region30: #{_lambda_.17} parent=0
    _
  %s6 = ssub.s32 1, %s4
  %s7 = scalar_select 0, %s6, %s4
  // Predicated region
  $region2: #{_lambda_.17} parent=0 // pred_check
    _
  $region3: #{_lambda_.17} parent=0 // pred_check_branch
    %9 = sbr.rel (0) target = $region5
  $region4: #{_lambda_.17} parent=0 // pred_region
    _
  $region5: #{_lambda_.17} parent=0 // pred_fallthru
    _
  // Predicated region
  $region6: #{_lambda_.17} parent=0 // pred_check
    _
  $region7: #{_lambda_.17} parent=0 // pred_check_branch
    %11 = sbr.rel (0) target = $region9
  $region8: #{_lambda_.17} parent=0 // pred_region
    _
  $region9: #{_lambda_.17} parent=0 // pred_fallthru
    _
  // Predicated region
  $region10: #{_lambda_.17} parent=0 // pred_check
    _
  $region11: #{_lambda_.17} parent=0 // pred_check_branch
    %13 = sbr.rel (0) target = $region13
  $region12: #{_lambda_.17} parent=0 // pred_region
    _
  $region13: #{_lambda_.17} parent=0 // pred_fallthru
    _
  %p15 = scmp.eq.s32.totalorder 0, 0
  // Predicated region
  $region14: #{_lambda_.17} parent=0 // pred_check
    %p16 = pneg %p15
  $region15: #{_lambda_.17} parent=0 // pred_check_branch
    %18 = sbr.rel (%p16) target = $region17
  $region16: #{_lambda_.17} parent=0 // pred_region
    %19 = vst [vmem:[#allocation2] sm:$0xff] 0.0
    %20 = vst [vmem:[#allocation2 + $0x8] sm:$0xff] 0.0
    %21 = vst [vmem:[#allocation2 + $0x10] sm:$0xff] 0.0
    %22 = vst [vmem:[#allocation2 + $0x18] sm:$0xff] 0.0
  $region17: #{_lambda_.17} parent=0 // pred_fallthru
    _
  %v23 = vld [vmem:[#allocation2] sm:$0xff]
  %v24 = vld [vmem:[#allocation2 + $0x8] sm:$0xff]
  %v25 = vld [vmem:[#allocation2 + $0x10] sm:$0xff]
  %v26 = vld [vmem:[#allocation2 + $0x18] sm:$0xff]
  %v27 = vld [vmem:[%s0] sm:$0xff]
  %v28 = vld [vmem:[%s0 + $0x8] sm:$0xff]
  %v29 = vld [vmem:[%s0 + $0x10] sm:$0xff]
  %v30 = vld [vmem:[%s0 + $0x18] sm:$0xff]
  %v31 = vld [vmem:[%s0 + $0x20] sm:$0xff]
  %v32 = vld [vmem:[%s0 + $0x28] sm:$0xff]
  %v33 = vld [vmem:[%s0 + $0x30] sm:$0xff]
  %v34 = vld [vmem:[%s0 + $0x38] sm:$0xff]
  %v35 = vld [vmem:[%s0 + $0x40] sm:$0xff]
  %v36 = vld [vmem:[%s0 + $0x48] sm:$0xff]
  %v37 = vld [vmem:[%s0 + $0x50] sm:$0xff]
  %v38 = vld [vmem:[%s0 + $0x58] sm:$0xff]
  %v39 = vld [vmem:[%s0 + $0x60] sm:$0xff]
  %v40 = vld [vmem:[%s0 + $0x68] sm:$0xff]
  %v41 = vld [vmem:[%s0 + $0x70] sm:$0xff]
  %v42 = vld [vmem:[%s0 + $0x78] sm:$0xff]
  %v43 = vld [vmem:[%s1] sm:$0xf]
  %v44 = vld [vmem:[%s1 + $0x4] sm:$0xf]
  %v45 = vld [vmem:[%s1 + $0x8] sm:$0xf]
  %v46 = vld [vmem:[%s1 + $0xc] sm:$0xf]
  %v47 = vld [vmem:[%s1 + $0x10] sm:$0xf]
  %v48 = vld [vmem:[%s1 + $0x14] sm:$0xf]
  %v49 = vld [vmem:[%s1 + $0x18] sm:$0xf]
  %v50 = vld [vmem:[%s1 + $0x1c] sm:$0xf]
  %v51 = vld [vmem:[%s1 + $0x20] sm:$0xf]
  %v52 = vld [vmem:[%s1 + $0x24] sm:$0xf]
  %v53 = vld [vmem:[%s1 + $0x28] sm:$0xf]
  %v54 = vld [vmem:[%s1 + $0x2c] sm:$0xf]
  %v55 = vld [vmem:[%s1 + $0x30] sm:$0xf]
  %v56 = vld [vmem:[%s1 + $0x34] sm:$0xf]
  %v57 = vld [vmem:[%s1 + $0x38] sm:$0xf]
  %v58 = vld [vmem:[%s1 + $0x3c] sm:$0xf]
  %v59 = vld [vmem:[%s1 + $0x40] sm:$0xf]
  %v60 = vld [vmem:[%s1 + $0x44] sm:$0xf]
  %v61 = vld [vmem:[%s1 + $0x48] sm:$0xf]
  %v62 = vld [vmem:[%s1 + $0x4c] sm:$0xf]
  %v63 = vld [vmem:[%s1 + $0x50] sm:$0xf]
  %v64 = vld [vmem:[%s1 + $0x54] sm:$0xf]
  %v65 = vld [vmem:[%s1 + $0x58] sm:$0xf]
  %v66 = vld [vmem:[%s1 + $0x5c] sm:$0xf]
  %v67 = vld [vmem:[%s1 + $0x60] sm:$0xf]
  %v68 = vld [vmem:[%s1 + $0x64] sm:$0xf]
  %v69 = vld [vmem:[%s1 + $0x68] sm:$0xf]
  %v70 = vld [vmem:[%s1 + $0x6c] sm:$0xf]
  %v71 = vld [vmem:[%s1 + $0x70] sm:$0xf]
  %v72 = vld [vmem:[%s1 + $0x74] sm:$0xf]
  %v73 = vld [vmem:[%s1 + $0x78] sm:$0xf]
  %v74 = vld [vmem:[%s1 + $0x7c] sm:$0xf]
  %v75 = vld [vmem:[%s1 + $0x80] sm:$0xf]
  %v76 = vld [vmem:[%s1 + $0x84] sm:$0xf]
  %v77 = vld [vmem:[%s1 + $0x88] sm:$0xf]
  %v78 = vld [vmem:[%s1 + $0x8c] sm:$0xf]
  %v79 = vld [vmem:[%s1 + $0x90] sm:$0xf]
  %v80 = vld [vmem:[%s1 + $0x94] sm:$0xf]
  %v81 = vld [vmem:[%s1 + $0x98] sm:$0xf]
  %v82 = vld [vmem:[%s1 + $0x9c] sm:$0xf]
  %v83 = vld [vmem:[%s1 + $0xa0] sm:$0xf]
  %v84 = vld [vmem:[%s1 + $0xa4] sm:$0xf]
  %v85 = vld [vmem:[%s1 + $0xa8] sm:$0xf]
  %v86 = vld [vmem:[%s1 + $0xac] sm:$0xf]
  %v87 = vld [vmem:[%s1 + $0xb0] sm:$0xf]
  %v88 = vld [vmem:[%s1 + $0xb4] sm:$0xf]
  %v89 = vld [vmem:[%s1 + $0xb8] sm:$0xf]
  %v90 = vld [vmem:[%s1 + $0xbc] sm:$0xf]
  %v91 = vld [vmem:[%s1 + $0xc0] sm:$0xf]
  %v92 = vld [vmem:[%s1 + $0xc4] sm:$0xf]
  %v93 = vld [vmem:[%s1 + $0xc8] sm:$0xf]
  %v94 = vld [vmem:[%s1 + $0xcc] sm:$0xf]
  %v95 = vld [vmem:[%s1 + $0xd0] sm:$0xf]
  %v96 = vld [vmem:[%s1 + $0xd4] sm:$0xf]
  %v97 = vld [vmem:[%s1 + $0xd8] sm:$0xf]
  %v98 = vld [vmem:[%s1 + $0xdc] sm:$0xf]
  %v99 = vld [vmem:[%s1 + $0xe0] sm:$0xf]
  %v100 = vld [vmem:[%s1 + $0xe4] sm:$0xf]
  %v101 = vld [vmem:[%s1 + $0xe8] sm:$0xf]
  %v102 = vld [vmem:[%s1 + $0xec] sm:$0xf]
  %v103 = vld [vmem:[%s1 + $0xf0] sm:$0xf]
  %v104 = vld [vmem:[%s1 + $0xf4] sm:$0xf]
  %v105 = vld [vmem:[%s1 + $0xf8] sm:$0xf]
  %v106 = vld [vmem:[%s1 + $0xfc] sm:$0xf]
  %v107 = vld [vmem:[%s1 + $0x100] sm:$0xf]
  %v108 = vld [vmem:[%s1 + $0x104] sm:$0xf]
  %v109 = vld [vmem:[%s1 + $0x108] sm:$0xf]
  %v110 = vld [vmem:[%s1 + $0x10c] sm:$0xf]
  %v111 = vld [vmem:[%s1 + $0x110] sm:$0xf]
  %v112 = vld [vmem:[%s1 + $0x114] sm:$0xf]
  %v113 = vld [vmem:[%s1 + $0x118] sm:$0xf]
  %v114 = vld [vmem:[%s1 + $0x11c] sm:$0xf]
  %v115 = vld [vmem:[%s1 + $0x120] sm:$0xf]
  %v116 = vld [vmem:[%s1 + $0x124] sm:$0xf]
  %v117 = vld [vmem:[%s1 + $0x128] sm:$0xf]
  %v118 = vld [vmem:[%s1 + $0x12c] sm:$0xf]
  %v119 = vld [vmem:[%s1 + $0x130] sm:$0xf]
  %v120 = vld [vmem:[%s1 + $0x134] sm:$0xf]
  %v121 = vld [vmem:[%s1 + $0x138] sm:$0xf]
  %v122 = vld [vmem:[%s1 + $0x13c] sm:$0xf]
  %v123 = vld [vmem:[%s1 + $0x140] sm:$0xf]
  %v124 = vld [vmem:[%s1 + $0x144] sm:$0xf]
  %v125 = vld [vmem:[%s1 + $0x148] sm:$0xf]
  %v126 = vld [vmem:[%s1 + $0x14c] sm:$0xf]
  %v127 = vld [vmem:[%s1 + $0x150] sm:$0xf]
  %v128 = vld [vmem:[%s1 + $0x154] sm:$0xf]
  %v129 = vld [vmem:[%s1 + $0x158] sm:$0xf]
  %v130 = vld [vmem:[%s1 + $0x15c] sm:$0xf]
  %v131 = vld [vmem:[%s1 + $0x160] sm:$0xf]
  %v132 = vld [vmem:[%s1 + $0x164] sm:$0xf]
  %v133 = vld [vmem:[%s1 + $0x168] sm:$0xf]
  %v134 = vld [vmem:[%s1 + $0x16c] sm:$0xf]
  %v135 = vld [vmem:[%s1 + $0x170] sm:$0xf]
  %v136 = vld [vmem:[%s1 + $0x174] sm:$0xf]
  %v137 = vld [vmem:[%s1 + $0x178] sm:$0xf]
  %v138 = vld [vmem:[%s1 + $0x17c] sm:$0xf]
  %v139 = vld [vmem:[%s1 + $0x180] sm:$0xf]
  %v140 = vld [vmem:[%s1 + $0x184] sm:$0xf]
  %v141 = vld [vmem:[%s1 + $0x188] sm:$0xf]
  %v142 = vld [vmem:[%s1 + $0x18c] sm:$0xf]
  %v143 = vld [vmem:[%s1 + $0x190] sm:$0xf]
  %v144 = vld [vmem:[%s1 + $0x194] sm:$0xf]
  %v145 = vld [vmem:[%s1 + $0x198] sm:$0xf]
  %v146 = vld [vmem:[%s1 + $0x19c] sm:$0xf]
  %v147 = vld [vmem:[%s1 + $0x1a0] sm:$0xf]
  %v148 = vld [vmem:[%s1 + $0x1a4] sm:$0xf]
  %v149 = vld [vmem:[%s1 + $0x1a8] sm:$0xf]
  %v150 = vld [vmem:[%s1 + $0x1ac] sm:$0xf]
  %v151 = vld [vmem:[%s1 + $0x1b0] sm:$0xf]
  %v152 = vld [vmem:[%s1 + $0x1b4] sm:$0xf]
  %v153 = vld [vmem:[%s1 + $0x1b8] sm:$0xf]
  %v154 = vld [vmem:[%s1 + $0x1bc] sm:$0xf]
  %v155 = vld [vmem:[%s1 + $0x1c0] sm:$0xf]
  %v156 = vld [vmem:[%s1 + $0x1c4] sm:$0xf]
  %v157 = vld [vmem:[%s1 + $0x1c8] sm:$0xf]
  %v158 = vld [vmem:[%s1 + $0x1cc] sm:$0xf]
  %v159 = vld [vmem:[%s1 + $0x1d0] sm:$0xf]
  %v160 = vld [vmem:[%s1 + $0x1d4] sm:$0xf]
  %v161 = vld [vmem:[%s1 + $0x1d8] sm:$0xf]
  %v162 = vld [vmem:[%s1 + $0x1dc] sm:$0xf]
  %v163 = vld [vmem:[%s1 + $0x1e0] sm:$0xf]
  %v164 = vld [vmem:[%s1 + $0x1e4] sm:$0xf]
  %v165 = vld [vmem:[%s1 + $0x1e8] sm:$0xf]
  %v166 = vld [vmem:[%s1 + $0x1ec] sm:$0xf]
  %v167 = vld [vmem:[%s1 + $0x1f0] sm:$0xf]
  %v168 = vld [vmem:[%s1 + $0x1f4] sm:$0xf]
  %v169 = vld [vmem:[%s1 + $0x1f8] sm:$0xf]
  %v170 = vld [vmem:[%s1 + $0x1fc] sm:$0xf]
  %v187 = vunpack.c.l.b16 %v27
  %v188 = vunpack.c.h.b16 %v27
  %v189 = vunpack.c.l.b16 %v28
  %v190 = vunpack.c.h.b16 %v28
  %v191 = vunpack.c.l.b16 %v29
  %v192 = vunpack.c.h.b16 %v29
  %v193 = vunpack.c.l.b16 %v30
  %v194 = vunpack.c.h.b16 %v30
  %v195 = vunpack.c.l.b16 %v31
  %v196 = vunpack.c.h.b16 %v31
  %v197 = vunpack.c.l.b16 %v32
  %v198 = vunpack.c.h.b16 %v32
  %v199 = vunpack.c.l.b16 %v33
  %v200 = vunpack.c.h.b16 %v33
  %v201 = vunpack.c.l.b16 %v34
  %v202 = vunpack.c.h.b16 %v34
  %v203 = vunpack.c.l.b16 %v35
  %v204 = vunpack.c.h.b16 %v35
  %v205 = vunpack.c.l.b16 %v36
  %v206 = vunpack.c.h.b16 %v36
  %v207 = vunpack.c.l.b16 %v37
  %v208 = vunpack.c.h.b16 %v37
  %v209 = vunpack.c.l.b16 %v38
  %v210 = vunpack.c.h.b16 %v38
  %v211 = vunpack.c.l.b16 %v39
  %v212 = vunpack.c.h.b16 %v39
  %v213 = vunpack.c.l.b16 %v40
  %v214 = vunpack.c.h.b16 %v40
  %v215 = vunpack.c.l.b16 %v41
  %v216 = vunpack.c.h.b16 %v41
  %v217 = vunpack.c.l.b16 %v42
  %v218 = vunpack.c.h.b16 %v42
  %v219 = vpack.c.b16 %v195, %v187
  %v220 = vpack.c.b16 %v196, %v188
  %v221 = vpack.c.b16 %v197, %v189
  %v222 = vpack.c.b16 %v198, %v190
  %v223 = vpack.c.b16 %v199, %v191
  %v224 = vpack.c.b16 %v200, %v192
  %v225 = vpack.c.b16 %v201, %v193
  %v226 = vpack.c.b16 %v202, %v194
  %v227 = vpack.c.b16 %v211, %v203
  %v228 = vpack.c.b16 %v212, %v204
  %v229 = vpack.c.b16 %v213, %v205
  %v230 = vpack.c.b16 %v214, %v206
  %v231 = vpack.c.b16 %v215, %v207
  %v232 = vpack.c.b16 %v216, %v208
  %v233 = vpack.c.b16 %v217, %v209
  %v234 = vpack.c.b16 %v218, %v210
  %v379 = vunpack.c.l.b16 %v43
  %v380 = vunpack.c.l.b16 %v44
  %v381 = vunpack.c.l.b16 %v45
  %v382 = vunpack.c.l.b16 %v46
  %v383 = vunpack.c.l.b16 %v47
  %v384 = vunpack.c.l.b16 %v48
  %v385 = vunpack.c.l.b16 %v49
  %v386 = vunpack.c.l.b16 %v50
  %v387 = vunpack.c.l.b16 %v51
  %v388 = vunpack.c.l.b16 %v52
  %v389 = vunpack.c.l.b16 %v53
  %v390 = vunpack.c.l.b16 %v54
  %v391 = vunpack.c.l.b16 %v55
  %v392 = vunpack.c.l.b16 %v56
  %v393 = vunpack.c.l.b16 %v57
  %v394 = vunpack.c.l.b16 %v58
  %v395 = vunpack.c.l.b16 %v59
  %v396 = vunpack.c.l.b16 %v60
  %v397 = vunpack.c.l.b16 %v61
  %v398 = vunpack.c.l.b16 %v62
  %v399 = vunpack.c.l.b16 %v63
  %v400 = vunpack.c.l.b16 %v64
  %v401 = vunpack.c.l.b16 %v65
  %v402 = vunpack.c.l.b16 %v66
  %v403 = vunpack.c.l.b16 %v67
  %v404 = vunpack.c.l.b16 %v68
  %v405 = vunpack.c.l.b16 %v69
  %v406 = vunpack.c.l.b16 %v70
  %v407 = vunpack.c.l.b16 %v71
  %v408 = vunpack.c.l.b16 %v72
  %v409 = vunpack.c.l.b16 %v73
  %v410 = vunpack.c.l.b16 %v74
  %v411 = vunpack.c.l.b16 %v75
  %v412 = vunpack.c.l.b16 %v76
  %v413 = vunpack.c.l.b16 %v77
  %v414 = vunpack.c.l.b16 %v78
  %v415 = vunpack.c.l.b16 %v79
  %v416 = vunpack.c.l.b16 %v80
  %v417 = vunpack.c.l.b16 %v81
  %v418 = vunpack.c.l.b16 %v82
  %v419 = vunpack.c.l.b16 %v83
  %v420 = vunpack.c.l.b16 %v84
  %v421 = vunpack.c.l.b16 %v85
  %v422 = vunpack.c.l.b16 %v86
  %v423 = vunpack.c.l.b16 %v87
  %v424 = vunpack.c.l.b16 %v88
  %v425 = vunpack.c.l.b16 %v89
  %v426 = vunpack.c.l.b16 %v90
  %v427 = vunpack.c.l.b16 %v91
  %v428 = vunpack.c.l.b16 %v92
  %v429 = vunpack.c.l.b16 %v93
  %v430 = vunpack.c.l.b16 %v94
  %v431 = vunpack.c.l.b16 %v95
  %v432 = vunpack.c.l.b16 %v96
  %v433 = vunpack.c.l.b16 %v97
  %v434 = vunpack.c.l.b16 %v98
  %v435 = vunpack.c.l.b16 %v99
  %v436 = vunpack.c.l.b16 %v100
  %v437 = vunpack.c.l.b16 %v101
  %v438 = vunpack.c.l.b16 %v102
  %v439 = vunpack.c.l.b16 %v103
  %v440 = vunpack.c.l.b16 %v104
  %v441 = vunpack.c.l.b16 %v105
  %v442 = vunpack.c.l.b16 %v106
  %v443 = vunpack.c.l.b16 %v107
  %v444 = vunpack.c.l.b16 %v108
  %v445 = vunpack.c.l.b16 %v109
  %v446 = vunpack.c.l.b16 %v110
  %v447 = vunpack.c.l.b16 %v111
  %v448 = vunpack.c.l.b16 %v112
  %v449 = vunpack.c.l.b16 %v113
  %v450 = vunpack.c.l.b16 %v114
  %v451 = vunpack.c.l.b16 %v115
  %v452 = vunpack.c.l.b16 %v116
  %v453 = vunpack.c.l.b16 %v117
  %v454 = vunpack.c.l.b16 %v118
  %v455 = vunpack.c.l.b16 %v119
  %v456 = vunpack.c.l.b16 %v120
  %v457 = vunpack.c.l.b16 %v121
  %v458 = vunpack.c.l.b16 %v122
  %v459 = vunpack.c.l.b16 %v123
  %v460 = vunpack.c.l.b16 %v124
  %v461 = vunpack.c.l.b16 %v125
  %v462 = vunpack.c.l.b16 %v126
  %v463 = vunpack.c.l.b16 %v127
  %v464 = vunpack.c.l.b16 %v128
  %v465 = vunpack.c.l.b16 %v129
  %v466 = vunpack.c.l.b16 %v130
  %v467 = vunpack.c.l.b16 %v131
  %v468 = vunpack.c.l.b16 %v132
  %v469 = vunpack.c.l.b16 %v133
  %v470 = vunpack.c.l.b16 %v134
  %v471 = vunpack.c.l.b16 %v135
  %v472 = vunpack.c.l.b16 %v136
  %v473 = vunpack.c.l.b16 %v137
  %v474 = vunpack.c.l.b16 %v138
  %v475 = vunpack.c.l.b16 %v139
  %v476 = vunpack.c.l.b16 %v140
  %v477 = vunpack.c.l.b16 %v141
  %v478 = vunpack.c.l.b16 %v142
  %v479 = vunpack.c.l.b16 %v143
  %v480 = vunpack.c.l.b16 %v144
  %v481 = vunpack.c.l.b16 %v145
  %v482 = vunpack.c.l.b16 %v146
  %v483 = vunpack.c.l.b16 %v147
  %v484 = vunpack.c.l.b16 %v148
  %v485 = vunpack.c.l.b16 %v149
  %v486 = vunpack.c.l.b16 %v150
  %v487 = vunpack.c.l.b16 %v151
  %v488 = vunpack.c.l.b16 %v152
  %v489 = vunpack.c.l.b16 %v153
  %v490 = vunpack.c.l.b16 %v154
  %v491 = vunpack.c.l.b16 %v155
  %v492 = vunpack.c.l.b16 %v156
  %v493 = vunpack.c.l.b16 %v157
  %v494 = vunpack.c.l.b16 %v158
  %v495 = vunpack.c.l.b16 %v159
  %v496 = vunpack.c.l.b16 %v160
  %v497 = vunpack.c.l.b16 %v161
  %v498 = vunpack.c.l.b16 %v162
  %v499 = vunpack.c.l.b16 %v163
  %v500 = vunpack.c.l.b16 %v164
  %v501 = vunpack.c.l.b16 %v165
  %v502 = vunpack.c.l.b16 %v166
  %v503 = vunpack.c.l.b16 %v167
  %v504 = vunpack.c.l.b16 %v168
  %v505 = vunpack.c.l.b16 %v169
  %v506 = vunpack.c.l.b16 %v170
  %v507 = vpack.c.b16 %v380, %v379
  %v508 = vpack.c.b16 %v382, %v381
  %v509 = vpack.c.b16 %v384, %v383
  %v510 = vpack.c.b16 %v386, %v385
  %v511 = vpack.c.b16 %v388, %v387
  %v512 = vpack.c.b16 %v390, %v389
  %v513 = vpack.c.b16 %v392, %v391
  %v514 = vpack.c.b16 %v394, %v393
  %v515 = vpack.c.b16 %v396, %v395
  %v516 = vpack.c.b16 %v398, %v397
  %v517 = vpack.c.b16 %v400, %v399
  %v518 = vpack.c.b16 %v402, %v401
  %v519 = vpack.c.b16 %v404, %v403
  %v520 = vpack.c.b16 %v406, %v405
  %v521 = vpack.c.b16 %v408, %v407
  %v522 = vpack.c.b16 %v410, %v409
  %v523 = vpack.c.b16 %v412, %v411
  %v524 = vpack.c.b16 %v414, %v413
  %v525 = vpack.c.b16 %v416, %v415
  %v526 = vpack.c.b16 %v418, %v417
  %v527 = vpack.c.b16 %v420, %v419
  %v528 = vpack.c.b16 %v422, %v421
  %v529 = vpack.c.b16 %v424, %v423
  %v530 = vpack.c.b16 %v426, %v425
  %v531 = vpack.c.b16 %v428, %v427
  %v532 = vpack.c.b16 %v430, %v429
  %v533 = vpack.c.b16 %v432, %v431
  %v534 = vpack.c.b16 %v434, %v433
  %v535 = vpack.c.b16 %v436, %v435
  %v536 = vpack.c.b16 %v438, %v437
  %v537 = vpack.c.b16 %v440, %v439
  %v538 = vpack.c.b16 %v442, %v441
  %v539 = vpack.c.b16 %v444, %v443
  %v540 = vpack.c.b16 %v446, %v445
  %v541 = vpack.c.b16 %v448, %v447
  %v542 = vpack.c.b16 %v450, %v449
  %v543 = vpack.c.b16 %v452, %v451
  %v544 = vpack.c.b16 %v454, %v453
  %v545 = vpack.c.b16 %v456, %v455
  %v546 = vpack.c.b16 %v458, %v457
  %v547 = vpack.c.b16 %v460, %v459
  %v548 = vpack.c.b16 %v462, %v461
  %v549 = vpack.c.b16 %v464, %v463
  %v550 = vpack.c.b16 %v466, %v465
  %v551 = vpack.c.b16 %v468, %v467
  %v552 = vpack.c.b16 %v470, %v469
  %v553 = vpack.c.b16 %v472, %v471
  %v554 = vpack.c.b16 %v474, %v473
  %v555 = vpack.c.b16 %v476, %v475
  %v556 = vpack.c.b16 %v478, %v477
  %v557 = vpack.c.b16 %v480, %v479
  %v558 = vpack.c.b16 %v482, %v481
  %v559 = vpack.c.b16 %v484, %v483
  %v560 = vpack.c.b16 %v486, %v485
  %v561 = vpack.c.b16 %v488, %v487
  %v562 = vpack.c.b16 %v490, %v489
  %v563 = vpack.c.b16 %v492, %v491
  %v564 = vpack.c.b16 %v494, %v493
  %v565 = vpack.c.b16 %v496, %v495
  %v566 = vpack.c.b16 %v498, %v497
  %v567 = vpack.c.b16 %v500, %v499
  %v568 = vpack.c.b16 %v502, %v501
  %v569 = vpack.c.b16 %v504, %v503
  %v570 = vpack.c.b16 %v506, %v505
  %635 = vmatprep.subr.bf16.mxu0 0
  %636 = vmatpush1.bf16.msra.mxu0 %v507
  %637 = vmatprep.subr.bf16.mxu0 0
  %638 = vmatpush1.bf16.msra.mxu0 %v508
  %639 = vmatprep.subr.bf16.mxu0 0
  %640 = vmatpush1.bf16.msra.mxu0 %v509
  %641 = vmatprep.subr.bf16.mxu0 0
  %642 = vmatpush1.bf16.msra.mxu0 %v510
  %643 = vmatprep.subr.bf16.mxu0 0
  %644 = vmatpush1.bf16.msra.mxu0 %v511
  %645 = vmatprep.subr.bf16.mxu0 0
  %646 = vmatpush1.bf16.msra.mxu0 %v512
  %647 = vmatprep.subr.bf16.mxu0 0
  %648 = vmatpush1.bf16.msra.mxu0 %v513
  %649 = vmatprep.subr.bf16.mxu0 0
  %650 = vmatpush1.bf16.msra.mxu0 %v514
  %651 = vmatprep.subr.bf16.mxu0 0
  %652 = vmatpush1.bf16.msra.mxu0 %v515
  %653 = vmatprep.subr.bf16.mxu0 0
  %654 = vmatpush1.bf16.msra.mxu0 %v516
  %655 = vmatprep.subr.bf16.mxu0 0
  %656 = vmatpush1.bf16.msra.mxu0 %v517
  %657 = vmatprep.subr.bf16.mxu0 0
  %658 = vmatpush1.bf16.msra.mxu0 %v518
  %659 = vmatprep.subr.bf16.mxu0 0
  %660 = vmatpush1.bf16.msra.mxu0 %v519
  %661 = vmatprep.subr.bf16.mxu0 0
  %662 = vmatpush1.bf16.msra.mxu0 %v520
  %663 = vmatprep.subr.bf16.mxu0 0
  %664 = vmatpush1.bf16.msra.mxu0 %v521
  %665 = vmatprep.subr.bf16.mxu0 0
  %666 = vmatpush1.bf16.msra.mxu0 %v522
  %667 = vmatprep.mubr.bf16.mxu0 %v220
  %668 = vmatmul.mubr.bf16.gmra.mrb[0].mxu0 %v219
  %v669 = vpop.f32.mrb[0].mxu0
  %v670 = vadd.f32 0.0, %v669
  %v671 = vpop.f32.mrb[0].mxu0
  %v672 = vpop.f32.mrb[0].mxu0
  %v673 = vadd.f32 0.0, %v672
  %v674 = vpop.f32.mrb[0].mxu0
  %675 = vmatprep.mubr.bf16.mxu0 %v228
  %676 = vmatmul.mubr.bf16.gmra.mrb[0].mxu0 %v227
  %v677 = vpop.f32.mrb[0].mxu0
  %v678 = vadd.f32 0.0, %v677
  %v679 = vpop.f32.mrb[0].mxu0
  %v680 = vpop.f32.mrb[0].mxu0
  %v681 = vadd.f32 0.0, %v680
  %v682 = vpop.f32.mrb[0].mxu0
  %683 = vdwg.mxu0
  %684 = vmatprep.subr.bf16.mxu0 0
  %685 = vmatpush1.bf16.msra.mxu0 %v523
  %686 = vmatprep.subr.bf16.mxu0 0
  %687 = vmatpush1.bf16.msra.mxu0 %v524
  %688 = vmatprep.subr.bf16.mxu0 0
  %689 = vmatpush1.bf16.msra.mxu0 %v525
  %690 = vmatprep.subr.bf16.mxu0 0
  %691 = vmatpush1.bf16.msra.mxu0 %v526
  %692 = vmatprep.subr.bf16.mxu0 0
  %693 = vmatpush1.bf16.msra.mxu0 %v527
  %694 = vmatprep.subr.bf16.mxu0 0
  %695 = vmatpush1.bf16.msra.mxu0 %v528
  %696 = vmatprep.subr.bf16.mxu0 0
  %697 = vmatpush1.bf16.msra.mxu0 %v529
  %698 = vmatprep.subr.bf16.mxu0 0
  %699 = vmatpush1.bf16.msra.mxu0 %v530
  %700 = vmatprep.subr.bf16.mxu0 0
  %701 = vmatpush1.bf16.msra.mxu0 %v531
  %702 = vmatprep.subr.bf16.mxu0 0
  %703 = vmatpush1.bf16.msra.mxu0 %v532
  %704 = vmatprep.subr.bf16.mxu0 0
  %705 = vmatpush1.bf16.msra.mxu0 %v533
  %706 = vmatprep.subr.bf16.mxu0 0
  %707 = vmatpush1.bf16.msra.mxu0 %v534
  %708 = vmatprep.subr.bf16.mxu0 0
  %709 = vmatpush1.bf16.msra.mxu0 %v535
  %710 = vmatprep.subr.bf16.mxu0 0
  %711 = vmatpush1.bf16.msra.mxu0 %v536
  %712 = vmatprep.subr.bf16.mxu0 0
  %713 = vmatpush1.bf16.msra.mxu0 %v537
  %714 = vmatprep.subr.bf16.mxu0 0
  %715 = vmatpush1.bf16.msra.mxu0 %v538
  %716 = vmatprep.mubr.bf16.mxu0 %v222
  %717 = vmatmul.mubr.bf16.gmra.mrb[0].mxu0 %v221
  %v718 = vpop.f32.mrb[0].mxu0
  %v719 = vadd.f32 %v670, %v718
  %v720 = vpop.f32.mrb[0].mxu0
  %v721 = vpop.f32.mrb[0].mxu0
  %v722 = vadd.f32 %v673, %v721
  %v723 = vpop.f32.mrb[0].mxu0
  %724 = vmatprep.mubr.bf16.mxu0 %v230
  %725 = vmatmul.mubr.bf16.gmra.mrb[0].mxu0 %v229
  %v726 = vpop.f32.mrb[0].mxu0
  %v727 = vadd.f32 %v678, %v726
  %v728 = vpop.f32.mrb[0].mxu0
  %v729 = vpop.f32.mrb[0].mxu0
  %v730 = vadd.f32 %v681, %v729
  %v731 = vpop.f32.mrb[0].mxu0
  %732 = vdwg.mxu0
  %733 = vmatprep.subr.bf16.mxu0 0
  %734 = vmatpush1.bf16.msra.mxu0 %v539
  %735 = vmatprep.subr.bf16.mxu0 0
  %736 = vmatpush1.bf16.msra.mxu0 %v540
  %737 = vmatprep.subr.bf16.mxu0 0
  %738 = vmatpush1.bf16.msra.mxu0 %v541
  %739 = vmatprep.subr.bf16.mxu0 0
  %740 = vmatpush1.bf16.msra.mxu0 %v542
  %741 = vmatprep.subr.bf16.mxu0 0
  %742 = vmatpush1.bf16.msra.mxu0 %v543
  %743 = vmatprep.subr.bf16.mxu0 0
  %744 = vmatpush1.bf16.msra.mxu0 %v544
  %745 = vmatprep.subr.bf16.mxu0 0
  %746 = vmatpush1.bf16.msra.mxu0 %v545
  %747 = vmatprep.subr.bf16.mxu0 0
  %748 = vmatpush1.bf16.msra.mxu0 %v546
  %749 = vmatprep.subr.bf16.mxu0 0
  %750 = vmatpush1.bf16.msra.mxu0 %v547
  %751 = vmatprep.subr.bf16.mxu0 0
  %752 = vmatpush1.bf16.msra.mxu0 %v548
  %753 = vmatprep.subr.bf16.mxu0 0
  %754 = vmatpush1.bf16.msra.mxu0 %v549
  %755 = vmatprep.subr.bf16.mxu0 0
  %756 = vmatpush1.bf16.msra.mxu0 %v550
  %757 = vmatprep.subr.bf16.mxu0 0
  %758 = vmatpush1.bf16.msra.mxu0 %v551
  %759 = vmatprep.subr.bf16.mxu0 0
  %760 = vmatpush1.bf16.msra.mxu0 %v552
  %761 = vmatprep.subr.bf16.mxu0 0
  %762 = vmatpush1.bf16.msra.mxu0 %v553
  %763 = vmatprep.subr.bf16.mxu0 0
  %764 = vmatpush1.bf16.msra.mxu0 %v554
  %765 = vmatprep.mubr.bf16.mxu0 %v224
  %766 = vmatmul.mubr.bf16.gmra.mrb[0].mxu0 %v223
  %v767 = vpop.f32.mrb[0].mxu0
  %v768 = vadd.f32 %v719, %v767
  %v769 = vpop.f32.mrb[0].mxu0
  %v770 = vpop.f32.mrb[0].mxu0
  %v771 = vadd.f32 %v722, %v770
  %v772 = vpop.f32.mrb[0].mxu0
  %773 = vmatprep.mubr.bf16.mxu0 %v232
  %774 = vmatmul.mubr.bf16.gmra.mrb[0].mxu0 %v231
  %v775 = vpop.f32.mrb[0].mxu0
  %v776 = vadd.f32 %v727, %v775
  %v777 = vpop.f32.mrb[0].mxu0
  %v778 = vpop.f32.mrb[0].mxu0
  %v779 = vadd.f32 %v730, %v778
  %v780 = vpop.f32.mrb[0].mxu0
  %781 = vdwg.mxu0
  %782 = vmatprep.subr.bf16.mxu0 0
  %783 = vmatpush1.bf16.msra.mxu0 %v555
  %784 = vmatprep.subr.bf16.mxu0 0
  %785 = vmatpush1.bf16.msra.mxu0 %v556
  %786 = vmatprep.subr.bf16.mxu0 0
  %787 = vmatpush1.bf16.msra.mxu0 %v557
  %788 = vmatprep.subr.bf16.mxu0 0
  %789 = vmatpush1.bf16.msra.mxu0 %v558
  %790 = vmatprep.subr.bf16.mxu0 0
  %791 = vmatpush1.bf16.msra.mxu0 %v559
  %792 = vmatprep.subr.bf16.mxu0 0
  %793 = vmatpush1.bf16.msra.mxu0 %v560
  %794 = vmatprep.subr.bf16.mxu0 0
  %795 = vmatpush1.bf16.msra.mxu0 %v561
  %796 = vmatprep.subr.bf16.mxu0 0
  %797 = vmatpush1.bf16.msra.mxu0 %v562
  %798 = vmatprep.subr.bf16.mxu0 0
  %799 = vmatpush1.bf16.msra.mxu0 %v563
  %800 = vmatprep.subr.bf16.mxu0 0
  %801 = vmatpush1.bf16.msra.mxu0 %v564
  %802 = vmatprep.subr.bf16.mxu0 0
  %803 = vmatpush1.bf16.msra.mxu0 %v565
  %804 = vmatprep.subr.bf16.mxu0 0
  %805 = vmatpush1.bf16.msra.mxu0 %v566
  %806 = vmatprep.subr.bf16.mxu0 0
  %807 = vmatpush1.bf16.msra.mxu0 %v567
  %808 = vmatprep.subr.bf16.mxu0 0
  %809 = vmatpush1.bf16.msra.mxu0 %v568
  %810 = vmatprep.subr.bf16.mxu0 0
  %811 = vmatpush1.bf16.msra.mxu0 %v569
  %812 = vmatprep.subr.bf16.mxu0 0
  %813 = vmatpush1.bf16.msra.mxu0 %v570
  %814 = vmatprep.mubr.bf16.mxu0 %v226
  %815 = vmatmul.mubr.bf16.gmra.mrb[0].mxu0 %v225
  %v816 = vpop.f32.mrb[0].mxu0
  %v817 = vadd.f32 %v768, %v816
  %v818 = vpop.f32.mrb[0].mxu0
  %v819 = vpop.f32.mrb[0].mxu0
  %v820 = vadd.f32 %v771, %v819
  %v821 = vpop.f32.mrb[0].mxu0
  %822 = vmatprep.mubr.bf16.mxu0 %v234
  %823 = vmatmul.mubr.bf16.gmra.mrb[0].mxu0 %v233
  %v824 = vpop.f32.mrb[0].mxu0
  %v825 = vadd.f32 %v776, %v824
  %v826 = vpop.f32.mrb[0].mxu0
  %v827 = vpop.f32.mrb[0].mxu0
  %v828 = vadd.f32 %v779, %v827
  %v829 = vpop.f32.mrb[0].mxu0
  %830 = vdwg.mxu0
  %v831 = vadd.f32 %v23, %v817
  %v832 = vadd.f32 %v24, %v820
  %v833 = vadd.f32 %v25, %v825
  %v834 = vadd.f32 %v26, %v828
  %835 = vst [vmem:[#allocation2] sm:$0xff] %v831
  %836 = vst [vmem:[#allocation2 + $0x8] sm:$0xff] %v832
  %837 = vst [vmem:[#allocation2 + $0x10] sm:$0xff] %v833
  %838 = vst [vmem:[#allocation2 + $0x18] sm:$0xff] %v834
  // Predicated region
  $region18: #{_lambda_.17} parent=0 // pred_check
    %p839 = pneg %p15
  $region19: #{_lambda_.17} parent=0 // pred_check_branch
    %841 = sbr.rel (%p839) target = $region21
  $region20: #{_lambda_.17} parent=0 // pred_region
    %v842 = vld [vmem:[#allocation2] sm:$0xff]
    %v843 = vld [vmem:[#allocation2 + $0x8] sm:$0xff]
    %v844 = vld [vmem:[#allocation2 + $0x10] sm:$0xff]
    %v845 = vld [vmem:[#allocation2 + $0x18] sm:$0xff]
    %v846 = vld [vmem:[%s2] sm:$0x1]
    %v848 = vlaneseq
    %v849 = vshrl.u32 %v848, 7
    %v850 = vsub.s32 0, %v849
    %v851 = vrot.slane %v846, %v850
    %v853 = vadd.f32 %v842, %v851
    %v854 = vadd.f32 %v843, %v851
    %v855 = vadd.f32 %v844, %v851
    %v856 = vadd.f32 %v845, %v851
    %v857 = vadd.f32 %v853, %v854
    %v858 = vrot.slane %v857, 4
    %v859 = vadd.f32 %v857, %v858
    %v860 = vrot.slane %v859, 2
    %v861 = vadd.f32 %v859, %v860
    %v862 = vrot.slane %v861, 1
    %v863 = vadd.f32 %v861, %v862
    %v864 = vadd.f32 %v855, %v856
    %v865 = vrot.slane %v864, 4
    %v866 = vadd.f32 %v864, %v865
    %v867 = vrot.slane %v866, 2
    %v868 = vadd.f32 %v866, %v867
    %v869 = vrot.slane %v868, 1
    %v870 = vadd.f32 %v868, %v869
    %v871 = vrcp.pop 16.0
    %v872 = vmul.f32 %v863, %v871
    %v873 = vmul.f32 %v870, %v871
    %v874 = vsub.f32 %v853, %v872
    %v875 = vsub.f32 %v854, %v872
    %v876 = vsub.f32 %v855, %v873
    %v877 = vsub.f32 %v856, %v873
    %v878 = vmul.f32 %v874, %v874
    %v879 = vmul.f32 %v875, %v875
    %v880 = vmul.f32 %v876, %v876
    %v881 = vmul.f32 %v877, %v877
    %v882 = vadd.f32 %v878, %v879
    %v883 = vrot.slane %v882, 4
    %v884 = vadd.f32 %v882, %v883
    %v885 = vrot.slane %v884, 2
    %v886 = vadd.f32 %v884, %v885
    %v887 = vrot.slane %v886, 1
    %v888 = vadd.f32 %v886, %v887
    %v889 = vadd.f32 %v880, %v881
    %v890 = vrot.slane %v889, 4
    %v891 = vadd.f32 %v889, %v890
    %v892 = vrot.slane %v891, 2
    %v893 = vadd.f32 %v891, %v892
    %v894 = vrot.slane %v893, 1
    %v895 = vadd.f32 %v893, %v894
    %v896 = vmul.f32 %v888, %v871
    %v897 = vmul.f32 %v895, %v871
    %v898 = vadd.f32 %v896, 1e-05
    %v899 = vadd.f32 %v897, 1e-05
    %v900 = vrsqrt.pop %v898
    %v901 = vrsqrt.pop %v899
    %v902 = vmul.f32 %v874, %v900
    %v903 = vmul.f32 %v875, %v900
    %v904 = vmul.f32 %v876, %v901
    %v905 = vmul.f32 %v877, %v901
    %v906 = vmax.f32 %v902, 0.0
    %v907 = vmax.f32 %v903, 0.0
    %v908 = vmax.f32 %v904, 0.0
    %v909 = vmax.f32 %v905, 0.0
    %v910 = vpack.c.bf16 %v907, %v906
    %v911 = vpack.c.bf16 %v909, %v908
    %v914 = vunpack.c.l.b16 %v910
    %v915 = vunpack.c.h.b16 %v910
    %v916 = vunpack.c.l.b16 %v911
    %v917 = vunpack.c.h.b16 %v911
    %v918 = vpack.c.b16 %v914, %v914
    %v919 = vpack.c.b16 %v915, %v915
    %v920 = vpack.c.b16 %v916, %v916
    %v921 = vpack.c.b16 %v917, %v917
    %926 = vst [vmem:[%s3] sm:$0xf] %v918
    %927 = vst [vmem:[%s3 + $0x4] sm:$0xf] %v919
    %928 = vst [vmem:[%s3 + $0x8] sm:$0xf] %v920
    %929 = vst [vmem:[%s3 + $0xc] sm:$0xf] %v921
  $region21: #{_lambda_.17} parent=0 // pred_fallthru
    _
  // Predicated region
  $region22: #{_lambda_.17} parent=0 // pred_check
    _
  $region23: #{_lambda_.17} parent=0 // pred_check_branch
    %931 = sbr.rel (0) target = $region25
  $region24: #{_lambda_.17} parent=0 // pred_region
    _
  $region25: #{_lambda_.17} parent=0 // pred_fallthru
    _
  // Predicated region
  $region26: #{_lambda_.17} parent=0 // pred_check
    _
  $region27: #{_lambda_.17} parent=0 // pred_check_branch
    %933 = sbr.rel (0) target = $region29
  $region28: #{_lambda_.17} parent=0 // pred_region
    _
  $region29: #{_lambda_.17} parent=0 // pred_fallthru
    _

// kernel: _lambda_.19
$region0: #{_lambda_.19}
  #allocation0 [shape = 'u32[]', space=smem, size = 0x4, offset = 0x4, fixed_abs, tag = 'smem constant byte address 0x4 - core index']
  #allocation1 [shape = 'u32[144,128]{1,0:T(1,128)}', space=vmem, size = 0x12000, scoped, tag = 'internal scratch']
  #allocation2 [shape = 'f32[32,128]{1,0:T(8,128)}', space=vmem, size = 0x4000, scoped, tag = 'scratch operand']
  %s0 = inlined_call_operand.vmem [shape: bf16[32,1152], index: 0, kind: input, shape index: {}]
  %s1 = inlined_call_operand.vmem [shape: bf16[1152,128], index: 1, kind: input, shape index: {}]
  %s2 = inlined_call_operand.vmem [shape: f32[1,128], index: 2, kind: input, shape index: {}]
  %s3 = inlined_call_operand.vmem [shape: bf16[32,128], index: 3, kind: input, shape index: {}]
  %s4 = inlined_call_operand.vmem [shape: bf16[32,128], index: 4, kind: output, shape index: {}]
  %s5 = sld [smem:[#allocation0]]
  $region34: #{_lambda_.19} parent=0
    _
  %s7 = ssub.s32 1, %s5
  %s8 = scalar_select 0, %s7, %s5
  // Predicated region
  $region2: #{_lambda_.19} parent=0 // pred_check
    _
  $region3: #{_lambda_.19} parent=0 // pred_check_branch
    %10 = sbr.rel (0) target = $region5
  $region4: #{_lambda_.19} parent=0 // pred_region
    _
  $region5: #{_lambda_.19} parent=0 // pred_fallthru
    _
  // Predicated region
  $region6: #{_lambda_.19} parent=0 // pred_check
    _
  $region7: #{_lambda_.19} parent=0 // pred_check_branch
    %12 = sbr.rel (0) target = $region9
  $region8: #{_lambda_.19} parent=0 // pred_region
    _
  $region9: #{_lambda_.19} parent=0 // pred_fallthru
    _
  // Predicated region
  $region10: #{_lambda_.19} parent=0 // pred_check
    _
  $region11: #{_lambda_.19} parent=0 // pred_check_branch
    %14 = sbr.rel (0) target = $region13
  $region12: #{_lambda_.19} parent=0 // pred_region
    _
  $region13: #{_lambda_.19} parent=0 // pred_fallthru
    _
  // Predicated region
  $region14: #{_lambda_.19} parent=0 // pred_check
    _
  $region15: #{_lambda_.19} parent=0 // pred_check_branch
    %16 = sbr.rel (0) target = $region17
  $region16: #{_lambda_.19} parent=0 // pred_region
    _
  $region17: #{_lambda_.19} parent=0 // pred_fallthru
    _
  %p18 = scmp.eq.s32.totalorder 0, 0
  // Predicated region
  $region18: #{_lambda_.19} parent=0 // pred_check
    %p19 = pneg %p18
  $region19: #{_lambda_.19} parent=0 // pred_check_branch
    %21 = sbr.rel (%p19) target = $region21
  $region20: #{_lambda_.19} parent=0 // pred_region
    %22 = vst [vmem:[#allocation2] sm:$0xff] 0.0
    %23 = vst [vmem:[#allocation2 + $0x8] sm:$0xff] 0.0
    %24 = vst [vmem:[#allocation2 + $0x10] sm:$0xff] 0.0
    %25 = vst [vmem:[#allocation2 + $0x18] sm:$0xff] 0.0
  $region21: #{_lambda_.19} parent=0 // pred_fallthru
    _
  %v26 = vld [vmem:[#allocation2] sm:$0xff]
  %v27 = vld [vmem:[#allocation2 + $0x8] sm:$0xff]
  %v28 = vld [vmem:[#allocation2 + $0x10] sm:$0xff]
  %v29 = vld [vmem:[#allocation2 + $0x18] sm:$0xff]
  %v30 = vld [vmem:[%s0] sm:$0xff]
  %v31 = vld [vmem:[%s0 + $0x8] sm:$0xff]
  %v32 = vld [vmem:[%s0 + $0x10] sm:$0xff]
  %v33 = vld [vmem:[%s0 + $0x18] sm:$0xff]
  %v34 = vld [vmem:[%s0 + $0x20] sm:$0xf]
  %v35 = vld [vmem:[%s0 + $0x24] sm:$0xff]
  %v36 = vld [vmem:[%s0 + $0x2c] sm:$0xff]
  %v37 = vld [vmem:[%s0 + $0x34] sm:$0xff]
  %v38 = vld [vmem:[%s0 + $0x3c] sm:$0xff]
  %v39 = vld [vmem:[%s0 + $0x44] sm:$0xf]
  %v40 = vld [vmem:[%s0 + $0x48] sm:$0xff]
  %v41 = vld [vmem:[%s0 + $0x50] sm:$0xff]
  %v42 = vld [vmem:[%s0 + $0x58] sm:$0xff]
  %v43 = vld [vmem:[%s0 + $0x60] sm:$0xff]
  %v44 = vld [vmem:[%s0 + $0x68] sm:$0xf]
  %v45 = vld [vmem:[%s0 + $0x6c] sm:$0xff]
  %v46 = vld [vmem:[%s0 + $0x74] sm:$0xff]
  %v47 = vld [vmem:[%s0 + $0x7c] sm:$0xff]
  %v48 = vld [vmem:[%s0 + $0x84] sm:$0xff]
  %v49 = vld [vmem:[%s0 + $0x8c] sm:$0xf]
  %v50 = vld [vmem:[%s1] sm:$0xf]
  %v51 = vld [vmem:[%s1 + $0x4] sm:$0xf]
  %v52 = vld [vmem:[%s1 + $0x8] sm:$0xf]
  %v53 = vld [vmem:[%s1 + $0xc] sm:$0xf]
  %v54 = vld [vmem:[%s1 + $0x10] sm:$0xf]
  %v55 = vld [vmem:[%s1 + $0x14] sm:$0xf]
  %v56 = vld [vmem:[%s1 + $0x18] sm:$0xf]
  %v57 = vld [vmem:[%s1 + $0x1c] sm:$0xf]
  %v58 = vld [vmem:[%s1 + $0x20] sm:$0xf]
  %v59 = vld [vmem:[%s1 + $0x24] sm:$0xf]
  %v60 = vld [vmem:[%s1 + $0x28] sm:$0xf]
  %v61 = vld [vmem:[%s1 + $0x2c] sm:$0xf]
  %v62 = vld [vmem:[%s1 + $0x30] sm:$0xf]
  %v63 = vld [vmem:[%s1 + $0x34] sm:$0xf]
  %v64 = vld [vmem:[%s1 + $0x38] sm:$0xf]
  %v65 = vld [vmem:[%s1 + $0x3c] sm:$0xf]
  %v66 = vld [vmem:[%s1 + $0x40] sm:$0xf]
  %v67 = vld [vmem:[%s1 + $0x44] sm:$0xf]
  %v68 = vld [vmem:[%s1 + $0x48] sm:$0xf]
  %v69 = vld [vmem:[%s1 + $0x4c] sm:$0xf]
  %v70 = vld [vmem:[%s1 + $0x50] sm:$0xf]
  %v71 = vld [vmem:[%s1 + $0x54] sm:$0xf]
  %v72 = vld [vmem:[%s1 + $0x58] sm:$0xf]
  %v73 = vld [vmem:[%s1 + $0x5c] sm:$0xf]
  %v74 = vld [vmem:[%s1 + $0x60] sm:$0xf]
  %v75 = vld [vmem:[%s1 + $0x64] sm:$0xf]
  %v76 = vld [vmem:[%s1 + $0x68] sm:$0xf]
  %v77 = vld [vmem:[%s1 + $0x6c] sm:$0xf]
  %v78 = vld [vmem:[%s1 + $0x70] sm:$0xf]
  %v79 = vld [vmem:[%s1 + $0x74] sm:$0xf]
  %v80 = vld [vmem:[%s1 + $0x78] sm:$0xf]
  %v81 = vld [vmem:[%s1 + $0x7c] sm:$0xf]
  %v82 = vld [vmem:[%s1 + $0x80] sm:$0xf]
  %v83 = vld [vmem:[%s1 + $0x84] sm:$0xf]
  %v84 = vld [vmem:[%s1 + $0x88] sm:$0xf]
  %v85 = vld [vmem:[%s1 + $0x8c] sm:$0xf]
  %v86 = vld [vmem:[%s1 + $0x90] sm:$0xf]
  %v87 = vld [vmem:[%s1 + $0x94] sm:$0xf]
  %v88 = vld [vmem:[%s1 + $0x98] sm:$0xf]
  %v89 = vld [vmem:[%s1 + $0x9c] sm:$0xf]
  %v90 = vld [vmem:[%s1 + $0xa0] sm:$0xf]
  %v91 = vld [vmem:[%s1 + $0xa4] sm:$0xf]
  %v92 = vld [vmem:[%s1 + $0xa8] sm:$0xf]
  %v93 = vld [vmem:[%s1 + $0xac] sm:$0xf]
  %v94 = vld [vmem:[%s1 + $0xb0] sm:$0xf]
  %v95 = vld [vmem:[%s1 + $0xb4] sm:$0xf]
  %v96 = vld [vmem:[%s1 + $0xb8] sm:$0xf]
  %v97 = vld [vmem:[%s1 + $0xbc] sm:$0xf]
  %v98 = vld [vmem:[%s1 + $0xc0] sm:$0xf]
  %v99 = vld [vmem:[%s1 + $0xc4] sm:$0xf]
  %v100 = vld [vmem:[%s1 + $0xc8] sm:$0xf]
  %v101 = vld [vmem:[%s1 + $0xcc] sm:$0xf]
  %v102 = vld [vmem:[%s1 + $0xd0] sm:$0xf]
  %v103 = vld [vmem:[%s1 + $0xd4] sm:$0xf]
  %v104 = vld [vmem:[%s1 + $0xd8] sm:$0xf]
  %v105 = vld [vmem:[%s1 + $0xdc] sm:$0xf]
  %v106 = vld [vmem:[%s1 + $0xe0] sm:$0xf]
  %v107 = vld [vmem:[%s1 + $0xe4] sm:$0xf]
  %v108 = vld [vmem:[%s1 + $0xe8] sm:$0xf]
  %v109 = vld [vmem:[%s1 + $0xec] sm:$0xf]
  %v110 = vld [vmem:[%s1 + $0xf0] sm:$0xf]
  %v111 = vld [vmem:[%s1 + $0xf4] sm:$0xf]
  %v112 = vld [vmem:[%s1 + $0xf8] sm:$0xf]
  %v113 = vld [vmem:[%s1 + $0xfc] sm:$0xf]
  %v114 = vld [vmem:[%s1 + $0x100] sm:$0xf]
  %v115 = vld [vmem:[%s1 + $0x104] sm:$0xf]
  %v116 = vld [vmem:[%s1 + $0x108] sm:$0xf]
  %v117 = vld [vmem:[%s1 + $0x10c] sm:$0xf]
  %v118 = vld [vmem:[%s1 + $0x110] sm:$0xf]
  %v119 = vld [vmem:[%s1 + $0x114] sm:$0xf]
  %v120 = vld [vmem:[%s1 + $0x118] sm:$0xf]
  %v121 = vld [vmem:[%s1 + $0x11c] sm:$0xf]
  %v122 = vld [vmem:[%s1 + $0x120] sm:$0xf]
  %v123 = vld [vmem:[%s1 + $0x124] sm:$0xf]
  %v124 = vld [vmem:[%s1 + $0x128] sm:$0xf]
  %v125 = vld [vmem:[%s1 + $0x12c] sm:$0xf]
  %v126 = vld [vmem:[%s1 + $0x130] sm:$0xf]
  %v127 = vld [vmem:[%s1 + $0x134] sm:$0xf]
  %v128 = vld [vmem:[%s1 + $0x138] sm:$0xf]
  %v129 = vld [vmem:[%s1 + $0x13c] sm:$0xf]
  %v130 = vld [vmem:[%s1 + $0x140] sm:$0xf]
  %v131 = vld [vmem:[%s1 + $0x144] sm:$0xf]
  %v132 = vld [vmem:[%s1 + $0x148] sm:$0xf]
  %v133 = vld [vmem:[%s1 + $0x14c] sm:$0xf]
  %v134 = vld [vmem:[%s1 + $0x150] sm:$0xf]
  %v135 = vld [vmem:[%s1 + $0x154] sm:$0xf]
  %v136 = vld [vmem:[%s1 + $0x158] sm:$0xf]
  %v137 = vld [vmem:[%s1 + $0x15c] sm:$0xf]
  %v138 = vld [vmem:[%s1 + $0x160] sm:$0xf]
  %v139 = vld [vmem:[%s1 + $0x164] sm:$0xf]
  %v140 = vld [vmem:[%s1 + $0x168] sm:$0xf]
  %v141 = vld [vmem:[%s1 + $0x16c] sm:$0xf]
  %v142 = vld [vmem:[%s1 + $0x170] sm:$0xf]
  %v143 = vld [vmem:[%s1 + $0x174] sm:$0xf]
  %v144 = vld [vmem:[%s1 + $0x178] sm:$0xf]
  %v145 = vld [vmem:[%s1 + $0x17c] sm:$0xf]
  %v146 = vld [vmem:[%s1 + $0x180] sm:$0xf]
  %v147 = vld [vmem:[%s1 + $0x184] sm:$0xf]
  %v148 = vld [vmem:[%s1 + $0x188] sm:$0xf]
  %v149 = vld [vmem:[%s1 + $0x18c] sm:$0xf]
  %v150 = vld [vmem:[%s1 + $0x190] sm:$0xf]
  %v151 = vld [vmem:[%s1 + $0x194] sm:$0xf]
  %v152 = vld [vmem:[%s1 + $0x198] sm:$0xf]
  %v153 = vld [vmem:[%s1 + $0x19c] sm:$0xf]
  %v154 = vld [vmem:[%s1 + $0x1a0] sm:$0xf]
  %v155 = vld [vmem:[%s1 + $0x1a4] sm:$0xf]
  %v156 = vld [vmem:[%s1 + $0x1a8] sm:$0xf]
  %v157 = vld [vmem:[%s1 + $0x1ac] sm:$0xf]
  %v158 = vld [vmem:[%s1 + $0x1b0] sm:$0xf]
  %v159 = vld [vmem:[%s1 + $0x1b4] sm:$0xf]
  %v160 = vld [vmem:[%s1 + $0x1b8] sm:$0xf]
  %v161 = vld [vmem:[%s1 + $0x1bc] sm:$0xf]
  %v162 = vld [vmem:[%s1 + $0x1c0] sm:$0xf]
  %v163 = vld [vmem:[%s1 + $0x1c4] sm:$0xf]
  %v164 = vld [vmem:[%s1 + $0x1c8] sm:$0xf]
  %v165 = vld [vmem:[%s1 + $0x1cc] sm:$0xf]
  %v166 = vld [vmem:[%s1 + $0x1d0] sm:$0xf]
  %v167 = vld [vmem:[%s1 + $0x1d4] sm:$0xf]
  %v168 = vld [vmem:[%s1 + $0x1d8] sm:$0xf]
  %v169 = vld [vmem:[%s1 + $0x1dc] sm:$0xf]
  %v170 = vld [vmem:[%s1 + $0x1e0] sm:$0xf]
  %v171 = vld [vmem:[%s1 + $0x1e4] sm:$0xf]
  %v172 = vld [vmem:[%s1 + $0x1e8] sm:$0xf]
  %v173 = vld [vmem:[%s1 + $0x1ec] sm:$0xf]
  %v174 = vld [vmem:[%s1 + $0x1f0] sm:$0xf]
  %v175 = vld [vmem:[%s1 + $0x1f4] sm:$0xf]
  %v176 = vld [vmem:[%s1 + $0x1f8] sm:$0xf]
  %v177 = vld [vmem:[%s1 + $0x1fc] sm:$0xf]
  %v178 = vld [vmem:[%s1 + $0x200] sm:$0xf]
  %v179 = vld [vmem:[%s1 + $0x204] sm:$0xf]
  %v180 = vld [vmem:[%s1 + $0x208] sm:$0xf]
  %v181 = vld [vmem:[%s1 + $0x20c] sm:$0xf]
  %v182 = vld [vmem:[%s1 + $0x210] sm:$0xf]
  %v183 = vld [vmem:[%s1 + $0x214] sm:$0xf]
  %v184 = vld [vmem:[%s1 + $0x218] sm:$0xf]
  %v185 = vld [vmem:[%s1 + $0x21c] sm:$0xf]
  %v186 = vld [vmem:[%s1 + $0x220] sm:$0xf]
  %v187 = vld [vmem:[%s1 + $0x224] sm:$0xf]
  %v188 = vld [vmem:[%s1 + $0x228] sm:$0xf]
  %v189 = vld [vmem:[%s1 + $0x22c] sm:$0xf]
  %v190 = vld [vmem:[%s1 + $0x230] sm:$0xf]
  %v191 = vld [vmem:[%s1 + $0x234] sm:$0xf]
  %v192 = vld [vmem:[%s1 + $0x238] sm:$0xf]
  %v193 = vld [vmem:[%s1 + $0x23c] sm:$0xf]
  %v214 = vunpack.c.l.b16 %v30
  %v215 = vunpack.c.h.b16 %v30
  %v216 = vunpack.c.l.b16 %v31
  %v217 = vunpack.c.h.b16 %v31
  %v218 = vunpack.c.l.b16 %v32
  %v219 = vunpack.c.h.b16 %v32
  %v220 = vunpack.c.l.b16 %v33
  %v221 = vunpack.c.h.b16 %v33
  %v222 = vunpack.c.l.b16 %v34
  %v223 = vunpack.c.l.b16 %v35
  %v224 = vunpack.c.h.b16 %v35
  %v225 = vunpack.c.l.b16 %v36
  %v226 = vunpack.c.h.b16 %v36
  %v227 = vunpack.c.l.b16 %v37
  %v228 = vunpack.c.h.b16 %v37
  %v229 = vunpack.c.l.b16 %v38
  %v230 = vunpack.c.h.b16 %v38
  %v231 = vunpack.c.l.b16 %v39
  %v232 = vunpack.c.l.b16 %v40
  %v233 = vunpack.c.h.b16 %v40
  %v234 = vunpack.c.l.b16 %v41
  %v235 = vunpack.c.h.b16 %v41
  %v236 = vunpack.c.l.b16 %v42
  %v237 = vunpack.c.h.b16 %v42
  %v238 = vunpack.c.l.b16 %v43
  %v239 = vunpack.c.h.b16 %v43
  %v240 = vunpack.c.l.b16 %v44
  %v241 = vunpack.c.l.b16 %v45
  %v242 = vunpack.c.h.b16 %v45
  %v243 = vunpack.c.l.b16 %v46
  %v244 = vunpack.c.h.b16 %v46
  %v245 = vunpack.c.l.b16 %v47
  %v246 = vunpack.c.h.b16 %v47
  %v247 = vunpack.c.l.b16 %v48
  %v248 = vunpack.c.h.b16 %v48
  %v249 = vunpack.c.l.b16 %v49
  %v250 = vpack.c.b16 %v223, %v214
  %v251 = vpack.c.b16 %v224, %v215
  %v252 = vpack.c.b16 %v225, %v216
  %v253 = vpack.c.b16 %v226, %v217
  %v254 = vpack.c.b16 %v227, %v218
  %v255 = vpack.c.b16 %v228, %v219
  %v256 = vpack.c.b16 %v229, %v220
  %v257 = vpack.c.b16 %v230, %v221
  %v258 = vpack.c.b16 %v231, %v222
  %v259 = vpack.c.b16 %v241, %v232
  %v260 = vpack.c.b16 %v242, %v233
  %v261 = vpack.c.b16 %v243, %v234
  %v262 = vpack.c.b16 %v244, %v235
  %v263 = vpack.c.b16 %v245, %v236
  %v264 = vpack.c.b16 %v246, %v237
  %v265 = vpack.c.b16 %v247, %v238
  %v266 = vpack.c.b16 %v248, %v239
  %v267 = vpack.c.b16 %v249, %v240
  %v430 = vunpack.c.l.b16 %v50
  %v431 = vunpack.c.l.b16 %v51
  %v432 = vunpack.c.l.b16 %v52
  %v433 = vunpack.c.l.b16 %v53
  %v434 = vunpack.c.l.b16 %v54
  %v435 = vunpack.c.l.b16 %v55
  %v436 = vunpack.c.l.b16 %v56
  %v437 = vunpack.c.l.b16 %v57
  %v438 = vunpack.c.l.b16 %v58
  %v439 = vunpack.c.l.b16 %v59
  %v440 = vunpack.c.l.b16 %v60
  %v441 = vunpack.c.l.b16 %v61
  %v442 = vunpack.c.l.b16 %v62
  %v443 = vunpack.c.l.b16 %v63
  %v444 = vunpack.c.l.b16 %v64
  %v445 = vunpack.c.l.b16 %v65
  %v446 = vunpack.c.l.b16 %v66
  %v447 = vunpack.c.l.b16 %v67
  %v448 = vunpack.c.l.b16 %v68
  %v449 = vunpack.c.l.b16 %v69
  %v450 = vunpack.c.l.b16 %v70
  %v451 = vunpack.c.l.b16 %v71
  %v452 = vunpack.c.l.b16 %v72
  %v453 = vunpack.c.l.b16 %v73
  %v454 = vunpack.c.l.b16 %v74
  %v455 = vunpack.c.l.b16 %v75
  %v456 = vunpack.c.l.b16 %v76
  %v457 = vunpack.c.l.b16 %v77
  %v458 = vunpack.c.l.b16 %v78
  %v459 = vunpack.c.l.b16 %v79
  %v460 = vunpack.c.l.b16 %v80
  %v461 = vunpack.c.l.b16 %v81
  %v462 = vunpack.c.l.b16 %v82
  %v463 = vunpack.c.l.b16 %v83
  %v464 = vunpack.c.l.b16 %v84
  %v465 = vunpack.c.l.b16 %v85
  %v466 = vunpack.c.l.b16 %v86
  %v467 = vunpack.c.l.b16 %v87
  %v468 = vunpack.c.l.b16 %v88
  %v469 = vunpack.c.l.b16 %v89
  %v470 = vunpack.c.l.b16 %v90
  %v471 = vunpack.c.l.b16 %v91
  %v472 = vunpack.c.l.b16 %v92
  %v473 = vunpack.c.l.b16 %v93
  %v474 = vunpack.c.l.b16 %v94
  %v475 = vunpack.c.l.b16 %v95
  %v476 = vunpack.c.l.b16 %v96
  %v477 = vunpack.c.l.b16 %v97
  %v478 = vunpack.c.l.b16 %v98
  %v479 = vunpack.c.l.b16 %v99
  %v480 = vunpack.c.l.b16 %v100
  %v481 = vunpack.c.l.b16 %v101
  %v482 = vunpack.c.l.b16 %v102
  %v483 = vunpack.c.l.b16 %v103
  %v484 = vunpack.c.l.b16 %v104
  %v485 = vunpack.c.l.b16 %v105
  %v486 = vunpack.c.l.b16 %v106
  %v487 = vunpack.c.l.b16 %v107
  %v488 = vunpack.c.l.b16 %v108
  %v489 = vunpack.c.l.b16 %v109
  %v490 = vunpack.c.l.b16 %v110
  %v491 = vunpack.c.l.b16 %v111
  %v492 = vunpack.c.l.b16 %v112
  %v493 = vunpack.c.l.b16 %v113
  %v494 = vunpack.c.l.b16 %v114
  %v495 = vunpack.c.l.b16 %v115
  %v496 = vunpack.c.l.b16 %v116
  %v497 = vunpack.c.l.b16 %v117
  %v498 = vunpack.c.l.b16 %v118
  %v499 = vunpack.c.l.b16 %v119
  %v500 = vunpack.c.l.b16 %v120
  %v501 = vunpack.c.l.b16 %v121
  %v502 = vunpack.c.l.b16 %v122
  %v503 = vunpack.c.l.b16 %v123
  %v504 = vunpack.c.l.b16 %v124
  %v505 = vunpack.c.l.b16 %v125
  %v506 = vunpack.c.l.b16 %v126
  %v507 = vunpack.c.l.b16 %v127
  %v508 = vunpack.c.l.b16 %v128
  %v509 = vunpack.c.l.b16 %v129
  %v510 = vunpack.c.l.b16 %v130
  %v511 = vunpack.c.l.b16 %v131
  %v512 = vunpack.c.l.b16 %v132
  %v513 = vunpack.c.l.b16 %v133
  %v514 = vunpack.c.l.b16 %v134
  %v515 = vunpack.c.l.b16 %v135
  %v516 = vunpack.c.l.b16 %v136
  %v517 = vunpack.c.l.b16 %v137
  %v518 = vunpack.c.l.b16 %v138
  %v519 = vunpack.c.l.b16 %v139
  %v520 = vunpack.c.l.b16 %v140
  %v521 = vunpack.c.l.b16 %v141
  %v522 = vunpack.c.l.b16 %v142
  %v523 = vunpack.c.l.b16 %v143
  %v524 = vunpack.c.l.b16 %v144
  %v525 = vunpack.c.l.b16 %v145
  %v526 = vunpack.c.l.b16 %v146
  %v527 = vunpack.c.l.b16 %v147
  %v528 = vunpack.c.l.b16 %v148
  %v529 = vunpack.c.l.b16 %v149
  %v530 = vunpack.c.l.b16 %v150
  %v531 = vunpack.c.l.b16 %v151
  %v532 = vunpack.c.l.b16 %v152
  %v533 = vunpack.c.l.b16 %v153
  %v534 = vunpack.c.l.b16 %v154
  %v535 = vunpack.c.l.b16 %v155
  %v536 = vunpack.c.l.b16 %v156
  %v537 = vunpack.c.l.b16 %v157
  %v538 = vunpack.c.l.b16 %v158
  %v539 = vunpack.c.l.b16 %v159
  %v540 = vunpack.c.l.b16 %v160
  %v541 = vunpack.c.l.b16 %v161
  %v542 = vunpack.c.l.b16 %v162
  %v543 = vunpack.c.l.b16 %v163
  %v544 = vunpack.c.l.b16 %v164
  %v545 = vunpack.c.l.b16 %v165
  %v546 = vunpack.c.l.b16 %v166
  %v547 = vunpack.c.l.b16 %v167
  %v548 = vunpack.c.l.b16 %v168
  %v549 = vunpack.c.l.b16 %v169
  %v550 = vunpack.c.l.b16 %v170
  %v551 = vunpack.c.l.b16 %v171
  %v552 = vunpack.c.l.b16 %v172
  %v553 = vunpack.c.l.b16 %v173
  %v554 = vunpack.c.l.b16 %v174
  %v555 = vunpack.c.l.b16 %v175
  %v556 = vunpack.c.l.b16 %v176
  %v557 = vunpack.c.l.b16 %v177
  %v558 = vunpack.c.l.b16 %v178
  %v559 = vunpack.c.l.b16 %v179
  %v560 = vunpack.c.l.b16 %v180
  %v561 = vunpack.c.l.b16 %v181
  %v562 = vunpack.c.l.b16 %v182
  %v563 = vunpack.c.l.b16 %v183
  %v564 = vunpack.c.l.b16 %v184
  %v565 = vunpack.c.l.b16 %v185
  %v566 = vunpack.c.l.b16 %v186
  %v567 = vunpack.c.l.b16 %v187
  %v568 = vunpack.c.l.b16 %v188
  %v569 = vunpack.c.l.b16 %v189
  %v570 = vunpack.c.l.b16 %v190
  %v571 = vunpack.c.l.b16 %v191
  %v572 = vunpack.c.l.b16 %v192
  %v573 = vunpack.c.l.b16 %v193
  %v574 = vpack.c.b16 %v431, %v430
  %v575 = vpack.c.b16 %v433, %v432
  %v576 = vpack.c.b16 %v435, %v434
  %v577 = vpack.c.b16 %v437, %v436
  %v578 = vpack.c.b16 %v439, %v438
  %v579 = vpack.c.b16 %v441, %v440
  %v580 = vpack.c.b16 %v443, %v442
  %v581 = vpack.c.b16 %v445, %v444
  %v582 = vpack.c.b16 %v447, %v446
  %v583 = vpack.c.b16 %v449, %v448
  %v584 = vpack.c.b16 %v451, %v450
  %v585 = vpack.c.b16 %v453, %v452
  %v586 = vpack.c.b16 %v455, %v454
  %v587 = vpack.c.b16 %v457, %v456
  %v588 = vpack.c.b16 %v459, %v458
  %v589 = vpack.c.b16 %v461, %v460
  %v590 = vpack.c.b16 %v463, %v462
  %v591 = vpack.c.b16 %v465, %v464
  %v592 = vpack.c.b16 %v467, %v466
  %v593 = vpack.c.b16 %v469, %v468
  %v594 = vpack.c.b16 %v471, %v470
  %v595 = vpack.c.b16 %v473, %v472
  %v596 = vpack.c.b16 %v475, %v474
  %v597 = vpack.c.b16 %v477, %v476
  %v598 = vpack.c.b16 %v479, %v478
  %v599 = vpack.c.b16 %v481, %v480
  %v600 = vpack.c.b16 %v483, %v482
  %v601 = vpack.c.b16 %v485, %v484
  %v602 = vpack.c.b16 %v487, %v486
  %v603 = vpack.c.b16 %v489, %v488
  %v604 = vpack.c.b16 %v491, %v490
  %v605 = vpack.c.b16 %v493, %v492
  %v606 = vpack.c.b16 %v495, %v494
  %v607 = vpack.c.b16 %v497, %v496
  %v608 = vpack.c.b16 %v499, %v498
  %v609 = vpack.c.b16 %v501, %v500
  %v610 = vpack.c.b16 %v503, %v502
  %v611 = vpack.c.b16 %v505, %v504
  %v612 = vpack.c.b16 %v507, %v506
  %v613 = vpack.c.b16 %v509, %v508
  %v614 = vpack.c.b16 %v511, %v510
  %v615 = vpack.c.b16 %v513, %v512
  %v616 = vpack.c.b16 %v515, %v514
  %v617 = vpack.c.b16 %v517, %v516
  %v618 = vpack.c.b16 %v519, %v518
  %v619 = vpack.c.b16 %v521, %v520
  %v620 = vpack.c.b16 %v523, %v522
  %v621 = vpack.c.b16 %v525, %v524
  %v622 = vpack.c.b16 %v527, %v526
  %v623 = vpack.c.b16 %v529, %v528
  %v624 = vpack.c.b16 %v531, %v530
  %v625 = vpack.c.b16 %v533, %v532
  %v626 = vpack.c.b16 %v535, %v534
  %v627 = vpack.c.b16 %v537, %v536
  %v628 = vpack.c.b16 %v539, %v538
  %v629 = vpack.c.b16 %v541, %v540
  %v630 = vpack.c.b16 %v543, %v542
  %v631 = vpack.c.b16 %v545, %v544
  %v632 = vpack.c.b16 %v547, %v546
  %v633 = vpack.c.b16 %v549, %v548
  %v634 = vpack.c.b16 %v551, %v550
  %v635 = vpack.c.b16 %v553, %v552
  %v636 = vpack.c.b16 %v555, %v554
  %v637 = vpack.c.b16 %v557, %v556
  %v638 = vpack.c.b16 %v559, %v558
  %v639 = vpack.c.b16 %v561, %v560
  %v640 = vpack.c.b16 %v563, %v562
  %v641 = vpack.c.b16 %v565, %v564
  %v642 = vpack.c.b16 %v567, %v566
  %v643 = vpack.c.b16 %v569, %v568
  %v644 = vpack.c.b16 %v571, %v570
  %v645 = vpack.c.b16 %v573, %v572
  %718 = vmatprep.subr.bf16.mxu0 0
  %719 = vmatpush1.bf16.msra.mxu0 %v574
  %720 = vmatprep.subr.bf16.mxu0 0
  %721 = vmatpush1.bf16.msra.mxu0 %v575
  %722 = vmatprep.subr.bf16.mxu0 0
  %723 = vmatpush1.bf16.msra.mxu0 %v576
  %724 = vmatprep.subr.bf16.mxu0 0
  %725 = vmatpush1.bf16.msra.mxu0 %v577
  %726 = vmatprep.subr.bf16.mxu0 0
  %727 = vmatpush1.bf16.msra.mxu0 %v578
  %728 = vmatprep.subr.bf16.mxu0 0
  %729 = vmatpush1.bf16.msra.mxu0 %v579
  %730 = vmatprep.subr.bf16.mxu0 0
  %731 = vmatpush1.bf16.msra.mxu0 %v580
  %732 = vmatprep.subr.bf16.mxu0 0
  %733 = vmatpush1.bf16.msra.mxu0 %v581
  %734 = vmatprep.subr.bf16.mxu0 0
  %735 = vmatpush1.bf16.msra.mxu0 %v582
  %736 = vmatprep.subr.bf16.mxu0 0
  %737 = vmatpush1.bf16.msra.mxu0 %v583
  %738 = vmatprep.subr.bf16.mxu0 0
  %739 = vmatpush1.bf16.msra.mxu0 %v584
  %740 = vmatprep.subr.bf16.mxu0 0
  %741 = vmatpush1.bf16.msra.mxu0 %v585
  %742 = vmatprep.subr.bf16.mxu0 0
  %743 = vmatpush1.bf16.msra.mxu0 %v586
  %744 = vmatprep.subr.bf16.mxu0 0
  %745 = vmatpush1.bf16.msra.mxu0 %v587
  %746 = vmatprep.subr.bf16.mxu0 0
  %747 = vmatpush1.bf16.msra.mxu0 %v588
  %748 = vmatprep.subr.bf16.mxu0 0
  %749 = vmatpush1.bf16.msra.mxu0 %v589
  %750 = vmatprep.mubr.bf16.mxu0 %v251
  %751 = vmatmul.mubr.bf16.gmra.mrb[0].mxu0 %v250
  %v752 = vpop.f32.mrb[0].mxu0
  %v753 = vadd.f32 0.0, %v752
  %v754 = vpop.f32.mrb[0].mxu0
  %v755 = vpop.f32.mrb[0].mxu0
  %v756 = vadd.f32 0.0, %v755
  %v757 = vpop.f32.mrb[0].mxu0
  %758 = vmatprep.mubr.bf16.mxu0 %v260
  %759 = vmatmul.mubr.bf16.gmra.mrb[0].mxu0 %v259
  %v760 = vpop.f32.mrb[0].mxu0
  %v761 = vadd.f32 0.0, %v760
  %v762 = vpop.f32.mrb[0].mxu0
  %v763 = vpop.f32.mrb[0].mxu0
  %v764 = vadd.f32 0.0, %v763
  %v765 = vpop.f32.mrb[0].mxu0
  %766 = vdwg.mxu0
  %767 = vmatprep.subr.bf16.mxu0 0
  %768 = vmatpush1.bf16.msra.mxu0 %v590
  %769 = vmatprep.subr.bf16.mxu0 0
  %770 = vmatpush1.bf16.msra.mxu0 %v591
  %771 = vmatprep.subr.bf16.mxu0 0
  %772 = vmatpush1.bf16.msra.mxu0 %v592
  %773 = vmatprep.subr.bf16.mxu0 0
  %774 = vmatpush1.bf16.msra.mxu0 %v593
  %775 = vmatprep.subr.bf16.mxu0 0
  %776 = vmatpush1.bf16.msra.mxu0 %v594
  %777 = vmatprep.subr.bf16.mxu0 0
  %778 = vmatpush1.bf16.msra.mxu0 %v595
  %779 = vmatprep.subr.bf16.mxu0 0
  %780 = vmatpush1.bf16.msra.mxu0 %v596
  %781 = vmatprep.subr.bf16.mxu0 0
  %782 = vmatpush1.bf16.msra.mxu0 %v597
  %783 = vmatprep.subr.bf16.mxu0 0
  %784 = vmatpush1.bf16.msra.mxu0 %v598
  %785 = vmatprep.subr.bf16.mxu0 0
  %786 = vmatpush1.bf16.msra.mxu0 %v599
  %787 = vmatprep.subr.bf16.mxu0 0
  %788 = vmatpush1.bf16.msra.mxu0 %v600
  %789 = vmatprep.subr.bf16.mxu0 0
  %790 = vmatpush1.bf16.msra.mxu0 %v601
  %791 = vmatprep.subr.bf16.mxu0 0
  %792 = vmatpush1.bf16.msra.mxu0 %v602
  %793 = vmatprep.subr.bf16.mxu0 0
  %794 = vmatpush1.bf16.msra.mxu0 %v603
  %795 = vmatprep.subr.bf16.mxu0 0
  %796 = vmatpush1.bf16.msra.mxu0 %v604
  %797 = vmatprep.subr.bf16.mxu0 0
  %798 = vmatpush1.bf16.msra.mxu0 %v605
  %799 = vmatprep.mubr.bf16.mxu0 %v253
  %800 = vmatmul.mubr.bf16.gmra.mrb[0].mxu0 %v252
  %v801 = vpop.f32.mrb[0].mxu0
  %v802 = vadd.f32 %v753, %v801
  %v803 = vpop.f32.mrb[0].mxu0
  %v804 = vpop.f32.mrb[0].mxu0
  %v805 = vadd.f32 %v756, %v804
  %v806 = vpop.f32.mrb[0].mxu0
  %807 = vmatprep.mubr.bf16.mxu0 %v262
  %808 = vmatmul.mubr.bf16.gmra.mrb[0].mxu0 %v261
  %v809 = vpop.f32.mrb[0].mxu0
  %v810 = vadd.f32 %v761, %v809
  %v811 = vpop.f32.mrb[0].mxu0
  %v812 = vpop.f32.mrb[0].mxu0
  %v813 = vadd.f32 %v764, %v812
  %v814 = vpop.f32.mrb[0].mxu0
  %815 = vdwg.mxu0
  %816 = vmatprep.subr.bf16.mxu0 0
  %817 = vmatpush1.bf16.msra.mxu0 %v606
  %818 = vmatprep.subr.bf16.mxu0 0
  %819 = vmatpush1.bf16.msra.mxu0 %v607
  %820 = vmatprep.subr.bf16.mxu0 0
  %821 = vmatpush1.bf16.msra.mxu0 %v608
  %822 = vmatprep.subr.bf16.mxu0 0
  %823 = vmatpush1.bf16.msra.mxu0 %v609
  %824 = vmatprep.subr.bf16.mxu0 0
  %825 = vmatpush1.bf16.msra.mxu0 %v610
  %826 = vmatprep.subr.bf16.mxu0 0
  %827 = vmatpush1.bf16.msra.mxu0 %v611
  %828 = vmatprep.subr.bf16.mxu0 0
  %829 = vmatpush1.bf16.msra.mxu0 %v612
  %830 = vmatprep.subr.bf16.mxu0 0
  %831 = vmatpush1.bf16.msra.mxu0 %v613
  %832 = vmatprep.subr.bf16.mxu0 0
  %833 = vmatpush1.bf16.msra.mxu0 %v614
  %834 = vmatprep.subr.bf16.mxu0 0
  %835 = vmatpush1.bf16.msra.mxu0 %v615
  %836 = vmatprep.subr.bf16.mxu0 0
  %837 = vmatpush1.bf16.msra.mxu0 %v616
  %838 = vmatprep.subr.bf16.mxu0 0
  %839 = vmatpush1.bf16.msra.mxu0 %v617
  %840 = vmatprep.subr.bf16.mxu0 0
  %841 = vmatpush1.bf16.msra.mxu0 %v618
  %842 = vmatprep.subr.bf16.mxu0 0
  %843 = vmatpush1.bf16.msra.mxu0 %v619
  %844 = vmatprep.subr.bf16.mxu0 0
  %845 = vmatpush1.bf16.msra.mxu0 %v620
  %846 = vmatprep.subr.bf16.mxu0 0
  %847 = vmatpush1.bf16.msra.mxu0 %v621
  %848 = vmatprep.mubr.bf16.mxu0 %v255
  %849 = vmatmul.mubr.bf16.gmra.mrb[0].mxu0 %v254
  %v850 = vpop.f32.mrb[0].mxu0
  %v851 = vadd.f32 %v802, %v850
  %v852 = vpop.f32.mrb[0].mxu0
  %v853 = vpop.f32.mrb[0].mxu0
  %v854 = vadd.f32 %v805, %v853
  %v855 = vpop.f32.mrb[0].mxu0
  %856 = vmatprep.mubr.bf16.mxu0 %v264
  %857 = vmatmul.mubr.bf16.gmra.mrb[0].mxu0 %v263
  %v858 = vpop.f32.mrb[0].mxu0
  %v859 = vadd.f32 %v810, %v858
  %v860 = vpop.f32.mrb[0].mxu0
  %v861 = vpop.f32.mrb[0].mxu0
  %v862 = vadd.f32 %v813, %v861
  %v863 = vpop.f32.mrb[0].mxu0
  %864 = vdwg.mxu0
  %865 = vmatprep.subr.bf16.mxu0 0
  %866 = vmatpush1.bf16.msra.mxu0 %v622
  %867 = vmatprep.subr.bf16.mxu0 0
  %868 = vmatpush1.bf16.msra.mxu0 %v623
  %869 = vmatprep.subr.bf16.mxu0 0
  %870 = vmatpush1.bf16.msra.mxu0 %v624
  %871 = vmatprep.subr.bf16.mxu0 0
  %872 = vmatpush1.bf16.msra.mxu0 %v625
  %873 = vmatprep.subr.bf16.mxu0 0
  %874 = vmatpush1.bf16.msra.mxu0 %v626
  %875 = vmatprep.subr.bf16.mxu0 0
  %876 = vmatpush1.bf16.msra.mxu0 %v627
  %877 = vmatprep.subr.bf16.mxu0 0
  %878 = vmatpush1.bf16.msra.mxu0 %v628
  %879 = vmatprep.subr.bf16.mxu0 0
  %880 = vmatpush1.bf16.msra.mxu0 %v629
  %881 = vmatprep.subr.bf16.mxu0 0
  %882 = vmatpush1.bf16.msra.mxu0 %v630
  %883 = vmatprep.subr.bf16.mxu0 0
  %884 = vmatpush1.bf16.msra.mxu0 %v631
  %885 = vmatprep.subr.bf16.mxu0 0
  %886 = vmatpush1.bf16.msra.mxu0 %v632
  %887 = vmatprep.subr.bf16.mxu0 0
  %888 = vmatpush1.bf16.msra.mxu0 %v633
  %889 = vmatprep.subr.bf16.mxu0 0
  %890 = vmatpush1.bf16.msra.mxu0 %v634
  %891 = vmatprep.subr.bf16.mxu0 0
  %892 = vmatpush1.bf16.msra.mxu0 %v635
  %893 = vmatprep.subr.bf16.mxu0 0
  %894 = vmatpush1.bf16.msra.mxu0 %v636
  %895 = vmatprep.subr.bf16.mxu0 0
  %896 = vmatpush1.bf16.msra.mxu0 %v637
  %897 = vmatprep.mubr.bf16.mxu0 %v257
  %898 = vmatmul.mubr.bf16.gmra.mrb[0].mxu0 %v256
  %v899 = vpop.f32.mrb[0].mxu0
  %v900 = vadd.f32 %v851, %v899
  %v901 = vpop.f32.mrb[0].mxu0
  %v902 = vpop.f32.mrb[0].mxu0
  %v903 = vadd.f32 %v854, %v902
  %v904 = vpop.f32.mrb[0].mxu0
  %905 = vmatprep.mubr.bf16.mxu0 %v266
  %906 = vmatmul.mubr.bf16.gmra.mrb[0].mxu0 %v265
  %v907 = vpop.f32.mrb[0].mxu0
  %v908 = vadd.f32 %v859, %v907
  %v909 = vpop.f32.mrb[0].mxu0
  %v910 = vpop.f32.mrb[0].mxu0
  %v911 = vadd.f32 %v862, %v910
  %v912 = vpop.f32.mrb[0].mxu0
  %913 = vdwg.mxu0
  %914 = vmatprep.subr.bf16.mxu0 0
  %915 = vmatpush1.bf16.msra.mxu0 %v638
  %916 = vmatprep.subr.bf16.mxu0 0
  %917 = vmatpush1.bf16.msra.mxu0 %v639
  %918 = vmatprep.subr.bf16.mxu0 0
  %919 = vmatpush1.bf16.msra.mxu0 %v640
  %920 = vmatprep.subr.bf16.mxu0 0
  %921 = vmatpush1.bf16.msra.mxu0 %v641
  %922 = vmatprep.subr.bf16.mxu0 0
  %923 = vmatpush1.bf16.msra.mxu0 %v642
  %924 = vmatprep.subr.bf16.mxu0 0
  %925 = vmatpush1.bf16.msra.mxu0 %v643
  %926 = vmatprep.subr.bf16.mxu0 0
  %927 = vmatpush1.bf16.msra.mxu0 %v644
  %928 = vmatprep.subr.bf16.mxu0 0
  %929 = vmatpush1.bf16.msra.mxu0 %v645
  %930 = vmatprep.subr.bf16.mxu0 0
  %931 = vmatpush1.bf16.msra.mxu0 0
  %932 = vmatprep.subr.bf16.mxu0 0
  %933 = vmatpush1.bf16.msra.mxu0 0
  %934 = vmatprep.subr.bf16.mxu0 0
  %935 = vmatpush1.bf16.msra.mxu0 0
  %936 = vmatprep.subr.bf16.mxu0 0
  %937 = vmatpush1.bf16.msra.mxu0 0
  %938 = vmatprep.subr.bf16.mxu0 0
  %939 = vmatpush1.bf16.msra.mxu0 0
  %940 = vmatprep.subr.bf16.mxu0 0
  %941 = vmatpush1.bf16.msra.mxu0 0
  %942 = vmatprep.subr.bf16.mxu0 0
  %943 = vmatpush1.bf16.msra.mxu0 0
  %944 = vmatprep.subr.bf16.mxu0 0
  %945 = vmatpush1.bf16.msra.mxu0 0
  %946 = vmatprep.mubr.bf16.mxu0 0
  %947 = vmatmul.mubr.bf16.gmra.mrb[0].mxu0 %v258
  %v948 = vpop.f32.mrb[0].mxu0
  %v949 = vadd.f32 %v900, %v948
  %v950 = vpop.f32.mrb[0].mxu0
  %v951 = vpop.f32.mrb[0].mxu0
  %v952 = vadd.f32 %v903, %v951
  %v953 = vpop.f32.mrb[0].mxu0
  %954 = vmatprep.mubr.bf16.mxu0 0
  %955 = vmatmul.mubr.bf16.gmra.mrb[0].mxu0 %v267
  %v956 = vpop.f32.mrb[0].mxu0
  %v957 = vadd.f32 %v908, %v956
  %v958 = vpop.f32.mrb[0].mxu0
  %v959 = vpop.f32.mrb[0].mxu0
  %v960 = vadd.f32 %v911, %v959
  %v961 = vpop.f32.mrb[0].mxu0
  %962 = vdwg.mxu0
  %v963 = vadd.f32 %v26, %v949
  %v964 = vadd.f32 %v27, %v952
  %v965 = vadd.f32 %v28, %v957
  %v966 = vadd.f32 %v29, %v960
  %967 = vst [vmem:[#allocation2] sm:$0xff] %v963
  %968 = vst [vmem:[#allocation2 + $0x8] sm:$0xff] %v964
  %969 = vst [vmem:[#allocation2 + $0x10] sm:$0xff] %v965
  %970 = vst [vmem:[#allocation2 + $0x18] sm:$0xff] %v966
  // Predicated region
  $region22: #{_lambda_.19} parent=0 // pred_check
    %p971 = pneg %p18
  $region23: #{_lambda_.19} parent=0 // pred_check_branch
    %973 = sbr.rel (%p971) target = $region25
  $region24: #{_lambda_.19} parent=0 // pred_region
    %v974 = vld [vmem:[#allocation2] sm:$0xff]
    %v975 = vld [vmem:[#allocation2 + $0x8] sm:$0xff]
    %v976 = vld [vmem:[#allocation2 + $0x10] sm:$0xff]
    %v977 = vld [vmem:[#allocation2 + $0x18] sm:$0xff]
    %v978 = vld [vmem:[%s2] sm:$0x1]
    %v980 = vlaneseq
    %v981 = vshrl.u32 %v980, 7
    %v982 = vsub.s32 0, %v981
    %v983 = vrot.slane %v978, %v982
    %v985 = vadd.f32 %v974, %v983
    %v986 = vadd.f32 %v975, %v983
    %v987 = vadd.f32 %v976, %v983
    %v988 = vadd.f32 %v977, %v983
    %v989 = vadd.f32 %v985, %v986
    %v990 = vrot.slane %v989, 4
    %v991 = vadd.f32 %v989, %v990
    %v992 = vrot.slane %v991, 2
    %v993 = vadd.f32 %v991, %v992
    %v994 = vrot.slane %v993, 1
    %v995 = vadd.f32 %v993, %v994
    %v996 = vadd.f32 %v987, %v988
    %v997 = vrot.slane %v996, 4
    %v998 = vadd.f32 %v996, %v997
    %v999 = vrot.slane %v998, 2
    %v1000 = vadd.f32 %v998, %v999
    %v1001 = vrot.slane %v1000, 1
    %v1002 = vadd.f32 %v1000, %v1001
    %v1003 = vrcp.pop 16.0
    %v1004 = vmul.f32 %v995, %v1003
    %v1005 = vmul.f32 %v1002, %v1003
    %v1006 = vsub.f32 %v985, %v1004
    %v1007 = vsub.f32 %v986, %v1004
    %v1008 = vsub.f32 %v987, %v1005
    %v1009 = vsub.f32 %v988, %v1005
    %v1010 = vmul.f32 %v1006, %v1006
    %v1011 = vmul.f32 %v1007, %v1007
    %v1012 = vmul.f32 %v1008, %v1008
    %v1013 = vmul.f32 %v1009, %v1009
    %v1014 = vadd.f32 %v1010, %v1011
    %v1015 = vrot.slane %v1014, 4
    %v1016 = vadd.f32 %v1014, %v1015
    %v1017 = vrot.slane %v1016, 2
    %v1018 = vadd.f32 %v1016, %v1017
    %v1019 = vrot.slane %v1018, 1
    %v1020 = vadd.f32 %v1018, %v1019
    %v1021 = vadd.f32 %v1012, %v1013
    %v1022 = vrot.slane %v1021, 4
    %v1023 = vadd.f32 %v1021, %v1022
    %v1024 = vrot.slane %v1023, 2
    %v1025 = vadd.f32 %v1023, %v1024
    %v1026 = vrot.slane %v1025, 1
    %v1027 = vadd.f32 %v1025, %v1026
    %v1028 = vmul.f32 %v1020, %v1003
    %v1029 = vmul.f32 %v1027, %v1003
    %v1030 = vadd.f32 %v1028, 1e-05
    %v1031 = vadd.f32 %v1029, 1e-05
    %v1032 = vrsqrt.pop %v1030
    %v1033 = vrsqrt.pop %v1031
    %v1034 = vmul.f32 %v1006, %v1032
    %v1035 = vmul.f32 %v1007, %v1032
    %v1036 = vmul.f32 %v1008, %v1033
    %v1037 = vmul.f32 %v1009, %v1033
    %v1038 = vld [vmem:[%s3] sm:$0xf]
    %v1039 = vld [vmem:[%s3 + $0x4] sm:$0xf]
    %v1040 = vld [vmem:[%s3 + $0x8] sm:$0xf]
    %v1041 = vld [vmem:[%s3 + $0xc] sm:$0xf]
    %v1042 = vunpack.c.l.bf16 %v1038
    %v1043 = vunpack.c.l.bf16 %v1039
    %v1044 = vunpack.c.l.bf16 %v1040
    %v1045 = vunpack.c.l.bf16 %v1041
    %v1046 = vadd.f32 %v1034, %v1042
    %v1047 = vadd.f32 %v1035, %v1043
    %v1048 = vadd.f32 %v1036, %v1044
    %v1049 = vadd.f32 %v1037, %v1045
    %v1050 = vpack.c.bf16 %v1047, %v1046
    %v1051 = vpack.c.bf16 %v1049, %v1048
    %v1054 = vunpack.c.l.b16 %v1050
    %v1055 = vunpack.c.h.b16 %v1050
    %v1056 = vunpack.c.l.b16 %v1051
    %v1057 = vunpack.c.h.b16 %v1051
    %v1058 = vpack.c.b16 %v1054, %v1054
    %v1059 = vpack.c.b16 %v1055, %v1055
    %v1060 = vpack.c.b16 %v1056, %v1056
    %v1061 = vpack.c.b16 %v1057, %v1057
    %1066 = vst [vmem:[%s4] sm:$0xf] %v1058
    %1067 = vst [vmem:[%s4 + $0x4] sm:$0xf] %v1059
    %1068 = vst [vmem:[%s4 + $0x8] sm:$0xf] %v1060
    %1069 = vst [vmem:[%s4 + $0xc] sm:$0xf] %v1061
  $region25: #{_lambda_.19} parent=0 // pred_fallthru
    _
  // Predicated region
  $region26: #{_lambda_.19} parent=0 // pred_check
    _
  $region27: #{_lambda_.19} parent=0 // pred_check_branch
    %1071 = sbr.rel (0) target = $region29
  $region28: #{_lambda_.19} parent=0 // pred_region
    _
  $region29: #{_lambda_.19} parent=0 // pred_fallthru
    _
  // Predicated region
  $region30: #{_lambda_.19} parent=0 // pred_check
    _
  $region31: #{_lambda_.19} parent=0 // pred_check_branch
    %1073 = sbr.rel (0) target = $region33
  $region32: #{_lambda_.19} parent=0 // pred_region
    _
  $region33: #{_lambda_.19} parent=0 // pred_fallthru
    _

// kernel: _lambda_.18
$region0: #{_lambda_.18}
  #allocation0 [shape = 'u32[]', space=smem, size = 0x4, offset = 0x4, fixed_abs, tag = 'smem constant byte address 0x4 - core index']
  #allocation1 [shape = 'u32[144,128]{1,0:T(1,128)}', space=vmem, size = 0x12000, scoped, tag = 'internal scratch']
  #allocation2 [shape = 'f32[32,128]{1,0:T(8,128)}', space=vmem, size = 0x4000, scoped, tag = 'scratch operand']
  %s0 = inlined_call_operand.vmem [shape: bf16[32,1152], index: 0, kind: input, shape index: {}]
  %s1 = inlined_call_operand.vmem [shape: bf16[1152,128], index: 1, kind: input, shape index: {}]
  %s2 = inlined_call_operand.vmem [shape: f32[1,128], index: 2, kind: input, shape index: {}]
  %s3 = inlined_call_operand.vmem [shape: bf16[32,128], index: 3, kind: output, shape index: {}]
  %s4 = sld [smem:[#allocation0]]
  $region30: #{_lambda_.18} parent=0
    _
  %s6 = ssub.s32 1, %s4
  %s7 = scalar_select 0, %s6, %s4
  // Predicated region
  $region2: #{_lambda_.18} parent=0 // pred_check
    _
  $region3: #{_lambda_.18} parent=0 // pred_check_branch
    %9 = sbr.rel (0) target = $region5
  $region4: #{_lambda_.18} parent=0 // pred_region
    _
  $region5: #{_lambda_.18} parent=0 // pred_fallthru
    _
  // Predicated region
  $region6: #{_lambda_.18} parent=0 // pred_check
    _
  $region7: #{_lambda_.18} parent=0 // pred_check_branch
    %11 = sbr.rel (0) target = $region9
  $region8: #{_lambda_.18} parent=0 // pred_region
    _
  $region9: #{_lambda_.18} parent=0 // pred_fallthru
    _
  // Predicated region
  $region10: #{_lambda_.18} parent=0 // pred_check
    _
  $region11: #{_lambda_.18} parent=0 // pred_check_branch
    %13 = sbr.rel (0) target = $region13
  $region12: #{_lambda_.18} parent=0 // pred_region
    _
  $region13: #{_lambda_.18} parent=0 // pred_fallthru
    _
  %p15 = scmp.eq.s32.totalorder 0, 0
  // Predicated region
  $region14: #{_lambda_.18} parent=0 // pred_check
    %p16 = pneg %p15
  $region15: #{_lambda_.18} parent=0 // pred_check_branch
    %18 = sbr.rel (%p16) target = $region17
  $region16: #{_lambda_.18} parent=0 // pred_region
    %19 = vst [vmem:[#allocation2] sm:$0xff] 0.0
    %20 = vst [vmem:[#allocation2 + $0x8] sm:$0xff] 0.0
    %21 = vst [vmem:[#allocation2 + $0x10] sm:$0xff] 0.0
    %22 = vst [vmem:[#allocation2 + $0x18] sm:$0xff] 0.0
  $region17: #{_lambda_.18} parent=0 // pred_fallthru
    _
  %v23 = vld [vmem:[#allocation2] sm:$0xff]
  %v24 = vld [vmem:[#allocation2 + $0x8] sm:$0xff]
  %v25 = vld [vmem:[#allocation2 + $0x10] sm:$0xff]
  %v26 = vld [vmem:[#allocation2 + $0x18] sm:$0xff]
  %v27 = vld [vmem:[%s0] sm:$0xff]
  %v28 = vld [vmem:[%s0 + $0x8] sm:$0xff]
  %v29 = vld [vmem:[%s0 + $0x10] sm:$0xff]
  %v30 = vld [vmem:[%s0 + $0x18] sm:$0xff]
  %v31 = vld [vmem:[%s0 + $0x20] sm:$0xf]
  %v32 = vld [vmem:[%s0 + $0x24] sm:$0xff]
  %v33 = vld [vmem:[%s0 + $0x2c] sm:$0xff]
  %v34 = vld [vmem:[%s0 + $0x34] sm:$0xff]
  %v35 = vld [vmem:[%s0 + $0x3c] sm:$0xff]
  %v36 = vld [vmem:[%s0 + $0x44] sm:$0xf]
  %v37 = vld [vmem:[%s0 + $0x48] sm:$0xff]
  %v38 = vld [vmem:[%s0 + $0x50] sm:$0xff]
  %v39 = vld [vmem:[%s0 + $0x58] sm:$0xff]
  %v40 = vld [vmem:[%s0 + $0x60] sm:$0xff]
  %v41 = vld [vmem:[%s0 + $0x68] sm:$0xf]
  %v42 = vld [vmem:[%s0 + $0x6c] sm:$0xff]
  %v43 = vld [vmem:[%s0 + $0x74] sm:$0xff]
  %v44 = vld [vmem:[%s0 + $0x7c] sm:$0xff]
  %v45 = vld [vmem:[%s0 + $0x84] sm:$0xff]
  %v46 = vld [vmem:[%s0 + $0x8c] sm:$0xf]
  %v47 = vld [vmem:[%s1] sm:$0xf]
  %v48 = vld [vmem:[%s1 + $0x4] sm:$0xf]
  %v49 = vld [vmem:[%s1 + $0x8] sm:$0xf]
  %v50 = vld [vmem:[%s1 + $0xc] sm:$0xf]
  %v51 = vld [vmem:[%s1 + $0x10] sm:$0xf]
  %v52 = vld [vmem:[%s1 + $0x14] sm:$0xf]
  %v53 = vld [vmem:[%s1 + $0x18] sm:$0xf]
  %v54 = vld [vmem:[%s1 + $0x1c] sm:$0xf]
  %v55 = vld [vmem:[%s1 + $0x20] sm:$0xf]
  %v56 = vld [vmem:[%s1 + $0x24] sm:$0xf]
  %v57 = vld [vmem:[%s1 + $0x28] sm:$0xf]
  %v58 = vld [vmem:[%s1 + $0x2c] sm:$0xf]
  %v59 = vld [vmem:[%s1 + $0x30] sm:$0xf]
  %v60 = vld [vmem:[%s1 + $0x34] sm:$0xf]
  %v61 = vld [vmem:[%s1 + $0x38] sm:$0xf]
  %v62 = vld [vmem:[%s1 + $0x3c] sm:$0xf]
  %v63 = vld [vmem:[%s1 + $0x40] sm:$0xf]
  %v64 = vld [vmem:[%s1 + $0x44] sm:$0xf]
  %v65 = vld [vmem:[%s1 + $0x48] sm:$0xf]
  %v66 = vld [vmem:[%s1 + $0x4c] sm:$0xf]
  %v67 = vld [vmem:[%s1 + $0x50] sm:$0xf]
  %v68 = vld [vmem:[%s1 + $0x54] sm:$0xf]
  %v69 = vld [vmem:[%s1 + $0x58] sm:$0xf]
  %v70 = vld [vmem:[%s1 + $0x5c] sm:$0xf]
  %v71 = vld [vmem:[%s1 + $0x60] sm:$0xf]
  %v72 = vld [vmem:[%s1 + $0x64] sm:$0xf]
  %v73 = vld [vmem:[%s1 + $0x68] sm:$0xf]
  %v74 = vld [vmem:[%s1 + $0x6c] sm:$0xf]
  %v75 = vld [vmem:[%s1 + $0x70] sm:$0xf]
  %v76 = vld [vmem:[%s1 + $0x74] sm:$0xf]
  %v77 = vld [vmem:[%s1 + $0x78] sm:$0xf]
  %v78 = vld [vmem:[%s1 + $0x7c] sm:$0xf]
  %v79 = vld [vmem:[%s1 + $0x80] sm:$0xf]
  %v80 = vld [vmem:[%s1 + $0x84] sm:$0xf]
  %v81 = vld [vmem:[%s1 + $0x88] sm:$0xf]
  %v82 = vld [vmem:[%s1 + $0x8c] sm:$0xf]
  %v83 = vld [vmem:[%s1 + $0x90] sm:$0xf]
  %v84 = vld [vmem:[%s1 + $0x94] sm:$0xf]
  %v85 = vld [vmem:[%s1 + $0x98] sm:$0xf]
  %v86 = vld [vmem:[%s1 + $0x9c] sm:$0xf]
  %v87 = vld [vmem:[%s1 + $0xa0] sm:$0xf]
  %v88 = vld [vmem:[%s1 + $0xa4] sm:$0xf]
  %v89 = vld [vmem:[%s1 + $0xa8] sm:$0xf]
  %v90 = vld [vmem:[%s1 + $0xac] sm:$0xf]
  %v91 = vld [vmem:[%s1 + $0xb0] sm:$0xf]
  %v92 = vld [vmem:[%s1 + $0xb4] sm:$0xf]
  %v93 = vld [vmem:[%s1 + $0xb8] sm:$0xf]
  %v94 = vld [vmem:[%s1 + $0xbc] sm:$0xf]
  %v95 = vld [vmem:[%s1 + $0xc0] sm:$0xf]
  %v96 = vld [vmem:[%s1 + $0xc4] sm:$0xf]
  %v97 = vld [vmem:[%s1 + $0xc8] sm:$0xf]
  %v98 = vld [vmem:[%s1 + $0xcc] sm:$0xf]
  %v99 = vld [vmem:[%s1 + $0xd0] sm:$0xf]
  %v100 = vld [vmem:[%s1 + $0xd4] sm:$0xf]
  %v101 = vld [vmem:[%s1 + $0xd8] sm:$0xf]
  %v102 = vld [vmem:[%s1 + $0xdc] sm:$0xf]
  %v103 = vld [vmem:[%s1 + $0xe0] sm:$0xf]
  %v104 = vld [vmem:[%s1 + $0xe4] sm:$0xf]
  %v105 = vld [vmem:[%s1 + $0xe8] sm:$0xf]
  %v106 = vld [vmem:[%s1 + $0xec] sm:$0xf]
  %v107 = vld [vmem:[%s1 + $0xf0] sm:$0xf]
  %v108 = vld [vmem:[%s1 + $0xf4] sm:$0xf]
  %v109 = vld [vmem:[%s1 + $0xf8] sm:$0xf]
  %v110 = vld [vmem:[%s1 + $0xfc] sm:$0xf]
  %v111 = vld [vmem:[%s1 + $0x100] sm:$0xf]
  %v112 = vld [vmem:[%s1 + $0x104] sm:$0xf]
  %v113 = vld [vmem:[%s1 + $0x108] sm:$0xf]
  %v114 = vld [vmem:[%s1 + $0x10c] sm:$0xf]
  %v115 = vld [vmem:[%s1 + $0x110] sm:$0xf]
  %v116 = vld [vmem:[%s1 + $0x114] sm:$0xf]
  %v117 = vld [vmem:[%s1 + $0x118] sm:$0xf]
  %v118 = vld [vmem:[%s1 + $0x11c] sm:$0xf]
  %v119 = vld [vmem:[%s1 + $0x120] sm:$0xf]
  %v120 = vld [vmem:[%s1 + $0x124] sm:$0xf]
  %v121 = vld [vmem:[%s1 + $0x128] sm:$0xf]
  %v122 = vld [vmem:[%s1 + $0x12c] sm:$0xf]
  %v123 = vld [vmem:[%s1 + $0x130] sm:$0xf]
  %v124 = vld [vmem:[%s1 + $0x134] sm:$0xf]
  %v125 = vld [vmem:[%s1 + $0x138] sm:$0xf]
  %v126 = vld [vmem:[%s1 + $0x13c] sm:$0xf]
  %v127 = vld [vmem:[%s1 + $0x140] sm:$0xf]
  %v128 = vld [vmem:[%s1 + $0x144] sm:$0xf]
  %v129 = vld [vmem:[%s1 + $0x148] sm:$0xf]
  %v130 = vld [vmem:[%s1 + $0x14c] sm:$0xf]
  %v131 = vld [vmem:[%s1 + $0x150] sm:$0xf]
  %v132 = vld [vmem:[%s1 + $0x154] sm:$0xf]
  %v133 = vld [vmem:[%s1 + $0x158] sm:$0xf]
  %v134 = vld [vmem:[%s1 + $0x15c] sm:$0xf]
  %v135 = vld [vmem:[%s1 + $0x160] sm:$0xf]
  %v136 = vld [vmem:[%s1 + $0x164] sm:$0xf]
  %v137 = vld [vmem:[%s1 + $0x168] sm:$0xf]
  %v138 = vld [vmem:[%s1 + $0x16c] sm:$0xf]
  %v139 = vld [vmem:[%s1 + $0x170] sm:$0xf]
  %v140 = vld [vmem:[%s1 + $0x174] sm:$0xf]
  %v141 = vld [vmem:[%s1 + $0x178] sm:$0xf]
  %v142 = vld [vmem:[%s1 + $0x17c] sm:$0xf]
  %v143 = vld [vmem:[%s1 + $0x180] sm:$0xf]
  %v144 = vld [vmem:[%s1 + $0x184] sm:$0xf]
  %v145 = vld [vmem:[%s1 + $0x188] sm:$0xf]
  %v146 = vld [vmem:[%s1 + $0x18c] sm:$0xf]
  %v147 = vld [vmem:[%s1 + $0x190] sm:$0xf]
  %v148 = vld [vmem:[%s1 + $0x194] sm:$0xf]
  %v149 = vld [vmem:[%s1 + $0x198] sm:$0xf]
  %v150 = vld [vmem:[%s1 + $0x19c] sm:$0xf]
  %v151 = vld [vmem:[%s1 + $0x1a0] sm:$0xf]
  %v152 = vld [vmem:[%s1 + $0x1a4] sm:$0xf]
  %v153 = vld [vmem:[%s1 + $0x1a8] sm:$0xf]
  %v154 = vld [vmem:[%s1 + $0x1ac] sm:$0xf]
  %v155 = vld [vmem:[%s1 + $0x1b0] sm:$0xf]
  %v156 = vld [vmem:[%s1 + $0x1b4] sm:$0xf]
  %v157 = vld [vmem:[%s1 + $0x1b8] sm:$0xf]
  %v158 = vld [vmem:[%s1 + $0x1bc] sm:$0xf]
  %v159 = vld [vmem:[%s1 + $0x1c0] sm:$0xf]
  %v160 = vld [vmem:[%s1 + $0x1c4] sm:$0xf]
  %v161 = vld [vmem:[%s1 + $0x1c8] sm:$0xf]
  %v162 = vld [vmem:[%s1 + $0x1cc] sm:$0xf]
  %v163 = vld [vmem:[%s1 + $0x1d0] sm:$0xf]
  %v164 = vld [vmem:[%s1 + $0x1d4] sm:$0xf]
  %v165 = vld [vmem:[%s1 + $0x1d8] sm:$0xf]
  %v166 = vld [vmem:[%s1 + $0x1dc] sm:$0xf]
  %v167 = vld [vmem:[%s1 + $0x1e0] sm:$0xf]
  %v168 = vld [vmem:[%s1 + $0x1e4] sm:$0xf]
  %v169 = vld [vmem:[%s1 + $0x1e8] sm:$0xf]
  %v170 = vld [vmem:[%s1 + $0x1ec] sm:$0xf]
  %v171 = vld [vmem:[%s1 + $0x1f0] sm:$0xf]
  %v172 = vld [vmem:[%s1 + $0x1f4] sm:$0xf]
  %v173 = vld [vmem:[%s1 + $0x1f8] sm:$0xf]
  %v174 = vld [vmem:[%s1 + $0x1fc] sm:$0xf]
  %v175 = vld [vmem:[%s1 + $0x200] sm:$0xf]
  %v176 = vld [vmem:[%s1 + $0x204] sm:$0xf]
  %v177 = vld [vmem:[%s1 + $0x208] sm:$0xf]
  %v178 = vld [vmem:[%s1 + $0x20c] sm:$0xf]
  %v179 = vld [vmem:[%s1 + $0x210] sm:$0xf]
  %v180 = vld [vmem:[%s1 + $0x214] sm:$0xf]
  %v181 = vld [vmem:[%s1 + $0x218] sm:$0xf]
  %v182 = vld [vmem:[%s1 + $0x21c] sm:$0xf]
  %v183 = vld [vmem:[%s1 + $0x220] sm:$0xf]
  %v184 = vld [vmem:[%s1 + $0x224] sm:$0xf]
  %v185 = vld [vmem:[%s1 + $0x228] sm:$0xf]
  %v186 = vld [vmem:[%s1 + $0x22c] sm:$0xf]
  %v187 = vld [vmem:[%s1 + $0x230] sm:$0xf]
  %v188 = vld [vmem:[%s1 + $0x234] sm:$0xf]
  %v189 = vld [vmem:[%s1 + $0x238] sm:$0xf]
  %v190 = vld [vmem:[%s1 + $0x23c] sm:$0xf]
  %v211 = vunpack.c.l.b16 %v27
  %v212 = vunpack.c.h.b16 %v27
  %v213 = vunpack.c.l.b16 %v28
  %v214 = vunpack.c.h.b16 %v28
  %v215 = vunpack.c.l.b16 %v29
  %v216 = vunpack.c.h.b16 %v29
  %v217 = vunpack.c.l.b16 %v30
  %v218 = vunpack.c.h.b16 %v30
  %v219 = vunpack.c.l.b16 %v31
  %v220 = vunpack.c.l.b16 %v32
  %v221 = vunpack.c.h.b16 %v32
  %v222 = vunpack.c.l.b16 %v33
  %v223 = vunpack.c.h.b16 %v33
  %v224 = vunpack.c.l.b16 %v34
  %v225 = vunpack.c.h.b16 %v34
  %v226 = vunpack.c.l.b16 %v35
  %v227 = vunpack.c.h.b16 %v35
  %v228 = vunpack.c.l.b16 %v36
  %v229 = vunpack.c.l.b16 %v37
  %v230 = vunpack.c.h.b16 %v37
  %v231 = vunpack.c.l.b16 %v38
  %v232 = vunpack.c.h.b16 %v38
  %v233 = vunpack.c.l.b16 %v39
  %v234 = vunpack.c.h.b16 %v39
  %v235 = vunpack.c.l.b16 %v40
  %v236 = vunpack.c.h.b16 %v40
  %v237 = vunpack.c.l.b16 %v41
  %v238 = vunpack.c.l.b16 %v42
  %v239 = vunpack.c.h.b16 %v42
  %v240 = vunpack.c.l.b16 %v43
  %v241 = vunpack.c.h.b16 %v43
  %v242 = vunpack.c.l.b16 %v44
  %v243 = vunpack.c.h.b16 %v44
  %v244 = vunpack.c.l.b16 %v45
  %v245 = vunpack.c.h.b16 %v45
  %v246 = vunpack.c.l.b16 %v46
  %v247 = vpack.c.b16 %v220, %v211
  %v248 = vpack.c.b16 %v221, %v212
  %v249 = vpack.c.b16 %v222, %v213
  %v250 = vpack.c.b16 %v223, %v214
  %v251 = vpack.c.b16 %v224, %v215
  %v252 = vpack.c.b16 %v225, %v216
  %v253 = vpack.c.b16 %v226, %v217
  %v254 = vpack.c.b16 %v227, %v218
  %v255 = vpack.c.b16 %v228, %v219
  %v256 = vpack.c.b16 %v238, %v229
  %v257 = vpack.c.b16 %v239, %v230
  %v258 = vpack.c.b16 %v240, %v231
  %v259 = vpack.c.b16 %v241, %v232
  %v260 = vpack.c.b16 %v242, %v233
  %v261 = vpack.c.b16 %v243, %v234
  %v262 = vpack.c.b16 %v244, %v235
  %v263 = vpack.c.b16 %v245, %v236
  %v264 = vpack.c.b16 %v246, %v237
  %v427 = vunpack.c.l.b16 %v47
  %v428 = vunpack.c.l.b16 %v48
  %v429 = vunpack.c.l.b16 %v49
  %v430 = vunpack.c.l.b16 %v50
  %v431 = vunpack.c.l.b16 %v51
  %v432 = vunpack.c.l.b16 %v52
  %v433 = vunpack.c.l.b16 %v53
  %v434 = vunpack.c.l.b16 %v54
  %v435 = vunpack.c.l.b16 %v55
  %v436 = vunpack.c.l.b16 %v56
  %v437 = vunpack.c.l.b16 %v57
  %v438 = vunpack.c.l.b16 %v58
  %v439 = vunpack.c.l.b16 %v59
  %v440 = vunpack.c.l.b16 %v60
  %v441 = vunpack.c.l.b16 %v61
  %v442 = vunpack.c.l.b16 %v62
  %v443 = vunpack.c.l.b16 %v63
  %v444 = vunpack.c.l.b16 %v64
  %v445 = vunpack.c.l.b16 %v65
  %v446 = vunpack.c.l.b16 %v66
  %v447 = vunpack.c.l.b16 %v67
  %v448 = vunpack.c.l.b16 %v68
  %v449 = vunpack.c.l.b16 %v69
  %v450 = vunpack.c.l.b16 %v70
  %v451 = vunpack.c.l.b16 %v71
  %v452 = vunpack.c.l.b16 %v72
  %v453 = vunpack.c.l.b16 %v73
  %v454 = vunpack.c.l.b16 %v74
  %v455 = vunpack.c.l.b16 %v75
  %v456 = vunpack.c.l.b16 %v76
  %v457 = vunpack.c.l.b16 %v77
  %v458 = vunpack.c.l.b16 %v78
  %v459 = vunpack.c.l.b16 %v79
  %v460 = vunpack.c.l.b16 %v80
  %v461 = vunpack.c.l.b16 %v81
  %v462 = vunpack.c.l.b16 %v82
  %v463 = vunpack.c.l.b16 %v83
  %v464 = vunpack.c.l.b16 %v84
  %v465 = vunpack.c.l.b16 %v85
  %v466 = vunpack.c.l.b16 %v86
  %v467 = vunpack.c.l.b16 %v87
  %v468 = vunpack.c.l.b16 %v88
  %v469 = vunpack.c.l.b16 %v89
  %v470 = vunpack.c.l.b16 %v90
  %v471 = vunpack.c.l.b16 %v91
  %v472 = vunpack.c.l.b16 %v92
  %v473 = vunpack.c.l.b16 %v93
  %v474 = vunpack.c.l.b16 %v94
  %v475 = vunpack.c.l.b16 %v95
  %v476 = vunpack.c.l.b16 %v96
  %v477 = vunpack.c.l.b16 %v97
  %v478 = vunpack.c.l.b16 %v98
  %v479 = vunpack.c.l.b16 %v99
  %v480 = vunpack.c.l.b16 %v100
  %v481 = vunpack.c.l.b16 %v101
  %v482 = vunpack.c.l.b16 %v102
  %v483 = vunpack.c.l.b16 %v103
  %v484 = vunpack.c.l.b16 %v104
  %v485 = vunpack.c.l.b16 %v105
  %v486 = vunpack.c.l.b16 %v106
  %v487 = vunpack.c.l.b16 %v107
  %v488 = vunpack.c.l.b16 %v108
  %v489 = vunpack.c.l.b16 %v109
  %v490 = vunpack.c.l.b16 %v110
  %v491 = vunpack.c.l.b16 %v111
  %v492 = vunpack.c.l.b16 %v112
  %v493 = vunpack.c.l.b16 %v113
  %v494 = vunpack.c.l.b16 %v114
  %v495 = vunpack.c.l.b16 %v115
  %v496 = vunpack.c.l.b16 %v116
  %v497 = vunpack.c.l.b16 %v117
  %v498 = vunpack.c.l.b16 %v118
  %v499 = vunpack.c.l.b16 %v119
  %v500 = vunpack.c.l.b16 %v120
  %v501 = vunpack.c.l.b16 %v121
  %v502 = vunpack.c.l.b16 %v122
  %v503 = vunpack.c.l.b16 %v123
  %v504 = vunpack.c.l.b16 %v124
  %v505 = vunpack.c.l.b16 %v125
  %v506 = vunpack.c.l.b16 %v126
  %v507 = vunpack.c.l.b16 %v127
  %v508 = vunpack.c.l.b16 %v128
  %v509 = vunpack.c.l.b16 %v129
  %v510 = vunpack.c.l.b16 %v130
  %v511 = vunpack.c.l.b16 %v131
  %v512 = vunpack.c.l.b16 %v132
  %v513 = vunpack.c.l.b16 %v133
  %v514 = vunpack.c.l.b16 %v134
  %v515 = vunpack.c.l.b16 %v135
  %v516 = vunpack.c.l.b16 %v136
  %v517 = vunpack.c.l.b16 %v137
  %v518 = vunpack.c.l.b16 %v138
  %v519 = vunpack.c.l.b16 %v139
  %v520 = vunpack.c.l.b16 %v140
  %v521 = vunpack.c.l.b16 %v141
  %v522 = vunpack.c.l.b16 %v142
  %v523 = vunpack.c.l.b16 %v143
  %v524 = vunpack.c.l.b16 %v144
  %v525 = vunpack.c.l.b16 %v145
  %v526 = vunpack.c.l.b16 %v146
  %v527 = vunpack.c.l.b16 %v147
  %v528 = vunpack.c.l.b16 %v148
  %v529 = vunpack.c.l.b16 %v149
  %v530 = vunpack.c.l.b16 %v150
  %v531 = vunpack.c.l.b16 %v151
  %v532 = vunpack.c.l.b16 %v152
  %v533 = vunpack.c.l.b16 %v153
  %v534 = vunpack.c.l.b16 %v154
  %v535 = vunpack.c.l.b16 %v155
  %v536 = vunpack.c.l.b16 %v156
  %v537 = vunpack.c.l.b16 %v157
  %v538 = vunpack.c.l.b16 %v158
  %v539 = vunpack.c.l.b16 %v159
  %v540 = vunpack.c.l.b16 %v160
  %v541 = vunpack.c.l.b16 %v161
  %v542 = vunpack.c.l.b16 %v162
  %v543 = vunpack.c.l.b16 %v163
  %v544 = vunpack.c.l.b16 %v164
  %v545 = vunpack.c.l.b16 %v165
  %v546 = vunpack.c.l.b16 %v166
  %v547 = vunpack.c.l.b16 %v167
  %v548 = vunpack.c.l.b16 %v168
  %v549 = vunpack.c.l.b16 %v169
  %v550 = vunpack.c.l.b16 %v170
  %v551 = vunpack.c.l.b16 %v171
  %v552 = vunpack.c.l.b16 %v172
  %v553 = vunpack.c.l.b16 %v173
  %v554 = vunpack.c.l.b16 %v174
  %v555 = vunpack.c.l.b16 %v175
  %v556 = vunpack.c.l.b16 %v176
  %v557 = vunpack.c.l.b16 %v177
  %v558 = vunpack.c.l.b16 %v178
  %v559 = vunpack.c.l.b16 %v179
  %v560 = vunpack.c.l.b16 %v180
  %v561 = vunpack.c.l.b16 %v181
  %v562 = vunpack.c.l.b16 %v182
  %v563 = vunpack.c.l.b16 %v183
  %v564 = vunpack.c.l.b16 %v184
  %v565 = vunpack.c.l.b16 %v185
  %v566 = vunpack.c.l.b16 %v186
  %v567 = vunpack.c.l.b16 %v187
  %v568 = vunpack.c.l.b16 %v188
  %v569 = vunpack.c.l.b16 %v189
  %v570 = vunpack.c.l.b16 %v190
  %v571 = vpack.c.b16 %v428, %v427
  %v572 = vpack.c.b16 %v430, %v429
  %v573 = vpack.c.b16 %v432, %v431
  %v574 = vpack.c.b16 %v434, %v433
  %v575 = vpack.c.b16 %v436, %v435
  %v576 = vpack.c.b16 %v438, %v437
  %v577 = vpack.c.b16 %v440, %v439
  %v578 = vpack.c.b16 %v442, %v441
  %v579 = vpack.c.b16 %v444, %v443
  %v580 = vpack.c.b16 %v446, %v445
  %v581 = vpack.c.b16 %v448, %v447
  %v582 = vpack.c.b16 %v450, %v449
  %v583 = vpack.c.b16 %v452, %v451
  %v584 = vpack.c.b16 %v454, %v453
  %v585 = vpack.c.b16 %v456, %v455
  %v586 = vpack.c.b16 %v458, %v457
  %v587 = vpack.c.b16 %v460, %v459
  %v588 = vpack.c.b16 %v462, %v461
  %v589 = vpack.c.b16 %v464, %v463
  %v590 = vpack.c.b16 %v466, %v465
  %v591 = vpack.c.b16 %v468, %v467
  %v592 = vpack.c.b16 %v470, %v469
  %v593 = vpack.c.b16 %v472, %v471
  %v594 = vpack.c.b16 %v474, %v473
  %v595 = vpack.c.b16 %v476, %v475
  %v596 = vpack.c.b16 %v478, %v477
  %v597 = vpack.c.b16 %v480, %v479
  %v598 = vpack.c.b16 %v482, %v481
  %v599 = vpack.c.b16 %v484, %v483
  %v600 = vpack.c.b16 %v486, %v485
  %v601 = vpack.c.b16 %v488, %v487
  %v602 = vpack.c.b16 %v490, %v489
  %v603 = vpack.c.b16 %v492, %v491
  %v604 = vpack.c.b16 %v494, %v493
  %v605 = vpack.c.b16 %v496, %v495
  %v606 = vpack.c.b16 %v498, %v497
  %v607 = vpack.c.b16 %v500, %v499
  %v608 = vpack.c.b16 %v502, %v501
  %v609 = vpack.c.b16 %v504, %v503
  %v610 = vpack.c.b16 %v506, %v505
  %v611 = vpack.c.b16 %v508, %v507
  %v612 = vpack.c.b16 %v510, %v509
  %v613 = vpack.c.b16 %v512, %v511
  %v614 = vpack.c.b16 %v514, %v513
  %v615 = vpack.c.b16 %v516, %v515
  %v616 = vpack.c.b16 %v518, %v517
  %v617 = vpack.c.b16 %v520, %v519
  %v618 = vpack.c.b16 %v522, %v521
  %v619 = vpack.c.b16 %v524, %v523
  %v620 = vpack.c.b16 %v526, %v525
  %v621 = vpack.c.b16 %v528, %v527
  %v622 = vpack.c.b16 %v530, %v529
  %v623 = vpack.c.b16 %v532, %v531
  %v624 = vpack.c.b16 %v534, %v533
  %v625 = vpack.c.b16 %v536, %v535
  %v626 = vpack.c.b16 %v538, %v537
  %v627 = vpack.c.b16 %v540, %v539
  %v628 = vpack.c.b16 %v542, %v541
  %v629 = vpack.c.b16 %v544, %v543
  %v630 = vpack.c.b16 %v546, %v545
  %v631 = vpack.c.b16 %v548, %v547
  %v632 = vpack.c.b16 %v550, %v549
  %v633 = vpack.c.b16 %v552, %v551
  %v634 = vpack.c.b16 %v554, %v553
  %v635 = vpack.c.b16 %v556, %v555
  %v636 = vpack.c.b16 %v558, %v557
  %v637 = vpack.c.b16 %v560, %v559
  %v638 = vpack.c.b16 %v562, %v561
  %v639 = vpack.c.b16 %v564, %v563
  %v640 = vpack.c.b16 %v566, %v565
  %v641 = vpack.c.b16 %v568, %v567
  %v642 = vpack.c.b16 %v570, %v569
  %715 = vmatprep.subr.bf16.mxu0 0
  %716 = vmatpush1.bf16.msra.mxu0 %v571
  %717 = vmatprep.subr.bf16.mxu0 0
  %718 = vmatpush1.bf16.msra.mxu0 %v572
  %719 = vmatprep.subr.bf16.mxu0 0
  %720 = vmatpush1.bf16.msra.mxu0 %v573
  %721 = vmatprep.subr.bf16.mxu0 0
  %722 = vmatpush1.bf16.msra.mxu0 %v574
  %723 = vmatprep.subr.bf16.mxu0 0
  %724 = vmatpush1.bf16.msra.mxu0 %v575
  %725 = vmatprep.subr.bf16.mxu0 0
  %726 = vmatpush1.bf16.msra.mxu0 %v576
  %727 = vmatprep.subr.bf16.mxu0 0
  %728 = vmatpush1.bf16.msra.mxu0 %v577
  %729 = vmatprep.subr.bf16.mxu0 0
  %730 = vmatpush1.bf16.msra.mxu0 %v578
  %731 = vmatprep.subr.bf16.mxu0 0
  %732 = vmatpush1.bf16.msra.mxu0 %v579
  %733 = vmatprep.subr.bf16.mxu0 0
  %734 = vmatpush1.bf16.msra.mxu0 %v580
  %735 = vmatprep.subr.bf16.mxu0 0
  %736 = vmatpush1.bf16.msra.mxu0 %v581
  %737 = vmatprep.subr.bf16.mxu0 0
  %738 = vmatpush1.bf16.msra.mxu0 %v582
  %739 = vmatprep.subr.bf16.mxu0 0
  %740 = vmatpush1.bf16.msra.mxu0 %v583
  %741 = vmatprep.subr.bf16.mxu0 0
  %742 = vmatpush1.bf16.msra.mxu0 %v584
  %743 = vmatprep.subr.bf16.mxu0 0
  %744 = vmatpush1.bf16.msra.mxu0 %v585
  %745 = vmatprep.subr.bf16.mxu0 0
  %746 = vmatpush1.bf16.msra.mxu0 %v586
  %747 = vmatprep.mubr.bf16.mxu0 %v248
  %748 = vmatmul.mubr.bf16.gmra.mrb[0].mxu0 %v247
  %v749 = vpop.f32.mrb[0].mxu0
  %v750 = vadd.f32 0.0, %v749
  %v751 = vpop.f32.mrb[0].mxu0
  %v752 = vpop.f32.mrb[0].mxu0
  %v753 = vadd.f32 0.0, %v752
  %v754 = vpop.f32.mrb[0].mxu0
  %755 = vmatprep.mubr.bf16.mxu0 %v257
  %756 = vmatmul.mubr.bf16.gmra.mrb[0].mxu0 %v256
  %v757 = vpop.f32.mrb[0].mxu0
  %v758 = vadd.f32 0.0, %v757
  %v759 = vpop.f32.mrb[0].mxu0
  %v760 = vpop.f32.mrb[0].mxu0
  %v761 = vadd.f32 0.0, %v760
  %v762 = vpop.f32.mrb[0].mxu0
  %763 = vdwg.mxu0
  %764 = vmatprep.subr.bf16.mxu0 0
  %765 = vmatpush1.bf16.msra.mxu0 %v587
  %766 = vmatprep.subr.bf16.mxu0 0
  %767 = vmatpush1.bf16.msra.mxu0 %v588
  %768 = vmatprep.subr.bf16.mxu0 0
  %769 = vmatpush1.bf16.msra.mxu0 %v589
  %770 = vmatprep.subr.bf16.mxu0 0
  %771 = vmatpush1.bf16.msra.mxu0 %v590
  %772 = vmatprep.subr.bf16.mxu0 0
  %773 = vmatpush1.bf16.msra.mxu0 %v591
  %774 = vmatprep.subr.bf16.mxu0 0
  %775 = vmatpush1.bf16.msra.mxu0 %v592
  %776 = vmatprep.subr.bf16.mxu0 0
  %777 = vmatpush1.bf16.msra.mxu0 %v593
  %778 = vmatprep.subr.bf16.mxu0 0
  %779 = vmatpush1.bf16.msra.mxu0 %v594
  %780 = vmatprep.subr.bf16.mxu0 0
  %781 = vmatpush1.bf16.msra.mxu0 %v595
  %782 = vmatprep.subr.bf16.mxu0 0
  %783 = vmatpush1.bf16.msra.mxu0 %v596
  %784 = vmatprep.subr.bf16.mxu0 0
  %785 = vmatpush1.bf16.msra.mxu0 %v597
  %786 = vmatprep.subr.bf16.mxu0 0
  %787 = vmatpush1.bf16.msra.mxu0 %v598
  %788 = vmatprep.subr.bf16.mxu0 0
  %789 = vmatpush1.bf16.msra.mxu0 %v599
  %790 = vmatprep.subr.bf16.mxu0 0
  %791 = vmatpush1.bf16.msra.mxu0 %v600
  %792 = vmatprep.subr.bf16.mxu0 0
  %793 = vmatpush1.bf16.msra.mxu0 %v601
  %794 = vmatprep.subr.bf16.mxu0 0
  %795 = vmatpush1.bf16.msra.mxu0 %v602
  %796 = vmatprep.mubr.bf16.mxu0 %v250
  %797 = vmatmul.mubr.bf16.gmra.mrb[0].mxu0 %v249
  %v798 = vpop.f32.mrb[0].mxu0
  %v799 = vadd.f32 %v750, %v798
  %v800 = vpop.f32.mrb[0].mxu0
  %v801 = vpop.f32.mrb[0].mxu0
  %v802 = vadd.f32 %v753, %v801
  %v803 = vpop.f32.mrb[0].mxu0
  %804 = vmatprep.mubr.bf16.mxu0 %v259
  %805 = vmatmul.mubr.bf16.gmra.mrb[0].mxu0 %v258
  %v806 = vpop.f32.mrb[0].mxu0
  %v807 = vadd.f32 %v758, %v806
  %v808 = vpop.f32.mrb[0].mxu0
  %v809 = vpop.f32.mrb[0].mxu0
  %v810 = vadd.f32 %v761, %v809
  %v811 = vpop.f32.mrb[0].mxu0
  %812 = vdwg.mxu0
  %813 = vmatprep.subr.bf16.mxu0 0
  %814 = vmatpush1.bf16.msra.mxu0 %v603
  %815 = vmatprep.subr.bf16.mxu0 0
  %816 = vmatpush1.bf16.msra.mxu0 %v604
  %817 = vmatprep.subr.bf16.mxu0 0
  %818 = vmatpush1.bf16.msra.mxu0 %v605
  %819 = vmatprep.subr.bf16.mxu0 0
  %820 = vmatpush1.bf16.msra.mxu0 %v606
  %821 = vmatprep.subr.bf16.mxu0 0
  %822 = vmatpush1.bf16.msra.mxu0 %v607
  %823 = vmatprep.subr.bf16.mxu0 0
  %824 = vmatpush1.bf16.msra.mxu0 %v608
  %825 = vmatprep.subr.bf16.mxu0 0
  %826 = vmatpush1.bf16.msra.mxu0 %v609
  %827 = vmatprep.subr.bf16.mxu0 0
  %828 = vmatpush1.bf16.msra.mxu0 %v610
  %829 = vmatprep.subr.bf16.mxu0 0
  %830 = vmatpush1.bf16.msra.mxu0 %v611
  %831 = vmatprep.subr.bf16.mxu0 0
  %832 = vmatpush1.bf16.msra.mxu0 %v612
  %833 = vmatprep.subr.bf16.mxu0 0
  %834 = vmatpush1.bf16.msra.mxu0 %v613
  %835 = vmatprep.subr.bf16.mxu0 0
  %836 = vmatpush1.bf16.msra.mxu0 %v614
  %837 = vmatprep.subr.bf16.mxu0 0
  %838 = vmatpush1.bf16.msra.mxu0 %v615
  %839 = vmatprep.subr.bf16.mxu0 0
  %840 = vmatpush1.bf16.msra.mxu0 %v616
  %841 = vmatprep.subr.bf16.mxu0 0
  %842 = vmatpush1.bf16.msra.mxu0 %v617
  %843 = vmatprep.subr.bf16.mxu0 0
  %844 = vmatpush1.bf16.msra.mxu0 %v618
  %845 = vmatprep.mubr.bf16.mxu0 %v252
  %846 = vmatmul.mubr.bf16.gmra.mrb[0].mxu0 %v251
  %v847 = vpop.f32.mrb[0].mxu0
  %v848 = vadd.f32 %v799, %v847
  %v849 = vpop.f32.mrb[0].mxu0
  %v850 = vpop.f32.mrb[0].mxu0
  %v851 = vadd.f32 %v802, %v850
  %v852 = vpop.f32.mrb[0].mxu0
  %853 = vmatprep.mubr.bf16.mxu0 %v261
  %854 = vmatmul.mubr.bf16.gmra.mrb[0].mxu0 %v260
  %v855 = vpop.f32.mrb[0].mxu0
  %v856 = vadd.f32 %v807, %v855
  %v857 = vpop.f32.mrb[0].mxu0
  %v858 = vpop.f32.mrb[0].mxu0
  %v859 = vadd.f32 %v810, %v858
  %v860 = vpop.f32.mrb[0].mxu0
  %861 = vdwg.mxu0
  %862 = vmatprep.subr.bf16.mxu0 0
  %863 = vmatpush1.bf16.msra.mxu0 %v619
  %864 = vmatprep.subr.bf16.mxu0 0
  %865 = vmatpush1.bf16.msra.mxu0 %v620
  %866 = vmatprep.subr.bf16.mxu0 0
  %867 = vmatpush1.bf16.msra.mxu0 %v621
  %868 = vmatprep.subr.bf16.mxu0 0
  %869 = vmatpush1.bf16.msra.mxu0 %v622
  %870 = vmatprep.subr.bf16.mxu0 0
  %871 = vmatpush1.bf16.msra.mxu0 %v623
  %872 = vmatprep.subr.bf16.mxu0 0
  %873 = vmatpush1.bf16.msra.mxu0 %v624
  %874 = vmatprep.subr.bf16.mxu0 0
  %875 = vmatpush1.bf16.msra.mxu0 %v625
  %876 = vmatprep.subr.bf16.mxu0 0
  %877 = vmatpush1.bf16.msra.mxu0 %v626
  %878 = vmatprep.subr.bf16.mxu0 0
  %879 = vmatpush1.bf16.msra.mxu0 %v627
  %880 = vmatprep.subr.bf16.mxu0 0
  %881 = vmatpush1.bf16.msra.mxu0 %v628
  %882 = vmatprep.subr.bf16.mxu0 0
  %883 = vmatpush1.bf16.msra.mxu0 %v629
  %884 = vmatprep.subr.bf16.mxu0 0
  %885 = vmatpush1.bf16.msra.mxu0 %v630
  %886 = vmatprep.subr.bf16.mxu0 0
  %887 = vmatpush1.bf16.msra.mxu0 %v631
  %888 = vmatprep.subr.bf16.mxu0 0
  %889 = vmatpush1.bf16.msra.mxu0 %v632
  %890 = vmatprep.subr.bf16.mxu0 0
  %891 = vmatpush1.bf16.msra.mxu0 %v633
  %892 = vmatprep.subr.bf16.mxu0 0
  %893 = vmatpush1.bf16.msra.mxu0 %v634
  %894 = vmatprep.mubr.bf16.mxu0 %v254
  %895 = vmatmul.mubr.bf16.gmra.mrb[0].mxu0 %v253
  %v896 = vpop.f32.mrb[0].mxu0
  %v897 = vadd.f32 %v848, %v896
  %v898 = vpop.f32.mrb[0].mxu0
  %v899 = vpop.f32.mrb[0].mxu0
  %v900 = vadd.f32 %v851, %v899
  %v901 = vpop.f32.mrb[0].mxu0
  %902 = vmatprep.mubr.bf16.mxu0 %v263
  %903 = vmatmul.mubr.bf16.gmra.mrb[0].mxu0 %v262
  %v904 = vpop.f32.mrb[0].mxu0
  %v905 = vadd.f32 %v856, %v904
  %v906 = vpop.f32.mrb[0].mxu0
  %v907 = vpop.f32.mrb[0].mxu0
  %v908 = vadd.f32 %v859, %v907
  %v909 = vpop.f32.mrb[0].mxu0
  %910 = vdwg.mxu0
  %911 = vmatprep.subr.bf16.mxu0 0
  %912 = vmatpush1.bf16.msra.mxu0 %v635
  %913 = vmatprep.subr.bf16.mxu0 0
  %914 = vmatpush1.bf16.msra.mxu0 %v636
  %915 = vmatprep.subr.bf16.mxu0 0
  %916 = vmatpush1.bf16.msra.mxu0 %v637
  %917 = vmatprep.subr.bf16.mxu0 0
  %918 = vmatpush1.bf16.msra.mxu0 %v638
  %919 = vmatprep.subr.bf16.mxu0 0
  %920 = vmatpush1.bf16.msra.mxu0 %v639
  %921 = vmatprep.subr.bf16.mxu0 0
  %922 = vmatpush1.bf16.msra.mxu0 %v640
  %923 = vmatprep.subr.bf16.mxu0 0
  %924 = vmatpush1.bf16.msra.mxu0 %v641
  %925 = vmatprep.subr.bf16.mxu0 0
  %926 = vmatpush1.bf16.msra.mxu0 %v642
  %927 = vmatprep.subr.bf16.mxu0 0
  %928 = vmatpush1.bf16.msra.mxu0 0
  %929 = vmatprep.subr.bf16.mxu0 0
  %930 = vmatpush1.bf16.msra.mxu0 0
  %931 = vmatprep.subr.bf16.mxu0 0
  %932 = vmatpush1.bf16.msra.mxu0 0
  %933 = vmatprep.subr.bf16.mxu0 0
  %934 = vmatpush1.bf16.msra.mxu0 0
  %935 = vmatprep.subr.bf16.mxu0 0
  %936 = vmatpush1.bf16.msra.mxu0 0
  %937 = vmatprep.subr.bf16.mxu0 0
  %938 = vmatpush1.bf16.msra.mxu0 0
  %939 = vmatprep.subr.bf16.mxu0 0
  %940 = vmatpush1.bf16.msra.mxu0 0
  %941 = vmatprep.subr.bf16.mxu0 0
  %942 = vmatpush1.bf16.msra.mxu0 0
  %943 = vmatprep.mubr.bf16.mxu0 0
  %944 = vmatmul.mubr.bf16.gmra.mrb[0].mxu0 %v255
  %v945 = vpop.f32.mrb[0].mxu0
  %v946 = vadd.f32 %v897, %v945
  %v947 = vpop.f32.mrb[0].mxu0
  %v948 = vpop.f32.mrb[0].mxu0
  %v949 = vadd.f32 %v900, %v948
  %v950 = vpop.f32.mrb[0].mxu0
  %951 = vmatprep.mubr.bf16.mxu0 0
  %952 = vmatmul.mubr.bf16.gmra.mrb[0].mxu0 %v264
  %v953 = vpop.f32.mrb[0].mxu0
  %v954 = vadd.f32 %v905, %v953
  %v955 = vpop.f32.mrb[0].mxu0
  %v956 = vpop.f32.mrb[0].mxu0
  %v957 = vadd.f32 %v908, %v956
  %v958 = vpop.f32.mrb[0].mxu0
  %959 = vdwg.mxu0
  %v960 = vadd.f32 %v23, %v946
  %v961 = vadd.f32 %v24, %v949
  %v962 = vadd.f32 %v25, %v954
  %v963 = vadd.f32 %v26, %v957
  %964 = vst [vmem:[#allocation2] sm:$0xff] %v960
  %965 = vst [vmem:[#allocation2 + $0x8] sm:$0xff] %v961
  %966 = vst [vmem:[#allocation2 + $0x10] sm:$0xff] %v962
  %967 = vst [vmem:[#allocation2 + $0x18] sm:$0xff] %v963
  // Predicated region
  $region18: #{_lambda_.18} parent=0 // pred_check
    %p968 = pneg %p15
  $region19: #{_lambda_.18} parent=0 // pred_check_branch
    %970 = sbr.rel (%p968) target = $region21
  $region20: #{_lambda_.18} parent=0 // pred_region
    %v971 = vld [vmem:[#allocation2] sm:$0xff]
    %v972 = vld [vmem:[#allocation2 + $0x8] sm:$0xff]
    %v973 = vld [vmem:[#allocation2 + $0x10] sm:$0xff]
    %v974 = vld [vmem:[#allocation2 + $0x18] sm:$0xff]
    %v975 = vld [vmem:[%s2] sm:$0x1]
    %v977 = vlaneseq
    %v978 = vshrl.u32 %v977, 7
    %v979 = vsub.s32 0, %v978
    %v980 = vrot.slane %v975, %v979
    %v982 = vadd.f32 %v971, %v980
    %v983 = vadd.f32 %v972, %v980
    %v984 = vadd.f32 %v973, %v980
    %v985 = vadd.f32 %v974, %v980
    %v986 = vadd.f32 %v982, %v983
    %v987 = vrot.slane %v986, 4
    %v988 = vadd.f32 %v986, %v987
    %v989 = vrot.slane %v988, 2
    %v990 = vadd.f32 %v988, %v989
    %v991 = vrot.slane %v990, 1
    %v992 = vadd.f32 %v990, %v991
    %v993 = vadd.f32 %v984, %v985
    %v994 = vrot.slane %v993, 4
    %v995 = vadd.f32 %v993, %v994
    %v996 = vrot.slane %v995, 2
    %v997 = vadd.f32 %v995, %v996
    %v998 = vrot.slane %v997, 1
    %v999 = vadd.f32 %v997, %v998
    %v1000 = vrcp.pop 16.0
    %v1001 = vmul.f32 %v992, %v1000
    %v1002 = vmul.f32 %v999, %v1000
    %v1003 = vsub.f32 %v982, %v1001
    %v1004 = vsub.f32 %v983, %v1001
    %v1005 = vsub.f32 %v984, %v1002
    %v1006 = vsub.f32 %v985, %v1002
    %v1007 = vmul.f32 %v1003, %v1003
    %v1008 = vmul.f32 %v1004, %v1004
    %v1009 = vmul.f32 %v1005, %v1005
    %v1010 = vmul.f32 %v1006, %v1006
    %v1011 = vadd.f32 %v1007, %v1008
    %v1012 = vrot.slane %v1011, 4
    %v1013 = vadd.f32 %v1011, %v1012
    %v1014 = vrot.slane %v1013, 2
    %v1015 = vadd.f32 %v1013, %v1014
    %v1016 = vrot.slane %v1015, 1
    %v1017 = vadd.f32 %v1015, %v1016
    %v1018 = vadd.f32 %v1009, %v1010
    %v1019 = vrot.slane %v1018, 4
    %v1020 = vadd.f32 %v1018, %v1019
    %v1021 = vrot.slane %v1020, 2
    %v1022 = vadd.f32 %v1020, %v1021
    %v1023 = vrot.slane %v1022, 1
    %v1024 = vadd.f32 %v1022, %v1023
    %v1025 = vmul.f32 %v1017, %v1000
    %v1026 = vmul.f32 %v1024, %v1000
    %v1027 = vadd.f32 %v1025, 1e-05
    %v1028 = vadd.f32 %v1026, 1e-05
    %v1029 = vrsqrt.pop %v1027
    %v1030 = vrsqrt.pop %v1028
    %v1031 = vmul.f32 %v1003, %v1029
    %v1032 = vmul.f32 %v1004, %v1029
    %v1033 = vmul.f32 %v1005, %v1030
    %v1034 = vmul.f32 %v1006, %v1030
    %v1035 = vmax.f32 %v1031, 0.0
    %v1036 = vmax.f32 %v1032, 0.0
    %v1037 = vmax.f32 %v1033, 0.0
    %v1038 = vmax.f32 %v1034, 0.0
    %v1039 = vpack.c.bf16 %v1036, %v1035
    %v1040 = vpack.c.bf16 %v1038, %v1037
    %v1043 = vunpack.c.l.b16 %v1039
    %v1044 = vunpack.c.h.b16 %v1039
    %v1045 = vunpack.c.l.b16 %v1040
    %v1046 = vunpack.c.h.b16 %v1040
    %v1047 = vpack.c.b16 %v1043, %v1043
    %v1048 = vpack.c.b16 %v1044, %v1044
    %v1049 = vpack.c.b16 %v1045, %v1045
    %v1050 = vpack.c.b16 %v1046, %v1046
    %1055 = vst [vmem:[%s3] sm:$0xf] %v1047
    %1056 = vst [vmem:[%s3 + $0x4] sm:$0xf] %v1048
    %1057 = vst [vmem:[%s3 + $0x8] sm:$0xf] %v1049
    %1058 = vst [vmem:[%s3 + $0xc] sm:$0xf] %v1050
  $region21: #{_lambda_.18} parent=0 // pred_fallthru
    _
  // Predicated region
  $region22: #{_lambda_.18} parent=0 // pred_check
    _
  $region23: #{_lambda_.18} parent=0 // pred_check_branch
    %1060 = sbr.rel (0) target = $region25
  $region24: #{_lambda_.18} parent=0 // pred_region
    _
  $region25: #{_lambda_.18} parent=0 // pred_fallthru
    _
  // Predicated region
  $region26: #{_lambda_.18} parent=0 // pred_check
    _
  $region27: #{_lambda_.18} parent=0 // pred_check_branch
    %1062 = sbr.rel (0) target = $region29
  $region28: #{_lambda_.18} parent=0 // pred_region
    _
  $region29: #{_lambda_.18} parent=0 // pred_fallthru
    _

// kernel: _lambda_.30
$region0: #{_lambda_.30}
  #allocation0 [shape = 'u32[]', space=smem, size = 0x4, offset = 0x4, fixed_abs, tag = 'smem constant byte address 0x4 - core index']
  #allocation1 [shape = 'u32[144,128]{1,0:T(1,128)}', space=vmem, size = 0x12000, scoped, tag = 'internal scratch']
  #allocation2 [shape = 'f32[128,128]{1,0:T(8,128)}', space=vmem, size = 0x10000, scoped, tag = 'scratch operand']
  %s0 = inlined_call_operand.vmem [shape: bf16[128,2048], index: 0, kind: input, shape index: {}]
  %s1 = inlined_call_operand.vmem [shape: bf16[2048,128], index: 1, kind: input, shape index: {}]
  %s2 = inlined_call_operand.vmem [shape: f32[1,128], index: 2, kind: input, shape index: {}]
  %s3 = inlined_call_operand.vmem [shape: bf16[128,128], index: 3, kind: output, shape index: {}]
  %s4 = sld [smem:[#allocation0]]
  $region30: #{_lambda_.30} parent=0
    _
  %s6 = ssub.s32 1, %s4
  %s7 = scalar_select 0, %s6, %s4
  // Predicated region
  $region2: #{_lambda_.30} parent=0 // pred_check
    _
  $region3: #{_lambda_.30} parent=0 // pred_check_branch
    %9 = sbr.rel (0) target = $region5
  $region4: #{_lambda_.30} parent=0 // pred_region
    _
  $region5: #{_lambda_.30} parent=0 // pred_fallthru
    _
  // Predicated region
  $region6: #{_lambda_.30} parent=0 // pred_check
    _
  $region7: #{_lambda_.30} parent=0 // pred_check_branch
    %11 = sbr.rel (0) target = $region9
  $region8: #{_lambda_.30} parent=0 // pred_region
    _
  $region9: #{_lambda_.30} parent=0 // pred_fallthru
    _
  // Predicated region
  $region10: #{_lambda_.30} parent=0 // pred_check
    _
  $region11: #{_lambda_.30} parent=0 // pred_check_branch
    %13 = sbr.rel (0) target = $region13
  $region12: #{_lambda_.30} parent=0 // pred_region
    _
  $region13: #{_lambda_.30} parent=0 // pred_fallthru
    _
  %p15 = scmp.eq.s32.totalorder 0, 0
  // Predicated region
  $region14: #{_lambda_.30} parent=0 // pred_check
    %p16 = pneg %p15
  $region15: #{_lambda_.30} parent=0 // pred_check_branch
    %18 = sbr.rel (%p16) target = $region17
  $region16: #{_lambda_.30} parent=0 // pred_region
    %19 = vst [vmem:[#allocation2] sm:$0xff] 0.0
    %20 = vst [vmem:[#allocation2 + $0x8] sm:$0xff] 0.0
    %21 = vst [vmem:[#allocation2 + $0x10] sm:$0xff] 0.0
    %22 = vst [vmem:[#allocation2 + $0x18] sm:$0xff] 0.0
    %23 = vst [vmem:[#allocation2 + $0x20] sm:$0xff] 0.0
    %24 = vst [vmem:[#allocation2 + $0x28] sm:$0xff] 0.0
    %25 = vst [vmem:[#allocation2 + $0x30] sm:$0xff] 0.0
    %26 = vst [vmem:[#allocation2 + $0x38] sm:$0xff] 0.0
    %27 = vst [vmem:[#allocation2 + $0x40] sm:$0xff] 0.0
    %28 = vst [vmem:[#allocation2 + $0x48] sm:$0xff] 0.0
    %29 = vst [vmem:[#allocation2 + $0x50] sm:$0xff] 0.0
    %30 = vst [vmem:[#allocation2 + $0x58] sm:$0xff] 0.0
    %31 = vst [vmem:[#allocation2 + $0x60] sm:$0xff] 0.0
    %32 = vst [vmem:[#allocation2 + $0x68] sm:$0xff] 0.0
    %33 = vst [vmem:[#allocation2 + $0x70] sm:$0xff] 0.0
    %34 = vst [vmem:[#allocation2 + $0x78] sm:$0xff] 0.0
  $region17: #{_lambda_.30} parent=0 // pred_fallthru
    _
  %v35 = vld [vmem:[#allocation2] sm:$0xff]
  %v36 = vld [vmem:[#allocation2 + $0x8] sm:$0xff]
  %v37 = vld [vmem:[#allocation2 + $0x10] sm:$0xff]
  %v38 = vld [vmem:[#allocation2 + $0x18] sm:$0xff]
  %v39 = vld [vmem:[#allocation2 + $0x20] sm:$0xff]
  %v40 = vld [vmem:[#allocation2 + $0x28] sm:$0xff]
  %v41 = vld [vmem:[#allocation2 + $0x30] sm:$0xff]
  %v42 = vld [vmem:[#allocation2 + $0x38] sm:$0xff]
  %v43 = vld [vmem:[#allocation2 + $0x40] sm:$0xff]
  %v44 = vld [vmem:[#allocation2 + $0x48] sm:$0xff]
  %v45 = vld [vmem:[#allocation2 + $0x50] sm:$0xff]
  %v46 = vld [vmem:[#allocation2 + $0x58] sm:$0xff]
  %v47 = vld [vmem:[#allocation2 + $0x60] sm:$0xff]
  %v48 = vld [vmem:[#allocation2 + $0x68] sm:$0xff]
  %v49 = vld [vmem:[#allocation2 + $0x70] sm:$0xff]
  %v50 = vld [vmem:[#allocation2 + $0x78] sm:$0xff]
  %v51 = vld [vmem:[%s0] sm:$0xff]
  %v52 = vld [vmem:[%s0 + $0x8] sm:$0xff]
  %v53 = vld [vmem:[%s0 + $0x10] sm:$0xff]
  %v54 = vld [vmem:[%s0 + $0x18] sm:$0xff]
  %v55 = vld [vmem:[%s0 + $0x20] sm:$0xff]
  %v56 = vld [vmem:[%s0 + $0x28] sm:$0xff]
  %v57 = vld [vmem:[%s0 + $0x30] sm:$0xff]
  %v58 = vld [vmem:[%s0 + $0x38] sm:$0xff]
  %v59 = vld [vmem:[%s0 + $0x40] sm:$0xff]
  %v60 = vld [vmem:[%s0 + $0x48] sm:$0xff]
  %v61 = vld [vmem:[%s0 + $0x50] sm:$0xff]
  %v62 = vld [vmem:[%s0 + $0x58] sm:$0xff]
  %v63 = vld [vmem:[%s0 + $0x60] sm:$0xff]
  %v64 = vld [vmem:[%s0 + $0x68] sm:$0xff]
  %v65 = vld [vmem:[%s0 + $0x70] sm:$0xff]
  %v66 = vld [vmem:[%s0 + $0x78] sm:$0xff]
  %v67 = vld [vmem:[%s0 + $0x80] sm:$0xff]
  %v68 = vld [vmem:[%s0 + $0x88] sm:$0xff]
  %v69 = vld [vmem:[%s0 + $0x90] sm:$0xff]
  %v70 = vld [vmem:[%s0 + $0x98] sm:$0xff]
  %v71 = vld [vmem:[%s0 + $0xa0] sm:$0xff]
  %v72 = vld [vmem:[%s0 + $0xa8] sm:$0xff]
  %v73 = vld [vmem:[%s0 + $0xb0] sm:$0xff]
  %v74 = vld [vmem:[%s0 + $0xb8] sm:$0xff]
  %v75 = vld [vmem:[%s0 + $0xc0] sm:$0xff]
  %v76 = vld [vmem:[%s0 + $0xc8] sm:$0xff]
  %v77 = vld [vmem:[%s0 + $0xd0] sm:$0xff]
  %v78 = vld [vmem:[%s0 + $0xd8] sm:$0xff]
  %v79 = vld [vmem:[%s0 + $0xe0] sm:$0xff]
  %v80 = vld [vmem:[%s0 + $0xe8] sm:$0xff]
  %v81 = vld [vmem:[%s0 + $0xf0] sm:$0xff]
  %v82 = vld [vmem:[%s0 + $0xf8] sm:$0xff]
  %v83 = vld [vmem:[%s0 + $0x100] sm:$0xff]
  %v84 = vld [vmem:[%s0 + $0x108] sm:$0xff]
  %v85 = vld [vmem:[%s0 + $0x110] sm:$0xff]
  %v86 = vld [vmem:[%s0 + $0x118] sm:$0xff]
  %v87 = vld [vmem:[%s0 + $0x120] sm:$0xff]
  %v88 = vld [vmem:[%s0 + $0x128] sm:$0xff]
  %v89 = vld [vmem:[%s0 + $0x130] sm:$0xff]
  %v90 = vld [vmem:[%s0 + $0x138] sm:$0xff]
  %v91 = vld [vmem:[%s0 + $0x140] sm:$0xff]
  %v92 = vld [vmem:[%s0 + $0x148] sm:$0xff]
  %v93 = vld [vmem:[%s0 + $0x150] sm:$0xff]
  %v94 = vld [vmem:[%s0 + $0x158] sm:$0xff]
  %v95 = vld [vmem:[%s0 + $0x160] sm:$0xff]
  %v96 = vld [vmem:[%s0 + $0x168] sm:$0xff]
  %v97 = vld [vmem:[%s0 + $0x170] sm:$0xff]
  %v98 = vld [vmem:[%s0 + $0x178] sm:$0xff]
  %v99 = vld [vmem:[%s0 + $0x180] sm:$0xff]
  %v100 = vld [vmem:[%s0 + $0x188] sm:$0xff]
  %v101 = vld [vmem:[%s0 + $0x190] sm:$0xff]
  %v102 = vld [vmem:[%s0 + $0x198] sm:$0xff]
  %v103 = vld [vmem:[%s0 + $0x1a0] sm:$0xff]
  %v104 = vld [vmem:[%s0 + $0x1a8] sm:$0xff]
  %v105 = vld [vmem:[%s0 + $0x1b0] sm:$0xff]
  %v106 = vld [vmem:[%s0 + $0x1b8] sm:$0xff]
  %v107 = vld [vmem:[%s0 + $0x1c0] sm:$0xff]
  %v108 = vld [vmem:[%s0 + $0x1c8] sm:$0xff]
  %v109 = vld [vmem:[%s0 + $0x1d0] sm:$0xff]
  %v110 = vld [vmem:[%s0 + $0x1d8] sm:$0xff]
  %v111 = vld [vmem:[%s0 + $0x1e0] sm:$0xff]
  %v112 = vld [vmem:[%s0 + $0x1e8] sm:$0xff]
  %v113 = vld [vmem:[%s0 + $0x1f0] sm:$0xff]
  %v114 = vld [vmem:[%s0 + $0x1f8] sm:$0xff]
  %v115 = vld [vmem:[%s0 + $0x200] sm:$0xff]
  %v116 = vld [vmem:[%s0 + $0x208] sm:$0xff]
  %v117 = vld [vmem:[%s0 + $0x210] sm:$0xff]
  %v118 = vld [vmem:[%s0 + $0x218] sm:$0xff]
  %v119 = vld [vmem:[%s0 + $0x220] sm:$0xff]
  %v120 = vld [vmem:[%s0 + $0x228] sm:$0xff]
  %v121 = vld [vmem:[%s0 + $0x230] sm:$0xff]
  %v122 = vld [vmem:[%s0 + $0x238] sm:$0xff]
  %v123 = vld [vmem:[%s0 + $0x240] sm:$0xff]
  %v124 = vld [vmem:[%s0 + $0x248] sm:$0xff]
  %v125 = vld [vmem:[%s0 + $0x250] sm:$0xff]
  %v126 = vld [vmem:[%s0 + $0x258] sm:$0xff]
  %v127 = vld [vmem:[%s0 + $0x260] sm:$0xff]
  %v128 = vld [vmem:[%s0 + $0x268] sm:$0xff]
  %v129 = vld [vmem:[%s0 + $0x270] sm:$0xff]
  %v130 = vld [vmem:[%s0 + $0x278] sm:$0xff]
  %v131 = vld [vmem:[%s0 + $0x280] sm:$0xff]
  %v132 = vld [vmem:[%s0 + $0x288] sm:$0xff]
  %v133 = vld [vmem:[%s0 + $0x290] sm:$0xff]
  %v134 = vld [vmem:[%s0 + $0x298] sm:$0xff]
  %v135 = vld [vmem:[%s0 + $0x2a0] sm:$0xff]
  %v136 = vld [vmem:[%s0 + $0x2a8] sm:$0xff]
  %v137 = vld [vmem:[%s0 + $0x2b0] sm:$0xff]
  %v138 = vld [vmem:[%s0 + $0x2b8] sm:$0xff]
  %v139 = vld [vmem:[%s0 + $0x2c0] sm:$0xff]
  %v140 = vld [vmem:[%s0 + $0x2c8] sm:$0xff]
  %v141 = vld [vmem:[%s0 + $0x2d0] sm:$0xff]
  %v142 = vld [vmem:[%s0 + $0x2d8] sm:$0xff]
  %v143 = vld [vmem:[%s0 + $0x2e0] sm:$0xff]
  %v144 = vld [vmem:[%s0 + $0x2e8] sm:$0xff]
  %v145 = vld [vmem:[%s0 + $0x2f0] sm:$0xff]
  %v146 = vld [vmem:[%s0 + $0x2f8] sm:$0xff]
  %v147 = vld [vmem:[%s0 + $0x300] sm:$0xff]
  %v148 = vld [vmem:[%s0 + $0x308] sm:$0xff]
  %v149 = vld [vmem:[%s0 + $0x310] sm:$0xff]
  %v150 = vld [vmem:[%s0 + $0x318] sm:$0xff]
  %v151 = vld [vmem:[%s0 + $0x320] sm:$0xff]
  %v152 = vld [vmem:[%s0 + $0x328] sm:$0xff]
  %v153 = vld [vmem:[%s0 + $0x330] sm:$0xff]
  %v154 = vld [vmem:[%s0 + $0x338] sm:$0xff]
  %v155 = vld [vmem:[%s0 + $0x340] sm:$0xff]
  %v156 = vld [vmem:[%s0 + $0x348] sm:$0xff]
  %v157 = vld [vmem:[%s0 + $0x350] sm:$0xff]
  %v158 = vld [vmem:[%s0 + $0x358] sm:$0xff]
  %v159 = vld [vmem:[%s0 + $0x360] sm:$0xff]
  %v160 = vld [vmem:[%s0 + $0x368] sm:$0xff]
  %v161 = vld [vmem:[%s0 + $0x370] sm:$0xff]
  %v162 = vld [vmem:[%s0 + $0x378] sm:$0xff]
  %v163 = vld [vmem:[%s0 + $0x380] sm:$0xff]
  %v164 = vld [vmem:[%s0 + $0x388] sm:$0xff]
  %v165 = vld [vmem:[%s0 + $0x390] sm:$0xff]
  %v166 = vld [vmem:[%s0 + $0x398] sm:$0xff]
  %v167 = vld [vmem:[%s0 + $0x3a0] sm:$0xff]
  %v168 = vld [vmem:[%s0 + $0x3a8] sm:$0xff]
  %v169 = vld [vmem:[%s0 + $0x3b0] sm:$0xff]
  %v170 = vld [vmem:[%s0 + $0x3b8] sm:$0xff]
  %v171 = vld [vmem:[%s0 + $0x3c0] sm:$0xff]
  %v172 = vld [vmem:[%s0 + $0x3c8] sm:$0xff]
  %v173 = vld [vmem:[%s0 + $0x3d0] sm:$0xff]
  %v174 = vld [vmem:[%s0 + $0x3d8] sm:$0xff]
  %v175 = vld [vmem:[%s0 + $0x3e0] sm:$0xff]
  %v176 = vld [vmem:[%s0 + $0x3e8] sm:$0xff]
  %v177 = vld [vmem:[%s0 + $0x3f0] sm:$0xff]
  %v178 = vld [vmem:[%s0 + $0x3f8] sm:$0xff]
  %v179 = vld [vmem:[%s1] sm:$0xf]
  %v180 = vld [vmem:[%s1 + $0x4] sm:$0xf]
  %v181 = vld [vmem:[%s1 + $0x8] sm:$0xf]
  %v182 = vld [vmem:[%s1 + $0xc] sm:$0xf]
  %v183 = vld [vmem:[%s1 + $0x10] sm:$0xf]
  %v184 = vld [vmem:[%s1 + $0x14] sm:$0xf]
  %v185 = vld [vmem:[%s1 + $0x18] sm:$0xf]
  %v186 = vld [vmem:[%s1 + $0x1c] sm:$0xf]
  %v187 = vld [vmem:[%s1 + $0x20] sm:$0xf]
  %v188 = vld [vmem:[%s1 + $0x24] sm:$0xf]
  %v189 = vld [vmem:[%s1 + $0x28] sm:$0xf]
  %v190 = vld [vmem:[%s1 + $0x2c] sm:$0xf]
  %v191 = vld [vmem:[%s1 + $0x30] sm:$0xf]
  %v192 = vld [vmem:[%s1 + $0x34] sm:$0xf]
  %v193 = vld [vmem:[%s1 + $0x38] sm:$0xf]
  %v194 = vld [vmem:[%s1 + $0x3c] sm:$0xf]
  %v195 = vld [vmem:[%s1 + $0x40] sm:$0xf]
  %v196 = vld [vmem:[%s1 + $0x44] sm:$0xf]
  %v197 = vld [vmem:[%s1 + $0x48] sm:$0xf]
  %v198 = vld [vmem:[%s1 + $0x4c] sm:$0xf]
  %v199 = vld [vmem:[%s1 + $0x50] sm:$0xf]
  %v200 = vld [vmem:[%s1 + $0x54] sm:$0xf]
  %v201 = vld [vmem:[%s1 + $0x58] sm:$0xf]
  %v202 = vld [vmem:[%s1 + $0x5c] sm:$0xf]
  %v203 = vld [vmem:[%s1 + $0x60] sm:$0xf]
  %v204 = vld [vmem:[%s1 + $0x64] sm:$0xf]
  %v205 = vld [vmem:[%s1 + $0x68] sm:$0xf]
  %v206 = vld [vmem:[%s1 + $0x6c] sm:$0xf]
  %v207 = vld [vmem:[%s1 + $0x70] sm:$0xf]
  %v208 = vld [vmem:[%s1 + $0x74] sm:$0xf]
  %v209 = vld [vmem:[%s1 + $0x78] sm:$0xf]
  %v210 = vld [vmem:[%s1 + $0x7c] sm:$0xf]
  %v211 = vld [vmem:[%s1 + $0x80] sm:$0xf]
  %v212 = vld [vmem:[%s1 + $0x84] sm:$0xf]
  %v213 = vld [vmem:[%s1 + $0x88] sm:$0xf]
  %v214 = vld [vmem:[%s1 + $0x8c] sm:$0xf]
  %v215 = vld [vmem:[%s1 + $0x90] sm:$0xf]
  %v216 = vld [vmem:[%s1 + $0x94] sm:$0xf]
  %v217 = vld [vmem:[%s1 + $0x98] sm:$0xf]
  %v218 = vld [vmem:[%s1 + $0x9c] sm:$0xf]
  %v219 = vld [vmem:[%s1 + $0xa0] sm:$0xf]
  %v220 = vld [vmem:[%s1 + $0xa4] sm:$0xf]
  %v221 = vld [vmem:[%s1 + $0xa8] sm:$0xf]
  %v222 = vld [vmem:[%s1 + $0xac] sm:$0xf]
  %v223 = vld [vmem:[%s1 + $0xb0] sm:$0xf]
  %v224 = vld [vmem:[%s1 + $0xb4] sm:$0xf]
  %v225 = vld [vmem:[%s1 + $0xb8] sm:$0xf]
  %v226 = vld [vmem:[%s1 + $0xbc] sm:$0xf]
  %v227 = vld [vmem:[%s1 + $0xc0] sm:$0xf]
  %v228 = vld [vmem:[%s1 + $0xc4] sm:$0xf]
  %v229 = vld [vmem:[%s1 + $0xc8] sm:$0xf]
  %v230 = vld [vmem:[%s1 + $0xcc] sm:$0xf]
  %v231 = vld [vmem:[%s1 + $0xd0] sm:$0xf]
  %v232 = vld [vmem:[%s1 + $0xd4] sm:$0xf]
  %v233 = vld [vmem:[%s1 + $0xd8] sm:$0xf]
  %v234 = vld [vmem:[%s1 + $0xdc] sm:$0xf]
  %v235 = vld [vmem:[%s1 + $0xe0] sm:$0xf]
  %v236 = vld [vmem:[%s1 + $0xe4] sm:$0xf]
  %v237 = vld [vmem:[%s1 + $0xe8] sm:$0xf]
  %v238 = vld [vmem:[%s1 + $0xec] sm:$0xf]
  %v239 = vld [vmem:[%s1 + $0xf0] sm:$0xf]
  %v240 = vld [vmem:[%s1 + $0xf4] sm:$0xf]
  %v241 = vld [vmem:[%s1 + $0xf8] sm:$0xf]
  %v242 = vld [vmem:[%s1 + $0xfc] sm:$0xf]
  %v243 = vld [vmem:[%s1 + $0x100] sm:$0xf]
  %v244 = vld [vmem:[%s1 + $0x104] sm:$0xf]
  %v245 = vld [vmem:[%s1 + $0x108] sm:$0xf]
  %v246 = vld [vmem:[%s1 + $0x10c] sm:$0xf]
  %v247 = vld [vmem:[%s1 + $0x110] sm:$0xf]
  %v248 = vld [vmem:[%s1 + $0x114] sm:$0xf]
  %v249 = vld [vmem:[%s1 + $0x118] sm:$0xf]
  %v250 = vld [vmem:[%s1 + $0x11c] sm:$0xf]
  %v251 = vld [vmem:[%s1 + $0x120] sm:$0xf]
  %v252 = vld [vmem:[%s1 + $0x124] sm:$0xf]
  %v253 = vld [vmem:[%s1 + $0x128] sm:$0xf]
  %v254 = vld [vmem:[%s1 + $0x12c] sm:$0xf]
  %v255 = vld [vmem:[%s1 + $0x130] sm:$0xf]
  %v256 = vld [vmem:[%s1 + $0x134] sm:$0xf]
  %v257 = vld [vmem:[%s1 + $0x138] sm:$0xf]
  %v258 = vld [vmem:[%s1 + $0x13c] sm:$0xf]
  %v259 = vld [vmem:[%s1 + $0x140] sm:$0xf]
  %v260 = vld [vmem:[%s1 + $0x144] sm:$0xf]
  %v261 = vld [vmem:[%s1 + $0x148] sm:$0xf]
  %v262 = vld [vmem:[%s1 + $0x14c] sm:$0xf]
  %v263 = vld [vmem:[%s1 + $0x150] sm:$0xf]
  %v264 = vld [vmem:[%s1 + $0x154] sm:$0xf]
  %v265 = vld [vmem:[%s1 + $0x158] sm:$0xf]
  %v266 = vld [vmem:[%s1 + $0x15c] sm:$0xf]
  %v267 = vld [vmem:[%s1 + $0x160] sm:$0xf]
  %v268 = vld [vmem:[%s1 + $0x164] sm:$0xf]
  %v269 = vld [vmem:[%s1 + $0x168] sm:$0xf]
  %v270 = vld [vmem:[%s1 + $0x16c] sm:$0xf]
  %v271 = vld [vmem:[%s1 + $0x170] sm:$0xf]
  %v272 = vld [vmem:[%s1 + $0x174] sm:$0xf]
  %v273 = vld [vmem:[%s1 + $0x178] sm:$0xf]
  %v274 = vld [vmem:[%s1 + $0x17c] sm:$0xf]
  %v275 = vld [vmem:[%s1 + $0x180] sm:$0xf]
  %v276 = vld [vmem:[%s1 + $0x184] sm:$0xf]
  %v277 = vld [vmem:[%s1 + $0x188] sm:$0xf]
  %v278 = vld [vmem:[%s1 + $0x18c] sm:$0xf]
  %v279 = vld [vmem:[%s1 + $0x190] sm:$0xf]
  %v280 = vld [vmem:[%s1 + $0x194] sm:$0xf]
  %v281 = vld [vmem:[%s1 + $0x198] sm:$0xf]
  %v282 = vld [vmem:[%s1 + $0x19c] sm:$0xf]
  %v283 = vld [vmem:[%s1 + $0x1a0] sm:$0xf]
  %v284 = vld [vmem:[%s1 + $0x1a4] sm:$0xf]
  %v285 = vld [vmem:[%s1 + $0x1a8] sm:$0xf]
  %v286 = vld [vmem:[%s1 + $0x1ac] sm:$0xf]
  %v287 = vld [vmem:[%s1 + $0x1b0] sm:$0xf]
  %v288 = vld [vmem:[%s1 + $0x1b4] sm:$0xf]
  %v289 = vld [vmem:[%s1 + $0x1b8] sm:$0xf]
  %v290 = vld [vmem:[%s1 + $0x1bc] sm:$0xf]
  %v291 = vld [vmem:[%s1 + $0x1c0] sm:$0xf]
  %v292 = vld [vmem:[%s1 + $0x1c4] sm:$0xf]
  %v293 = vld [vmem:[%s1 + $0x1c8] sm:$0xf]
  %v294 = vld [vmem:[%s1 + $0x1cc] sm:$0xf]
  %v295 = vld [vmem:[%s1 + $0x1d0] sm:$0xf]
  %v296 = vld [vmem:[%s1 + $0x1d4] sm:$0xf]
  %v297 = vld [vmem:[%s1 + $0x1d8] sm:$0xf]
  %v298 = vld [vmem:[%s1 + $0x1dc] sm:$0xf]
  %v299 = vld [vmem:[%s1 + $0x1e0] sm:$0xf]
  %v300 = vld [vmem:[%s1 + $0x1e4] sm:$0xf]
  %v301 = vld [vmem:[%s1 + $0x1e8] sm:$0xf]
  %v302 = vld [vmem:[%s1 + $0x1ec] sm:$0xf]
  %v303 = vld [vmem:[%s1 + $0x1f0] sm:$0xf]
  %v304 = vld [vmem:[%s1 + $0x1f4] sm:$0xf]
  %v305 = vld [vmem:[%s1 + $0x1f8] sm:$0xf]
  %v306 = vld [vmem:[%s1 + $0x1fc] sm:$0xf]
  %v307 = vld [vmem:[%s1 + $0x200] sm:$0xf]
  %v308 = vld [vmem:[%s1 + $0x204] sm:$0xf]
  %v309 = vld [vmem:[%s1 + $0x208] sm:$0xf]
  %v310 = vld [vmem:[%s1 + $0x20c] sm:$0xf]
  %v311 = vld [vmem:[%s1 + $0x210] sm:$0xf]
  %v312 = vld [vmem:[%s1 + $0x214] sm:$0xf]
  %v313 = vld [vmem:[%s1 + $0x218] sm:$0xf]
  %v314 = vld [vmem:[%s1 + $0x21c] sm:$0xf]
  %v315 = vld [vmem:[%s1 + $0x220] sm:$0xf]
  %v316 = vld [vmem:[%s1 + $0x224] sm:$0xf]
  %v317 = vld [vmem:[%s1 + $0x228] sm:$0xf]
  %v318 = vld [vmem:[%s1 + $0x22c] sm:$0xf]
  %v319 = vld [vmem:[%s1 + $0x230] sm:$0xf]
  %v320 = vld [vmem:[%s1 + $0x234] sm:$0xf]
  %v321 = vld [vmem:[%s1 + $0x238] sm:$0xf]
  %v322 = vld [vmem:[%s1 + $0x23c] sm:$0xf]
  %v323 = vld [vmem:[%s1 + $0x240] sm:$0xf]
  %v324 = vld [vmem:[%s1 + $0x244] sm:$0xf]
  %v325 = vld [vmem:[%s1 + $0x248] sm:$0xf]
  %v326 = vld [vmem:[%s1 + $0x24c] sm:$0xf]
  %v327 = vld [vmem:[%s1 + $0x250] sm:$0xf]
  %v328 = vld [vmem:[%s1 + $0x254] sm:$0xf]
  %v329 = vld [vmem:[%s1 + $0x258] sm:$0xf]
  %v330 = vld [vmem:[%s1 + $0x25c] sm:$0xf]
  %v331 = vld [vmem:[%s1 + $0x260] sm:$0xf]
  %v332 = vld [vmem:[%s1 + $0x264] sm:$0xf]
  %v333 = vld [vmem:[%s1 + $0x268] sm:$0xf]
  %v334 = vld [vmem:[%s1 + $0x26c] sm:$0xf]
  %v335 = vld [vmem:[%s1 + $0x270] sm:$0xf]
  %v336 = vld [vmem:[%s1 + $0x274] sm:$0xf]
  %v337 = vld [vmem:[%s1 + $0x278] sm:$0xf]
  %v338 = vld [vmem:[%s1 + $0x27c] sm:$0xf]
  %v339 = vld [vmem:[%s1 + $0x280] sm:$0xf]
  %v340 = vld [vmem:[%s1 + $0x284] sm:$0xf]
  %v341 = vld [vmem:[%s1 + $0x288] sm:$0xf]
  %v342 = vld [vmem:[%s1 + $0x28c] sm:$0xf]
  %v343 = vld [vmem:[%s1 + $0x290] sm:$0xf]
  %v344 = vld [vmem:[%s1 + $0x294] sm:$0xf]
  %v345 = vld [vmem:[%s1 + $0x298] sm:$0xf]
  %v346 = vld [vmem:[%s1 + $0x29c] sm:$0xf]
  %v347 = vld [vmem:[%s1 + $0x2a0] sm:$0xf]
  %v348 = vld [vmem:[%s1 + $0x2a4] sm:$0xf]
  %v349 = vld [vmem:[%s1 + $0x2a8] sm:$0xf]
  %v350 = vld [vmem:[%s1 + $0x2ac] sm:$0xf]
  %v351 = vld [vmem:[%s1 + $0x2b0] sm:$0xf]
  %v352 = vld [vmem:[%s1 + $0x2b4] sm:$0xf]
  %v353 = vld [vmem:[%s1 + $0x2b8] sm:$0xf]
  %v354 = vld [vmem:[%s1 + $0x2bc] sm:$0xf]
  %v355 = vld [vmem:[%s1 + $0x2c0] sm:$0xf]
  %v356 = vld [vmem:[%s1 + $0x2c4] sm:$0xf]
  %v357 = vld [vmem:[%s1 + $0x2c8] sm:$0xf]
  %v358 = vld [vmem:[%s1 + $0x2cc] sm:$0xf]
  %v359 = vld [vmem:[%s1 + $0x2d0] sm:$0xf]
  %v360 = vld [vmem:[%s1 + $0x2d4] sm:$0xf]
  %v361 = vld [vmem:[%s1 + $0x2d8] sm:$0xf]
  %v362 = vld [vmem:[%s1 + $0x2dc] sm:$0xf]
  %v363 = vld [vmem:[%s1 + $0x2e0] sm:$0xf]
  %v364 = vld [vmem:[%s1 + $0x2e4] sm:$0xf]
  %v365 = vld [vmem:[%s1 + $0x2e8] sm:$0xf]
  %v366 = vld [vmem:[%s1 + $0x2ec] sm:$0xf]
  %v367 = vld [vmem:[%s1 + $0x2f0] sm:$0xf]
  %v368 = vld [vmem:[%s1 + $0x2f4] sm:$0xf]
  %v369 = vld [vmem:[%s1 + $0x2f8] sm:$0xf]
  %v370 = vld [vmem:[%s1 + $0x2fc] sm:$0xf]
  %v371 = vld [vmem:[%s1 + $0x300] sm:$0xf]
  %v372 = vld [vmem:[%s1 + $0x304] sm:$0xf]
  %v373 = vld [vmem:[%s1 + $0x308] sm:$0xf]
  %v374 = vld [vmem:[%s1 + $0x30c] sm:$0xf]
  %v375 = vld [vmem:[%s1 + $0x310] sm:$0xf]
  %v376 = vld [vmem:[%s1 + $0x314] sm:$0xf]
  %v377 = vld [vmem:[%s1 + $0x318] sm:$0xf]
  %v378 = vld [vmem:[%s1 + $0x31c] sm:$0xf]
  %v379 = vld [vmem:[%s1 + $0x320] sm:$0xf]
  %v380 = vld [vmem:[%s1 + $0x324] sm:$0xf]
  %v381 = vld [vmem:[%s1 + $0x328] sm:$0xf]
  %v382 = vld [vmem:[%s1 + $0x32c] sm:$0xf]
  %v383 = vld [vmem:[%s1 + $0x330] sm:$0xf]
  %v384 = vld [vmem:[%s1 + $0x334] sm:$0xf]
  %v385 = vld [vmem:[%s1 + $0x338] sm:$0xf]
  %v386 = vld [vmem:[%s1 + $0x33c] sm:$0xf]
  %v387 = vld [vmem:[%s1 + $0x340] sm:$0xf]
  %v388 = vld [vmem:[%s1 + $0x344] sm:$0xf]
  %v389 = vld [vmem:[%s1 + $0x348] sm:$0xf]
  %v390 = vld [vmem:[%s1 + $0x34c] sm:$0xf]
  %v391 = vld [vmem:[%s1 + $0x350] sm:$0xf]
  %v392 = vld [vmem:[%s1 + $0x354] sm:$0xf]
  %v393 = vld [vmem:[%s1 + $0x358] sm:$0xf]
  %v394 = vld [vmem:[%s1 + $0x35c] sm:$0xf]
  %v395 = vld [vmem:[%s1 + $0x360] sm:$0xf]
  %v396 = vld [vmem:[%s1 + $0x364] sm:$0xf]
  %v397 = vld [vmem:[%s1 + $0x368] sm:$0xf]
  %v398 = vld [vmem:[%s1 + $0x36c] sm:$0xf]
  %v399 = vld [vmem:[%s1 + $0x370] sm:$0xf]
  %v400 = vld [vmem:[%s1 + $0x374] sm:$0xf]
  %v401 = vld [vmem:[%s1 + $0x378] sm:$0xf]
  %v402 = vld [vmem:[%s1 + $0x37c] sm:$0xf]
  %v403 = vld [vmem:[%s1 + $0x380] sm:$0xf]
  %v404 = vld [vmem:[%s1 + $0x384] sm:$0xf]
  %v405 = vld [vmem:[%s1 + $0x388] sm:$0xf]
  %v406 = vld [vmem:[%s1 + $0x38c] sm:$0xf]
  %v407 = vld [vmem:[%s1 + $0x390] sm:$0xf]
  %v408 = vld [vmem:[%s1 + $0x394] sm:$0xf]
  %v409 = vld [vmem:[%s1 + $0x398] sm:$0xf]
  %v410 = vld [vmem:[%s1 + $0x39c] sm:$0xf]
  %v411 = vld [vmem:[%s1 + $0x3a0] sm:$0xf]
  %v412 = vld [vmem:[%s1 + $0x3a4] sm:$0xf]
  %v413 = vld [vmem:[%s1 + $0x3a8] sm:$0xf]
  %v414 = vld [vmem:[%s1 + $0x3ac] sm:$0xf]
  %v415 = vld [vmem:[%s1 + $0x3b0] sm:$0xf]
  %v416 = vld [vmem:[%s1 + $0x3b4] sm:$0xf]
  %v417 = vld [vmem:[%s1 + $0x3b8] sm:$0xf]
  %v418 = vld [vmem:[%s1 + $0x3bc] sm:$0xf]
  %v419 = vld [vmem:[%s1 + $0x3c0] sm:$0xf]
  %v420 = vld [vmem:[%s1 + $0x3c4] sm:$0xf]
  %v421 = vld [vmem:[%s1 + $0x3c8] sm:$0xf]
  %v422 = vld [vmem:[%s1 + $0x3cc] sm:$0xf]
  %v423 = vld [vmem:[%s1 + $0x3d0] sm:$0xf]
  %v424 = vld [vmem:[%s1 + $0x3d4] sm:$0xf]
  %v425 = vld [vmem:[%s1 + $0x3d8] sm:$0xf]
  %v426 = vld [vmem:[%s1 + $0x3dc] sm:$0xf]
  %v427 = vld [vmem:[%s1 + $0x3e0] sm:$0xf]
  %v428 = vld [vmem:[%s1 + $0x3e4] sm:$0xf]
  %v429 = vld [vmem:[%s1 + $0x3e8] sm:$0xf]
  %v430 = vld [vmem:[%s1 + $0x3ec] sm:$0xf]
  %v431 = vld [vmem:[%s1 + $0x3f0] sm:$0xf]
  %v432 = vld [vmem:[%s1 + $0x3f4] sm:$0xf]
  %v433 = vld [vmem:[%s1 + $0x3f8] sm:$0xf]
  %v434 = vld [vmem:[%s1 + $0x3fc] sm:$0xf]
  %v563 = vunpack.c.l.b16 %v51
  %v564 = vunpack.c.h.b16 %v51
  %v565 = vunpack.c.l.b16 %v52
  %v566 = vunpack.c.h.b16 %v52
  %v567 = vunpack.c.l.b16 %v53
  %v568 = vunpack.c.h.b16 %v53
  %v569 = vunpack.c.l.b16 %v54
  %v570 = vunpack.c.h.b16 %v54
  %v571 = vunpack.c.l.b16 %v55
  %v572 = vunpack.c.h.b16 %v55
  %v573 = vunpack.c.l.b16 %v56
  %v574 = vunpack.c.h.b16 %v56
  %v575 = vunpack.c.l.b16 %v57
  %v576 = vunpack.c.h.b16 %v57
  %v577 = vunpack.c.l.b16 %v58
  %v578 = vunpack.c.h.b16 %v58
  %v579 = vunpack.c.l.b16 %v59
  %v580 = vunpack.c.h.b16 %v59
  %v581 = vunpack.c.l.b16 %v60
  %v582 = vunpack.c.h.b16 %v60
  %v583 = vunpack.c.l.b16 %v61
  %v584 = vunpack.c.h.b16 %v61
  %v585 = vunpack.c.l.b16 %v62
  %v586 = vunpack.c.h.b16 %v62
  %v587 = vunpack.c.l.b16 %v63
  %v588 = vunpack.c.h.b16 %v63
  %v589 = vunpack.c.l.b16 %v64
  %v590 = vunpack.c.h.b16 %v64
  %v591 = vunpack.c.l.b16 %v65
  %v592 = vunpack.c.h.b16 %v65
  %v593 = vunpack.c.l.b16 %v66
  %v594 = vunpack.c.h.b16 %v66
  %v595 = vunpack.c.l.b16 %v67
  %v596 = vunpack.c.h.b16 %v67
  %v597 = vunpack.c.l.b16 %v68
  %v598 = vunpack.c.h.b16 %v68
  %v599 = vunpack.c.l.b16 %v69
  %v600 = vunpack.c.h.b16 %v69
  %v601 = vunpack.c.l.b16 %v70
  %v602 = vunpack.c.h.b16 %v70
  %v603 = vunpack.c.l.b16 %v71
  %v604 = vunpack.c.h.b16 %v71
  %v605 = vunpack.c.l.b16 %v72
  %v606 = vunpack.c.h.b16 %v72
  %v607 = vunpack.c.l.b16 %v73
  %v608 = vunpack.c.h.b16 %v73
  %v609 = vunpack.c.l.b16 %v74
  %v610 = vunpack.c.h.b16 %v74
  %v611 = vunpack.c.l.b16 %v75
  %v612 = vunpack.c.h.b16 %v75
  %v613 = vunpack.c.l.b16 %v76
  %v614 = vunpack.c.h.b16 %v76
  %v615 = vunpack.c.l.b16 %v77
  %v616 = vunpack.c.h.b16 %v77
  %v617 = vunpack.c.l.b16 %v78
  %v618 = vunpack.c.h.b16 %v78
  %v619 = vunpack.c.l.b16 %v79
  %v620 = vunpack.c.h.b16 %v79
  %v621 = vunpack.c.l.b16 %v80
  %v622 = vunpack.c.h.b16 %v80
  %v623 = vunpack.c.l.b16 %v81
  %v624 = vunpack.c.h.b16 %v81
  %v625 = vunpack.c.l.b16 %v82
  %v626 = vunpack.c.h.b16 %v82
  %v627 = vunpack.c.l.b16 %v83
  %v628 = vunpack.c.h.b16 %v83
  %v629 = vunpack.c.l.b16 %v84
  %v630 = vunpack.c.h.b16 %v84
  %v631 = vunpack.c.l.b16 %v85
  %v632 = vunpack.c.h.b16 %v85
  %v633 = vunpack.c.l.b16 %v86
  %v634 = vunpack.c.h.b16 %v86
  %v635 = vunpack.c.l.b16 %v87
  %v636 = vunpack.c.h.b16 %v87
  %v637 = vunpack.c.l.b16 %v88
  %v638 = vunpack.c.h.b16 %v88
  %v639 = vunpack.c.l.b16 %v89
  %v640 = vunpack.c.h.b16 %v89
  %v641 = vunpack.c.l.b16 %v90
  %v642 = vunpack.c.h.b16 %v90
  %v643 = vunpack.c.l.b16 %v91
  %v644 = vunpack.c.h.b16 %v91
  %v645 = vunpack.c.l.b16 %v92
  %v646 = vunpack.c.h.b16 %v92
  %v647 = vunpack.c.l.b16 %v93
  %v648 = vunpack.c.h.b16 %v93
  %v649 = vunpack.c.l.b16 %v94
  %v650 = vunpack.c.h.b16 %v94
  %v651 = vunpack.c.l.b16 %v95
  %v652 = vunpack.c.h.b16 %v95
  %v653 = vunpack.c.l.b16 %v96
  %v654 = vunpack.c.h.b16 %v96
  %v655 = vunpack.c.l.b16 %v97
  %v656 = vunpack.c.h.b16 %v97
  %v657 = vunpack.c.l.b16 %v98
  %v658 = vunpack.c.h.b16 %v98
  %v659 = vunpack.c.l.b16 %v99
  %v660 = vunpack.c.h.b16 %v99
  %v661 = vunpack.c.l.b16 %v100
  %v662 = vunpack.c.h.b16 %v100
  %v663 = vunpack.c.l.b16 %v101
  %v664 = vunpack.c.h.b16 %v101
  %v665 = vunpack.c.l.b16 %v102
  %v666 = vunpack.c.h.b16 %v102
  %v667 = vunpack.c.l.b16 %v103
  %v668 = vunpack.c.h.b16 %v103
  %v669 = vunpack.c.l.b16 %v104
  %v670 = vunpack.c.h.b16 %v104
  %v671 = vunpack.c.l.b16 %v105
  %v672 = vunpack.c.h.b16 %v105
  %v673 = vunpack.c.l.b16 %v106
  %v674 = vunpack.c.h.b16 %v106
  %v675 = vunpack.c.l.b16 %v107
  %v676 = vunpack.c.h.b16 %v107
  %v677 = vunpack.c.l.b16 %v108
  %v678 = vunpack.c.h.b16 %v108
  %v679 = vunpack.c.l.b16 %v109
  %v680 = vunpack.c.h.b16 %v109
  %v681 = vunpack.c.l.b16 %v110
  %v682 = vunpack.c.h.b16 %v110
  %v683 = vunpack.c.l.b16 %v111
  %v684 = vunpack.c.h.b16 %v111
  %v685 = vunpack.c.l.b16 %v112
  %v686 = vunpack.c.h.b16 %v112
  %v687 = vunpack.c.l.b16 %v113
  %v688 = vunpack.c.h.b16 %v113
  %v689 = vunpack.c.l.b16 %v114
  %v690 = vunpack.c.h.b16 %v114
  %v691 = vunpack.c.l.b16 %v115
  %v692 = vunpack.c.h.b16 %v115
  %v693 = vunpack.c.l.b16 %v116
  %v694 = vunpack.c.h.b16 %v116
  %v695 = vunpack.c.l.b16 %v117
  %v696 = vunpack.c.h.b16 %v117
  %v697 = vunpack.c.l.b16 %v118
  %v698 = vunpack.c.h.b16 %v118
  %v699 = vunpack.c.l.b16 %v119
  %v700 = vunpack.c.h.b16 %v119
  %v701 = vunpack.c.l.b16 %v120
  %v702 = vunpack.c.h.b16 %v120
  %v703 = vunpack.c.l.b16 %v121
  %v704 = vunpack.c.h.b16 %v121
  %v705 = vunpack.c.l.b16 %v122
  %v706 = vunpack.c.h.b16 %v122
  %v707 = vunpack.c.l.b16 %v123
  %v708 = vunpack.c.h.b16 %v123
  %v709 = vunpack.c.l.b16 %v124
  %v710 = vunpack.c.h.b16 %v124
  %v711 = vunpack.c.l.b16 %v125
  %v712 = vunpack.c.h.b16 %v125
  %v713 = vunpack.c.l.b16 %v126
  %v714 = vunpack.c.h.b16 %v126
  %v715 = vunpack.c.l.b16 %v127
  %v716 = vunpack.c.h.b16 %v127
  %v717 = vunpack.c.l.b16 %v128
  %v718 = vunpack.c.h.b16 %v128
  %v719 = vunpack.c.l.b16 %v129
  %v720 = vunpack.c.h.b16 %v129
  %v721 = vunpack.c.l.b16 %v130
  %v722 = vunpack.c.h.b16 %v130
  %v723 = vunpack.c.l.b16 %v131
  %v724 = vunpack.c.h.b16 %v131
  %v725 = vunpack.c.l.b16 %v132
  %v726 = vunpack.c.h.b16 %v132
  %v727 = vunpack.c.l.b16 %v133
  %v728 = vunpack.c.h.b16 %v133
  %v729 = vunpack.c.l.b16 %v134
  %v730 = vunpack.c.h.b16 %v134
  %v731 = vunpack.c.l.b16 %v135
  %v732 = vunpack.c.h.b16 %v135
  %v733 = vunpack.c.l.b16 %v136
  %v734 = vunpack.c.h.b16 %v136
  %v735 = vunpack.c.l.b16 %v137
  %v736 = vunpack.c.h.b16 %v137
  %v737 = vunpack.c.l.b16 %v138
  %v738 = vunpack.c.h.b16 %v138
  %v739 = vunpack.c.l.b16 %v139
  %v740 = vunpack.c.h.b16 %v139
  %v741 = vunpack.c.l.b16 %v140
  %v742 = vunpack.c.h.b16 %v140
  %v743 = vunpack.c.l.b16 %v141
  %v744 = vunpack.c.h.b16 %v141
  %v745 = vunpack.c.l.b16 %v142
  %v746 = vunpack.c.h.b16 %v142
  %v747 = vunpack.c.l.b16 %v143
  %v748 = vunpack.c.h.b16 %v143
  %v749 = vunpack.c.l.b16 %v144
  %v750 = vunpack.c.h.b16 %v144
  %v751 = vunpack.c.l.b16 %v145
  %v752 = vunpack.c.h.b16 %v145
  %v753 = vunpack.c.l.b16 %v146
  %v754 = vunpack.c.h.b16 %v146
  %v755 = vunpack.c.l.b16 %v147
  %v756 = vunpack.c.h.b16 %v147
  %v757 = vunpack.c.l.b16 %v148
  %v758 = vunpack.c.h.b16 %v148
  %v759 = vunpack.c.l.b16 %v149
  %v760 = vunpack.c.h.b16 %v149
  %v761 = vunpack.c.l.b16 %v150
  %v762 = vunpack.c.h.b16 %v150
  %v763 = vunpack.c.l.b16 %v151
  %v764 = vunpack.c.h.b16 %v151
  %v765 = vunpack.c.l.b16 %v152
  %v766 = vunpack.c.h.b16 %v152
  %v767 = vunpack.c.l.b16 %v153
  %v768 = vunpack.c.h.b16 %v153
  %v769 = vunpack.c.l.b16 %v154
  %v770 = vunpack.c.h.b16 %v154
  %v771 = vunpack.c.l.b16 %v155
  %v772 = vunpack.c.h.b16 %v155
  %v773 = vunpack.c.l.b16 %v156
  %v774 = vunpack.c.h.b16 %v156
  %v775 = vunpack.c.l.b16 %v157
  %v776 = vunpack.c.h.b16 %v157
  %v777 = vunpack.c.l.b16 %v158
  %v778 = vunpack.c.h.b16 %v158
  %v779 = vunpack.c.l.b16 %v159
  %v780 = vunpack.c.h.b16 %v159
  %v781 = vunpack.c.l.b16 %v160
  %v782 = vunpack.c.h.b16 %v160
  %v783 = vunpack.c.l.b16 %v161
  %v784 = vunpack.c.h.b16 %v161
  %v785 = vunpack.c.l.b16 %v162
  %v786 = vunpack.c.h.b16 %v162
  %v787 = vunpack.c.l.b16 %v163
  %v788 = vunpack.c.h.b16 %v163
  %v789 = vunpack.c.l.b16 %v164
  %v790 = vunpack.c.h.b16 %v164
  %v791 = vunpack.c.l.b16 %v165
  %v792 = vunpack.c.h.b16 %v165
  %v793 = vunpack.c.l.b16 %v166
  %v794 = vunpack.c.h.b16 %v166
  %v795 = vunpack.c.l.b16 %v167
  %v796 = vunpack.c.h.b16 %v167
  %v797 = vunpack.c.l.b16 %v168
  %v798 = vunpack.c.h.b16 %v168
  %v799 = vunpack.c.l.b16 %v169
  %v800 = vunpack.c.h.b16 %v169
  %v801 = vunpack.c.l.b16 %v170
  %v802 = vunpack.c.h.b16 %v170
  %v803 = vunpack.c.l.b16 %v171
  %v804 = vunpack.c.h.b16 %v171
  %v805 = vunpack.c.l.b16 %v172
  %v806 = vunpack.c.h.b16 %v172
  %v807 = vunpack.c.l.b16 %v173
  %v808 = vunpack.c.h.b16 %v173
  %v809 = vunpack.c.l.b16 %v174
  %v810 = vunpack.c.h.b16 %v174
  %v811 = vunpack.c.l.b16 %v175
  %v812 = vunpack.c.h.b16 %v175
  %v813 = vunpack.c.l.b16 %v176
  %v814 = vunpack.c.h.b16 %v176
  %v815 = vunpack.c.l.b16 %v177
  %v816 = vunpack.c.h.b16 %v177
  %v817 = vunpack.c.l.b16 %v178
  %v818 = vunpack.c.h.b16 %v178
  %v819 = vpack.c.b16 %v579, %v563
  %v820 = vpack.c.b16 %v580, %v564
  %v821 = vpack.c.b16 %v581, %v565
  %v822 = vpack.c.b16 %v582, %v566
  %v823 = vpack.c.b16 %v583, %v567
  %v824 = vpack.c.b16 %v584, %v568
  %v825 = vpack.c.b16 %v585, %v569
  %v826 = vpack.c.b16 %v586, %v570
  %v827 = vpack.c.b16 %v587, %v571
  %v828 = vpack.c.b16 %v588, %v572
  %v829 = vpack.c.b16 %v589, %v573
  %v830 = vpack.c.b16 %v590, %v574
  %v831 = vpack.c.b16 %v591, %v575
  %v832 = vpack.c.b16 %v592, %v576
  %v833 = vpack.c.b16 %v593, %v577
  %v834 = vpack.c.b16 %v594, %v578
  %v835 = vpack.c.b16 %v611, %v595
  %v836 = vpack.c.b16 %v612, %v596
  %v837 = vpack.c.b16 %v613, %v597
  %v838 = vpack.c.b16 %v614, %v598
  %v839 = vpack.c.b16 %v615, %v599
  %v840 = vpack.c.b16 %v616, %v600
  %v841 = vpack.c.b16 %v617, %v601
  %v842 = vpack.c.b16 %v618, %v602
  %v843 = vpack.c.b16 %v619, %v603
  %v844 = vpack.c.b16 %v620, %v604
  %v845 = vpack.c.b16 %v621, %v605
  %v846 = vpack.c.b16 %v622, %v606
  %v847 = vpack.c.b16 %v623, %v607
  %v848 = vpack.c.b16 %v624, %v608
  %v849 = vpack.c.b16 %v625, %v609
  %v850 = vpack.c.b16 %v626, %v610
  %v851 = vpack.c.b16 %v643, %v627
  %v852 = vpack.c.b16 %v644, %v628
  %v853 = vpack.c.b16 %v645, %v629
  %v854 = vpack.c.b16 %v646, %v630
  %v855 = vpack.c.b16 %v647, %v631
  %v856 = vpack.c.b16 %v648, %v632
  %v857 = vpack.c.b16 %v649, %v633
  %v858 = vpack.c.b16 %v650, %v634
  %v859 = vpack.c.b16 %v651, %v635
  %v860 = vpack.c.b16 %v652, %v636
  %v861 = vpack.c.b16 %v653, %v637
  %v862 = vpack.c.b16 %v654, %v638
  %v863 = vpack.c.b16 %v655, %v639
  %v864 = vpack.c.b16 %v656, %v640
  %v865 = vpack.c.b16 %v657, %v641
  %v866 = vpack.c.b16 %v658, %v642
  %v867 = vpack.c.b16 %v675, %v659
  %v868 = vpack.c.b16 %v676, %v660
  %v869 = vpack.c.b16 %v677, %v661
  %v870 = vpack.c.b16 %v678, %v662
  %v871 = vpack.c.b16 %v679, %v663
  %v872 = vpack.c.b16 %v680, %v664
  %v873 = vpack.c.b16 %v681, %v665
  %v874 = vpack.c.b16 %v682, %v666
  %v875 = vpack.c.b16 %v683, %v667
  %v876 = vpack.c.b16 %v684, %v668
  %v877 = vpack.c.b16 %v685, %v669
  %v878 = vpack.c.b16 %v686, %v670
  %v879 = vpack.c.b16 %v687, %v671
  %v880 = vpack.c.b16 %v688, %v672
  %v881 = vpack.c.b16 %v689, %v673
  %v882 = vpack.c.b16 %v690, %v674
  %v883 = vpack.c.b16 %v707, %v691
  %v884 = vpack.c.b16 %v708, %v692
  %v885 = vpack.c.b16 %v709, %v693
  %v886 = vpack.c.b16 %v710, %v694
  %v887 = vpack.c.b16 %v711, %v695
  %v888 = vpack.c.b16 %v712, %v696
  %v889 = vpack.c.b16 %v713, %v697
  %v890 = vpack.c.b16 %v714, %v698
  %v891 = vpack.c.b16 %v715, %v699
  %v892 = vpack.c.b16 %v716, %v700
  %v893 = vpack.c.b16 %v717, %v701
  %v894 = vpack.c.b16 %v718, %v702
  %v895 = vpack.c.b16 %v719, %v703
  %v896 = vpack.c.b16 %v720, %v704
  %v897 = vpack.c.b16 %v721, %v705
  %v898 = vpack.c.b16 %v722, %v706
  %v899 = vpack.c.b16 %v739, %v723
  %v900 = vpack.c.b16 %v740, %v724
  %v901 = vpack.c.b16 %v741, %v725
  %v902 = vpack.c.b16 %v742, %v726
  %v903 = vpack.c.b16 %v743, %v727
  %v904 = vpack.c.b16 %v744, %v728
  %v905 = vpack.c.b16 %v745, %v729
  %v906 = vpack.c.b16 %v746, %v730
  %v907 = vpack.c.b16 %v747, %v731
  %v908 = vpack.c.b16 %v748, %v732
  %v909 = vpack.c.b16 %v749, %v733
  %v910 = vpack.c.b16 %v750, %v734
  %v911 = vpack.c.b16 %v751, %v735
  %v912 = vpack.c.b16 %v752, %v736
  %v913 = vpack.c.b16 %v753, %v737
  %v914 = vpack.c.b16 %v754, %v738
  %v915 = vpack.c.b16 %v771, %v755
  %v916 = vpack.c.b16 %v772, %v756
  %v917 = vpack.c.b16 %v773, %v757
  %v918 = vpack.c.b16 %v774, %v758
  %v919 = vpack.c.b16 %v775, %v759
  %v920 = vpack.c.b16 %v776, %v760
  %v921 = vpack.c.b16 %v777, %v761
  %v922 = vpack.c.b16 %v778, %v762
  %v923 = vpack.c.b16 %v779, %v763
  %v924 = vpack.c.b16 %v780, %v764
  %v925 = vpack.c.b16 %v781, %v765
  %v926 = vpack.c.b16 %v782, %v766
  %v927 = vpack.c.b16 %v783, %v767
  %v928 = vpack.c.b16 %v784, %v768
  %v929 = vpack.c.b16 %v785, %v769
  %v930 = vpack.c.b16 %v786, %v770
  %v931 = vpack.c.b16 %v803, %v787
  %v932 = vpack.c.b16 %v804, %v788
  %v933 = vpack.c.b16 %v805, %v789
  %v934 = vpack.c.b16 %v806, %v790
  %v935 = vpack.c.b16 %v807, %v791
  %v936 = vpack.c.b16 %v808, %v792
  %v937 = vpack.c.b16 %v809, %v793
  %v938 = vpack.c.b16 %v810, %v794
  %v939 = vpack.c.b16 %v811, %v795
  %v940 = vpack.c.b16 %v812, %v796
  %v941 = vpack.c.b16 %v813, %v797
  %v942 = vpack.c.b16 %v814, %v798
  %v943 = vpack.c.b16 %v815, %v799
  %v944 = vpack.c.b16 %v816, %v800
  %v945 = vpack.c.b16 %v817, %v801
  %v946 = vpack.c.b16 %v818, %v802
  %v1331 = vunpack.c.l.b16 %v179
  %v1332 = vunpack.c.l.b16 %v180
  %v1333 = vunpack.c.l.b16 %v181
  %v1334 = vunpack.c.l.b16 %v182
  %v1335 = vunpack.c.l.b16 %v183
  %v1336 = vunpack.c.l.b16 %v184
  %v1337 = vunpack.c.l.b16 %v185
  %v1338 = vunpack.c.l.b16 %v186
  %v1339 = vunpack.c.l.b16 %v187
  %v1340 = vunpack.c.l.b16 %v188
  %v1341 = vunpack.c.l.b16 %v189
  %v1342 = vunpack.c.l.b16 %v190
  %v1343 = vunpack.c.l.b16 %v191
  %v1344 = vunpack.c.l.b16 %v192
  %v1345 = vunpack.c.l.b16 %v193
  %v1346 = vunpack.c.l.b16 %v194
  %v1347 = vunpack.c.l.b16 %v195
  %v1348 = vunpack.c.l.b16 %v196
  %v1349 = vunpack.c.l.b16 %v197
  %v1350 = vunpack.c.l.b16 %v198
  %v1351 = vunpack.c.l.b16 %v199
  %v1352 = vunpack.c.l.b16 %v200
  %v1353 = vunpack.c.l.b16 %v201
  %v1354 = vunpack.c.l.b16 %v202
  %v1355 = vunpack.c.l.b16 %v203
  %v1356 = vunpack.c.l.b16 %v204
  %v1357 = vunpack.c.l.b16 %v205
  %v1358 = vunpack.c.l.b16 %v206
  %v1359 = vunpack.c.l.b16 %v207
  %v1360 = vunpack.c.l.b16 %v208
  %v1361 = vunpack.c.l.b16 %v209
  %v1362 = vunpack.c.l.b16 %v210
  %v1363 = vunpack.c.l.b16 %v211
  %v1364 = vunpack.c.l.b16 %v212
  %v1365 = vunpack.c.l.b16 %v213
  %v1366 = vunpack.c.l.b16 %v214
  %v1367 = vunpack.c.l.b16 %v215
  %v1368 = vunpack.c.l.b16 %v216
  %v1369 = vunpack.c.l.b16 %v217
  %v1370 = vunpack.c.l.b16 %v218
  %v1371 = vunpack.c.l.b16 %v219
  %v1372 = vunpack.c.l.b16 %v220
  %v1373 = vunpack.c.l.b16 %v221
  %v1374 = vunpack.c.l.b16 %v222
  %v1375 = vunpack.c.l.b16 %v223
  %v1376 = vunpack.c.l.b16 %v224
  %v1377 = vunpack.c.l.b16 %v225
  %v1378 = vunpack.c.l.b16 %v226
  %v1379 = vunpack.c.l.b16 %v227
  %v1380 = vunpack.c.l.b16 %v228
  %v1381 = vunpack.c.l.b16 %v229
  %v1382 = vunpack.c.l.b16 %v230
  %v1383 = vunpack.c.l.b16 %v231
  %v1384 = vunpack.c.l.b16 %v232
  %v1385 = vunpack.c.l.b16 %v233
  %v1386 = vunpack.c.l.b16 %v234
  %v1387 = vunpack.c.l.b16 %v235
  %v1388 = vunpack.c.l.b16 %v236
  %v1389 = vunpack.c.l.b16 %v237
  %v1390 = vunpack.c.l.b16 %v238
  %v1391 = vunpack.c.l.b16 %v239
  %v1392 = vunpack.c.l.b16 %v240
  %v1393 = vunpack.c.l.b16 %v241
  %v1394 = vunpack.c.l.b16 %v242
  %v1395 = vunpack.c.l.b16 %v243
  %v1396 = vunpack.c.l.b16 %v244
  %v1397 = vunpack.c.l.b16 %v245
  %v1398 = vunpack.c.l.b16 %v246
  %v1399 = vunpack.c.l.b16 %v247
  %v1400 = vunpack.c.l.b16 %v248
  %v1401 = vunpack.c.l.b16 %v249
  %v1402 = vunpack.c.l.b16 %v250
  %v1403 = vunpack.c.l.b16 %v251
  %v1404 = vunpack.c.l.b16 %v252
  %v1405 = vunpack.c.l.b16 %v253
  %v1406 = vunpack.c.l.b16 %v254
  %v1407 = vunpack.c.l.b16 %v255
  %v1408 = vunpack.c.l.b16 %v256
  %v1409 = vunpack.c.l.b16 %v257
  %v1410 = vunpack.c.l.b16 %v258
  %v1411 = vunpack.c.l.b16 %v259
  %v1412 = vunpack.c.l.b16 %v260
  %v1413 = vunpack.c.l.b16 %v261
  %v1414 = vunpack.c.l.b16 %v262
  %v1415 = vunpack.c.l.b16 %v263
  %v1416 = vunpack.c.l.b16 %v264
  %v1417 = vunpack.c.l.b16 %v265
  %v1418 = vunpack.c.l.b16 %v266
  %v1419 = vunpack.c.l.b16 %v267
  %v1420 = vunpack.c.l.b16 %v268
  %v1421 = vunpack.c.l.b16 %v269
  %v1422 = vunpack.c.l.b16 %v270
  %v1423 = vunpack.c.l.b16 %v271
  %v1424 = vunpack.c.l.b16 %v272
  %v1425 = vunpack.c.l.b16 %v273
  %v1426 = vunpack.c.l.b16 %v274
  %v1427 = vunpack.c.l.b16 %v275
  %v1428 = vunpack.c.l.b16 %v276
  %v1429 = vunpack.c.l.b16 %v277
  %v1430 = vunpack.c.l.b16 %v278
  %v1431 = vunpack.c.l.b16 %v279
  %v1432 = vunpack.c.l.b16 %v280
  %v1433 = vunpack.c.l.b16 %v281
  %v1434 = vunpack.c.l.b16 %v282
  %v1435 = vunpack.c.l.b16 %v283
  %v1436 = vunpack.c.l.b16 %v284
  %v1437 = vunpack.c.l.b16 %v285
  %v1438 = vunpack.c.l.b16 %v286
  %v1439 = vunpack.c.l.b16 %v287
  %v1440 = vunpack.c.l.b16 %v288
  %v1441 = vunpack.c.l.b16 %v289
  %v1442 = vunpack.c.l.b16 %v290
  %v1443 = vunpack.c.l.b16 %v291
  %v1444 = vunpack.c.l.b16 %v292
  %v1445 = vunpack.c.l.b16 %v293
  %v1446 = vunpack.c.l.b16 %v294
  %v1447 = vunpack.c.l.b16 %v295
  %v1448 = vunpack.c.l.b16 %v296
  %v1449 = vunpack.c.l.b16 %v297
  %v1450 = vunpack.c.l.b16 %v298
  %v1451 = vunpack.c.l.b16 %v299
  %v1452 = vunpack.c.l.b16 %v300
  %v1453 = vunpack.c.l.b16 %v301
  %v1454 = vunpack.c.l.b16 %v302
  %v1455 = vunpack.c.l.b16 %v303
  %v1456 = vunpack.c.l.b16 %v304
  %v1457 = vunpack.c.l.b16 %v305
  %v1458 = vunpack.c.l.b16 %v306
  %v1459 = vunpack.c.l.b16 %v307
  %v1460 = vunpack.c.l.b16 %v308
  %v1461 = vunpack.c.l.b16 %v309
  %v1462 = vunpack.c.l.b16 %v310
  %v1463 = vunpack.c.l.b16 %v311
  %v1464 = vunpack.c.l.b16 %v312
  %v1465 = vunpack.c.l.b16 %v313
  %v1466 = vunpack.c.l.b16 %v314
  %v1467 = vunpack.c.l.b16 %v315
  %v1468 = vunpack.c.l.b16 %v316
  %v1469 = vunpack.c.l.b16 %v317
  %v1470 = vunpack.c.l.b16 %v318
  %v1471 = vunpack.c.l.b16 %v319
  %v1472 = vunpack.c.l.b16 %v320
  %v1473 = vunpack.c.l.b16 %v321
  %v1474 = vunpack.c.l.b16 %v322
  %v1475 = vunpack.c.l.b16 %v323
  %v1476 = vunpack.c.l.b16 %v324
  %v1477 = vunpack.c.l.b16 %v325
  %v1478 = vunpack.c.l.b16 %v326
  %v1479 = vunpack.c.l.b16 %v327
  %v1480 = vunpack.c.l.b16 %v328
  %v1481 = vunpack.c.l.b16 %v329
  %v1482 = vunpack.c.l.b16 %v330
  %v1483 = vunpack.c.l.b16 %v331
  %v1484 = vunpack.c.l.b16 %v332
  %v1485 = vunpack.c.l.b16 %v333
  %v1486 = vunpack.c.l.b16 %v334
  %v1487 = vunpack.c.l.b16 %v335
  %v1488 = vunpack.c.l.b16 %v336
  %v1489 = vunpack.c.l.b16 %v337
  %v1490 = vunpack.c.l.b16 %v338
  %v1491 = vunpack.c.l.b16 %v339
  %v1492 = vunpack.c.l.b16 %v340
  %v1493 = vunpack.c.l.b16 %v341
  %v1494 = vunpack.c.l.b16 %v342
  %v1495 = vunpack.c.l.b16 %v343
  %v1496 = vunpack.c.l.b16 %v344
  %v1497 = vunpack.c.l.b16 %v345
  %v1498 = vunpack.c.l.b16 %v346
  %v1499 = vunpack.c.l.b16 %v347
  %v1500 = vunpack.c.l.b16 %v348
  %v1501 = vunpack.c.l.b16 %v349
  %v1502 = vunpack.c.l.b16 %v350
  %v1503 = vunpack.c.l.b16 %v351
  %v1504 = vunpack.c.l.b16 %v352
  %v1505 = vunpack.c.l.b16 %v353
  %v1506 = vunpack.c.l.b16 %v354
  %v1507 = vunpack.c.l.b16 %v355
  %v1508 = vunpack.c.l.b16 %v356
  %v1509 = vunpack.c.l.b16 %v357
  %v1510 = vunpack.c.l.b16 %v358
  %v1511 = vunpack.c.l.b16 %v359
  %v1512 = vunpack.c.l.b16 %v360
  %v1513 = vunpack.c.l.b16 %v361
  %v1514 = vunpack.c.l.b16 %v362
  %v1515 = vunpack.c.l.b16 %v363
  %v1516 = vunpack.c.l.b16 %v364
  %v1517 = vunpack.c.l.b16 %v365
  %v1518 = vunpack.c.l.b16 %v366
  %v1519 = vunpack.c.l.b16 %v367
  %v1520 = vunpack.c.l.b16 %v368
  %v1521 = vunpack.c.l.b16 %v369
  %v1522 = vunpack.c.l.b16 %v370
  %v1523 = vunpack.c.l.b16 %v371
  %v1524 = vunpack.c.l.b16 %v372
  %v1525 = vunpack.c.l.b16 %v373
  %v1526 = vunpack.c.l.b16 %v374
  %v1527 = vunpack.c.l.b16 %v375
  %v1528 = vunpack.c.l.b16 %v376
  %v1529 = vunpack.c.l.b16 %v377
  %v1530 = vunpack.c.l.b16 %v378
  %v1531 = vunpack.c.l.b16 %v379
  %v1532 = vunpack.c.l.b16 %v380
  %v1533 = vunpack.c.l.b16 %v381
  %v1534 = vunpack.c.l.b16 %v382
  %v1535 = vunpack.c.l.b16 %v383
  %v1536 = vunpack.c.l.b16 %v384
  %v1537 = vunpack.c.l.b16 %v385
  %v1538 = vunpack.c.l.b16 %v386
  %v1539 = vunpack.c.l.b16 %v387
  %v1540 = vunpack.c.l.b16 %v388
  %v1541 = vunpack.c.l.b16 %v389
  %v1542 = vunpack.c.l.b16 %v390
  %v1543 = vunpack.c.l.b16 %v391
  %v1544 = vunpack.c.l.b16 %v392
  %v1545 = vunpack.c.l.b16 %v393
  %v1546 = vunpack.c.l.b16 %v394
  %v1547 = vunpack.c.l.b16 %v395
  %v1548 = vunpack.c.l.b16 %v396
  %v1549 = vunpack.c.l.b16 %v397
  %v1550 = vunpack.c.l.b16 %v398
  %v1551 = vunpack.c.l.b16 %v399
  %v1552 = vunpack.c.l.b16 %v400
  %v1553 = vunpack.c.l.b16 %v401
  %v1554 = vunpack.c.l.b16 %v402
  %v1555 = vunpack.c.l.b16 %v403
  %v1556 = vunpack.c.l.b16 %v404
  %v1557 = vunpack.c.l.b16 %v405
  %v1558 = vunpack.c.l.b16 %v406
  %v1559 = vunpack.c.l.b16 %v407
  %v1560 = vunpack.c.l.b16 %v408
  %v1561 = vunpack.c.l.b16 %v409
  %v1562 = vunpack.c.l.b16 %v410
  %v1563 = vunpack.c.l.b16 %v411
  %v1564 = vunpack.c.l.b16 %v412
  %v1565 = vunpack.c.l.b16 %v413
  %v1566 = vunpack.c.l.b16 %v414
  %v1567 = vunpack.c.l.b16 %v415
  %v1568 = vunpack.c.l.b16 %v416
  %v1569 = vunpack.c.l.b16 %v417
  %v1570 = vunpack.c.l.b16 %v418
  %v1571 = vunpack.c.l.b16 %v419
  %v1572 = vunpack.c.l.b16 %v420
  %v1573 = vunpack.c.l.b16 %v421
  %v1574 = vunpack.c.l.b16 %v422
  %v1575 = vunpack.c.l.b16 %v423
  %v1576 = vunpack.c.l.b16 %v424
  %v1577 = vunpack.c.l.b16 %v425
  %v1578 = vunpack.c.l.b16 %v426
  %v1579 = vunpack.c.l.b16 %v427
  %v1580 = vunpack.c.l.b16 %v428
  %v1581 = vunpack.c.l.b16 %v429
  %v1582 = vunpack.c.l.b16 %v430
  %v1583 = vunpack.c.l.b16 %v431
  %v1584 = vunpack.c.l.b16 %v432
  %v1585 = vunpack.c.l.b16 %v433
  %v1586 = vunpack.c.l.b16 %v434
  %v1587 = vpack.c.b16 %v1332, %v1331
  %v1588 = vpack.c.b16 %v1334, %v1333
  %v1589 = vpack.c.b16 %v1336, %v1335
  %v1590 = vpack.c.b16 %v1338, %v1337
  %v1591 = vpack.c.b16 %v1340, %v1339
  %v1592 = vpack.c.b16 %v1342, %v1341
  %v1593 = vpack.c.b16 %v1344, %v1343
  %v1594 = vpack.c.b16 %v1346, %v1345
  %v1595 = vpack.c.b16 %v1348, %v1347
  %v1596 = vpack.c.b16 %v1350, %v1349
  %v1597 = vpack.c.b16 %v1352, %v1351
  %v1598 = vpack.c.b16 %v1354, %v1353
  %v1599 = vpack.c.b16 %v1356, %v1355
  %v1600 = vpack.c.b16 %v1358, %v1357
  %v1601 = vpack.c.b16 %v1360, %v1359
  %v1602 = vpack.c.b16 %v1362, %v1361
  %v1603 = vpack.c.b16 %v1364, %v1363
  %v1604 = vpack.c.b16 %v1366, %v1365
  %v1605 = vpack.c.b16 %v1368, %v1367
  %v1606 = vpack.c.b16 %v1370, %v1369
  %v1607 = vpack.c.b16 %v1372, %v1371
  %v1608 = vpack.c.b16 %v1374, %v1373
  %v1609 = vpack.c.b16 %v1376, %v1375
  %v1610 = vpack.c.b16 %v1378, %v1377
  %v1611 = vpack.c.b16 %v1380, %v1379
  %v1612 = vpack.c.b16 %v1382, %v1381
  %v1613 = vpack.c.b16 %v1384, %v1383
  %v1614 = vpack.c.b16 %v1386, %v1385
  %v1615 = vpack.c.b16 %v1388, %v1387
  %v1616 = vpack.c.b16 %v1390, %v1389
  %v1617 = vpack.c.b16 %v1392, %v1391
  %v1618 = vpack.c.b16 %v1394, %v1393
  %v1619 = vpack.c.b16 %v1396, %v1395
  %v1620 = vpack.c.b16 %v1398, %v1397
  %v1621 = vpack.c.b16 %v1400, %v1399
  %v1622 = vpack.c.b16 %v1402, %v1401
  %v1623 = vpack.c.b16 %v1404, %v1403
  %v1624 = vpack.c.b16 %v1406, %v1405
  %v1625 = vpack.c.b16 %v1408, %v1407
  %v1626 = vpack.c.b16 %v1410, %v1409
  %v1627 = vpack.c.b16 %v1412, %v1411
  %v1628 = vpack.c.b16 %v1414, %v1413
  %v1629 = vpack.c.b16 %v1416, %v1415
  %v1630 = vpack.c.b16 %v1418, %v1417
  %v1631 = vpack.c.b16 %v1420, %v1419
  %v1632 = vpack.c.b16 %v1422, %v1421
  %v1633 = vpack.c.b16 %v1424, %v1423
  %v1634 = vpack.c.b16 %v1426, %v1425
  %v1635 = vpack.c.b16 %v1428, %v1427
  %v1636 = vpack.c.b16 %v1430, %v1429
  %v1637 = vpack.c.b16 %v1432, %v1431
  %v1638 = vpack.c.b16 %v1434, %v1433
  %v1639 = vpack.c.b16 %v1436, %v1435
  %v1640 = vpack.c.b16 %v1438, %v1437
  %v1641 = vpack.c.b16 %v1440, %v1439
  %v1642 = vpack.c.b16 %v1442, %v1441
  %v1643 = vpack.c.b16 %v1444, %v1443
  %v1644 = vpack.c.b16 %v1446, %v1445
  %v1645 = vpack.c.b16 %v1448, %v1447
  %v1646 = vpack.c.b16 %v1450, %v1449
  %v1647 = vpack.c.b16 %v1452, %v1451
  %v1648 = vpack.c.b16 %v1454, %v1453
  %v1649 = vpack.c.b16 %v1456, %v1455
  %v1650 = vpack.c.b16 %v1458, %v1457
  %v1651 = vpack.c.b16 %v1460, %v1459
  %v1652 = vpack.c.b16 %v1462, %v1461
  %v1653 = vpack.c.b16 %v1464, %v1463
  %v1654 = vpack.c.b16 %v1466, %v1465
  %v1655 = vpack.c.b16 %v1468, %v1467
  %v1656 = vpack.c.b16 %v1470, %v1469
  %v1657 = vpack.c.b16 %v1472, %v1471
  %v1658 = vpack.c.b16 %v1474, %v1473
  %v1659 = vpack.c.b16 %v1476, %v1475
  %v1660 = vpack.c.b16 %v1478, %v1477
  %v1661 = vpack.c.b16 %v1480, %v1479
  %v1662 = vpack.c.b16 %v1482, %v1481
  %v1663 = vpack.c.b16 %v1484, %v1483
  %v1664 = vpack.c.b16 %v1486, %v1485
  %v1665 = vpack.c.b16 %v1488, %v1487
  %v1666 = vpack.c.b16 %v1490, %v1489
  %v1667 = vpack.c.b16 %v1492, %v1491
  %v1668 = vpack.c.b16 %v1494, %v1493
  %v1669 = vpack.c.b16 %v1496, %v1495
  %v1670 = vpack.c.b16 %v1498, %v1497
  %v1671 = vpack.c.b16 %v1500, %v1499
  %v1672 = vpack.c.b16 %v1502, %v1501
  %v1673 = vpack.c.b16 %v1504, %v1503
  %v1674 = vpack.c.b16 %v1506, %v1505
  %v1675 = vpack.c.b16 %v1508, %v1507
  %v1676 = vpack.c.b16 %v1510, %v1509
  %v1677 = vpack.c.b16 %v1512, %v1511
  %v1678 = vpack.c.b16 %v1514, %v1513
  %v1679 = vpack.c.b16 %v1516, %v1515
  %v1680 = vpack.c.b16 %v1518, %v1517
  %v1681 = vpack.c.b16 %v1520, %v1519
  %v1682 = vpack.c.b16 %v1522, %v1521
  %v1683 = vpack.c.b16 %v1524, %v1523
  %v1684 = vpack.c.b16 %v1526, %v1525
  %v1685 = vpack.c.b16 %v1528, %v1527
  %v1686 = vpack.c.b16 %v1530, %v1529
  %v1687 = vpack.c.b16 %v1532, %v1531
  %v1688 = vpack.c.b16 %v1534, %v1533
  %v1689 = vpack.c.b16 %v1536, %v1535
  %v1690 = vpack.c.b16 %v1538, %v1537
  %v1691 = vpack.c.b16 %v1540, %v1539
  %v1692 = vpack.c.b16 %v1542, %v1541
  %v1693 = vpack.c.b16 %v1544, %v1543
  %v1694 = vpack.c.b16 %v1546, %v1545
  %v1695 = vpack.c.b16 %v1548, %v1547
  %v1696 = vpack.c.b16 %v1550, %v1549
  %v1697 = vpack.c.b16 %v1552, %v1551
  %v1698 = vpack.c.b16 %v1554, %v1553
  %v1699 = vpack.c.b16 %v1556, %v1555
  %v1700 = vpack.c.b16 %v1558, %v1557
  %v1701 = vpack.c.b16 %v1560, %v1559
  %v1702 = vpack.c.b16 %v1562, %v1561
  %v1703 = vpack.c.b16 %v1564, %v1563
  %v1704 = vpack.c.b16 %v1566, %v1565
  %v1705 = vpack.c.b16 %v1568, %v1567
  %v1706 = vpack.c.b16 %v1570, %v1569
  %v1707 = vpack.c.b16 %v1572, %v1571
  %v1708 = vpack.c.b16 %v1574, %v1573
  %v1709 = vpack.c.b16 %v1576, %v1575
  %v1710 = vpack.c.b16 %v1578, %v1577
  %v1711 = vpack.c.b16 %v1580, %v1579
  %v1712 = vpack.c.b16 %v1582, %v1581
  %v1713 = vpack.c.b16 %v1584, %v1583
  %v1714 = vpack.c.b16 %v1586, %v1585
  %1843 = vmatprep.subr.bf16.mxu0 0
  %1844 = vmatpush1.bf16.msra.mxu0 %v1587
  %1845 = vmatprep.subr.bf16.mxu0 0
  %1846 = vmatpush1.bf16.msra.mxu0 %v1588
  %1847 = vmatprep.subr.bf16.mxu0 0
  %1848 = vmatpush1.bf16.msra.mxu0 %v1589
  %1849 = vmatprep.subr.bf16.mxu0 0
  %1850 = vmatpush1.bf16.msra.mxu0 %v1590
  %1851 = vmatprep.subr.bf16.mxu0 0
  %1852 = vmatpush1.bf16.msra.mxu0 %v1591
  %1853 = vmatprep.subr.bf16.mxu0 0
  %1854 = vmatpush1.bf16.msra.mxu0 %v1592
  %1855 = vmatprep.subr.bf16.mxu0 0
  %1856 = vmatpush1.bf16.msra.mxu0 %v1593
  %1857 = vmatprep.subr.bf16.mxu0 0
  %1858 = vmatpush1.bf16.msra.mxu0 %v1594
  %1859 = vmatprep.subr.bf16.mxu0 0
  %1860 = vmatpush1.bf16.msra.mxu0 %v1595
  %1861 = vmatprep.subr.bf16.mxu0 0
  %1862 = vmatpush1.bf16.msra.mxu0 %v1596
  %1863 = vmatprep.subr.bf16.mxu0 0
  %1864 = vmatpush1.bf16.msra.mxu0 %v1597
  %1865 = vmatprep.subr.bf16.mxu0 0
  %1866 = vmatpush1.bf16.msra.mxu0 %v1598
  %1867 = vmatprep.subr.bf16.mxu0 0
  %1868 = vmatpush1.bf16.msra.mxu0 %v1599
  %1869 = vmatprep.subr.bf16.mxu0 0
  %1870 = vmatpush1.bf16.msra.mxu0 %v1600
  %1871 = vmatprep.subr.bf16.mxu0 0
  %1872 = vmatpush1.bf16.msra.mxu0 %v1601
  %1873 = vmatprep.subr.bf16.mxu0 0
  %1874 = vmatpush1.bf16.msra.mxu0 %v1602
  %1875 = vmatprep.mubr.bf16.mxu0 %v820
  %1876 = vmatmul.mubr.bf16.gmra.mrb[0].mxu0 %v819
  %v1877 = vpop.f32.mrb[0].mxu0
  %v1878 = vadd.f32 0.0, %v1877
  %v1879 = vpop.f32.mrb[0].mxu0
  %v1880 = vpop.f32.mrb[0].mxu0
  %v1881 = vadd.f32 0.0, %v1880
  %v1882 = vpop.f32.mrb[0].mxu0
  %1883 = vmatprep.mubr.bf16.mxu0 %v836
  %1884 = vmatmul.mubr.bf16.gmra.mrb[0].mxu0 %v835
  %v1885 = vpop.f32.mrb[0].mxu0
  %v1886 = vadd.f32 0.0, %v1885
  %v1887 = vpop.f32.mrb[0].mxu0
  %v1888 = vpop.f32.mrb[0].mxu0
  %v1889 = vadd.f32 0.0, %v1888
  %v1890 = vpop.f32.mrb[0].mxu0
  %1891 = vmatprep.mubr.bf16.mxu0 %v852
  %1892 = vmatmul.mubr.bf16.gmra.mrb[0].mxu0 %v851
  %v1893 = vpop.f32.mrb[0].mxu0
  %v1894 = vadd.f32 0.0, %v1893
  %v1895 = vpop.f32.mrb[0].mxu0
  %v1896 = vpop.f32.mrb[0].mxu0
  %v1897 = vadd.f32 0.0, %v1896
  %v1898 = vpop.f32.mrb[0].mxu0
  %1899 = vmatprep.mubr.bf16.mxu0 %v868
  %1900 = vmatmul.mubr.bf16.gmra.mrb[0].mxu0 %v867
  %v1901 = vpop.f32.mrb[0].mxu0
  %v1902 = vadd.f32 0.0, %v1901
  %v1903 = vpop.f32.mrb[0].mxu0
  %v1904 = vpop.f32.mrb[0].mxu0
  %v1905 = vadd.f32 0.0, %v1904
  %v1906 = vpop.f32.mrb[0].mxu0
  %1907 = vmatprep.mubr.bf16.mxu0 %v884
  %1908 = vmatmul.mubr.bf16.gmra.mrb[0].mxu0 %v883
  %v1909 = vpop.f32.mrb[0].mxu0
  %v1910 = vadd.f32 0.0, %v1909
  %v1911 = vpop.f32.mrb[0].mxu0
  %v1912 = vpop.f32.mrb[0].mxu0
  %v1913 = vadd.f32 0.0, %v1912
  %v1914 = vpop.f32.mrb[0].mxu0
  %1915 = vmatprep.mubr.bf16.mxu0 %v900
  %1916 = vmatmul.mubr.bf16.gmra.mrb[0].mxu0 %v899
  %v1917 = vpop.f32.mrb[0].mxu0
  %v1918 = vadd.f32 0.0, %v1917
  %v1919 = vpop.f32.mrb[0].mxu0
  %v1920 = vpop.f32.mrb[0].mxu0
  %v1921 = vadd.f32 0.0, %v1920
  %v1922 = vpop.f32.mrb[0].mxu0
  %1923 = vmatprep.mubr.bf16.mxu0 %v916
  %1924 = vmatmul.mubr.bf16.gmra.mrb[0].mxu0 %v915
  %v1925 = vpop.f32.mrb[0].mxu0
  %v1926 = vadd.f32 0.0, %v1925
  %v1927 = vpop.f32.mrb[0].mxu0
  %v1928 = vpop.f32.mrb[0].mxu0
  %v1929 = vadd.f32 0.0, %v1928
  %v1930 = vpop.f32.mrb[0].mxu0
  %1931 = vmatprep.mubr.bf16.mxu0 %v932
  %1932 = vmatmul.mubr.bf16.gmra.mrb[0].mxu0 %v931
  %v1933 = vpop.f32.mrb[0].mxu0
  %v1934 = vadd.f32 0.0, %v1933
  %v1935 = vpop.f32.mrb[0].mxu0
  %v1936 = vpop.f32.mrb[0].mxu0
  %v1937 = vadd.f32 0.0, %v1936
  %v1938 = vpop.f32.mrb[0].mxu0
  %1939 = vdwg.mxu0
  %1940 = vmatprep.subr.bf16.mxu0 0
  %1941 = vmatpush1.bf16.msra.mxu0 %v1603
  %1942 = vmatprep.subr.bf16.mxu0 0
  %1943 = vmatpush1.bf16.msra.mxu0 %v1604
  %1944 = vmatprep.subr.bf16.mxu0 0
  %1945 = vmatpush1.bf16.msra.mxu0 %v1605
  %1946 = vmatprep.subr.bf16.mxu0 0
  %1947 = vmatpush1.bf16.msra.mxu0 %v1606
  %1948 = vmatprep.subr.bf16.mxu0 0
  %1949 = vmatpush1.bf16.msra.mxu0 %v1607
  %1950 = vmatprep.subr.bf16.mxu0 0
  %1951 = vmatpush1.bf16.msra.mxu0 %v1608
  %1952 = vmatprep.subr.bf16.mxu0 0
  %1953 = vmatpush1.bf16.msra.mxu0 %v1609
  %1954 = vmatprep.subr.bf16.mxu0 0
  %1955 = vmatpush1.bf16.msra.mxu0 %v1610
  %1956 = vmatprep.subr.bf16.mxu0 0
  %1957 = vmatpush1.bf16.msra.mxu0 %v1611
  %1958 = vmatprep.subr.bf16.mxu0 0
  %1959 = vmatpush1.bf16.msra.mxu0 %v1612
  %1960 = vmatprep.subr.bf16.mxu0 0
  %1961 = vmatpush1.bf16.msra.mxu0 %v1613
  %1962 = vmatprep.subr.bf16.mxu0 0
  %1963 = vmatpush1.bf16.msra.mxu0 %v1614
  %1964 = vmatprep.subr.bf16.mxu0 0
  %1965 = vmatpush1.bf16.msra.mxu0 %v1615
  %1966 = vmatprep.subr.bf16.mxu0 0
  %1967 = vmatpush1.bf16.msra.mxu0 %v1616
  %1968 = vmatprep.subr.bf16.mxu0 0
  %1969 = vmatpush1.bf16.msra.mxu0 %v1617
  %1970 = vmatprep.subr.bf16.mxu0 0
  %1971 = vmatpush1.bf16.msra.mxu0 %v1618
  %1972 = vmatprep.mubr.bf16.mxu0 %v822
  %1973 = vmatmul.mubr.bf16.gmra.mrb[0].mxu0 %v821
  %v1974 = vpop.f32.mrb[0].mxu0
  %v1975 = vadd.f32 %v1878, %v1974
  %v1976 = vpop.f32.mrb[0].mxu0
  %v1977 = vpop.f32.mrb[0].mxu0
  %v1978 = vadd.f32 %v1881, %v1977
  %v1979 = vpop.f32.mrb[0].mxu0
  %1980 = vmatprep.mubr.bf16.mxu0 %v838
  %1981 = vmatmul.mubr.bf16.gmra.mrb[0].mxu0 %v837
  %v1982 = vpop.f32.mrb[0].mxu0
  %v1983 = vadd.f32 %v1886, %v1982
  %v1984 = vpop.f32.mrb[0].mxu0
  %v1985 = vpop.f32.mrb[0].mxu0
  %v1986 = vadd.f32 %v1889, %v1985
  %v1987 = vpop.f32.mrb[0].mxu0
  %1988 = vmatprep.mubr.bf16.mxu0 %v854
  %1989 = vmatmul.mubr.bf16.gmra.mrb[0].mxu0 %v853
  %v1990 = vpop.f32.mrb[0].mxu0
  %v1991 = vadd.f32 %v1894, %v1990
  %v1992 = vpop.f32.mrb[0].mxu0
  %v1993 = vpop.f32.mrb[0].mxu0
  %v1994 = vadd.f32 %v1897, %v1993
  %v1995 = vpop.f32.mrb[0].mxu0
  %1996 = vmatprep.mubr.bf16.mxu0 %v870
  %1997 = vmatmul.mubr.bf16.gmra.mrb[0].mxu0 %v869
  %v1998 = vpop.f32.mrb[0].mxu0
  %v1999 = vadd.f32 %v1902, %v1998
  %v2000 = vpop.f32.mrb[0].mxu0
  %v2001 = vpop.f32.mrb[0].mxu0
  %v2002 = vadd.f32 %v1905, %v2001
  %v2003 = vpop.f32.mrb[0].mxu0
  %2004 = vmatprep.mubr.bf16.mxu0 %v886
  %2005 = vmatmul.mubr.bf16.gmra.mrb[0].mxu0 %v885
  %v2006 = vpop.f32.mrb[0].mxu0
  %v2007 = vadd.f32 %v1910, %v2006
  %v2008 = vpop.f32.mrb[0].mxu0
  %v2009 = vpop.f32.mrb[0].mxu0
  %v2010 = vadd.f32 %v1913, %v2009
  %v2011 = vpop.f32.mrb[0].mxu0
  %2012 = vmatprep.mubr.bf16.mxu0 %v902
  %2013 = vmatmul.mubr.bf16.gmra.mrb[0].mxu0 %v901
  %v2014 = vpop.f32.mrb[0].mxu0
  %v2015 = vadd.f32 %v1918, %v2014
  %v2016 = vpop.f32.mrb[0].mxu0
  %v2017 = vpop.f32.mrb[0].mxu0
  %v2018 = vadd.f32 %v1921, %v2017
  %v2019 = vpop.f32.mrb[0].mxu0
  %2020 = vmatprep.mubr.bf16.mxu0 %v918
  %2021 = vmatmul.mubr.bf16.gmra.mrb[0].mxu0 %v917
  %v2022 = vpop.f32.mrb[0].mxu0
  %v2023 = vadd.f32 %v1926, %v2022
  %v2024 = vpop.f32.mrb[0].mxu0
  %v2025 = vpop.f32.mrb[0].mxu0
  %v2026 = vadd.f32 %v1929, %v2025
  %v2027 = vpop.f32.mrb[0].mxu0
  %2028 = vmatprep.mubr.bf16.mxu0 %v934
  %2029 = vmatmul.mubr.bf16.gmra.mrb[0].mxu0 %v933
  %v2030 = vpop.f32.mrb[0].mxu0
  %v2031 = vadd.f32 %v1934, %v2030
  %v2032 = vpop.f32.mrb[0].mxu0
  %v2033 = vpop.f32.mrb[0].mxu0
  %v2034 = vadd.f32 %v1937, %v2033
  %v2035 = vpop.f32.mrb[0].mxu0
  %2036 = vdwg.mxu0
  %2037 = vmatprep.subr.bf16.mxu0 0
  %2038 = vmatpush1.bf16.msra.mxu0 %v1619
  %2039 = vmatprep.subr.bf16.mxu0 0
  %2040 = vmatpush1.bf16.msra.mxu0 %v1620
  %2041 = vmatprep.subr.bf16.mxu0 0
  %2042 = vmatpush1.bf16.msra.mxu0 %v1621
  %2043 = vmatprep.subr.bf16.mxu0 0
  %2044 = vmatpush1.bf16.msra.mxu0 %v1622
  %2045 = vmatprep.subr.bf16.mxu0 0
  %2046 = vmatpush1.bf16.msra.mxu0 %v1623
  %2047 = vmatprep.subr.bf16.mxu0 0
  %2048 = vmatpush1.bf16.msra.mxu0 %v1624
  %2049 = vmatprep.subr.bf16.mxu0 0
  %2050 = vmatpush1.bf16.msra.mxu0 %v1625
  %2051 = vmatprep.subr.bf16.mxu0 0
  %2052 = vmatpush1.bf16.msra.mxu0 %v1626
  %2053 = vmatprep.subr.bf16.mxu0 0
  %2054 = vmatpush1.bf16.msra.mxu0 %v1627
  %2055 = vmatprep.subr.bf16.mxu0 0
  %2056 = vmatpush1.bf16.msra.mxu0 %v1628
  %2057 = vmatprep.subr.bf16.mxu0 0
  %2058 = vmatpush1.bf16.msra.mxu0 %v1629
  %2059 = vmatprep.subr.bf16.mxu0 0
  %2060 = vmatpush1.bf16.msra.mxu0 %v1630
  %2061 = vmatprep.subr.bf16.mxu0 0
  %2062 = vmatpush1.bf16.msra.mxu0 %v1631
  %2063 = vmatprep.subr.bf16.mxu0 0
  %2064 = vmatpush1.bf16.msra.mxu0 %v1632
  %2065 = vmatprep.subr.bf16.mxu0 0
  %2066 = vmatpush1.bf16.msra.mxu0 %v1633
  %2067 = vmatprep.subr.bf16.mxu0 0
  %2068 = vmatpush1.bf16.msra.mxu0 %v1634
  %2069 = vmatprep.mubr.bf16.mxu0 %v824
  %2070 = vmatmul.mubr.bf16.gmra.mrb[0].mxu0 %v823
  %v2071 = vpop.f32.mrb[0].mxu0
  %v2072 = vadd.f32 %v1975, %v2071
  %v2073 = vpop.f32.mrb[0].mxu0
  %v2074 = vpop.f32.mrb[0].mxu0
  %v2075 = vadd.f32 %v1978, %v2074
  %v2076 = vpop.f32.mrb[0].mxu0
  %2077 = vmatprep.mubr.bf16.mxu0 %v840
  %2078 = vmatmul.mubr.bf16.gmra.mrb[0].mxu0 %v839
  %v2079 = vpop.f32.mrb[0].mxu0
  %v2080 = vadd.f32 %v1983, %v2079
  %v2081 = vpop.f32.mrb[0].mxu0
  %v2082 = vpop.f32.mrb[0].mxu0
  %v2083 = vadd.f32 %v1986, %v2082
  %v2084 = vpop.f32.mrb[0].mxu0
  %2085 = vmatprep.mubr.bf16.mxu0 %v856
  %2086 = vmatmul.mubr.bf16.gmra.mrb[0].mxu0 %v855
  %v2087 = vpop.f32.mrb[0].mxu0
  %v2088 = vadd.f32 %v1991, %v2087
  %v2089 = vpop.f32.mrb[0].mxu0
  %v2090 = vpop.f32.mrb[0].mxu0
  %v2091 = vadd.f32 %v1994, %v2090
  %v2092 = vpop.f32.mrb[0].mxu0
  %2093 = vmatprep.mubr.bf16.mxu0 %v872
  %2094 = vmatmul.mubr.bf16.gmra.mrb[0].mxu0 %v871
  %v2095 = vpop.f32.mrb[0].mxu0
  %v2096 = vadd.f32 %v1999, %v2095
  %v2097 = vpop.f32.mrb[0].mxu0
  %v2098 = vpop.f32.mrb[0].mxu0
  %v2099 = vadd.f32 %v2002, %v2098
  %v2100 = vpop.f32.mrb[0].mxu0
  %2101 = vmatprep.mubr.bf16.mxu0 %v888
  %2102 = vmatmul.mubr.bf16.gmra.mrb[0].mxu0 %v887
  %v2103 = vpop.f32.mrb[0].mxu0
  %v2104 = vadd.f32 %v2007, %v2103
  %v2105 = vpop.f32.mrb[0].mxu0
  %v2106 = vpop.f32.mrb[0].mxu0
  %v2107 = vadd.f32 %v2010, %v2106
  %v2108 = vpop.f32.mrb[0].mxu0
  %2109 = vmatprep.mubr.bf16.mxu0 %v904
  %2110 = vmatmul.mubr.bf16.gmra.mrb[0].mxu0 %v903
  %v2111 = vpop.f32.mrb[0].mxu0
  %v2112 = vadd.f32 %v2015, %v2111
  %v2113 = vpop.f32.mrb[0].mxu0
  %v2114 = vpop.f32.mrb[0].mxu0
  %v2115 = vadd.f32 %v2018, %v2114
  %v2116 = vpop.f32.mrb[0].mxu0
  %2117 = vmatprep.mubr.bf16.mxu0 %v920
  %2118 = vmatmul.mubr.bf16.gmra.mrb[0].mxu0 %v919
  %v2119 = vpop.f32.mrb[0].mxu0
  %v2120 = vadd.f32 %v2023, %v2119
  %v2121 = vpop.f32.mrb[0].mxu0
  %v2122 = vpop.f32.mrb[0].mxu0
  %v2123 = vadd.f32 %v2026, %v2122
  %v2124 = vpop.f32.mrb[0].mxu0
  %2125 = vmatprep.mubr.bf16.mxu0 %v936
  %2126 = vmatmul.mubr.bf16.gmra.mrb[0].mxu0 %v935
  %v2127 = vpop.f32.mrb[0].mxu0
  %v2128 = vadd.f32 %v2031, %v2127
  %v2129 = vpop.f32.mrb[0].mxu0
  %v2130 = vpop.f32.mrb[0].mxu0
  %v2131 = vadd.f32 %v2034, %v2130
  %v2132 = vpop.f32.mrb[0].mxu0
  %2133 = vdwg.mxu0
  %2134 = vmatprep.subr.bf16.mxu0 0
  %2135 = vmatpush1.bf16.msra.mxu0 %v1635
  %2136 = vmatprep.subr.bf16.mxu0 0
  %2137 = vmatpush1.bf16.msra.mxu0 %v1636
  %2138 = vmatprep.subr.bf16.mxu0 0
  %2139 = vmatpush1.bf16.msra.mxu0 %v1637
  %2140 = vmatprep.subr.bf16.mxu0 0
  %2141 = vmatpush1.bf16.msra.mxu0 %v1638
  %2142 = vmatprep.subr.bf16.mxu0 0
  %2143 = vmatpush1.bf16.msra.mxu0 %v1639
  %2144 = vmatprep.subr.bf16.mxu0 0
  %2145 = vmatpush1.bf16.msra.mxu0 %v1640
  %2146 = vmatprep.subr.bf16.mxu0 0
  %2147 = vmatpush1.bf16.msra.mxu0 %v1641
  %2148 = vmatprep.subr.bf16.mxu0 0
  %2149 = vmatpush1.bf16.msra.mxu0 %v1642
  %2150 = vmatprep.subr.bf16.mxu0 0
  %2151 = vmatpush1.bf16.msra.mxu0 %v1643
  %2152 = vmatprep.subr.bf16.mxu0 0
  %2153 = vmatpush1.bf16.msra.mxu0 %v1644
  %2154 = vmatprep.subr.bf16.mxu0 0
  %2155 = vmatpush1.bf16.msra.mxu0 %v1645
  %2156 = vmatprep.subr.bf16.mxu0 0
  %2157 = vmatpush1.bf16.msra.mxu0 %v1646
  %2158 = vmatprep.subr.bf16.mxu0 0
  %2159 = vmatpush1.bf16.msra.mxu0 %v1647
  %2160 = vmatprep.subr.bf16.mxu0 0
  %2161 = vmatpush1.bf16.msra.mxu0 %v1648
  %2162 = vmatprep.subr.bf16.mxu0 0
  %2163 = vmatpush1.bf16.msra.mxu0 %v1649
  %2164 = vmatprep.subr.bf16.mxu0 0
  %2165 = vmatpush1.bf16.msra.mxu0 %v1650
  %2166 = vmatprep.mubr.bf16.mxu0 %v826
  %2167 = vmatmul.mubr.bf16.gmra.mrb[0].mxu0 %v825
  %v2168 = vpop.f32.mrb[0].mxu0
  %v2169 = vadd.f32 %v2072, %v2168
  %v2170 = vpop.f32.mrb[0].mxu0
  %v2171 = vpop.f32.mrb[0].mxu0
  %v2172 = vadd.f32 %v2075, %v2171
  %v2173 = vpop.f32.mrb[0].mxu0
  %2174 = vmatprep.mubr.bf16.mxu0 %v842
  %2175 = vmatmul.mubr.bf16.gmra.mrb[0].mxu0 %v841
  %v2176 = vpop.f32.mrb[0].mxu0
  %v2177 = vadd.f32 %v2080, %v2176
  %v2178 = vpop.f32.mrb[0].mxu0
  %v2179 = vpop.f32.mrb[0].mxu0
  %v2180 = vadd.f32 %v2083, %v2179
  %v2181 = vpop.f32.mrb[0].mxu0
  %2182 = vmatprep.mubr.bf16.mxu0 %v858
  %2183 = vmatmul.mubr.bf16.gmra.mrb[0].mxu0 %v857
  %v2184 = vpop.f32.mrb[0].mxu0
  %v2185 = vadd.f32 %v2088, %v2184
  %v2186 = vpop.f32.mrb[0].mxu0
  %v2187 = vpop.f32.mrb[0].mxu0
  %v2188 = vadd.f32 %v2091, %v2187
  %v2189 = vpop.f32.mrb[0].mxu0
  %2190 = vmatprep.mubr.bf16.mxu0 %v874
  %2191 = vmatmul.mubr.bf16.gmra.mrb[0].mxu0 %v873
  %v2192 = vpop.f32.mrb[0].mxu0
  %v2193 = vadd.f32 %v2096, %v2192
  %v2194 = vpop.f32.mrb[0].mxu0
  %v2195 = vpop.f32.mrb[0].mxu0
  %v2196 = vadd.f32 %v2099, %v2195
  %v2197 = vpop.f32.mrb[0].mxu0
  %2198 = vmatprep.mubr.bf16.mxu0 %v890
  %2199 = vmatmul.mubr.bf16.gmra.mrb[0].mxu0 %v889
  %v2200 = vpop.f32.mrb[0].mxu0
  %v2201 = vadd.f32 %v2104, %v2200
  %v2202 = vpop.f32.mrb[0].mxu0
  %v2203 = vpop.f32.mrb[0].mxu0
  %v2204 = vadd.f32 %v2107, %v2203
  %v2205 = vpop.f32.mrb[0].mxu0
  %2206 = vmatprep.mubr.bf16.mxu0 %v906
  %2207 = vmatmul.mubr.bf16.gmra.mrb[0].mxu0 %v905
  %v2208 = vpop.f32.mrb[0].mxu0
  %v2209 = vadd.f32 %v2112, %v2208
  %v2210 = vpop.f32.mrb[0].mxu0
  %v2211 = vpop.f32.mrb[0].mxu0
  %v2212 = vadd.f32 %v2115, %v2211
  %v2213 = vpop.f32.mrb[0].mxu0
  %2214 = vmatprep.mubr.bf16.mxu0 %v922
  %2215 = vmatmul.mubr.bf16.gmra.mrb[0].mxu0 %v921
  %v2216 = vpop.f32.mrb[0].mxu0
  %v2217 = vadd.f32 %v2120, %v2216
  %v2218 = vpop.f32.mrb[0].mxu0
  %v2219 = vpop.f32.mrb[0].mxu0
  %v2220 = vadd.f32 %v2123, %v2219
  %v2221 = vpop.f32.mrb[0].mxu0
  %2222 = vmatprep.mubr.bf16.mxu0 %v938
  %2223 = vmatmul.mubr.bf16.gmra.mrb[0].mxu0 %v937
  %v2224 = vpop.f32.mrb[0].mxu0
  %v2225 = vadd.f32 %v2128, %v2224
  %v2226 = vpop.f32.mrb[0].mxu0
  %v2227 = vpop.f32.mrb[0].mxu0
  %v2228 = vadd.f32 %v2131, %v2227
  %v2229 = vpop.f32.mrb[0].mxu0
  %2230 = vdwg.mxu0
  %2231 = vmatprep.subr.bf16.mxu0 0
  %2232 = vmatpush1.bf16.msra.mxu0 %v1651
  %2233 = vmatprep.subr.bf16.mxu0 0
  %2234 = vmatpush1.bf16.msra.mxu0 %v1652
  %2235 = vmatprep.subr.bf16.mxu0 0
  %2236 = vmatpush1.bf16.msra.mxu0 %v1653
  %2237 = vmatprep.subr.bf16.mxu0 0
  %2238 = vmatpush1.bf16.msra.mxu0 %v1654
  %2239 = vmatprep.subr.bf16.mxu0 0
  %2240 = vmatpush1.bf16.msra.mxu0 %v1655
  %2241 = vmatprep.subr.bf16.mxu0 0
  %2242 = vmatpush1.bf16.msra.mxu0 %v1656
  %2243 = vmatprep.subr.bf16.mxu0 0
  %2244 = vmatpush1.bf16.msra.mxu0 %v1657
  %2245 = vmatprep.subr.bf16.mxu0 0
  %2246 = vmatpush1.bf16.msra.mxu0 %v1658
  %2247 = vmatprep.subr.bf16.mxu0 0
  %2248 = vmatpush1.bf16.msra.mxu0 %v1659
  %2249 = vmatprep.subr.bf16.mxu0 0
  %2250 = vmatpush1.bf16.msra.mxu0 %v1660
  %2251 = vmatprep.subr.bf16.mxu0 0
  %2252 = vmatpush1.bf16.msra.mxu0 %v1661
  %2253 = vmatprep.subr.bf16.mxu0 0
  %2254 = vmatpush1.bf16.msra.mxu0 %v1662
  %2255 = vmatprep.subr.bf16.mxu0 0
  %2256 = vmatpush1.bf16.msra.mxu0 %v1663
  %2257 = vmatprep.subr.bf16.mxu0 0
  %2258 = vmatpush1.bf16.msra.mxu0 %v1664
  %2259 = vmatprep.subr.bf16.mxu0 0
  %2260 = vmatpush1.bf16.msra.mxu0 %v1665
  %2261 = vmatprep.subr.bf16.mxu0 0
  %2262 = vmatpush1.bf16.msra.mxu0 %v1666
  %2263 = vmatprep.mubr.bf16.mxu0 %v828
  %2264 = vmatmul.mubr.bf16.gmra.mrb[0].mxu0 %v827
  %v2265 = vpop.f32.mrb[0].mxu0
  %v2266 = vadd.f32 %v2169, %v2265
  %v2267 = vpop.f32.mrb[0].mxu0
  %v2268 = vpop.f32.mrb[0].mxu0
  %v2269 = vadd.f32 %v2172, %v2268
  %v2270 = vpop.f32.mrb[0].mxu0
  %2271 = vmatprep.mubr.bf16.mxu0 %v844
  %2272 = vmatmul.mubr.bf16.gmra.mrb[0].mxu0 %v843
  %v2273 = vpop.f32.mrb[0].mxu0
  %v2274 = vadd.f32 %v2177, %v2273
  %v2275 = vpop.f32.mrb[0].mxu0
  %v2276 = vpop.f32.mrb[0].mxu0
  %v2277 = vadd.f32 %v2180, %v2276
  %v2278 = vpop.f32.mrb[0].mxu0
  %2279 = vmatprep.mubr.bf16.mxu0 %v860
  %2280 = vmatmul.mubr.bf16.gmra.mrb[0].mxu0 %v859
  %v2281 = vpop.f32.mrb[0].mxu0
  %v2282 = vadd.f32 %v2185, %v2281
  %v2283 = vpop.f32.mrb[0].mxu0
  %v2284 = vpop.f32.mrb[0].mxu0
  %v2285 = vadd.f32 %v2188, %v2284
  %v2286 = vpop.f32.mrb[0].mxu0
  %2287 = vmatprep.mubr.bf16.mxu0 %v876
  %2288 = vmatmul.mubr.bf16.gmra.mrb[0].mxu0 %v875
  %v2289 = vpop.f32.mrb[0].mxu0
  %v2290 = vadd.f32 %v2193, %v2289
  %v2291 = vpop.f32.mrb[0].mxu0
  %v2292 = vpop.f32.mrb[0].mxu0
  %v2293 = vadd.f32 %v2196, %v2292
  %v2294 = vpop.f32.mrb[0].mxu0
  %2295 = vmatprep.mubr.bf16.mxu0 %v892
  %2296 = vmatmul.mubr.bf16.gmra.mrb[0].mxu0 %v891
  %v2297 = vpop.f32.mrb[0].mxu0
  %v2298 = vadd.f32 %v2201, %v2297
  %v2299 = vpop.f32.mrb[0].mxu0
  %v2300 = vpop.f32.mrb[0].mxu0
  %v2301 = vadd.f32 %v2204, %v2300
  %v2302 = vpop.f32.mrb[0].mxu0
  %2303 = vmatprep.mubr.bf16.mxu0 %v908
  %2304 = vmatmul.mubr.bf16.gmra.mrb[0].mxu0 %v907
  %v2305 = vpop.f32.mrb[0].mxu0
  %v2306 = vadd.f32 %v2209, %v2305
  %v2307 = vpop.f32.mrb[0].mxu0
  %v2308 = vpop.f32.mrb[0].mxu0
  %v2309 = vadd.f32 %v2212, %v2308
  %v2310 = vpop.f32.mrb[0].mxu0
  %2311 = vmatprep.mubr.bf16.mxu0 %v924
  %2312 = vmatmul.mubr.bf16.gmra.mrb[0].mxu0 %v923
  %v2313 = vpop.f32.mrb[0].mxu0
  %v2314 = vadd.f32 %v2217, %v2313
  %v2315 = vpop.f32.mrb[0].mxu0
  %v2316 = vpop.f32.mrb[0].mxu0
  %v2317 = vadd.f32 %v2220, %v2316
  %v2318 = vpop.f32.mrb[0].mxu0
  %2319 = vmatprep.mubr.bf16.mxu0 %v940
  %2320 = vmatmul.mubr.bf16.gmra.mrb[0].mxu0 %v939
  %v2321 = vpop.f32.mrb[0].mxu0
  %v2322 = vadd.f32 %v2225, %v2321
  %v2323 = vpop.f32.mrb[0].mxu0
  %v2324 = vpop.f32.mrb[0].mxu0
  %v2325 = vadd.f32 %v2228, %v2324
  %v2326 = vpop.f32.mrb[0].mxu0
  %2327 = vdwg.mxu0
  %2328 = vmatprep.subr.bf16.mxu0 0
  %2329 = vmatpush1.bf16.msra.mxu0 %v1667
  %2330 = vmatprep.subr.bf16.mxu0 0
  %2331 = vmatpush1.bf16.msra.mxu0 %v1668
  %2332 = vmatprep.subr.bf16.mxu0 0
  %2333 = vmatpush1.bf16.msra.mxu0 %v1669
  %2334 = vmatprep.subr.bf16.mxu0 0
  %2335 = vmatpush1.bf16.msra.mxu0 %v1670
  %2336 = vmatprep.subr.bf16.mxu0 0
  %2337 = vmatpush1.bf16.msra.mxu0 %v1671
  %2338 = vmatprep.subr.bf16.mxu0 0
  %2339 = vmatpush1.bf16.msra.mxu0 %v1672
  %2340 = vmatprep.subr.bf16.mxu0 0
  %2341 = vmatpush1.bf16.msra.mxu0 %v1673
  %2342 = vmatprep.subr.bf16.mxu0 0
  %2343 = vmatpush1.bf16.msra.mxu0 %v1674
  %2344 = vmatprep.subr.bf16.mxu0 0
  %2345 = vmatpush1.bf16.msra.mxu0 %v1675
  %2346 = vmatprep.subr.bf16.mxu0 0
  %2347 = vmatpush1.bf16.msra.mxu0 %v1676
  %2348 = vmatprep.subr.bf16.mxu0 0
  %2349 = vmatpush1.bf16.msra.mxu0 %v1677
  %2350 = vmatprep.subr.bf16.mxu0 0
  %2351 = vmatpush1.bf16.msra.mxu0 %v1678
  %2352 = vmatprep.subr.bf16.mxu0 0
  %2353 = vmatpush1.bf16.msra.mxu0 %v1679
  %2354 = vmatprep.subr.bf16.mxu0 0
  %2355 = vmatpush1.bf16.msra.mxu0 %v1680
  %2356 = vmatprep.subr.bf16.mxu0 0
  %2357 = vmatpush1.bf16.msra.mxu0 %v1681
  %2358 = vmatprep.subr.bf16.mxu0 0
  %2359 = vmatpush1.bf16.msra.mxu0 %v1682
  %2360 = vmatprep.mubr.bf16.mxu0 %v830
  %2361 = vmatmul.mubr.bf16.gmra.mrb[0].mxu0 %v829
  %v2362 = vpop.f32.mrb[0].mxu0
  %v2363 = vadd.f32 %v2266, %v2362
  %v2364 = vpop.f32.mrb[0].mxu0
  %v2365 = vpop.f32.mrb[0].mxu0
  %v2366 = vadd.f32 %v2269, %v2365
  %v2367 = vpop.f32.mrb[0].mxu0
  %2368 = vmatprep.mubr.bf16.mxu0 %v846
  %2369 = vmatmul.mubr.bf16.gmra.mrb[0].mxu0 %v845
  %v2370 = vpop.f32.mrb[0].mxu0
  %v2371 = vadd.f32 %v2274, %v2370
  %v2372 = vpop.f32.mrb[0].mxu0
  %v2373 = vpop.f32.mrb[0].mxu0
  %v2374 = vadd.f32 %v2277, %v2373
  %v2375 = vpop.f32.mrb[0].mxu0
  %2376 = vmatprep.mubr.bf16.mxu0 %v862
  %2377 = vmatmul.mubr.bf16.gmra.mrb[0].mxu0 %v861
  %v2378 = vpop.f32.mrb[0].mxu0
  %v2379 = vadd.f32 %v2282, %v2378
  %v2380 = vpop.f32.mrb[0].mxu0
  %v2381 = vpop.f32.mrb[0].mxu0
  %v2382 = vadd.f32 %v2285, %v2381
  %v2383 = vpop.f32.mrb[0].mxu0
  %2384 = vmatprep.mubr.bf16.mxu0 %v878
  %2385 = vmatmul.mubr.bf16.gmra.mrb[0].mxu0 %v877
  %v2386 = vpop.f32.mrb[0].mxu0
  %v2387 = vadd.f32 %v2290, %v2386
  %v2388 = vpop.f32.mrb[0].mxu0
  %v2389 = vpop.f32.mrb[0].mxu0
  %v2390 = vadd.f32 %v2293, %v2389
  %v2391 = vpop.f32.mrb[0].mxu0
  %2392 = vmatprep.mubr.bf16.mxu0 %v894
  %2393 = vmatmul.mubr.bf16.gmra.mrb[0].mxu0 %v893
  %v2394 = vpop.f32.mrb[0].mxu0
  %v2395 = vadd.f32 %v2298, %v2394
  %v2396 = vpop.f32.mrb[0].mxu0
  %v2397 = vpop.f32.mrb[0].mxu0
  %v2398 = vadd.f32 %v2301, %v2397
  %v2399 = vpop.f32.mrb[0].mxu0
  %2400 = vmatprep.mubr.bf16.mxu0 %v910
  %2401 = vmatmul.mubr.bf16.gmra.mrb[0].mxu0 %v909
  %v2402 = vpop.f32.mrb[0].mxu0
  %v2403 = vadd.f32 %v2306, %v2402
  %v2404 = vpop.f32.mrb[0].mxu0
  %v2405 = vpop.f32.mrb[0].mxu0
  %v2406 = vadd.f32 %v2309, %v2405
  %v2407 = vpop.f32.mrb[0].mxu0
  %2408 = vmatprep.mubr.bf16.mxu0 %v926
  %2409 = vmatmul.mubr.bf16.gmra.mrb[0].mxu0 %v925
  %v2410 = vpop.f32.mrb[0].mxu0
  %v2411 = vadd.f32 %v2314, %v2410
  %v2412 = vpop.f32.mrb[0].mxu0
  %v2413 = vpop.f32.mrb[0].mxu0
  %v2414 = vadd.f32 %v2317, %v2413
  %v2415 = vpop.f32.mrb[0].mxu0
  %2416 = vmatprep.mubr.bf16.mxu0 %v942
  %2417 = vmatmul.mubr.bf16.gmra.mrb[0].mxu0 %v941
  %v2418 = vpop.f32.mrb[0].mxu0
  %v2419 = vadd.f32 %v2322, %v2418
  %v2420 = vpop.f32.mrb[0].mxu0
  %v2421 = vpop.f32.mrb[0].mxu0
  %v2422 = vadd.f32 %v2325, %v2421
  %v2423 = vpop.f32.mrb[0].mxu0
  %2424 = vdwg.mxu0
  %2425 = vmatprep.subr.bf16.mxu0 0
  %2426 = vmatpush1.bf16.msra.mxu0 %v1683
  %2427 = vmatprep.subr.bf16.mxu0 0
  %2428 = vmatpush1.bf16.msra.mxu0 %v1684
  %2429 = vmatprep.subr.bf16.mxu0 0
  %2430 = vmatpush1.bf16.msra.mxu0 %v1685
  %2431 = vmatprep.subr.bf16.mxu0 0
  %2432 = vmatpush1.bf16.msra.mxu0 %v1686
  %2433 = vmatprep.subr.bf16.mxu0 0
  %2434 = vmatpush1.bf16.msra.mxu0 %v1687
  %2435 = vmatprep.subr.bf16.mxu0 0
  %2436 = vmatpush1.bf16.msra.mxu0 %v1688
  %2437 = vmatprep.subr.bf16.mxu0 0
  %2438 = vmatpush1.bf16.msra.mxu0 %v1689
  %2439 = vmatprep.subr.bf16.mxu0 0
  %2440 = vmatpush1.bf16.msra.mxu0 %v1690
  %2441 = vmatprep.subr.bf16.mxu0 0
  %2442 = vmatpush1.bf16.msra.mxu0 %v1691
  %2443 = vmatprep.subr.bf16.mxu0 0
  %2444 = vmatpush1.bf16.msra.mxu0 %v1692
  %2445 = vmatprep.subr.bf16.mxu0 0
  %2446 = vmatpush1.bf16.msra.mxu0 %v1693
  %2447 = vmatprep.subr.bf16.mxu0 0
  %2448 = vmatpush1.bf16.msra.mxu0 %v1694
  %2449 = vmatprep.subr.bf16.mxu0 0
  %2450 = vmatpush1.bf16.msra.mxu0 %v1695
  %2451 = vmatprep.subr.bf16.mxu0 0
  %2452 = vmatpush1.bf16.msra.mxu0 %v1696
  %2453 = vmatprep.subr.bf16.mxu0 0
  %2454 = vmatpush1.bf16.msra.mxu0 %v1697
  %2455 = vmatprep.subr.bf16.mxu0 0
  %2456 = vmatpush1.bf16.msra.mxu0 %v1698
  %2457 = vmatprep.mubr.bf16.mxu0 %v832
  %2458 = vmatmul.mubr.bf16.gmra.mrb[0].mxu0 %v831
  %v2459 = vpop.f32.mrb[0].mxu0
  %v2460 = vadd.f32 %v2363, %v2459
  %v2461 = vpop.f32.mrb[0].mxu0
  %v2462 = vpop.f32.mrb[0].mxu0
  %v2463 = vadd.f32 %v2366, %v2462
  %v2464 = vpop.f32.mrb[0].mxu0
  %2465 = vmatprep.mubr.bf16.mxu0 %v848
  %2466 = vmatmul.mubr.bf16.gmra.mrb[0].mxu0 %v847
  %v2467 = vpop.f32.mrb[0].mxu0
  %v2468 = vadd.f32 %v2371, %v2467
  %v2469 = vpop.f32.mrb[0].mxu0
  %v2470 = vpop.f32.mrb[0].mxu0
  %v2471 = vadd.f32 %v2374, %v2470
  %v2472 = vpop.f32.mrb[0].mxu0
  %2473 = vmatprep.mubr.bf16.mxu0 %v864
  %2474 = vmatmul.mubr.bf16.gmra.mrb[0].mxu0 %v863
  %v2475 = vpop.f32.mrb[0].mxu0
  %v2476 = vadd.f32 %v2379, %v2475
  %v2477 = vpop.f32.mrb[0].mxu0
  %v2478 = vpop.f32.mrb[0].mxu0
  %v2479 = vadd.f32 %v2382, %v2478
  %v2480 = vpop.f32.mrb[0].mxu0
  %2481 = vmatprep.mubr.bf16.mxu0 %v880
  %2482 = vmatmul.mubr.bf16.gmra.mrb[0].mxu0 %v879
  %v2483 = vpop.f32.mrb[0].mxu0
  %v2484 = vadd.f32 %v2387, %v2483
  %v2485 = vpop.f32.mrb[0].mxu0
  %v2486 = vpop.f32.mrb[0].mxu0
  %v2487 = vadd.f32 %v2390, %v2486
  %v2488 = vpop.f32.mrb[0].mxu0
  %2489 = vmatprep.mubr.bf16.mxu0 %v896
  %2490 = vmatmul.mubr.bf16.gmra.mrb[0].mxu0 %v895
  %v2491 = vpop.f32.mrb[0].mxu0
  %v2492 = vadd.f32 %v2395, %v2491
  %v2493 = vpop.f32.mrb[0].mxu0
  %v2494 = vpop.f32.mrb[0].mxu0
  %v2495 = vadd.f32 %v2398, %v2494
  %v2496 = vpop.f32.mrb[0].mxu0
  %2497 = vmatprep.mubr.bf16.mxu0 %v912
  %2498 = vmatmul.mubr.bf16.gmra.mrb[0].mxu0 %v911
  %v2499 = vpop.f32.mrb[0].mxu0
  %v2500 = vadd.f32 %v2403, %v2499
  %v2501 = vpop.f32.mrb[0].mxu0
  %v2502 = vpop.f32.mrb[0].mxu0
  %v2503 = vadd.f32 %v2406, %v2502
  %v2504 = vpop.f32.mrb[0].mxu0
  %2505 = vmatprep.mubr.bf16.mxu0 %v928
  %2506 = vmatmul.mubr.bf16.gmra.mrb[0].mxu0 %v927
  %v2507 = vpop.f32.mrb[0].mxu0
  %v2508 = vadd.f32 %v2411, %v2507
  %v2509 = vpop.f32.mrb[0].mxu0
  %v2510 = vpop.f32.mrb[0].mxu0
  %v2511 = vadd.f32 %v2414, %v2510
  %v2512 = vpop.f32.mrb[0].mxu0
  %2513 = vmatprep.mubr.bf16.mxu0 %v944
  %2514 = vmatmul.mubr.bf16.gmra.mrb[0].mxu0 %v943
  %v2515 = vpop.f32.mrb[0].mxu0
  %v2516 = vadd.f32 %v2419, %v2515
  %v2517 = vpop.f32.mrb[0].mxu0
  %v2518 = vpop.f32.mrb[0].mxu0
  %v2519 = vadd.f32 %v2422, %v2518
  %v2520 = vpop.f32.mrb[0].mxu0
  %2521 = vdwg.mxu0
  %2522 = vmatprep.subr.bf16.mxu0 0
  %2523 = vmatpush1.bf16.msra.mxu0 %v1699
  %2524 = vmatprep.subr.bf16.mxu0 0
  %2525 = vmatpush1.bf16.msra.mxu0 %v1700
  %2526 = vmatprep.subr.bf16.mxu0 0
  %2527 = vmatpush1.bf16.msra.mxu0 %v1701
  %2528 = vmatprep.subr.bf16.mxu0 0
  %2529 = vmatpush1.bf16.msra.mxu0 %v1702
  %2530 = vmatprep.subr.bf16.mxu0 0
  %2531 = vmatpush1.bf16.msra.mxu0 %v1703
  %2532 = vmatprep.subr.bf16.mxu0 0
  %2533 = vmatpush1.bf16.msra.mxu0 %v1704
  %2534 = vmatprep.subr.bf16.mxu0 0
  %2535 = vmatpush1.bf16.msra.mxu0 %v1705
  %2536 = vmatprep.subr.bf16.mxu0 0
  %2537 = vmatpush1.bf16.msra.mxu0 %v1706
  %2538 = vmatprep.subr.bf16.mxu0 0
  %2539 = vmatpush1.bf16.msra.mxu0 %v1707
  %2540 = vmatprep.subr.bf16.mxu0 0
  %2541 = vmatpush1.bf16.msra.mxu0 %v1708
  %2542 = vmatprep.subr.bf16.mxu0 0
  %2543 = vmatpush1.bf16.msra.mxu0 %v1709
  %2544 = vmatprep.subr.bf16.mxu0 0
  %2545 = vmatpush1.bf16.msra.mxu0 %v1710
  %2546 = vmatprep.subr.bf16.mxu0 0
  %2547 = vmatpush1.bf16.msra.mxu0 %v1711
  %2548 = vmatprep.subr.bf16.mxu0 0
  %2549 = vmatpush1.bf16.msra.mxu0 %v1712
  %2550 = vmatprep.subr.bf16.mxu0 0
  %2551 = vmatpush1.bf16.msra.mxu0 %v1713
  %2552 = vmatprep.subr.bf16.mxu0 0
  %2553 = vmatpush1.bf16.msra.mxu0 %v1714
  %2554 = vmatprep.mubr.bf16.mxu0 %v834
  %2555 = vmatmul.mubr.bf16.gmra.mrb[0].mxu0 %v833
  %v2556 = vpop.f32.mrb[0].mxu0
  %v2557 = vadd.f32 %v2460, %v2556
  %v2558 = vpop.f32.mrb[0].mxu0
  %v2559 = vpop.f32.mrb[0].mxu0
  %v2560 = vadd.f32 %v2463, %v2559
  %v2561 = vpop.f32.mrb[0].mxu0
  %2562 = vmatprep.mubr.bf16.mxu0 %v850
  %2563 = vmatmul.mubr.bf16.gmra.mrb[0].mxu0 %v849
  %v2564 = vpop.f32.mrb[0].mxu0
  %v2565 = vadd.f32 %v2468, %v2564
  %v2566 = vpop.f32.mrb[0].mxu0
  %v2567 = vpop.f32.mrb[0].mxu0
  %v2568 = vadd.f32 %v2471, %v2567
  %v2569 = vpop.f32.mrb[0].mxu0
  %2570 = vmatprep.mubr.bf16.mxu0 %v866
  %2571 = vmatmul.mubr.bf16.gmra.mrb[0].mxu0 %v865
  %v2572 = vpop.f32.mrb[0].mxu0
  %v2573 = vadd.f32 %v2476, %v2572
  %v2574 = vpop.f32.mrb[0].mxu0
  %v2575 = vpop.f32.mrb[0].mxu0
  %v2576 = vadd.f32 %v2479, %v2575
  %v2577 = vpop.f32.mrb[0].mxu0
  %2578 = vmatprep.mubr.bf16.mxu0 %v882
  %2579 = vmatmul.mubr.bf16.gmra.mrb[0].mxu0 %v881
  %v2580 = vpop.f32.mrb[0].mxu0
  %v2581 = vadd.f32 %v2484, %v2580
  %v2582 = vpop.f32.mrb[0].mxu0
  %v2583 = vpop.f32.mrb[0].mxu0
  %v2584 = vadd.f32 %v2487, %v2583
  %v2585 = vpop.f32.mrb[0].mxu0
  %2586 = vmatprep.mubr.bf16.mxu0 %v898
  %2587 = vmatmul.mubr.bf16.gmra.mrb[0].mxu0 %v897
  %v2588 = vpop.f32.mrb[0].mxu0
  %v2589 = vadd.f32 %v2492, %v2588
  %v2590 = vpop.f32.mrb[0].mxu0
  %v2591 = vpop.f32.mrb[0].mxu0
  %v2592 = vadd.f32 %v2495, %v2591
  %v2593 = vpop.f32.mrb[0].mxu0
  %2594 = vmatprep.mubr.bf16.mxu0 %v914
  %2595 = vmatmul.mubr.bf16.gmra.mrb[0].mxu0 %v913
  %v2596 = vpop.f32.mrb[0].mxu0
  %v2597 = vadd.f32 %v2500, %v2596
  %v2598 = vpop.f32.mrb[0].mxu0
  %v2599 = vpop.f32.mrb[0].mxu0
  %v2600 = vadd.f32 %v2503, %v2599
  %v2601 = vpop.f32.mrb[0].mxu0
  %2602 = vmatprep.mubr.bf16.mxu0 %v930
  %2603 = vmatmul.mubr.bf16.gmra.mrb[0].mxu0 %v929
  %v2604 = vpop.f32.mrb[0].mxu0
  %v2605 = vadd.f32 %v2508, %v2604
  %v2606 = vpop.f32.mrb[0].mxu0
  %v2607 = vpop.f32.mrb[0].mxu0
  %v2608 = vadd.f32 %v2511, %v2607
  %v2609 = vpop.f32.mrb[0].mxu0
  %2610 = vmatprep.mubr.bf16.mxu0 %v946
  %2611 = vmatmul.mubr.bf16.gmra.mrb[0].mxu0 %v945
  %v2612 = vpop.f32.mrb[0].mxu0
  %v2613 = vadd.f32 %v2516, %v2612
  %v2614 = vpop.f32.mrb[0].mxu0
  %v2615 = vpop.f32.mrb[0].mxu0
  %v2616 = vadd.f32 %v2519, %v2615
  %v2617 = vpop.f32.mrb[0].mxu0
  %2618 = vdwg.mxu0
  %v2619 = vadd.f32 %v35, %v2557
  %v2620 = vadd.f32 %v36, %v2560
  %v2621 = vadd.f32 %v37, %v2565
  %v2622 = vadd.f32 %v38, %v2568
  %v2623 = vadd.f32 %v39, %v2573
  %v2624 = vadd.f32 %v40, %v2576
  %v2625 = vadd.f32 %v41, %v2581
  %v2626 = vadd.f32 %v42, %v2584
  %v2627 = vadd.f32 %v43, %v2589
  %v2628 = vadd.f32 %v44, %v2592
  %v2629 = vadd.f32 %v45, %v2597
  %v2630 = vadd.f32 %v46, %v2600
  %v2631 = vadd.f32 %v47, %v2605
  %v2632 = vadd.f32 %v48, %v2608
  %v2633 = vadd.f32 %v49, %v2613
  %v2634 = vadd.f32 %v50, %v2616
  %2635 = vst [vmem:[#allocation2] sm:$0xff] %v2619
  %2636 = vst [vmem:[#allocation2 + $0x8] sm:$0xff] %v2620
  %2637 = vst [vmem:[#allocation2 + $0x10] sm:$0xff] %v2621
  %2638 = vst [vmem:[#allocation2 + $0x18] sm:$0xff] %v2622
  %2639 = vst [vmem:[#allocation2 + $0x20] sm:$0xff] %v2623
  %2640 = vst [vmem:[#allocation2 + $0x28] sm:$0xff] %v2624
  %2641 = vst [vmem:[#allocation2 + $0x30] sm:$0xff] %v2625
  %2642 = vst [vmem:[#allocation2 + $0x38] sm:$0xff] %v2626
  %2643 = vst [vmem:[#allocation2 + $0x40] sm:$0xff] %v2627
  %2644 = vst [vmem:[#allocation2 + $0x48] sm:$0xff] %v2628
  %2645 = vst [vmem:[#allocation2 + $0x50] sm:$0xff] %v2629
  %2646 = vst [vmem:[#allocation2 + $0x58] sm:$0xff] %v2630
  %2647 = vst [vmem:[#allocation2 + $0x60] sm:$0xff] %v2631
  %2648 = vst [vmem:[#allocation2 + $0x68] sm:$0xff] %v2632
  %2649 = vst [vmem:[#allocation2 + $0x70] sm:$0xff] %v2633
  %2650 = vst [vmem:[#allocation2 + $0x78] sm:$0xff] %v2634
  // Predicated region
  $region18: #{_lambda_.30} parent=0 // pred_check
    %p2651 = pneg %p15
  $region19: #{_lambda_.30} parent=0 // pred_check_branch
    %2653 = sbr.rel (%p2651) target = $region21
  $region20: #{_lambda_.30} parent=0 // pred_region
    %v2654 = vld [vmem:[#allocation2] sm:$0xff]
    %v2655 = vld [vmem:[#allocation2 + $0x8] sm:$0xff]
    %v2656 = vld [vmem:[#allocation2 + $0x10] sm:$0xff]
    %v2657 = vld [vmem:[#allocation2 + $0x18] sm:$0xff]
    %v2658 = vld [vmem:[#allocation2 + $0x20] sm:$0xff]
    %v2659 = vld [vmem:[#allocation2 + $0x28] sm:$0xff]
    %v2660 = vld [vmem:[#allocation2 + $0x30] sm:$0xff]
    %v2661 = vld [vmem:[#allocation2 + $0x38] sm:$0xff]
    %v2662 = vld [vmem:[#allocation2 + $0x40] sm:$0xff]
    %v2663 = vld [vmem:[#allocation2 + $0x48] sm:$0xff]
    %v2664 = vld [vmem:[#allocation2 + $0x50] sm:$0xff]
    %v2665 = vld [vmem:[#allocation2 + $0x58] sm:$0xff]
    %v2666 = vld [vmem:[#allocation2 + $0x60] sm:$0xff]
    %v2667 = vld [vmem:[#allocation2 + $0x68] sm:$0xff]
    %v2668 = vld [vmem:[#allocation2 + $0x70] sm:$0xff]
    %v2669 = vld [vmem:[#allocation2 + $0x78] sm:$0xff]
    %v2670 = vld [vmem:[%s2] sm:$0x1]
    %v2672 = vlaneseq
    %v2673 = vshrl.u32 %v2672, 7
    %v2674 = vsub.s32 0, %v2673
    %v2675 = vrot.slane %v2670, %v2674
    %v2677 = vadd.f32 %v2654, %v2675
    %v2678 = vadd.f32 %v2655, %v2675
    %v2679 = vadd.f32 %v2656, %v2675
    %v2680 = vadd.f32 %v2657, %v2675
    %v2681 = vadd.f32 %v2658, %v2675
    %v2682 = vadd.f32 %v2659, %v2675
    %v2683 = vadd.f32 %v2660, %v2675
    %v2684 = vadd.f32 %v2661, %v2675
    %v2685 = vadd.f32 %v2662, %v2675
    %v2686 = vadd.f32 %v2663, %v2675
    %v2687 = vadd.f32 %v2664, %v2675
    %v2688 = vadd.f32 %v2665, %v2675
    %v2689 = vadd.f32 %v2666, %v2675
    %v2690 = vadd.f32 %v2667, %v2675
    %v2691 = vadd.f32 %v2668, %v2675
    %v2692 = vadd.f32 %v2669, %v2675
    %v2693 = vadd.f32 %v2677, %v2678
    %v2694 = vadd.f32 %v2693, %v2679
    %v2695 = vadd.f32 %v2694, %v2680
    %v2696 = vadd.f32 %v2695, %v2681
    %v2697 = vadd.f32 %v2696, %v2682
    %v2698 = vadd.f32 %v2697, %v2683
    %v2699 = vadd.f32 %v2698, %v2684
    %v2700 = vrot.slane %v2699, 4
    %v2701 = vadd.f32 %v2699, %v2700
    %v2702 = vrot.slane %v2701, 2
    %v2703 = vadd.f32 %v2701, %v2702
    %v2704 = vrot.slane %v2703, 1
    %v2705 = vadd.f32 %v2703, %v2704
    %v2706 = vadd.f32 %v2685, %v2686
    %v2707 = vadd.f32 %v2706, %v2687
    %v2708 = vadd.f32 %v2707, %v2688
    %v2709 = vadd.f32 %v2708, %v2689
    %v2710 = vadd.f32 %v2709, %v2690
    %v2711 = vadd.f32 %v2710, %v2691
    %v2712 = vadd.f32 %v2711, %v2692
    %v2713 = vrot.slane %v2712, 4
    %v2714 = vadd.f32 %v2712, %v2713
    %v2715 = vrot.slane %v2714, 2
    %v2716 = vadd.f32 %v2714, %v2715
    %v2717 = vrot.slane %v2716, 1
    %v2718 = vadd.f32 %v2716, %v2717
    %v2719 = vrcp.pop 64.0
    %v2720 = vmul.f32 %v2705, %v2719
    %v2721 = vmul.f32 %v2718, %v2719
    %v2722 = vsub.f32 %v2677, %v2720
    %v2723 = vsub.f32 %v2678, %v2720
    %v2724 = vsub.f32 %v2679, %v2720
    %v2725 = vsub.f32 %v2680, %v2720
    %v2726 = vsub.f32 %v2681, %v2720
    %v2727 = vsub.f32 %v2682, %v2720
    %v2728 = vsub.f32 %v2683, %v2720
    %v2729 = vsub.f32 %v2684, %v2720
    %v2730 = vsub.f32 %v2685, %v2721
    %v2731 = vsub.f32 %v2686, %v2721
    %v2732 = vsub.f32 %v2687, %v2721
    %v2733 = vsub.f32 %v2688, %v2721
    %v2734 = vsub.f32 %v2689, %v2721
    %v2735 = vsub.f32 %v2690, %v2721
    %v2736 = vsub.f32 %v2691, %v2721
    %v2737 = vsub.f32 %v2692, %v2721
    %v2738 = vmul.f32 %v2722, %v2722
    %v2739 = vmul.f32 %v2723, %v2723
    %v2740 = vmul.f32 %v2724, %v2724
    %v2741 = vmul.f32 %v2725, %v2725
    %v2742 = vmul.f32 %v2726, %v2726
    %v2743 = vmul.f32 %v2727, %v2727
    %v2744 = vmul.f32 %v2728, %v2728
    %v2745 = vmul.f32 %v2729, %v2729
    %v2746 = vmul.f32 %v2730, %v2730
    %v2747 = vmul.f32 %v2731, %v2731
    %v2748 = vmul.f32 %v2732, %v2732
    %v2749 = vmul.f32 %v2733, %v2733
    %v2750 = vmul.f32 %v2734, %v2734
    %v2751 = vmul.f32 %v2735, %v2735
    %v2752 = vmul.f32 %v2736, %v2736
    %v2753 = vmul.f32 %v2737, %v2737
    %v2754 = vadd.f32 %v2738, %v2739
    %v2755 = vadd.f32 %v2754, %v2740
    %v2756 = vadd.f32 %v2755, %v2741
    %v2757 = vadd.f32 %v2756, %v2742
    %v2758 = vadd.f32 %v2757, %v2743
    %v2759 = vadd.f32 %v2758, %v2744
    %v2760 = vadd.f32 %v2759, %v2745
    %v2761 = vrot.slane %v2760, 4
    %v2762 = vadd.f32 %v2760, %v2761
    %v2763 = vrot.slane %v2762, 2
    %v2764 = vadd.f32 %v2762, %v2763
    %v2765 = vrot.slane %v2764, 1
    %v2766 = vadd.f32 %v2764, %v2765
    %v2767 = vadd.f32 %v2746, %v2747
    %v2768 = vadd.f32 %v2767, %v2748
    %v2769 = vadd.f32 %v2768, %v2749
    %v2770 = vadd.f32 %v2769, %v2750
    %v2771 = vadd.f32 %v2770, %v2751
    %v2772 = vadd.f32 %v2771, %v2752
    %v2773 = vadd.f32 %v2772, %v2753
    %v2774 = vrot.slane %v2773, 4
    %v2775 = vadd.f32 %v2773, %v2774
    %v2776 = vrot.slane %v2775, 2
    %v2777 = vadd.f32 %v2775, %v2776
    %v2778 = vrot.slane %v2777, 1
    %v2779 = vadd.f32 %v2777, %v2778
    %v2780 = vmul.f32 %v2766, %v2719
    %v2781 = vmul.f32 %v2779, %v2719
    %v2782 = vadd.f32 %v2780, 1e-05
    %v2783 = vadd.f32 %v2781, 1e-05
    %v2784 = vrsqrt.pop %v2782
    %v2785 = vrsqrt.pop %v2783
    %v2786 = vmul.f32 %v2722, %v2784
    %v2787 = vmul.f32 %v2723, %v2784
    %v2788 = vmul.f32 %v2724, %v2784
    %v2789 = vmul.f32 %v2725, %v2784
    %v2790 = vmul.f32 %v2726, %v2784
    %v2791 = vmul.f32 %v2727, %v2784
    %v2792 = vmul.f32 %v2728, %v2784
    %v2793 = vmul.f32 %v2729, %v2784
    %v2794 = vmul.f32 %v2730, %v2785
    %v2795 = vmul.f32 %v2731, %v2785
    %v2796 = vmul.f32 %v2732, %v2785
    %v2797 = vmul.f32 %v2733, %v2785
    %v2798 = vmul.f32 %v2734, %v2785
    %v2799 = vmul.f32 %v2735, %v2785
    %v2800 = vmul.f32 %v2736, %v2785
    %v2801 = vmul.f32 %v2737, %v2785
    %v2802 = vmax.f32 %v2786, 0.0
    %v2803 = vmax.f32 %v2787, 0.0
    %v2804 = vmax.f32 %v2788, 0.0
    %v2805 = vmax.f32 %v2789, 0.0
    %v2806 = vmax.f32 %v2790, 0.0
    %v2807 = vmax.f32 %v2791, 0.0
    %v2808 = vmax.f32 %v2792, 0.0
    %v2809 = vmax.f32 %v2793, 0.0
    %v2810 = vmax.f32 %v2794, 0.0
    %v2811 = vmax.f32 %v2795, 0.0
    %v2812 = vmax.f32 %v2796, 0.0
    %v2813 = vmax.f32 %v2797, 0.0
    %v2814 = vmax.f32 %v2798, 0.0
    %v2815 = vmax.f32 %v2799, 0.0
    %v2816 = vmax.f32 %v2800, 0.0
    %v2817 = vmax.f32 %v2801, 0.0
    %v2818 = vpack.c.bf16 %v2803, %v2802
    %v2819 = vpack.c.bf16 %v2805, %v2804
    %v2820 = vpack.c.bf16 %v2807, %v2806
    %v2821 = vpack.c.bf16 %v2809, %v2808
    %v2822 = vpack.c.bf16 %v2811, %v2810
    %v2823 = vpack.c.bf16 %v2813, %v2812
    %v2824 = vpack.c.bf16 %v2815, %v2814
    %v2825 = vpack.c.bf16 %v2817, %v2816
    %v2834 = vunpack.c.l.b16 %v2818
    %v2835 = vunpack.c.h.b16 %v2818
    %v2836 = vunpack.c.l.b16 %v2819
    %v2837 = vunpack.c.h.b16 %v2819
    %v2838 = vunpack.c.l.b16 %v2820
    %v2839 = vunpack.c.h.b16 %v2820
    %v2840 = vunpack.c.l.b16 %v2821
    %v2841 = vunpack.c.h.b16 %v2821
    %v2842 = vunpack.c.l.b16 %v2822
    %v2843 = vunpack.c.h.b16 %v2822
    %v2844 = vunpack.c.l.b16 %v2823
    %v2845 = vunpack.c.h.b16 %v2823
    %v2846 = vunpack.c.l.b16 %v2824
    %v2847 = vunpack.c.h.b16 %v2824
    %v2848 = vunpack.c.l.b16 %v2825
    %v2849 = vunpack.c.h.b16 %v2825
    %v2850 = vpack.c.b16 %v2834, %v2834
    %v2851 = vpack.c.b16 %v2835, %v2835
    %v2852 = vpack.c.b16 %v2836, %v2836
    %v2853 = vpack.c.b16 %v2837, %v2837
    %v2854 = vpack.c.b16 %v2838, %v2838
    %v2855 = vpack.c.b16 %v2839, %v2839
    %v2856 = vpack.c.b16 %v2840, %v2840
    %v2857 = vpack.c.b16 %v2841, %v2841
    %v2858 = vpack.c.b16 %v2842, %v2842
    %v2859 = vpack.c.b16 %v2843, %v2843
    %v2860 = vpack.c.b16 %v2844, %v2844
    %v2861 = vpack.c.b16 %v2845, %v2845
    %v2862 = vpack.c.b16 %v2846, %v2846
    %v2863 = vpack.c.b16 %v2847, %v2847
    %v2864 = vpack.c.b16 %v2848, %v2848
    %v2865 = vpack.c.b16 %v2849, %v2849
    %2882 = vst [vmem:[%s3] sm:$0xf] %v2850
    %2883 = vst [vmem:[%s3 + $0x4] sm:$0xf] %v2851
    %2884 = vst [vmem:[%s3 + $0x8] sm:$0xf] %v2852
    %2885 = vst [vmem:[%s3 + $0xc] sm:$0xf] %v2853
    %2886 = vst [vmem:[%s3 + $0x10] sm:$0xf] %v2854
    %2887 = vst [vmem:[%s3 + $0x14] sm:$0xf] %v2855
    %2888 = vst [vmem:[%s3 + $0x18] sm:$0xf] %v2856
    %2889 = vst [vmem:[%s3 + $0x1c] sm:$0xf] %v2857
    %2890 = vst [vmem:[%s3 + $0x20] sm:$0xf] %v2858
    %2891 = vst [vmem:[%s3 + $0x24] sm:$0xf] %v2859
    %2892 = vst [vmem:[%s3 + $0x28] sm:$0xf] %v2860
    %2893 = vst [vmem:[%s3 + $0x2c] sm:$0xf] %v2861
    %2894 = vst [vmem:[%s3 + $0x30] sm:$0xf] %v2862
    %2895 = vst [vmem:[%s3 + $0x34] sm:$0xf] %v2863
    %2896 = vst [vmem:[%s3 + $0x38] sm:$0xf] %v2864
    %2897 = vst [vmem:[%s3 + $0x3c] sm:$0xf] %v2865
  $region21: #{_lambda_.30} parent=0 // pred_fallthru
    _
  // Predicated region
  $region22: #{_lambda_.30} parent=0 // pred_check
    _
  $region23: #{_lambda_.30} parent=0 // pred_check_branch
    %2899 = sbr.rel (0) target = $region25
  $region24: #{_lambda_.30} parent=0 // pred_region
    _
  $region25: #{_lambda_.30} parent=0 // pred_fallthru
    _
  // Predicated region
  $region26: #{_lambda_.30} parent=0 // pred_check
    _
  $region27: #{_lambda_.30} parent=0 // pred_check_branch
    %2901 = sbr.rel (0) target = $region29
  $region28: #{_lambda_.30} parent=0 // pred_region
    _
  $region29: #{_lambda_.30} parent=0 // pred_fallthru
    _

// kernel: _lambda_.31
$region0: #{_lambda_.31}
  #allocation0 [shape = 'u32[]', space=smem, size = 0x4, offset = 0x4, fixed_abs, tag = 'smem constant byte address 0x4 - core index']
  #allocation1 [shape = 'u32[144,128]{1,0:T(1,128)}', space=vmem, size = 0x12000, scoped, tag = 'internal scratch']
  #allocation2 [shape = 'f32[256,128]{1,0:T(8,128)}', space=vmem, size = 0x20000, scoped, tag = 'scratch operand']
  %s0 = inlined_call_operand.vmem [shape: bf16[512,1024], index: 0, kind: input, shape index: {}]
  %s1 = inlined_call_operand.vmem [shape: bf16[1024,128], index: 1, kind: input, shape index: {}]
  %s2 = inlined_call_operand.vmem [shape: f32[1,128], index: 2, kind: input, shape index: {}]
  %s3 = inlined_call_operand.vmem [shape: f32[512,128], index: 3, kind: output, shape index: {}]
  %s4 = sld [smem:[#allocation0]]
  $region53: #{_lambda_.31} parent=0
    _
  %s6 = ssub.s32 1, %s4
  %s7 = scalar_select 0, %s6, %s4
  loop: start=0, step=1, limit=4
  $region2: #{_lambda_.31} parent=0 // loop_pre_header
    _
  $region3: #{_lambda_.31} parent=0 // loop_header
    %s9 = sphi 0, %s13
    %p10 = scmp.ge.s32.totalorder %s9, 4
    %s16 = sphi 0, %s35
    %s17 = sphi 0, %s31
    %s18 = sphi 0, %s27
    %s19 = sphi 0, %s16
    %s20 = sphi 0, %s17
    %s21 = sphi 0, %s18
    %s22 = sphi 0, %s19
    %s23 = sphi 0, %s20
    %s24 = sphi 0, %s21
    %s40 = sphi 0, %s42
    %s43 = sphi 0, %s40
    %s44 = sphi 0, %s43
    %s60 = sphi 0, %s44
    %s68 = sphi 0, %s70
    %s71 = sphi 0, %s68
    %s72 = sphi 0, %s71
    %s88 = sphi 0, %s72
    %s94 = sphi 0, %s96
    %s97 = sphi 0, %s94
    %s98 = sphi 0, %s97
    %s114 = sphi 0, %s98
    %s122 = sphi 0, %s124
    %s125 = sphi 0, %s122
    %s126 = sphi 0, %s125
    %s142 = sphi 0, %s126
  $region4: #{_lambda_.31} parent=0 // loop_header_branch
    %12 = sbr.rel (%p10) target = $region8
  $region5: #{_lambda_.31} parent=0 // loop_body
    %s14 = ssub.s32 %s9, 1
    %s15 = ssub.s32 %s9, 2
    %s25 = sadd.s32 1, %s18
    %p26 = scmp.ge.s32.totalorder %s25, 1
    %s27 = scalar_select %p26, 0, %s25
    %s28 = sadd.s32 1, %s17
    %s29 = scalar_select %p26, %s28, %s17
    %p30 = scmp.ge.s32.totalorder %s29, 1
    %s31 = scalar_select %p30, 0, %s29
    %s32 = sadd.s32 1, %s16
    %s33 = scalar_select %p30, %s32, %s16
    %p34 = scmp.ge.s32.totalorder %s33, 2
    %s35 = scalar_select %p34, 0, %s33
    %s36 = ssub.s32 %s16, %s35
    %s37 = ssub.s32 %s18, %s27
    %s38 = sor.u32 %s36, %s37
    %p39 = scmp.eq.s32.totalorder %s38, 0
    %s41 = sadd.s32 %s40, 1
    %s42 = scalar_select %p39, %s40, %s41
    %p45 = pneg %p39
    %p46 = scmp.eq.s32.totalorder %s9, 1
    %p47 = por %p45, %p46
    %p48 = scmp.ne.s32.totalorder %s40, %s43
    %p49 = scmp.eq.s32.totalorder %s9, 0
    %p50 = por %p48, %p49
    %p51 = scmp.ne.s32.totalorder %s40, %s43
    %p52 = scmp.eq.s32.totalorder %s14, 1
    %p53 = por %p51, %p52
    %p54 = scmp.ne.s32.totalorder %s43, %s44
    %p55 = scmp.eq.s32.totalorder %s14, 0
    %p56 = por %p54, %p55
    %p57 = scmp.ne.s32.totalorder %s43, %s44
    %p58 = scmp.eq.s32.totalorder %s15, 1
    %p59 = por %p57, %p58
    %p61 = scmp.ne.s32.totalorder %s44, %s60
    %p62 = scmp.eq.s32.totalorder %s15, 0
    %p63 = por %p61, %p62
    %s64 = ssub.s32 %s18, %s27
    %s65 = ssub.s32 %s17, %s31
    %s66 = sor.u32 %s64, %s65
    %p67 = scmp.eq.s32.totalorder %s66, 0
    %s69 = sadd.s32 %s68, 1
    %s70 = scalar_select %p67, %s68, %s69
    %p73 = pneg %p67
    %p74 = scmp.eq.s32.totalorder %s9, 1
    %p75 = por %p73, %p74
    %p76 = scmp.ne.s32.totalorder %s68, %s71
    %p77 = scmp.eq.s32.totalorder %s9, 0
    %p78 = por %p76, %p77
    %p79 = scmp.ne.s32.totalorder %s68, %s71
    %p80 = scmp.eq.s32.totalorder %s14, 1
    %p81 = por %p79, %p80
    %p82 = scmp.ne.s32.totalorder %s71, %s72
    %p83 = scmp.eq.s32.totalorder %s14, 0
    %p84 = por %p82, %p83
    %p85 = scmp.ne.s32.totalorder %s71, %s72
    %p86 = scmp.eq.s32.totalorder %s15, 1
    %p87 = por %p85, %p86
    %p89 = scmp.ne.s32.totalorder %s72, %s88
    %p90 = scmp.eq.s32.totalorder %s15, 0
    %p91 = por %p89, %p90
    %s92 = ssub.s32 %s17, %s31
    %p93 = scmp.eq.s32.totalorder %s92, 0
    %s95 = sadd.s32 %s94, 1
    %s96 = scalar_select %p93, %s94, %s95
    %p99 = pneg %p93
    %p100 = scmp.eq.s32.totalorder %s9, 1
    %p101 = por %p99, %p100
    %p102 = scmp.ne.s32.totalorder %s94, %s97
    %p103 = scmp.eq.s32.totalorder %s9, 0
    %p104 = por %p102, %p103
    %p105 = scmp.ne.s32.totalorder %s94, %s97
    %p106 = scmp.eq.s32.totalorder %s14, 1
    %p107 = por %p105, %p106
    %p108 = scmp.ne.s32.totalorder %s97, %s98
    %p109 = scmp.eq.s32.totalorder %s14, 0
    %p110 = por %p108, %p109
    %p111 = scmp.ne.s32.totalorder %s97, %s98
    %p112 = scmp.eq.s32.totalorder %s15, 1
    %p113 = por %p111, %p112
    %p115 = scmp.ne.s32.totalorder %s98, %s114
    %p116 = scmp.eq.s32.totalorder %s15, 0
    %p117 = por %p115, %p116
    %s118 = ssub.s32 %s16, %s35
    %s119 = ssub.s32 %s17, %s31
    %s120 = sor.u32 %s118, %s119
    %p121 = scmp.eq.s32.totalorder %s120, 0
    %s123 = sadd.s32 %s122, 1
    %s124 = scalar_select %p121, %s122, %s123
    %p127 = pneg %p121
    %p128 = scmp.eq.s32.totalorder %s9, 1
    %p129 = por %p127, %p128
    %p130 = scmp.ne.s32.totalorder %s122, %s125
    %p131 = scmp.eq.s32.totalorder %s9, 0
    %p132 = por %p130, %p131
    %p133 = scmp.ne.s32.totalorder %s122, %s125
    %p134 = scmp.eq.s32.totalorder %s14, 1
    %p135 = por %p133, %p134
    %p136 = scmp.ne.s32.totalorder %s125, %s126
    %p137 = scmp.eq.s32.totalorder %s14, 0
    %p138 = por %p136, %p137
    %p139 = scmp.ne.s32.totalorder %s125, %s126
    %p140 = scmp.eq.s32.totalorder %s15, 1
    %p141 = por %p139, %p140
    %p143 = scmp.ne.s32.totalorder %s126, %s142
    %p144 = scmp.eq.s32.totalorder %s15, 0
    %p145 = por %p143, %p144
    %p146 = scmp.le.s32.totalorder 1, %s9
    %p147 = scmp.lt.s32.totalorder %s9, 3
    %p148 = pnand %p146, %p147
    %p149 = pneg %p148
    // Predicated region
    $region9: #{_lambda_.31} parent=5 // pred_check
      _
    $region10: #{_lambda_.31} parent=5 // pred_check_branch
      %151 = sbr.rel (%p148) target = $region12
    $region11: #{_lambda_.31} parent=5 // pred_region
      %s152 = ssub.s32 %s9, 1
      // Predicated region
      $region13: #{_lambda_.31} parent=11 // pred_check
        %p153 = pneg %p84
      $region14: #{_lambda_.31} parent=11 // pred_check_branch
        %155 = sbr.rel (%p153) target = $region16
      $region15: #{_lambda_.31} parent=11 // pred_region
        %s156 = smul.u32 128, %s21
        %p157 = scmp.lt.s32.totalorder %s156, 127
        %s158 = scalar_select %p157, %s156, 127
        %p159 = scmp.lt.s32.totalorder %s20, 0
        %s160 = scalar_select %p159, %s20, 0
        %s161 = sadd.s32 %s160, %s158
        %s162 = smul.addr %s161, 4
        %s163 = scalar_lea.vmem %s1, %s162
        %s164 = smul.u32 128, %s21
      $region16: #{_lambda_.31} parent=11 // pred_fallthru
        _
      // Predicated region
      $region17: #{_lambda_.31} parent=11 // pred_check
        %p165 = pneg %p110
      $region18: #{_lambda_.31} parent=11 // pred_check_branch
        %167 = sbr.rel (%p165) target = $region20
      $region19: #{_lambda_.31} parent=11 // pred_region
        %p168 = scmp.lt.s32.totalorder %s20, 0
        %s169 = scalar_select %p168, %s20, 0
        %s170 = scalar_lea.vmem %s2, %s169
      $region20: #{_lambda_.31} parent=11 // pred_fallthru
        _
    $region12: #{_lambda_.31} parent=5 // pred_fallthru
      _
    %p171 = scmp.lt.s32.totalorder %s9, 2
    // Predicated region
    $region21: #{_lambda_.31} parent=5 // pred_check
      %p172 = pneg %p171
    $region22: #{_lambda_.31} parent=5 // pred_check_branch
      %174 = sbr.rel (%p172) target = $region24
    $region23: #{_lambda_.31} parent=5 // pred_region
      // Predicated region
      $region25: #{_lambda_.31} parent=23 // pred_check
        %p175 = pneg %p50
      $region26: #{_lambda_.31} parent=23 // pred_check_branch
        %177 = sbr.rel (%p175) target = $region28
      $region27: #{_lambda_.31} parent=23 // pred_region
        %s178 = smul.u32 32, %s16
        %s179 = smul.u32 8, %s18
        %p180 = scmp.lt.s32.totalorder %s178, 63
        %s181 = scalar_select %p180, %s178, 63
        %p182 = scmp.lt.s32.totalorder %s179, 7
        %s183 = scalar_select %p182, %s179, 7
        %s184 = smul.addr %s181, 8
        %s185 = sadd.s32 %s183, %s184
        %s186 = smul.addr %s185, 4
        %s187 = scalar_lea.vmem %s0, %s186
        %s188 = smul.u32 32, %s16
        %s189 = smul.u32 8, %s18
      $region28: #{_lambda_.31} parent=23 // pred_fallthru
        _
    $region24: #{_lambda_.31} parent=5 // pred_fallthru
      _
    %p190 = scmp.le.s32.totalorder 1, %s9
    %p191 = scmp.lt.s32.totalorder %s9, 3
    %p192 = pnand %p190, %p191
    %p193 = pneg %p192
    // Predicated region
    $region29: #{_lambda_.31} parent=5 // pred_check
      _
    $region30: #{_lambda_.31} parent=5 // pred_check_branch
      %195 = sbr.rel (%p192) target = $region32
    $region31: #{_lambda_.31} parent=5 // pred_region
      %s196 = ssub.s32 %s9, 1
      %s197 = smul.u32 32, %s19
      %s198 = smul.u32 8, %s21
      %p199 = scmp.lt.s32.totalorder %s197, 63
      %s200 = scalar_select %p199, %s197, 63
      %p201 = scmp.lt.s32.totalorder %s198, 7
      %s202 = scalar_select %p201, %s198, 7
      %s203 = smul.addr %s200, 8
      %s204 = sadd.s32 %s202, %s203
      %s205 = smul.addr %s204, 4
      %s206 = scalar_lea.vmem %s0, %s205
      %p207 = pneg %p56
      %p208 = pneg %p53
      %s209 = smul.u32 128, %s21
      %p210 = scmp.lt.s32.totalorder %s209, 127
      %s211 = scalar_select %p210, %s209, 127
      %p212 = scmp.lt.s32.totalorder %s20, 0
      %s213 = scalar_select %p212, %s20, 0
      %s214 = sadd.s32 %s213, %s211
      %s215 = smul.addr %s214, 4
      %s216 = scalar_lea.vmem %s1, %s215
      %p217 = pneg %p84
      %p218 = pneg %p81
      %p219 = scmp.lt.s32.totalorder %s20, 0
      %s220 = scalar_select %p219, %s20, 0
      %s221 = scalar_lea.vmem %s2, %s220
      %p222 = pneg %p110
      %p223 = pneg %p107
      %p224 = pneg %p138
      %p225 = pneg %p135
      %s226 = smul.u32 32, %s19
      %p227 = scmp.lt.s32.totalorder %s226, 63
      %s228 = scalar_select %p227, %s226, 63
      %p229 = scmp.lt.s32.totalorder %s20, 0
      %s230 = scalar_select %p229, %s20, 0
      %s231 = sadd.s32 %s230, %s228
      %s232 = smul.addr %s231, 8
      %s233 = scalar_lea.vmem %s3, %s232
      %s234 = smul.u32 32, %s19
      %s235 = smul.u32 8, %s21
      %p236 = scmp.lt.s32.totalorder %s234, 63
      %s237 = scalar_select %p236, %s234, 63
      %p238 = scmp.lt.s32.totalorder %s235, 7
      %s239 = scalar_select %p238, %s235, 7
      %s240 = smul.addr %s237, 8
      %s241 = sadd.s32 %s239, %s240
      %s242 = smul.addr %s241, 4
      %s243 = scalar_lea.vmem %s0, %s242
      %s244 = smul.u32 32, %s19
      %s245 = smul.u32 8, %s21
      %s246 = smul.u32 128, %s21
      %p247 = scmp.lt.s32.totalorder %s246, 127
      %s248 = scalar_select %p247, %s246, 127
      %p249 = scmp.lt.s32.totalorder %s20, 0
      %s250 = scalar_select %p249, %s20, 0
      %s251 = sadd.s32 %s250, %s248
      %s252 = smul.addr %s251, 4
      %s253 = scalar_lea.vmem %s1, %s252
      %s254 = smul.u32 128, %s21
      %p255 = scmp.lt.s32.totalorder %s20, 0
      %s256 = scalar_select %p255, %s20, 0
      %s257 = scalar_lea.vmem %s2, %s256
      %s258 = smul.u32 32, %s19
      %p259 = scmp.lt.s32.totalorder %s258, 63
      %s260 = scalar_select %p259, %s258, 63
      %p261 = scmp.lt.s32.totalorder %s20, 0
      %s262 = scalar_select %p261, %s20, 0
      %s263 = sadd.s32 %s262, %s260
      %s264 = smul.addr %s263, 8
      %s265 = scalar_lea.vmem %s3, %s264
      %s266 = smul.u32 32, %s19
      %p268 = scmp.eq.s32.totalorder %s21, 0
      // Predicated region
      $region33: #{_lambda_.31} parent=31 // pred_check
        %p269 = pneg %p268
      $region34: #{_lambda_.31} parent=31 // pred_check_branch
        %271 = sbr.rel (%p269) target = $region36
      $region35: #{_lambda_.31} parent=31 // pred_region
        %272 = vst [vmem:[#allocation2] sm:$0xff] 0.0
        %273 = vst [vmem:[#allocation2 + $0x8] sm:$0xff] 0.0
        %274 = vst [vmem:[#allocation2 + $0x10] sm:$0xff] 0.0
        %275 = vst [vmem:[#allocation2 + $0x18] sm:$0xff] 0.0
        %276 = vst [vmem:[#allocation2 + $0x20] sm:$0xff] 0.0
        %277 = vst [vmem:[#allocation2 + $0x28] sm:$0xff] 0.0
        %278 = vst [vmem:[#allocation2 + $0x30] sm:$0xff] 0.0
        %279 = vst [vmem:[#allocation2 + $0x38] sm:$0xff] 0.0
        %280 = vst [vmem:[#allocation2 + $0x40] sm:$0xff] 0.0
        %281 = vst [vmem:[#allocation2 + $0x48] sm:$0xff] 0.0
        %282 = vst [vmem:[#allocation2 + $0x50] sm:$0xff] 0.0
        %283 = vst [vmem:[#allocation2 + $0x58] sm:$0xff] 0.0
        %284 = vst [vmem:[#allocation2 + $0x60] sm:$0xff] 0.0
        %285 = vst [vmem:[#allocation2 + $0x68] sm:$0xff] 0.0
        %286 = vst [vmem:[#allocation2 + $0x70] sm:$0xff] 0.0
        %287 = vst [vmem:[#allocation2 + $0x78] sm:$0xff] 0.0
        %288 = vst [vmem:[#allocation2 + $0x80] sm:$0xff] 0.0
        %289 = vst [vmem:[#allocation2 + $0x88] sm:$0xff] 0.0
        %290 = vst [vmem:[#allocation2 + $0x90] sm:$0xff] 0.0
        %291 = vst [vmem:[#allocation2 + $0x98] sm:$0xff] 0.0
        %292 = vst [vmem:[#allocation2 + $0xa0] sm:$0xff] 0.0
        %293 = vst [vmem:[#allocation2 + $0xa8] sm:$0xff] 0.0
        %294 = vst [vmem:[#allocation2 + $0xb0] sm:$0xff] 0.0
        %295 = vst [vmem:[#allocation2 + $0xb8] sm:$0xff] 0.0
        %296 = vst [vmem:[#allocation2 + $0xc0] sm:$0xff] 0.0
        %297 = vst [vmem:[#allocation2 + $0xc8] sm:$0xff] 0.0
        %298 = vst [vmem:[#allocation2 + $0xd0] sm:$0xff] 0.0
        %299 = vst [vmem:[#allocation2 + $0xd8] sm:$0xff] 0.0
        %300 = vst [vmem:[#allocation2 + $0xe0] sm:$0xff] 0.0
        %301 = vst [vmem:[#allocation2 + $0xe8] sm:$0xff] 0.0
        %302 = vst [vmem:[#allocation2 + $0xf0] sm:$0xff] 0.0
        %303 = vst [vmem:[#allocation2 + $0xf8] sm:$0xff] 0.0
      $region36: #{_lambda_.31} parent=31 // pred_fallthru
        _
      %v304 = vld [vmem:[#allocation2] sm:$0xff]
      %v305 = vld [vmem:[#allocation2 + $0x8] sm:$0xff]
      %v306 = vld [vmem:[#allocation2 + $0x10] sm:$0xff]
      %v307 = vld [vmem:[#allocation2 + $0x18] sm:$0xff]
      %v308 = vld [vmem:[#allocation2 + $0x20] sm:$0xff]
      %v309 = vld [vmem:[#allocation2 + $0x28] sm:$0xff]
      %v310 = vld [vmem:[#allocation2 + $0x30] sm:$0xff]
      %v311 = vld [vmem:[#allocation2 + $0x38] sm:$0xff]
      %v312 = vld [vmem:[#allocation2 + $0x40] sm:$0xff]
      %v313 = vld [vmem:[#allocation2 + $0x48] sm:$0xff]
      %v314 = vld [vmem:[#allocation2 + $0x50] sm:$0xff]
      %v315 = vld [vmem:[#allocation2 + $0x58] sm:$0xff]
      %v316 = vld [vmem:[#allocation2 + $0x60] sm:$0xff]
      %v317 = vld [vmem:[#allocation2 + $0x68] sm:$0xff]
      %v318 = vld [vmem:[#allocation2 + $0x70] sm:$0xff]
      %v319 = vld [vmem:[#allocation2 + $0x78] sm:$0xff]
      %v320 = vld [vmem:[#allocation2 + $0x80] sm:$0xff]
      %v321 = vld [vmem:[#allocation2 + $0x88] sm:$0xff]
      %v322 = vld [vmem:[#allocation2 + $0x90] sm:$0xff]
      %v323 = vld [vmem:[#allocation2 + $0x98] sm:$0xff]
      %v324 = vld [vmem:[#allocation2 + $0xa0] sm:$0xff]
      %v325 = vld [vmem:[#allocation2 + $0xa8] sm:$0xff]
      %v326 = vld [vmem:[#allocation2 + $0xb0] sm:$0xff]
      %v327 = vld [vmem:[#allocation2 + $0xb8] sm:$0xff]
      %v328 = vld [vmem:[#allocation2 + $0xc0] sm:$0xff]
      %v329 = vld [vmem:[#allocation2 + $0xc8] sm:$0xff]
      %v330 = vld [vmem:[#allocation2 + $0xd0] sm:$0xff]
      %v331 = vld [vmem:[#allocation2 + $0xd8] sm:$0xff]
      %v332 = vld [vmem:[#allocation2 + $0xe0] sm:$0xff]
      %v333 = vld [vmem:[#allocation2 + $0xe8] sm:$0xff]
      %v334 = vld [vmem:[#allocation2 + $0xf0] sm:$0xff]
      %v335 = vld [vmem:[#allocation2 + $0xf8] sm:$0xff]
      %v336 = vld [vmem:[%s243] sm:$0xff]
      %v337 = vld [vmem:[%s243 + $0x8] sm:$0xff]
      %v338 = vld [vmem:[%s243 + $0x10] sm:$0xff]
      %v339 = vld [vmem:[%s243 + $0x18] sm:$0xff]
      %v340 = vld [vmem:[%s243 + $0x20] sm:$0xff]
      %v341 = vld [vmem:[%s243 + $0x28] sm:$0xff]
      %v342 = vld [vmem:[%s243 + $0x30] sm:$0xff]
      %v343 = vld [vmem:[%s243 + $0x38] sm:$0xff]
      %v344 = vld [vmem:[%s243 + $0x40] sm:$0xff]
      %v345 = vld [vmem:[%s243 + $0x48] sm:$0xff]
      %v346 = vld [vmem:[%s243 + $0x50] sm:$0xff]
      %v347 = vld [vmem:[%s243 + $0x58] sm:$0xff]
      %v348 = vld [vmem:[%s243 + $0x60] sm:$0xff]
      %v349 = vld [vmem:[%s243 + $0x68] sm:$0xff]
      %v350 = vld [vmem:[%s243 + $0x70] sm:$0xff]
      %v351 = vld [vmem:[%s243 + $0x78] sm:$0xff]
      %v352 = vld [vmem:[%s243 + $0x80] sm:$0xff]
      %v353 = vld [vmem:[%s243 + $0x88] sm:$0xff]
      %v354 = vld [vmem:[%s243 + $0x90] sm:$0xff]
      %v355 = vld [vmem:[%s243 + $0x98] sm:$0xff]
      %v356 = vld [vmem:[%s243 + $0xa0] sm:$0xff]
      %v357 = vld [vmem:[%s243 + $0xa8] sm:$0xff]
      %v358 = vld [vmem:[%s243 + $0xb0] sm:$0xff]
      %v359 = vld [vmem:[%s243 + $0xb8] sm:$0xff]
      %v360 = vld [vmem:[%s243 + $0xc0] sm:$0xff]
      %v361 = vld [vmem:[%s243 + $0xc8] sm:$0xff]
      %v362 = vld [vmem:[%s243 + $0xd0] sm:$0xff]
      %v363 = vld [vmem:[%s243 + $0xd8] sm:$0xff]
      %v364 = vld [vmem:[%s243 + $0xe0] sm:$0xff]
      %v365 = vld [vmem:[%s243 + $0xe8] sm:$0xff]
      %v366 = vld [vmem:[%s243 + $0xf0] sm:$0xff]
      %v367 = vld [vmem:[%s243 + $0xf8] sm:$0xff]
      %v368 = vld [vmem:[%s243 + $0x100] sm:$0xff]
      %v369 = vld [vmem:[%s243 + $0x108] sm:$0xff]
      %v370 = vld [vmem:[%s243 + $0x110] sm:$0xff]
      %v371 = vld [vmem:[%s243 + $0x118] sm:$0xff]
      %v372 = vld [vmem:[%s243 + $0x120] sm:$0xff]
      %v373 = vld [vmem:[%s243 + $0x128] sm:$0xff]
      %v374 = vld [vmem:[%s243 + $0x130] sm:$0xff]
      %v375 = vld [vmem:[%s243 + $0x138] sm:$0xff]
      %v376 = vld [vmem:[%s243 + $0x140] sm:$0xff]
      %v377 = vld [vmem:[%s243 + $0x148] sm:$0xff]
      %v378 = vld [vmem:[%s243 + $0x150] sm:$0xff]
      %v379 = vld [vmem:[%s243 + $0x158] sm:$0xff]
      %v380 = vld [vmem:[%s243 + $0x160] sm:$0xff]
      %v381 = vld [vmem:[%s243 + $0x168] sm:$0xff]
      %v382 = vld [vmem:[%s243 + $0x170] sm:$0xff]
      %v383 = vld [vmem:[%s243 + $0x178] sm:$0xff]
      %v384 = vld [vmem:[%s243 + $0x180] sm:$0xff]
      %v385 = vld [vmem:[%s243 + $0x188] sm:$0xff]
      %v386 = vld [vmem:[%s243 + $0x190] sm:$0xff]
      %v387 = vld [vmem:[%s243 + $0x198] sm:$0xff]
      %v388 = vld [vmem:[%s243 + $0x1a0] sm:$0xff]
      %v389 = vld [vmem:[%s243 + $0x1a8] sm:$0xff]
      %v390 = vld [vmem:[%s243 + $0x1b0] sm:$0xff]
      %v391 = vld [vmem:[%s243 + $0x1b8] sm:$0xff]
      %v392 = vld [vmem:[%s243 + $0x1c0] sm:$0xff]
      %v393 = vld [vmem:[%s243 + $0x1c8] sm:$0xff]
      %v394 = vld [vmem:[%s243 + $0x1d0] sm:$0xff]
      %v395 = vld [vmem:[%s243 + $0x1d8] sm:$0xff]
      %v396 = vld [vmem:[%s243 + $0x1e0] sm:$0xff]
      %v397 = vld [vmem:[%s243 + $0x1e8] sm:$0xff]
      %v398 = vld [vmem:[%s243 + $0x1f0] sm:$0xff]
      %v399 = vld [vmem:[%s243 + $0x1f8] sm:$0xff]
      %v400 = vld [vmem:[%s243 + $0x200] sm:$0xff]
      %v401 = vld [vmem:[%s243 + $0x208] sm:$0xff]
      %v402 = vld [vmem:[%s243 + $0x210] sm:$0xff]
      %v403 = vld [vmem:[%s243 + $0x218] sm:$0xff]
      %v404 = vld [vmem:[%s243 + $0x220] sm:$0xff]
      %v405 = vld [vmem:[%s243 + $0x228] sm:$0xff]
      %v406 = vld [vmem:[%s243 + $0x230] sm:$0xff]
      %v407 = vld [vmem:[%s243 + $0x238] sm:$0xff]
      %v408 = vld [vmem:[%s243 + $0x240] sm:$0xff]
      %v409 = vld [vmem:[%s243 + $0x248] sm:$0xff]
      %v410 = vld [vmem:[%s243 + $0x250] sm:$0xff]
      %v411 = vld [vmem:[%s243 + $0x258] sm:$0xff]
      %v412 = vld [vmem:[%s243 + $0x260] sm:$0xff]
      %v413 = vld [vmem:[%s243 + $0x268] sm:$0xff]
      %v414 = vld [vmem:[%s243 + $0x270] sm:$0xff]
      %v415 = vld [vmem:[%s243 + $0x278] sm:$0xff]
      %v416 = vld [vmem:[%s243 + $0x280] sm:$0xff]
      %v417 = vld [vmem:[%s243 + $0x288] sm:$0xff]
      %v418 = vld [vmem:[%s243 + $0x290] sm:$0xff]
      %v419 = vld [vmem:[%s243 + $0x298] sm:$0xff]
      %v420 = vld [vmem:[%s243 + $0x2a0] sm:$0xff]
      %v421 = vld [vmem:[%s243 + $0x2a8] sm:$0xff]
      %v422 = vld [vmem:[%s243 + $0x2b0] sm:$0xff]
      %v423 = vld [vmem:[%s243 + $0x2b8] sm:$0xff]
      %v424 = vld [vmem:[%s243 + $0x2c0] sm:$0xff]
      %v425 = vld [vmem:[%s243 + $0x2c8] sm:$0xff]
      %v426 = vld [vmem:[%s243 + $0x2d0] sm:$0xff]
      %v427 = vld [vmem:[%s243 + $0x2d8] sm:$0xff]
      %v428 = vld [vmem:[%s243 + $0x2e0] sm:$0xff]
      %v429 = vld [vmem:[%s243 + $0x2e8] sm:$0xff]
      %v430 = vld [vmem:[%s243 + $0x2f0] sm:$0xff]
      %v431 = vld [vmem:[%s243 + $0x2f8] sm:$0xff]
      %v432 = vld [vmem:[%s243 + $0x300] sm:$0xff]
      %v433 = vld [vmem:[%s243 + $0x308] sm:$0xff]
      %v434 = vld [vmem:[%s243 + $0x310] sm:$0xff]
      %v435 = vld [vmem:[%s243 + $0x318] sm:$0xff]
      %v436 = vld [vmem:[%s243 + $0x320] sm:$0xff]
      %v437 = vld [vmem:[%s243 + $0x328] sm:$0xff]
      %v438 = vld [vmem:[%s243 + $0x330] sm:$0xff]
      %v439 = vld [vmem:[%s243 + $0x338] sm:$0xff]
      %v440 = vld [vmem:[%s243 + $0x340] sm:$0xff]
      %v441 = vld [vmem:[%s243 + $0x348] sm:$0xff]
      %v442 = vld [vmem:[%s243 + $0x350] sm:$0xff]
      %v443 = vld [vmem:[%s243 + $0x358] sm:$0xff]
      %v444 = vld [vmem:[%s243 + $0x360] sm:$0xff]
      %v445 = vld [vmem:[%s243 + $0x368] sm:$0xff]
      %v446 = vld [vmem:[%s243 + $0x370] sm:$0xff]
      %v447 = vld [vmem:[%s243 + $0x378] sm:$0xff]
      %v448 = vld [vmem:[%s243 + $0x380] sm:$0xff]
      %v449 = vld [vmem:[%s243 + $0x388] sm:$0xff]
      %v450 = vld [vmem:[%s243 + $0x390] sm:$0xff]
      %v451 = vld [vmem:[%s243 + $0x398] sm:$0xff]
      %v452 = vld [vmem:[%s243 + $0x3a0] sm:$0xff]
      %v453 = vld [vmem:[%s243 + $0x3a8] sm:$0xff]
      %v454 = vld [vmem:[%s243 + $0x3b0] sm:$0xff]
      %v455 = vld [vmem:[%s243 + $0x3b8] sm:$0xff]
      %v456 = vld [vmem:[%s243 + $0x3c0] sm:$0xff]
      %v457 = vld [vmem:[%s243 + $0x3c8] sm:$0xff]
      %v458 = vld [vmem:[%s243 + $0x3d0] sm:$0xff]
      %v459 = vld [vmem:[%s243 + $0x3d8] sm:$0xff]
      %v460 = vld [vmem:[%s243 + $0x3e0] sm:$0xff]
      %v461 = vld [vmem:[%s243 + $0x3e8] sm:$0xff]
      %v462 = vld [vmem:[%s243 + $0x3f0] sm:$0xff]
      %v463 = vld [vmem:[%s243 + $0x3f8] sm:$0xff]
      %v464 = vld [vmem:[%s253] sm:$0xf]
      %v465 = vld [vmem:[%s253 + $0x4] sm:$0xf]
      %v466 = vld [vmem:[%s253 + $0x8] sm:$0xf]
      %v467 = vld [vmem:[%s253 + $0xc] sm:$0xf]
      %v468 = vld [vmem:[%s253 + $0x10] sm:$0xf]
      %v469 = vld [vmem:[%s253 + $0x14] sm:$0xf]
      %v470 = vld [vmem:[%s253 + $0x18] sm:$0xf]
      %v471 = vld [vmem:[%s253 + $0x1c] sm:$0xf]
      %v472 = vld [vmem:[%s253 + $0x20] sm:$0xf]
      %v473 = vld [vmem:[%s253 + $0x24] sm:$0xf]
      %v474 = vld [vmem:[%s253 + $0x28] sm:$0xf]
      %v475 = vld [vmem:[%s253 + $0x2c] sm:$0xf]
      %v476 = vld [vmem:[%s253 + $0x30] sm:$0xf]
      %v477 = vld [vmem:[%s253 + $0x34] sm:$0xf]
      %v478 = vld [vmem:[%s253 + $0x38] sm:$0xf]
      %v479 = vld [vmem:[%s253 + $0x3c] sm:$0xf]
      %v480 = vld [vmem:[%s253 + $0x40] sm:$0xf]
      %v481 = vld [vmem:[%s253 + $0x44] sm:$0xf]
      %v482 = vld [vmem:[%s253 + $0x48] sm:$0xf]
      %v483 = vld [vmem:[%s253 + $0x4c] sm:$0xf]
      %v484 = vld [vmem:[%s253 + $0x50] sm:$0xf]
      %v485 = vld [vmem:[%s253 + $0x54] sm:$0xf]
      %v486 = vld [vmem:[%s253 + $0x58] sm:$0xf]
      %v487 = vld [vmem:[%s253 + $0x5c] sm:$0xf]
      %v488 = vld [vmem:[%s253 + $0x60] sm:$0xf]
      %v489 = vld [vmem:[%s253 + $0x64] sm:$0xf]
      %v490 = vld [vmem:[%s253 + $0x68] sm:$0xf]
      %v491 = vld [vmem:[%s253 + $0x6c] sm:$0xf]
      %v492 = vld [vmem:[%s253 + $0x70] sm:$0xf]
      %v493 = vld [vmem:[%s253 + $0x74] sm:$0xf]
      %v494 = vld [vmem:[%s253 + $0x78] sm:$0xf]
      %v495 = vld [vmem:[%s253 + $0x7c] sm:$0xf]
      %v496 = vld [vmem:[%s253 + $0x80] sm:$0xf]
      %v497 = vld [vmem:[%s253 + $0x84] sm:$0xf]
      %v498 = vld [vmem:[%s253 + $0x88] sm:$0xf]
      %v499 = vld [vmem:[%s253 + $0x8c] sm:$0xf]
      %v500 = vld [vmem:[%s253 + $0x90] sm:$0xf]
      %v501 = vld [vmem:[%s253 + $0x94] sm:$0xf]
      %v502 = vld [vmem:[%s253 + $0x98] sm:$0xf]
      %v503 = vld [vmem:[%s253 + $0x9c] sm:$0xf]
      %v504 = vld [vmem:[%s253 + $0xa0] sm:$0xf]
      %v505 = vld [vmem:[%s253 + $0xa4] sm:$0xf]
      %v506 = vld [vmem:[%s253 + $0xa8] sm:$0xf]
      %v507 = vld [vmem:[%s253 + $0xac] sm:$0xf]
      %v508 = vld [vmem:[%s253 + $0xb0] sm:$0xf]
      %v509 = vld [vmem:[%s253 + $0xb4] sm:$0xf]
      %v510 = vld [vmem:[%s253 + $0xb8] sm:$0xf]
      %v511 = vld [vmem:[%s253 + $0xbc] sm:$0xf]
      %v512 = vld [vmem:[%s253 + $0xc0] sm:$0xf]
      %v513 = vld [vmem:[%s253 + $0xc4] sm:$0xf]
      %v514 = vld [vmem:[%s253 + $0xc8] sm:$0xf]
      %v515 = vld [vmem:[%s253 + $0xcc] sm:$0xf]
      %v516 = vld [vmem:[%s253 + $0xd0] sm:$0xf]
      %v517 = vld [vmem:[%s253 + $0xd4] sm:$0xf]
      %v518 = vld [vmem:[%s253 + $0xd8] sm:$0xf]
      %v519 = vld [vmem:[%s253 + $0xdc] sm:$0xf]
      %v520 = vld [vmem:[%s253 + $0xe0] sm:$0xf]
      %v521 = vld [vmem:[%s253 + $0xe4] sm:$0xf]
      %v522 = vld [vmem:[%s253 + $0xe8] sm:$0xf]
      %v523 = vld [vmem:[%s253 + $0xec] sm:$0xf]
      %v524 = vld [vmem:[%s253 + $0xf0] sm:$0xf]
      %v525 = vld [vmem:[%s253 + $0xf4] sm:$0xf]
      %v526 = vld [vmem:[%s253 + $0xf8] sm:$0xf]
      %v527 = vld [vmem:[%s253 + $0xfc] sm:$0xf]
      %v528 = vld [vmem:[%s253 + $0x100] sm:$0xf]
      %v529 = vld [vmem:[%s253 + $0x104] sm:$0xf]
      %v530 = vld [vmem:[%s253 + $0x108] sm:$0xf]
      %v531 = vld [vmem:[%s253 + $0x10c] sm:$0xf]
      %v532 = vld [vmem:[%s253 + $0x110] sm:$0xf]
      %v533 = vld [vmem:[%s253 + $0x114] sm:$0xf]
      %v534 = vld [vmem:[%s253 + $0x118] sm:$0xf]
      %v535 = vld [vmem:[%s253 + $0x11c] sm:$0xf]
      %v536 = vld [vmem:[%s253 + $0x120] sm:$0xf]
      %v537 = vld [vmem:[%s253 + $0x124] sm:$0xf]
      %v538 = vld [vmem:[%s253 + $0x128] sm:$0xf]
      %v539 = vld [vmem:[%s253 + $0x12c] sm:$0xf]
      %v540 = vld [vmem:[%s253 + $0x130] sm:$0xf]
      %v541 = vld [vmem:[%s253 + $0x134] sm:$0xf]
      %v542 = vld [vmem:[%s253 + $0x138] sm:$0xf]
      %v543 = vld [vmem:[%s253 + $0x13c] sm:$0xf]
      %v544 = vld [vmem:[%s253 + $0x140] sm:$0xf]
      %v545 = vld [vmem:[%s253 + $0x144] sm:$0xf]
      %v546 = vld [vmem:[%s253 + $0x148] sm:$0xf]
      %v547 = vld [vmem:[%s253 + $0x14c] sm:$0xf]
      %v548 = vld [vmem:[%s253 + $0x150] sm:$0xf]
      %v549 = vld [vmem:[%s253 + $0x154] sm:$0xf]
      %v550 = vld [vmem:[%s253 + $0x158] sm:$0xf]
      %v551 = vld [vmem:[%s253 + $0x15c] sm:$0xf]
      %v552 = vld [vmem:[%s253 + $0x160] sm:$0xf]
      %v553 = vld [vmem:[%s253 + $0x164] sm:$0xf]
      %v554 = vld [vmem:[%s253 + $0x168] sm:$0xf]
      %v555 = vld [vmem:[%s253 + $0x16c] sm:$0xf]
      %v556 = vld [vmem:[%s253 + $0x170] sm:$0xf]
      %v557 = vld [vmem:[%s253 + $0x174] sm:$0xf]
      %v558 = vld [vmem:[%s253 + $0x178] sm:$0xf]
      %v559 = vld [vmem:[%s253 + $0x17c] sm:$0xf]
      %v560 = vld [vmem:[%s253 + $0x180] sm:$0xf]
      %v561 = vld [vmem:[%s253 + $0x184] sm:$0xf]
      %v562 = vld [vmem:[%s253 + $0x188] sm:$0xf]
      %v563 = vld [vmem:[%s253 + $0x18c] sm:$0xf]
      %v564 = vld [vmem:[%s253 + $0x190] sm:$0xf]
      %v565 = vld [vmem:[%s253 + $0x194] sm:$0xf]
      %v566 = vld [vmem:[%s253 + $0x198] sm:$0xf]
      %v567 = vld [vmem:[%s253 + $0x19c] sm:$0xf]
      %v568 = vld [vmem:[%s253 + $0x1a0] sm:$0xf]
      %v569 = vld [vmem:[%s253 + $0x1a4] sm:$0xf]
      %v570 = vld [vmem:[%s253 + $0x1a8] sm:$0xf]
      %v571 = vld [vmem:[%s253 + $0x1ac] sm:$0xf]
      %v572 = vld [vmem:[%s253 + $0x1b0] sm:$0xf]
      %v573 = vld [vmem:[%s253 + $0x1b4] sm:$0xf]
      %v574 = vld [vmem:[%s253 + $0x1b8] sm:$0xf]
      %v575 = vld [vmem:[%s253 + $0x1bc] sm:$0xf]
      %v576 = vld [vmem:[%s253 + $0x1c0] sm:$0xf]
      %v577 = vld [vmem:[%s253 + $0x1c4] sm:$0xf]
      %v578 = vld [vmem:[%s253 + $0x1c8] sm:$0xf]
      %v579 = vld [vmem:[%s253 + $0x1cc] sm:$0xf]
      %v580 = vld [vmem:[%s253 + $0x1d0] sm:$0xf]
      %v581 = vld [vmem:[%s253 + $0x1d4] sm:$0xf]
      %v582 = vld [vmem:[%s253 + $0x1d8] sm:$0xf]
      %v583 = vld [vmem:[%s253 + $0x1dc] sm:$0xf]
      %v584 = vld [vmem:[%s253 + $0x1e0] sm:$0xf]
      %v585 = vld [vmem:[%s253 + $0x1e4] sm:$0xf]
      %v586 = vld [vmem:[%s253 + $0x1e8] sm:$0xf]
      %v587 = vld [vmem:[%s253 + $0x1ec] sm:$0xf]
      %v588 = vld [vmem:[%s253 + $0x1f0] sm:$0xf]
      %v589 = vld [vmem:[%s253 + $0x1f4] sm:$0xf]
      %v590 = vld [vmem:[%s253 + $0x1f8] sm:$0xf]
      %v591 = vld [vmem:[%s253 + $0x1fc] sm:$0xf]
      %v720 = vunpack.c.l.b16 %v336
      %v721 = vunpack.c.h.b16 %v336
      %v722 = vunpack.c.l.b16 %v337
      %v723 = vunpack.c.h.b16 %v337
      %v724 = vunpack.c.l.b16 %v338
      %v725 = vunpack.c.h.b16 %v338
      %v726 = vunpack.c.l.b16 %v339
      %v727 = vunpack.c.h.b16 %v339
      %v728 = vunpack.c.l.b16 %v340
      %v729 = vunpack.c.h.b16 %v340
      %v730 = vunpack.c.l.b16 %v341
      %v731 = vunpack.c.h.b16 %v341
      %v732 = vunpack.c.l.b16 %v342
      %v733 = vunpack.c.h.b16 %v342
      %v734 = vunpack.c.l.b16 %v343
      %v735 = vunpack.c.h.b16 %v343
      %v736 = vunpack.c.l.b16 %v344
      %v737 = vunpack.c.h.b16 %v344
      %v738 = vunpack.c.l.b16 %v345
      %v739 = vunpack.c.h.b16 %v345
      %v740 = vunpack.c.l.b16 %v346
      %v741 = vunpack.c.h.b16 %v346
      %v742 = vunpack.c.l.b16 %v347
      %v743 = vunpack.c.h.b16 %v347
      %v744 = vunpack.c.l.b16 %v348
      %v745 = vunpack.c.h.b16 %v348
      %v746 = vunpack.c.l.b16 %v349
      %v747 = vunpack.c.h.b16 %v349
      %v748 = vunpack.c.l.b16 %v350
      %v749 = vunpack.c.h.b16 %v350
      %v750 = vunpack.c.l.b16 %v351
      %v751 = vunpack.c.h.b16 %v351
      %v752 = vunpack.c.l.b16 %v352
      %v753 = vunpack.c.h.b16 %v352
      %v754 = vunpack.c.l.b16 %v353
      %v755 = vunpack.c.h.b16 %v353
      %v756 = vunpack.c.l.b16 %v354
      %v757 = vunpack.c.h.b16 %v354
      %v758 = vunpack.c.l.b16 %v355
      %v759 = vunpack.c.h.b16 %v355
      %v760 = vunpack.c.l.b16 %v356
      %v761 = vunpack.c.h.b16 %v356
      %v762 = vunpack.c.l.b16 %v357
      %v763 = vunpack.c.h.b16 %v357
      %v764 = vunpack.c.l.b16 %v358
      %v765 = vunpack.c.h.b16 %v358
      %v766 = vunpack.c.l.b16 %v359
      %v767 = vunpack.c.h.b16 %v359
      %v768 = vunpack.c.l.b16 %v360
      %v769 = vunpack.c.h.b16 %v360
      %v770 = vunpack.c.l.b16 %v361
      %v771 = vunpack.c.h.b16 %v361
      %v772 = vunpack.c.l.b16 %v362
      %v773 = vunpack.c.h.b16 %v362
      %v774 = vunpack.c.l.b16 %v363
      %v775 = vunpack.c.h.b16 %v363
      %v776 = vunpack.c.l.b16 %v364
      %v777 = vunpack.c.h.b16 %v364
      %v778 = vunpack.c.l.b16 %v365
      %v779 = vunpack.c.h.b16 %v365
      %v780 = vunpack.c.l.b16 %v366
      %v781 = vunpack.c.h.b16 %v366
      %v782 = vunpack.c.l.b16 %v367
      %v783 = vunpack.c.h.b16 %v367
      %v784 = vunpack.c.l.b16 %v368
      %v785 = vunpack.c.h.b16 %v368
      %v786 = vunpack.c.l.b16 %v369
      %v787 = vunpack.c.h.b16 %v369
      %v788 = vunpack.c.l.b16 %v370
      %v789 = vunpack.c.h.b16 %v370
      %v790 = vunpack.c.l.b16 %v371
      %v791 = vunpack.c.h.b16 %v371
      %v792 = vunpack.c.l.b16 %v372
      %v793 = vunpack.c.h.b16 %v372
      %v794 = vunpack.c.l.b16 %v373
      %v795 = vunpack.c.h.b16 %v373
      %v796 = vunpack.c.l.b16 %v374
      %v797 = vunpack.c.h.b16 %v374
      %v798 = vunpack.c.l.b16 %v375
      %v799 = vunpack.c.h.b16 %v375
      %v800 = vunpack.c.l.b16 %v376
      %v801 = vunpack.c.h.b16 %v376
      %v802 = vunpack.c.l.b16 %v377
      %v803 = vunpack.c.h.b16 %v377
      %v804 = vunpack.c.l.b16 %v378
      %v805 = vunpack.c.h.b16 %v378
      %v806 = vunpack.c.l.b16 %v379
      %v807 = vunpack.c.h.b16 %v379
      %v808 = vunpack.c.l.b16 %v380
      %v809 = vunpack.c.h.b16 %v380
      %v810 = vunpack.c.l.b16 %v381
      %v811 = vunpack.c.h.b16 %v381
      %v812 = vunpack.c.l.b16 %v382
      %v813 = vunpack.c.h.b16 %v382
      %v814 = vunpack.c.l.b16 %v383
      %v815 = vunpack.c.h.b16 %v383
      %v816 = vunpack.c.l.b16 %v384
      %v817 = vunpack.c.h.b16 %v384
      %v818 = vunpack.c.l.b16 %v385
      %v819 = vunpack.c.h.b16 %v385
      %v820 = vunpack.c.l.b16 %v386
      %v821 = vunpack.c.h.b16 %v386
      %v822 = vunpack.c.l.b16 %v387
      %v823 = vunpack.c.h.b16 %v387
      %v824 = vunpack.c.l.b16 %v388
      %v825 = vunpack.c.h.b16 %v388
      %v826 = vunpack.c.l.b16 %v389
      %v827 = vunpack.c.h.b16 %v389
      %v828 = vunpack.c.l.b16 %v390
      %v829 = vunpack.c.h.b16 %v390
      %v830 = vunpack.c.l.b16 %v391
      %v831 = vunpack.c.h.b16 %v391
      %v832 = vunpack.c.l.b16 %v392
      %v833 = vunpack.c.h.b16 %v392
      %v834 = vunpack.c.l.b16 %v393
      %v835 = vunpack.c.h.b16 %v393
      %v836 = vunpack.c.l.b16 %v394
      %v837 = vunpack.c.h.b16 %v394
      %v838 = vunpack.c.l.b16 %v395
      %v839 = vunpack.c.h.b16 %v395
      %v840 = vunpack.c.l.b16 %v396
      %v841 = vunpack.c.h.b16 %v396
      %v842 = vunpack.c.l.b16 %v397
      %v843 = vunpack.c.h.b16 %v397
      %v844 = vunpack.c.l.b16 %v398
      %v845 = vunpack.c.h.b16 %v398
      %v846 = vunpack.c.l.b16 %v399
      %v847 = vunpack.c.h.b16 %v399
      %v848 = vunpack.c.l.b16 %v400
      %v849 = vunpack.c.h.b16 %v400
      %v850 = vunpack.c.l.b16 %v401
      %v851 = vunpack.c.h.b16 %v401
      %v852 = vunpack.c.l.b16 %v402
      %v853 = vunpack.c.h.b16 %v402
      %v854 = vunpack.c.l.b16 %v403
      %v855 = vunpack.c.h.b16 %v403
      %v856 = vunpack.c.l.b16 %v404
      %v857 = vunpack.c.h.b16 %v404
      %v858 = vunpack.c.l.b16 %v405
      %v859 = vunpack.c.h.b16 %v405
      %v860 = vunpack.c.l.b16 %v406
      %v861 = vunpack.c.h.b16 %v406
      %v862 = vunpack.c.l.b16 %v407
      %v863 = vunpack.c.h.b16 %v407
      %v864 = vunpack.c.l.b16 %v408
      %v865 = vunpack.c.h.b16 %v408
      %v866 = vunpack.c.l.b16 %v409
      %v867 = vunpack.c.h.b16 %v409
      %v868 = vunpack.c.l.b16 %v410
      %v869 = vunpack.c.h.b16 %v410
      %v870 = vunpack.c.l.b16 %v411
      %v871 = vunpack.c.h.b16 %v411
      %v872 = vunpack.c.l.b16 %v412
      %v873 = vunpack.c.h.b16 %v412
      %v874 = vunpack.c.l.b16 %v413
      %v875 = vunpack.c.h.b16 %v413
      %v876 = vunpack.c.l.b16 %v414
      %v877 = vunpack.c.h.b16 %v414
      %v878 = vunpack.c.l.b16 %v415
      %v879 = vunpack.c.h.b16 %v415
      %v880 = vunpack.c.l.b16 %v416
      %v881 = vunpack.c.h.b16 %v416
      %v882 = vunpack.c.l.b16 %v417
      %v883 = vunpack.c.h.b16 %v417
      %v884 = vunpack.c.l.b16 %v418
      %v885 = vunpack.c.h.b16 %v418
      %v886 = vunpack.c.l.b16 %v419
      %v887 = vunpack.c.h.b16 %v419
      %v888 = vunpack.c.l.b16 %v420
      %v889 = vunpack.c.h.b16 %v420
      %v890 = vunpack.c.l.b16 %v421
      %v891 = vunpack.c.h.b16 %v421
      %v892 = vunpack.c.l.b16 %v422
      %v893 = vunpack.c.h.b16 %v422
      %v894 = vunpack.c.l.b16 %v423
      %v895 = vunpack.c.h.b16 %v423
      %v896 = vunpack.c.l.b16 %v424
      %v897 = vunpack.c.h.b16 %v424
      %v898 = vunpack.c.l.b16 %v425
      %v899 = vunpack.c.h.b16 %v425
      %v900 = vunpack.c.l.b16 %v426
      %v901 = vunpack.c.h.b16 %v426
      %v902 = vunpack.c.l.b16 %v427
      %v903 = vunpack.c.h.b16 %v427
      %v904 = vunpack.c.l.b16 %v428
      %v905 = vunpack.c.h.b16 %v428
      %v906 = vunpack.c.l.b16 %v429
      %v907 = vunpack.c.h.b16 %v429
      %v908 = vunpack.c.l.b16 %v430
      %v909 = vunpack.c.h.b16 %v430
      %v910 = vunpack.c.l.b16 %v431
      %v911 = vunpack.c.h.b16 %v431
      %v912 = vunpack.c.l.b16 %v432
      %v913 = vunpack.c.h.b16 %v432
      %v914 = vunpack.c.l.b16 %v433
      %v915 = vunpack.c.h.b16 %v433
      %v916 = vunpack.c.l.b16 %v434
      %v917 = vunpack.c.h.b16 %v434
      %v918 = vunpack.c.l.b16 %v435
      %v919 = vunpack.c.h.b16 %v435
      %v920 = vunpack.c.l.b16 %v436
      %v921 = vunpack.c.h.b16 %v436
      %v922 = vunpack.c.l.b16 %v437
      %v923 = vunpack.c.h.b16 %v437
      %v924 = vunpack.c.l.b16 %v438
      %v925 = vunpack.c.h.b16 %v438
      %v926 = vunpack.c.l.b16 %v439
      %v927 = vunpack.c.h.b16 %v439
      %v928 = vunpack.c.l.b16 %v440
      %v929 = vunpack.c.h.b16 %v440
      %v930 = vunpack.c.l.b16 %v441
      %v931 = vunpack.c.h.b16 %v441
      %v932 = vunpack.c.l.b16 %v442
      %v933 = vunpack.c.h.b16 %v442
      %v934 = vunpack.c.l.b16 %v443
      %v935 = vunpack.c.h.b16 %v443
      %v936 = vunpack.c.l.b16 %v444
      %v937 = vunpack.c.h.b16 %v444
      %v938 = vunpack.c.l.b16 %v445
      %v939 = vunpack.c.h.b16 %v445
      %v940 = vunpack.c.l.b16 %v446
      %v941 = vunpack.c.h.b16 %v446
      %v942 = vunpack.c.l.b16 %v447
      %v943 = vunpack.c.h.b16 %v447
      %v944 = vunpack.c.l.b16 %v448
      %v945 = vunpack.c.h.b16 %v448
      %v946 = vunpack.c.l.b16 %v449
      %v947 = vunpack.c.h.b16 %v449
      %v948 = vunpack.c.l.b16 %v450
      %v949 = vunpack.c.h.b16 %v450
      %v950 = vunpack.c.l.b16 %v451
      %v951 = vunpack.c.h.b16 %v451
      %v952 = vunpack.c.l.b16 %v452
      %v953 = vunpack.c.h.b16 %v452
      %v954 = vunpack.c.l.b16 %v453
      %v955 = vunpack.c.h.b16 %v453
      %v956 = vunpack.c.l.b16 %v454
      %v957 = vunpack.c.h.b16 %v454
      %v958 = vunpack.c.l.b16 %v455
      %v959 = vunpack.c.h.b16 %v455
      %v960 = vunpack.c.l.b16 %v456
      %v961 = vunpack.c.h.b16 %v456
      %v962 = vunpack.c.l.b16 %v457
      %v963 = vunpack.c.h.b16 %v457
      %v964 = vunpack.c.l.b16 %v458
      %v965 = vunpack.c.h.b16 %v458
      %v966 = vunpack.c.l.b16 %v459
      %v967 = vunpack.c.h.b16 %v459
      %v968 = vunpack.c.l.b16 %v460
      %v969 = vunpack.c.h.b16 %v460
      %v970 = vunpack.c.l.b16 %v461
      %v971 = vunpack.c.h.b16 %v461
      %v972 = vunpack.c.l.b16 %v462
      %v973 = vunpack.c.h.b16 %v462
      %v974 = vunpack.c.l.b16 %v463
      %v975 = vunpack.c.h.b16 %v463
      %v976 = vpack.c.b16 %v728, %v720
      %v977 = vpack.c.b16 %v729, %v721
      %v978 = vpack.c.b16 %v730, %v722
      %v979 = vpack.c.b16 %v731, %v723
      %v980 = vpack.c.b16 %v732, %v724
      %v981 = vpack.c.b16 %v733, %v725
      %v982 = vpack.c.b16 %v734, %v726
      %v983 = vpack.c.b16 %v735, %v727
      %v984 = vpack.c.b16 %v744, %v736
      %v985 = vpack.c.b16 %v745, %v737
      %v986 = vpack.c.b16 %v746, %v738
      %v987 = vpack.c.b16 %v747, %v739
      %v988 = vpack.c.b16 %v748, %v740
      %v989 = vpack.c.b16 %v749, %v741
      %v990 = vpack.c.b16 %v750, %v742
      %v991 = vpack.c.b16 %v751, %v743
      %v992 = vpack.c.b16 %v760, %v752
      %v993 = vpack.c.b16 %v761, %v753
      %v994 = vpack.c.b16 %v762, %v754
      %v995 = vpack.c.b16 %v763, %v755
      %v996 = vpack.c.b16 %v764, %v756
      %v997 = vpack.c.b16 %v765, %v757
      %v998 = vpack.c.b16 %v766, %v758
      %v999 = vpack.c.b16 %v767, %v759
      %v1000 = vpack.c.b16 %v776, %v768
      %v1001 = vpack.c.b16 %v777, %v769
      %v1002 = vpack.c.b16 %v778, %v770
      %v1003 = vpack.c.b16 %v779, %v771
      %v1004 = vpack.c.b16 %v780, %v772
      %v1005 = vpack.c.b16 %v781, %v773
      %v1006 = vpack.c.b16 %v782, %v774
      %v1007 = vpack.c.b16 %v783, %v775
      %v1008 = vpack.c.b16 %v792, %v784
      %v1009 = vpack.c.b16 %v793, %v785
      %v1010 = vpack.c.b16 %v794, %v786
      %v1011 = vpack.c.b16 %v795, %v787
      %v1012 = vpack.c.b16 %v796, %v788
      %v1013 = vpack.c.b16 %v797, %v789
      %v1014 = vpack.c.b16 %v798, %v790
      %v1015 = vpack.c.b16 %v799, %v791
      %v1016 = vpack.c.b16 %v808, %v800
      %v1017 = vpack.c.b16 %v809, %v801
      %v1018 = vpack.c.b16 %v810, %v802
      %v1019 = vpack.c.b16 %v811, %v803
      %v1020 = vpack.c.b16 %v812, %v804
      %v1021 = vpack.c.b16 %v813, %v805
      %v1022 = vpack.c.b16 %v814, %v806
      %v1023 = vpack.c.b16 %v815, %v807
      %v1024 = vpack.c.b16 %v824, %v816
      %v1025 = vpack.c.b16 %v825, %v817
      %v1026 = vpack.c.b16 %v826, %v818
      %v1027 = vpack.c.b16 %v827, %v819
      %v1028 = vpack.c.b16 %v828, %v820
      %v1029 = vpack.c.b16 %v829, %v821
      %v1030 = vpack.c.b16 %v830, %v822
      %v1031 = vpack.c.b16 %v831, %v823
      %v1032 = vpack.c.b16 %v840, %v832
      %v1033 = vpack.c.b16 %v841, %v833
      %v1034 = vpack.c.b16 %v842, %v834
      %v1035 = vpack.c.b16 %v843, %v835
      %v1036 = vpack.c.b16 %v844, %v836
      %v1037 = vpack.c.b16 %v845, %v837
      %v1038 = vpack.c.b16 %v846, %v838
      %v1039 = vpack.c.b16 %v847, %v839
      %v1040 = vpack.c.b16 %v856, %v848
      %v1041 = vpack.c.b16 %v857, %v849
      %v1042 = vpack.c.b16 %v858, %v850
      %v1043 = vpack.c.b16 %v859, %v851
      %v1044 = vpack.c.b16 %v860, %v852
      %v1045 = vpack.c.b16 %v861, %v853
      %v1046 = vpack.c.b16 %v862, %v854
      %v1047 = vpack.c.b16 %v863, %v855
      %v1048 = vpack.c.b16 %v872, %v864
      %v1049 = vpack.c.b16 %v873, %v865
      %v1050 = vpack.c.b16 %v874, %v866
      %v1051 = vpack.c.b16 %v875, %v867
      %v1052 = vpack.c.b16 %v876, %v868
      %v1053 = vpack.c.b16 %v877, %v869
      %v1054 = vpack.c.b16 %v878, %v870
      %v1055 = vpack.c.b16 %v879, %v871
      %v1056 = vpack.c.b16 %v888, %v880
      %v1057 = vpack.c.b16 %v889, %v881
      %v1058 = vpack.c.b16 %v890, %v882
      %v1059 = vpack.c.b16 %v891, %v883
      %v1060 = vpack.c.b16 %v892, %v884
      %v1061 = vpack.c.b16 %v893, %v885
      %v1062 = vpack.c.b16 %v894, %v886
      %v1063 = vpack.c.b16 %v895, %v887
      %v1064 = vpack.c.b16 %v904, %v896
      %v1065 = vpack.c.b16 %v905, %v897
      %v1066 = vpack.c.b16 %v906, %v898
      %v1067 = vpack.c.b16 %v907, %v899
      %v1068 = vpack.c.b16 %v908, %v900
      %v1069 = vpack.c.b16 %v909, %v901
      %v1070 = vpack.c.b16 %v910, %v902
      %v1071 = vpack.c.b16 %v911, %v903
      %v1072 = vpack.c.b16 %v920, %v912
      %v1073 = vpack.c.b16 %v921, %v913
      %v1074 = vpack.c.b16 %v922, %v914
      %v1075 = vpack.c.b16 %v923, %v915
      %v1076 = vpack.c.b16 %v924, %v916
      %v1077 = vpack.c.b16 %v925, %v917
      %v1078 = vpack.c.b16 %v926, %v918
      %v1079 = vpack.c.b16 %v927, %v919
      %v1080 = vpack.c.b16 %v936, %v928
      %v1081 = vpack.c.b16 %v937, %v929
      %v1082 = vpack.c.b16 %v938, %v930
      %v1083 = vpack.c.b16 %v939, %v931
      %v1084 = vpack.c.b16 %v940, %v932
      %v1085 = vpack.c.b16 %v941, %v933
      %v1086 = vpack.c.b16 %v942, %v934
      %v1087 = vpack.c.b16 %v943, %v935
      %v1088 = vpack.c.b16 %v952, %v944
      %v1089 = vpack.c.b16 %v953, %v945
      %v1090 = vpack.c.b16 %v954, %v946
      %v1091 = vpack.c.b16 %v955, %v947
      %v1092 = vpack.c.b16 %v956, %v948
      %v1093 = vpack.c.b16 %v957, %v949
      %v1094 = vpack.c.b16 %v958, %v950
      %v1095 = vpack.c.b16 %v959, %v951
      %v1096 = vpack.c.b16 %v968, %v960
      %v1097 = vpack.c.b16 %v969, %v961
      %v1098 = vpack.c.b16 %v970, %v962
      %v1099 = vpack.c.b16 %v971, %v963
      %v1100 = vpack.c.b16 %v972, %v964
      %v1101 = vpack.c.b16 %v973, %v965
      %v1102 = vpack.c.b16 %v974, %v966
      %v1103 = vpack.c.b16 %v975, %v967
      %v1360 = vunpack.c.l.b16 %v464
      %v1361 = vunpack.c.l.b16 %v465
      %v1362 = vunpack.c.l.b16 %v466
      %v1363 = vunpack.c.l.b16 %v467
      %v1364 = vunpack.c.l.b16 %v468
      %v1365 = vunpack.c.l.b16 %v469
      %v1366 = vunpack.c.l.b16 %v470
      %v1367 = vunpack.c.l.b16 %v471
      %v1368 = vunpack.c.l.b16 %v472
      %v1369 = vunpack.c.l.b16 %v473
      %v1370 = vunpack.c.l.b16 %v474
      %v1371 = vunpack.c.l.b16 %v475
      %v1372 = vunpack.c.l.b16 %v476
      %v1373 = vunpack.c.l.b16 %v477
      %v1374 = vunpack.c.l.b16 %v478
      %v1375 = vunpack.c.l.b16 %v479
      %v1376 = vunpack.c.l.b16 %v480
      %v1377 = vunpack.c.l.b16 %v481
      %v1378 = vunpack.c.l.b16 %v482
      %v1379 = vunpack.c.l.b16 %v483
      %v1380 = vunpack.c.l.b16 %v484
      %v1381 = vunpack.c.l.b16 %v485
      %v1382 = vunpack.c.l.b16 %v486
      %v1383 = vunpack.c.l.b16 %v487
      %v1384 = vunpack.c.l.b16 %v488
      %v1385 = vunpack.c.l.b16 %v489
      %v1386 = vunpack.c.l.b16 %v490
      %v1387 = vunpack.c.l.b16 %v491
      %v1388 = vunpack.c.l.b16 %v492
      %v1389 = vunpack.c.l.b16 %v493
      %v1390 = vunpack.c.l.b16 %v494
      %v1391 = vunpack.c.l.b16 %v495
      %v1392 = vunpack.c.l.b16 %v496
      %v1393 = vunpack.c.l.b16 %v497
      %v1394 = vunpack.c.l.b16 %v498
      %v1395 = vunpack.c.l.b16 %v499
      %v1396 = vunpack.c.l.b16 %v500
      %v1397 = vunpack.c.l.b16 %v501
      %v1398 = vunpack.c.l.b16 %v502
      %v1399 = vunpack.c.l.b16 %v503
      %v1400 = vunpack.c.l.b16 %v504
      %v1401 = vunpack.c.l.b16 %v505
      %v1402 = vunpack.c.l.b16 %v506
      %v1403 = vunpack.c.l.b16 %v507
      %v1404 = vunpack.c.l.b16 %v508
      %v1405 = vunpack.c.l.b16 %v509
      %v1406 = vunpack.c.l.b16 %v510
      %v1407 = vunpack.c.l.b16 %v511
      %v1408 = vunpack.c.l.b16 %v512
      %v1409 = vunpack.c.l.b16 %v513
      %v1410 = vunpack.c.l.b16 %v514
      %v1411 = vunpack.c.l.b16 %v515
      %v1412 = vunpack.c.l.b16 %v516
      %v1413 = vunpack.c.l.b16 %v517
      %v1414 = vunpack.c.l.b16 %v518
      %v1415 = vunpack.c.l.b16 %v519
      %v1416 = vunpack.c.l.b16 %v520
      %v1417 = vunpack.c.l.b16 %v521
      %v1418 = vunpack.c.l.b16 %v522
      %v1419 = vunpack.c.l.b16 %v523
      %v1420 = vunpack.c.l.b16 %v524
      %v1421 = vunpack.c.l.b16 %v525
      %v1422 = vunpack.c.l.b16 %v526
      %v1423 = vunpack.c.l.b16 %v527
      %v1424 = vunpack.c.l.b16 %v528
      %v1425 = vunpack.c.l.b16 %v529
      %v1426 = vunpack.c.l.b16 %v530
      %v1427 = vunpack.c.l.b16 %v531
      %v1428 = vunpack.c.l.b16 %v532
      %v1429 = vunpack.c.l.b16 %v533
      %v1430 = vunpack.c.l.b16 %v534
      %v1431 = vunpack.c.l.b16 %v535
      %v1432 = vunpack.c.l.b16 %v536
      %v1433 = vunpack.c.l.b16 %v537
      %v1434 = vunpack.c.l.b16 %v538
      %v1435 = vunpack.c.l.b16 %v539
      %v1436 = vunpack.c.l.b16 %v540
      %v1437 = vunpack.c.l.b16 %v541
      %v1438 = vunpack.c.l.b16 %v542
      %v1439 = vunpack.c.l.b16 %v543
      %v1440 = vunpack.c.l.b16 %v544
      %v1441 = vunpack.c.l.b16 %v545
      %v1442 = vunpack.c.l.b16 %v546
      %v1443 = vunpack.c.l.b16 %v547
      %v1444 = vunpack.c.l.b16 %v548
      %v1445 = vunpack.c.l.b16 %v549
      %v1446 = vunpack.c.l.b16 %v550
      %v1447 = vunpack.c.l.b16 %v551
      %v1448 = vunpack.c.l.b16 %v552
      %v1449 = vunpack.c.l.b16 %v553
      %v1450 = vunpack.c.l.b16 %v554
      %v1451 = vunpack.c.l.b16 %v555
      %v1452 = vunpack.c.l.b16 %v556
      %v1453 = vunpack.c.l.b16 %v557
      %v1454 = vunpack.c.l.b16 %v558
      %v1455 = vunpack.c.l.b16 %v559
      %v1456 = vunpack.c.l.b16 %v560
      %v1457 = vunpack.c.l.b16 %v561
      %v1458 = vunpack.c.l.b16 %v562
      %v1459 = vunpack.c.l.b16 %v563
      %v1460 = vunpack.c.l.b16 %v564
      %v1461 = vunpack.c.l.b16 %v565
      %v1462 = vunpack.c.l.b16 %v566
      %v1463 = vunpack.c.l.b16 %v567
      %v1464 = vunpack.c.l.b16 %v568
      %v1465 = vunpack.c.l.b16 %v569
      %v1466 = vunpack.c.l.b16 %v570
      %v1467 = vunpack.c.l.b16 %v571
      %v1468 = vunpack.c.l.b16 %v572
      %v1469 = vunpack.c.l.b16 %v573
      %v1470 = vunpack.c.l.b16 %v574
      %v1471 = vunpack.c.l.b16 %v575
      %v1472 = vunpack.c.l.b16 %v576
      %v1473 = vunpack.c.l.b16 %v577
      %v1474 = vunpack.c.l.b16 %v578
      %v1475 = vunpack.c.l.b16 %v579
      %v1476 = vunpack.c.l.b16 %v580
      %v1477 = vunpack.c.l.b16 %v581
      %v1478 = vunpack.c.l.b16 %v582
      %v1479 = vunpack.c.l.b16 %v583
      %v1480 = vunpack.c.l.b16 %v584
      %v1481 = vunpack.c.l.b16 %v585
      %v1482 = vunpack.c.l.b16 %v586
      %v1483 = vunpack.c.l.b16 %v587
      %v1484 = vunpack.c.l.b16 %v588
      %v1485 = vunpack.c.l.b16 %v589
      %v1486 = vunpack.c.l.b16 %v590
      %v1487 = vunpack.c.l.b16 %v591
      %v1488 = vpack.c.b16 %v1361, %v1360
      %v1489 = vpack.c.b16 %v1363, %v1362
      %v1490 = vpack.c.b16 %v1365, %v1364
      %v1491 = vpack.c.b16 %v1367, %v1366
      %v1492 = vpack.c.b16 %v1369, %v1368
      %v1493 = vpack.c.b16 %v1371, %v1370
      %v1494 = vpack.c.b16 %v1373, %v1372
      %v1495 = vpack.c.b16 %v1375, %v1374
      %v1496 = vpack.c.b16 %v1377, %v1376
      %v1497 = vpack.c.b16 %v1379, %v1378
      %v1498 = vpack.c.b16 %v1381, %v1380
      %v1499 = vpack.c.b16 %v1383, %v1382
      %v1500 = vpack.c.b16 %v1385, %v1384
      %v1501 = vpack.c.b16 %v1387, %v1386
      %v1502 = vpack.c.b16 %v1389, %v1388
      %v1503 = vpack.c.b16 %v1391, %v1390
      %v1504 = vpack.c.b16 %v1393, %v1392
      %v1505 = vpack.c.b16 %v1395, %v1394
      %v1506 = vpack.c.b16 %v1397, %v1396
      %v1507 = vpack.c.b16 %v1399, %v1398
      %v1508 = vpack.c.b16 %v1401, %v1400
      %v1509 = vpack.c.b16 %v1403, %v1402
      %v1510 = vpack.c.b16 %v1405, %v1404
      %v1511 = vpack.c.b16 %v1407, %v1406
      %v1512 = vpack.c.b16 %v1409, %v1408
      %v1513 = vpack.c.b16 %v1411, %v1410
      %v1514 = vpack.c.b16 %v1413, %v1412
      %v1515 = vpack.c.b16 %v1415, %v1414
      %v1516 = vpack.c.b16 %v1417, %v1416
      %v1517 = vpack.c.b16 %v1419, %v1418
      %v1518 = vpack.c.b16 %v1421, %v1420
      %v1519 = vpack.c.b16 %v1423, %v1422
      %v1520 = vpack.c.b16 %v1425, %v1424
      %v1521 = vpack.c.b16 %v1427, %v1426
      %v1522 = vpack.c.b16 %v1429, %v1428
      %v1523 = vpack.c.b16 %v1431, %v1430
      %v1524 = vpack.c.b16 %v1433, %v1432
      %v1525 = vpack.c.b16 %v1435, %v1434
      %v1526 = vpack.c.b16 %v1437, %v1436
      %v1527 = vpack.c.b16 %v1439, %v1438
      %v1528 = vpack.c.b16 %v1441, %v1440
      %v1529 = vpack.c.b16 %v1443, %v1442
      %v1530 = vpack.c.b16 %v1445, %v1444
      %v1531 = vpack.c.b16 %v1447, %v1446
      %v1532 = vpack.c.b16 %v1449, %v1448
      %v1533 = vpack.c.b16 %v1451, %v1450
      %v1534 = vpack.c.b16 %v1453, %v1452
      %v1535 = vpack.c.b16 %v1455, %v1454
      %v1536 = vpack.c.b16 %v1457, %v1456
      %v1537 = vpack.c.b16 %v1459, %v1458
      %v1538 = vpack.c.b16 %v1461, %v1460
      %v1539 = vpack.c.b16 %v1463, %v1462
      %v1540 = vpack.c.b16 %v1465, %v1464
      %v1541 = vpack.c.b16 %v1467, %v1466
      %v1542 = vpack.c.b16 %v1469, %v1468
      %v1543 = vpack.c.b16 %v1471, %v1470
      %v1544 = vpack.c.b16 %v1473, %v1472
      %v1545 = vpack.c.b16 %v1475, %v1474
      %v1546 = vpack.c.b16 %v1477, %v1476
      %v1547 = vpack.c.b16 %v1479, %v1478
      %v1548 = vpack.c.b16 %v1481, %v1480
      %v1549 = vpack.c.b16 %v1483, %v1482
      %v1550 = vpack.c.b16 %v1485, %v1484
      %v1551 = vpack.c.b16 %v1487, %v1486
      %1616 = vmatprep.subr.bf16.mxu0 0
      %1617 = vmatpush1.bf16.msra.mxu0 %v1488
      %1618 = vmatprep.subr.bf16.mxu0 0
      %1619 = vmatpush1.bf16.msra.mxu0 %v1489
      %1620 = vmatprep.subr.bf16.mxu0 0
      %1621 = vmatpush1.bf16.msra.mxu0 %v1490
      %1622 = vmatprep.subr.bf16.mxu0 0
      %1623 = vmatpush1.bf16.msra.mxu0 %v1491
      %1624 = vmatprep.subr.bf16.mxu0 0
      %1625 = vmatpush1.bf16.msra.mxu0 %v1492
      %1626 = vmatprep.subr.bf16.mxu0 0
      %1627 = vmatpush1.bf16.msra.mxu0 %v1493
      %1628 = vmatprep.subr.bf16.mxu0 0
      %1629 = vmatpush1.bf16.msra.mxu0 %v1494
      %1630 = vmatprep.subr.bf16.mxu0 0
      %1631 = vmatpush1.bf16.msra.mxu0 %v1495
      %1632 = vmatprep.subr.bf16.mxu0 0
      %1633 = vmatpush1.bf16.msra.mxu0 %v1496
      %1634 = vmatprep.subr.bf16.mxu0 0
      %1635 = vmatpush1.bf16.msra.mxu0 %v1497
      %1636 = vmatprep.subr.bf16.mxu0 0
      %1637 = vmatpush1.bf16.msra.mxu0 %v1498
      %1638 = vmatprep.subr.bf16.mxu0 0
      %1639 = vmatpush1.bf16.msra.mxu0 %v1499
      %1640 = vmatprep.subr.bf16.mxu0 0
      %1641 = vmatpush1.bf16.msra.mxu0 %v1500
      %1642 = vmatprep.subr.bf16.mxu0 0
      %1643 = vmatpush1.bf16.msra.mxu0 %v1501
      %1644 = vmatprep.subr.bf16.mxu0 0
      %1645 = vmatpush1.bf16.msra.mxu0 %v1502
      %1646 = vmatprep.subr.bf16.mxu0 0
      %1647 = vmatpush1.bf16.msra.mxu0 %v1503
      %1648 = vmatprep.mubr.bf16.mxu0 %v977
      %1649 = vmatmul.mubr.bf16.gmra.mrb[0].mxu0 %v976
      %v1650 = vpop.f32.mrb[0].mxu0
      %v1651 = vadd.f32 0.0, %v1650
      %v1652 = vpop.f32.mrb[0].mxu0
      %v1653 = vpop.f32.mrb[0].mxu0
      %v1654 = vadd.f32 0.0, %v1653
      %v1655 = vpop.f32.mrb[0].mxu0
      %1656 = vmatprep.mubr.bf16.mxu0 %v985
      %1657 = vmatmul.mubr.bf16.gmra.mrb[0].mxu0 %v984
      %v1658 = vpop.f32.mrb[0].mxu0
      %v1659 = vadd.f32 0.0, %v1658
      %v1660 = vpop.f32.mrb[0].mxu0
      %v1661 = vpop.f32.mrb[0].mxu0
      %v1662 = vadd.f32 0.0, %v1661
      %v1663 = vpop.f32.mrb[0].mxu0
      %1664 = vmatprep.mubr.bf16.mxu0 %v993
      %1665 = vmatmul.mubr.bf16.gmra.mrb[0].mxu0 %v992
      %v1666 = vpop.f32.mrb[0].mxu0
      %v1667 = vadd.f32 0.0, %v1666
      %v1668 = vpop.f32.mrb[0].mxu0
      %v1669 = vpop.f32.mrb[0].mxu0
      %v1670 = vadd.f32 0.0, %v1669
      %v1671 = vpop.f32.mrb[0].mxu0
      %1672 = vmatprep.mubr.bf16.mxu0 %v1001
      %1673 = vmatmul.mubr.bf16.gmra.mrb[0].mxu0 %v1000
      %v1674 = vpop.f32.mrb[0].mxu0
      %v1675 = vadd.f32 0.0, %v1674
      %v1676 = vpop.f32.mrb[0].mxu0
      %v1677 = vpop.f32.mrb[0].mxu0
      %v1678 = vadd.f32 0.0, %v1677
      %v1679 = vpop.f32.mrb[0].mxu0
      %1680 = vmatprep.mubr.bf16.mxu0 %v1009
      %1681 = vmatmul.mubr.bf16.gmra.mrb[0].mxu0 %v1008
      %v1682 = vpop.f32.mrb[0].mxu0
      %v1683 = vadd.f32 0.0, %v1682
      %v1684 = vpop.f32.mrb[0].mxu0
      %v1685 = vpop.f32.mrb[0].mxu0
      %v1686 = vadd.f32 0.0, %v1685
      %v1687 = vpop.f32.mrb[0].mxu0
      %1688 = vmatprep.mubr.bf16.mxu0 %v1017
      %1689 = vmatmul.mubr.bf16.gmra.mrb[0].mxu0 %v1016
      %v1690 = vpop.f32.mrb[0].mxu0
      %v1691 = vadd.f32 0.0, %v1690
      %v1692 = vpop.f32.mrb[0].mxu0
      %v1693 = vpop.f32.mrb[0].mxu0
      %v1694 = vadd.f32 0.0, %v1693
      %v1695 = vpop.f32.mrb[0].mxu0
      %1696 = vmatprep.mubr.bf16.mxu0 %v1025
      %1697 = vmatmul.mubr.bf16.gmra.mrb[0].mxu0 %v1024
      %v1698 = vpop.f32.mrb[0].mxu0
      %v1699 = vadd.f32 0.0, %v1698
      %v1700 = vpop.f32.mrb[0].mxu0
      %v1701 = vpop.f32.mrb[0].mxu0
      %v1702 = vadd.f32 0.0, %v1701
      %v1703 = vpop.f32.mrb[0].mxu0
      %1704 = vmatprep.mubr.bf16.mxu0 %v1033
      %1705 = vmatmul.mubr.bf16.gmra.mrb[0].mxu0 %v1032
      %v1706 = vpop.f32.mrb[0].mxu0
      %v1707 = vadd.f32 0.0, %v1706
      %v1708 = vpop.f32.mrb[0].mxu0
      %v1709 = vpop.f32.mrb[0].mxu0
      %v1710 = vadd.f32 0.0, %v1709
      %v1711 = vpop.f32.mrb[0].mxu0
      %1712 = vmatprep.mubr.bf16.mxu0 %v1041
      %1713 = vmatmul.mubr.bf16.gmra.mrb[0].mxu0 %v1040
      %v1714 = vpop.f32.mrb[0].mxu0
      %v1715 = vadd.f32 0.0, %v1714
      %v1716 = vpop.f32.mrb[0].mxu0
      %v1717 = vpop.f32.mrb[0].mxu0
      %v1718 = vadd.f32 0.0, %v1717
      %v1719 = vpop.f32.mrb[0].mxu0
      %1720 = vmatprep.mubr.bf16.mxu0 %v1049
      %1721 = vmatmul.mubr.bf16.gmra.mrb[0].mxu0 %v1048
      %v1722 = vpop.f32.mrb[0].mxu0
      %v1723 = vadd.f32 0.0, %v1722
      %v1724 = vpop.f32.mrb[0].mxu0
      %v1725 = vpop.f32.mrb[0].mxu0
      %v1726 = vadd.f32 0.0, %v1725
      %v1727 = vpop.f32.mrb[0].mxu0
      %1728 = vmatprep.mubr.bf16.mxu0 %v1057
      %1729 = vmatmul.mubr.bf16.gmra.mrb[0].mxu0 %v1056
      %v1730 = vpop.f32.mrb[0].mxu0
      %v1731 = vadd.f32 0.0, %v1730
      %v1732 = vpop.f32.mrb[0].mxu0
      %v1733 = vpop.f32.mrb[0].mxu0
      %v1734 = vadd.f32 0.0, %v1733
      %v1735 = vpop.f32.mrb[0].mxu0
      %1736 = vmatprep.mubr.bf16.mxu0 %v1065
      %1737 = vmatmul.mubr.bf16.gmra.mrb[0].mxu0 %v1064
      %v1738 = vpop.f32.mrb[0].mxu0
      %v1739 = vadd.f32 0.0, %v1738
      %v1740 = vpop.f32.mrb[0].mxu0
      %v1741 = vpop.f32.mrb[0].mxu0
      %v1742 = vadd.f32 0.0, %v1741
      %v1743 = vpop.f32.mrb[0].mxu0
      %1744 = vmatprep.mubr.bf16.mxu0 %v1073
      %1745 = vmatmul.mubr.bf16.gmra.mrb[0].mxu0 %v1072
      %v1746 = vpop.f32.mrb[0].mxu0
      %v1747 = vadd.f32 0.0, %v1746
      %v1748 = vpop.f32.mrb[0].mxu0
      %v1749 = vpop.f32.mrb[0].mxu0
      %v1750 = vadd.f32 0.0, %v1749
      %v1751 = vpop.f32.mrb[0].mxu0
      %1752 = vmatprep.mubr.bf16.mxu0 %v1081
      %1753 = vmatmul.mubr.bf16.gmra.mrb[0].mxu0 %v1080
      %v1754 = vpop.f32.mrb[0].mxu0
      %v1755 = vadd.f32 0.0, %v1754
      %v1756 = vpop.f32.mrb[0].mxu0
      %v1757 = vpop.f32.mrb[0].mxu0
      %v1758 = vadd.f32 0.0, %v1757
      %v1759 = vpop.f32.mrb[0].mxu0
      %1760 = vmatprep.mubr.bf16.mxu0 %v1089
      %1761 = vmatmul.mubr.bf16.gmra.mrb[0].mxu0 %v1088
      %v1762 = vpop.f32.mrb[0].mxu0
      %v1763 = vadd.f32 0.0, %v1762
      %v1764 = vpop.f32.mrb[0].mxu0
      %v1765 = vpop.f32.mrb[0].mxu0
      %v1766 = vadd.f32 0.0, %v1765
      %v1767 = vpop.f32.mrb[0].mxu0
      %1768 = vmatprep.mubr.bf16.mxu0 %v1097
      %1769 = vmatmul.mubr.bf16.gmra.mrb[0].mxu0 %v1096
      %v1770 = vpop.f32.mrb[0].mxu0
      %v1771 = vadd.f32 0.0, %v1770
      %v1772 = vpop.f32.mrb[0].mxu0
      %v1773 = vpop.f32.mrb[0].mxu0
      %v1774 = vadd.f32 0.0, %v1773
      %v1775 = vpop.f32.mrb[0].mxu0
      %1776 = vdwg.mxu0
      %1777 = vmatprep.subr.bf16.mxu0 0
      %1778 = vmatpush1.bf16.msra.mxu0 %v1504
      %1779 = vmatprep.subr.bf16.mxu0 0
      %1780 = vmatpush1.bf16.msra.mxu0 %v1505
      %1781 = vmatprep.subr.bf16.mxu0 0
      %1782 = vmatpush1.bf16.msra.mxu0 %v1506
      %1783 = vmatprep.subr.bf16.mxu0 0
      %1784 = vmatpush1.bf16.msra.mxu0 %v1507
      %1785 = vmatprep.subr.bf16.mxu0 0
      %1786 = vmatpush1.bf16.msra.mxu0 %v1508
      %1787 = vmatprep.subr.bf16.mxu0 0
      %1788 = vmatpush1.bf16.msra.mxu0 %v1509
      %1789 = vmatprep.subr.bf16.mxu0 0
      %1790 = vmatpush1.bf16.msra.mxu0 %v1510
      %1791 = vmatprep.subr.bf16.mxu0 0
      %1792 = vmatpush1.bf16.msra.mxu0 %v1511
      %1793 = vmatprep.subr.bf16.mxu0 0
      %1794 = vmatpush1.bf16.msra.mxu0 %v1512
      %1795 = vmatprep.subr.bf16.mxu0 0
      %1796 = vmatpush1.bf16.msra.mxu0 %v1513
      %1797 = vmatprep.subr.bf16.mxu0 0
      %1798 = vmatpush1.bf16.msra.mxu0 %v1514
      %1799 = vmatprep.subr.bf16.mxu0 0
      %1800 = vmatpush1.bf16.msra.mxu0 %v1515
      %1801 = vmatprep.subr.bf16.mxu0 0
      %1802 = vmatpush1.bf16.msra.mxu0 %v1516
      %1803 = vmatprep.subr.bf16.mxu0 0
      %1804 = vmatpush1.bf16.msra.mxu0 %v1517
      %1805 = vmatprep.subr.bf16.mxu0 0
      %1806 = vmatpush1.bf16.msra.mxu0 %v1518
      %1807 = vmatprep.subr.bf16.mxu0 0
      %1808 = vmatpush1.bf16.msra.mxu0 %v1519
      %1809 = vmatprep.mubr.bf16.mxu0 %v979
      %1810 = vmatmul.mubr.bf16.gmra.mrb[0].mxu0 %v978
      %v1811 = vpop.f32.mrb[0].mxu0
      %v1812 = vadd.f32 %v1651, %v1811
      %v1813 = vpop.f32.mrb[0].mxu0
      %v1814 = vpop.f32.mrb[0].mxu0
      %v1815 = vadd.f32 %v1654, %v1814
      %v1816 = vpop.f32.mrb[0].mxu0
      %1817 = vmatprep.mubr.bf16.mxu0 %v987
      %1818 = vmatmul.mubr.bf16.gmra.mrb[0].mxu0 %v986
      %v1819 = vpop.f32.mrb[0].mxu0
      %v1820 = vadd.f32 %v1659, %v1819
      %v1821 = vpop.f32.mrb[0].mxu0
      %v1822 = vpop.f32.mrb[0].mxu0
      %v1823 = vadd.f32 %v1662, %v1822
      %v1824 = vpop.f32.mrb[0].mxu0
      %1825 = vmatprep.mubr.bf16.mxu0 %v995
      %1826 = vmatmul.mubr.bf16.gmra.mrb[0].mxu0 %v994
      %v1827 = vpop.f32.mrb[0].mxu0
      %v1828 = vadd.f32 %v1667, %v1827
      %v1829 = vpop.f32.mrb[0].mxu0
      %v1830 = vpop.f32.mrb[0].mxu0
      %v1831 = vadd.f32 %v1670, %v1830
      %v1832 = vpop.f32.mrb[0].mxu0
      %1833 = vmatprep.mubr.bf16.mxu0 %v1003
      %1834 = vmatmul.mubr.bf16.gmra.mrb[0].mxu0 %v1002
      %v1835 = vpop.f32.mrb[0].mxu0
      %v1836 = vadd.f32 %v1675, %v1835
      %v1837 = vpop.f32.mrb[0].mxu0
      %v1838 = vpop.f32.mrb[0].mxu0
      %v1839 = vadd.f32 %v1678, %v1838
      %v1840 = vpop.f32.mrb[0].mxu0
      %1841 = vmatprep.mubr.bf16.mxu0 %v1011
      %1842 = vmatmul.mubr.bf16.gmra.mrb[0].mxu0 %v1010
      %v1843 = vpop.f32.mrb[0].mxu0
      %v1844 = vadd.f32 %v1683, %v1843
      %v1845 = vpop.f32.mrb[0].mxu0
      %v1846 = vpop.f32.mrb[0].mxu0
      %v1847 = vadd.f32 %v1686, %v1846
      %v1848 = vpop.f32.mrb[0].mxu0
      %1849 = vmatprep.mubr.bf16.mxu0 %v1019
      %1850 = vmatmul.mubr.bf16.gmra.mrb[0].mxu0 %v1018
      %v1851 = vpop.f32.mrb[0].mxu0
      %v1852 = vadd.f32 %v1691, %v1851
      %v1853 = vpop.f32.mrb[0].mxu0
      %v1854 = vpop.f32.mrb[0].mxu0
      %v1855 = vadd.f32 %v1694, %v1854
      %v1856 = vpop.f32.mrb[0].mxu0
      %1857 = vmatprep.mubr.bf16.mxu0 %v1027
      %1858 = vmatmul.mubr.bf16.gmra.mrb[0].mxu0 %v1026
      %v1859 = vpop.f32.mrb[0].mxu0
      %v1860 = vadd.f32 %v1699, %v1859
      %v1861 = vpop.f32.mrb[0].mxu0
      %v1862 = vpop.f32.mrb[0].mxu0
      %v1863 = vadd.f32 %v1702, %v1862
      %v1864 = vpop.f32.mrb[0].mxu0
      %1865 = vmatprep.mubr.bf16.mxu0 %v1035
      %1866 = vmatmul.mubr.bf16.gmra.mrb[0].mxu0 %v1034
      %v1867 = vpop.f32.mrb[0].mxu0
      %v1868 = vadd.f32 %v1707, %v1867
      %v1869 = vpop.f32.mrb[0].mxu0
      %v1870 = vpop.f32.mrb[0].mxu0
      %v1871 = vadd.f32 %v1710, %v1870
      %v1872 = vpop.f32.mrb[0].mxu0
      %1873 = vmatprep.mubr.bf16.mxu0 %v1043
      %1874 = vmatmul.mubr.bf16.gmra.mrb[0].mxu0 %v1042
      %v1875 = vpop.f32.mrb[0].mxu0
      %v1876 = vadd.f32 %v1715, %v1875
      %v1877 = vpop.f32.mrb[0].mxu0
      %v1878 = vpop.f32.mrb[0].mxu0
      %v1879 = vadd.f32 %v1718, %v1878
      %v1880 = vpop.f32.mrb[0].mxu0
      %1881 = vmatprep.mubr.bf16.mxu0 %v1051
      %1882 = vmatmul.mubr.bf16.gmra.mrb[0].mxu0 %v1050
      %v1883 = vpop.f32.mrb[0].mxu0
      %v1884 = vadd.f32 %v1723, %v1883
      %v1885 = vpop.f32.mrb[0].mxu0
      %v1886 = vpop.f32.mrb[0].mxu0
      %v1887 = vadd.f32 %v1726, %v1886
      %v1888 = vpop.f32.mrb[0].mxu0
      %1889 = vmatprep.mubr.bf16.mxu0 %v1059
      %1890 = vmatmul.mubr.bf16.gmra.mrb[0].mxu0 %v1058
      %v1891 = vpop.f32.mrb[0].mxu0
      %v1892 = vadd.f32 %v1731, %v1891
      %v1893 = vpop.f32.mrb[0].mxu0
      %v1894 = vpop.f32.mrb[0].mxu0
      %v1895 = vadd.f32 %v1734, %v1894
      %v1896 = vpop.f32.mrb[0].mxu0
      %1897 = vmatprep.mubr.bf16.mxu0 %v1067
      %1898 = vmatmul.mubr.bf16.gmra.mrb[0].mxu0 %v1066
      %v1899 = vpop.f32.mrb[0].mxu0
      %v1900 = vadd.f32 %v1739, %v1899
      %v1901 = vpop.f32.mrb[0].mxu0
      %v1902 = vpop.f32.mrb[0].mxu0
      %v1903 = vadd.f32 %v1742, %v1902
      %v1904 = vpop.f32.mrb[0].mxu0
      %1905 = vmatprep.mubr.bf16.mxu0 %v1075
      %1906 = vmatmul.mubr.bf16.gmra.mrb[0].mxu0 %v1074
      %v1907 = vpop.f32.mrb[0].mxu0
      %v1908 = vadd.f32 %v1747, %v1907
      %v1909 = vpop.f32.mrb[0].mxu0
      %v1910 = vpop.f32.mrb[0].mxu0
      %v1911 = vadd.f32 %v1750, %v1910
      %v1912 = vpop.f32.mrb[0].mxu0
      %1913 = vmatprep.mubr.bf16.mxu0 %v1083
      %1914 = vmatmul.mubr.bf16.gmra.mrb[0].mxu0 %v1082
      %v1915 = vpop.f32.mrb[0].mxu0
      %v1916 = vadd.f32 %v1755, %v1915
      %v1917 = vpop.f32.mrb[0].mxu0
      %v1918 = vpop.f32.mrb[0].mxu0
      %v1919 = vadd.f32 %v1758, %v1918
      %v1920 = vpop.f32.mrb[0].mxu0
      %1921 = vmatprep.mubr.bf16.mxu0 %v1091
      %1922 = vmatmul.mubr.bf16.gmra.mrb[0].mxu0 %v1090
      %v1923 = vpop.f32.mrb[0].mxu0
      %v1924 = vadd.f32 %v1763, %v1923
      %v1925 = vpop.f32.mrb[0].mxu0
      %v1926 = vpop.f32.mrb[0].mxu0
      %v1927 = vadd.f32 %v1766, %v1926
      %v1928 = vpop.f32.mrb[0].mxu0
      %1929 = vmatprep.mubr.bf16.mxu0 %v1099
      %1930 = vmatmul.mubr.bf16.gmra.mrb[0].mxu0 %v1098
      %v1931 = vpop.f32.mrb[0].mxu0
      %v1932 = vadd.f32 %v1771, %v1931
      %v1933 = vpop.f32.mrb[0].mxu0
      %v1934 = vpop.f32.mrb[0].mxu0
      %v1935 = vadd.f32 %v1774, %v1934
      %v1936 = vpop.f32.mrb[0].mxu0
      %1937 = vdwg.mxu0
      %1938 = vmatprep.subr.bf16.mxu0 0
      %1939 = vmatpush1.bf16.msra.mxu0 %v1520
      %1940 = vmatprep.subr.bf16.mxu0 0
      %1941 = vmatpush1.bf16.msra.mxu0 %v1521
      %1942 = vmatprep.subr.bf16.mxu0 0
      %1943 = vmatpush1.bf16.msra.mxu0 %v1522
      %1944 = vmatprep.subr.bf16.mxu0 0
      %1945 = vmatpush1.bf16.msra.mxu0 %v1523
      %1946 = vmatprep.subr.bf16.mxu0 0
      %1947 = vmatpush1.bf16.msra.mxu0 %v1524
      %1948 = vmatprep.subr.bf16.mxu0 0
      %1949 = vmatpush1.bf16.msra.mxu0 %v1525
      %1950 = vmatprep.subr.bf16.mxu0 0
      %1951 = vmatpush1.bf16.msra.mxu0 %v1526
      %1952 = vmatprep.subr.bf16.mxu0 0
      %1953 = vmatpush1.bf16.msra.mxu0 %v1527
      %1954 = vmatprep.subr.bf16.mxu0 0
      %1955 = vmatpush1.bf16.msra.mxu0 %v1528
      %1956 = vmatprep.subr.bf16.mxu0 0
      %1957 = vmatpush1.bf16.msra.mxu0 %v1529
      %1958 = vmatprep.subr.bf16.mxu0 0
      %1959 = vmatpush1.bf16.msra.mxu0 %v1530
      %1960 = vmatprep.subr.bf16.mxu0 0
      %1961 = vmatpush1.bf16.msra.mxu0 %v1531
      %1962 = vmatprep.subr.bf16.mxu0 0
      %1963 = vmatpush1.bf16.msra.mxu0 %v1532
      %1964 = vmatprep.subr.bf16.mxu0 0
      %1965 = vmatpush1.bf16.msra.mxu0 %v1533
      %1966 = vmatprep.subr.bf16.mxu0 0
      %1967 = vmatpush1.bf16.msra.mxu0 %v1534
      %1968 = vmatprep.subr.bf16.mxu0 0
      %1969 = vmatpush1.bf16.msra.mxu0 %v1535
      %1970 = vmatprep.mubr.bf16.mxu0 %v981
      %1971 = vmatmul.mubr.bf16.gmra.mrb[0].mxu0 %v980
      %v1972 = vpop.f32.mrb[0].mxu0
      %v1973 = vadd.f32 %v1812, %v1972
      %v1974 = vpop.f32.mrb[0].mxu0
      %v1975 = vpop.f32.mrb[0].mxu0
      %v1976 = vadd.f32 %v1815, %v1975
      %v1977 = vpop.f32.mrb[0].mxu0
      %1978 = vmatprep.mubr.bf16.mxu0 %v989
      %1979 = vmatmul.mubr.bf16.gmra.mrb[0].mxu0 %v988
      %v1980 = vpop.f32.mrb[0].mxu0
      %v1981 = vadd.f32 %v1820, %v1980
      %v1982 = vpop.f32.mrb[0].mxu0
      %v1983 = vpop.f32.mrb[0].mxu0
      %v1984 = vadd.f32 %v1823, %v1983
      %v1985 = vpop.f32.mrb[0].mxu0
      %1986 = vmatprep.mubr.bf16.mxu0 %v997
      %1987 = vmatmul.mubr.bf16.gmra.mrb[0].mxu0 %v996
      %v1988 = vpop.f32.mrb[0].mxu0
      %v1989 = vadd.f32 %v1828, %v1988
      %v1990 = vpop.f32.mrb[0].mxu0
      %v1991 = vpop.f32.mrb[0].mxu0
      %v1992 = vadd.f32 %v1831, %v1991
      %v1993 = vpop.f32.mrb[0].mxu0
      %1994 = vmatprep.mubr.bf16.mxu0 %v1005
      %1995 = vmatmul.mubr.bf16.gmra.mrb[0].mxu0 %v1004
      %v1996 = vpop.f32.mrb[0].mxu0
      %v1997 = vadd.f32 %v1836, %v1996
      %v1998 = vpop.f32.mrb[0].mxu0
      %v1999 = vpop.f32.mrb[0].mxu0
      %v2000 = vadd.f32 %v1839, %v1999
      %v2001 = vpop.f32.mrb[0].mxu0
      %2002 = vmatprep.mubr.bf16.mxu0 %v1013
      %2003 = vmatmul.mubr.bf16.gmra.mrb[0].mxu0 %v1012
      %v2004 = vpop.f32.mrb[0].mxu0
      %v2005 = vadd.f32 %v1844, %v2004
      %v2006 = vpop.f32.mrb[0].mxu0
      %v2007 = vpop.f32.mrb[0].mxu0
      %v2008 = vadd.f32 %v1847, %v2007
      %v2009 = vpop.f32.mrb[0].mxu0
      %2010 = vmatprep.mubr.bf16.mxu0 %v1021
      %2011 = vmatmul.mubr.bf16.gmra.mrb[0].mxu0 %v1020
      %v2012 = vpop.f32.mrb[0].mxu0
      %v2013 = vadd.f32 %v1852, %v2012
      %v2014 = vpop.f32.mrb[0].mxu0
      %v2015 = vpop.f32.mrb[0].mxu0
      %v2016 = vadd.f32 %v1855, %v2015
      %v2017 = vpop.f32.mrb[0].mxu0
      %2018 = vmatprep.mubr.bf16.mxu0 %v1029
      %2019 = vmatmul.mubr.bf16.gmra.mrb[0].mxu0 %v1028
      %v2020 = vpop.f32.mrb[0].mxu0
      %v2021 = vadd.f32 %v1860, %v2020
      %v2022 = vpop.f32.mrb[0].mxu0
      %v2023 = vpop.f32.mrb[0].mxu0
      %v2024 = vadd.f32 %v1863, %v2023
      %v2025 = vpop.f32.mrb[0].mxu0
      %2026 = vmatprep.mubr.bf16.mxu0 %v1037
      %2027 = vmatmul.mubr.bf16.gmra.mrb[0].mxu0 %v1036
      %v2028 = vpop.f32.mrb[0].mxu0
      %v2029 = vadd.f32 %v1868, %v2028
      %v2030 = vpop.f32.mrb[0].mxu0
      %v2031 = vpop.f32.mrb[0].mxu0
      %v2032 = vadd.f32 %v1871, %v2031
      %v2033 = vpop.f32.mrb[0].mxu0
      %2034 = vmatprep.mubr.bf16.mxu0 %v1045
      %2035 = vmatmul.mubr.bf16.gmra.mrb[0].mxu0 %v1044
      %v2036 = vpop.f32.mrb[0].mxu0
      %v2037 = vadd.f32 %v1876, %v2036
      %v2038 = vpop.f32.mrb[0].mxu0
      %v2039 = vpop.f32.mrb[0].mxu0
      %v2040 = vadd.f32 %v1879, %v2039
      %v2041 = vpop.f32.mrb[0].mxu0
      %2042 = vmatprep.mubr.bf16.mxu0 %v1053
      %2043 = vmatmul.mubr.bf16.gmra.mrb[0].mxu0 %v1052
      %v2044 = vpop.f32.mrb[0].mxu0
      %v2045 = vadd.f32 %v1884, %v2044
      %v2046 = vpop.f32.mrb[0].mxu0
      %v2047 = vpop.f32.mrb[0].mxu0
      %v2048 = vadd.f32 %v1887, %v2047
      %v2049 = vpop.f32.mrb[0].mxu0
      %2050 = vmatprep.mubr.bf16.mxu0 %v1061
      %2051 = vmatmul.mubr.bf16.gmra.mrb[0].mxu0 %v1060
      %v2052 = vpop.f32.mrb[0].mxu0
      %v2053 = vadd.f32 %v1892, %v2052
      %v2054 = vpop.f32.mrb[0].mxu0
      %v2055 = vpop.f32.mrb[0].mxu0
      %v2056 = vadd.f32 %v1895, %v2055
      %v2057 = vpop.f32.mrb[0].mxu0
      %2058 = vmatprep.mubr.bf16.mxu0 %v1069
      %2059 = vmatmul.mubr.bf16.gmra.mrb[0].mxu0 %v1068
      %v2060 = vpop.f32.mrb[0].mxu0
      %v2061 = vadd.f32 %v1900, %v2060
      %v2062 = vpop.f32.mrb[0].mxu0
      %v2063 = vpop.f32.mrb[0].mxu0
      %v2064 = vadd.f32 %v1903, %v2063
      %v2065 = vpop.f32.mrb[0].mxu0
      %2066 = vmatprep.mubr.bf16.mxu0 %v1077
      %2067 = vmatmul.mubr.bf16.gmra.mrb[0].mxu0 %v1076
      %v2068 = vpop.f32.mrb[0].mxu0
      %v2069 = vadd.f32 %v1908, %v2068
      %v2070 = vpop.f32.mrb[0].mxu0
      %v2071 = vpop.f32.mrb[0].mxu0
      %v2072 = vadd.f32 %v1911, %v2071
      %v2073 = vpop.f32.mrb[0].mxu0
      %2074 = vmatprep.mubr.bf16.mxu0 %v1085
      %2075 = vmatmul.mubr.bf16.gmra.mrb[0].mxu0 %v1084
      %v2076 = vpop.f32.mrb[0].mxu0
      %v2077 = vadd.f32 %v1916, %v2076
      %v2078 = vpop.f32.mrb[0].mxu0
      %v2079 = vpop.f32.mrb[0].mxu0
      %v2080 = vadd.f32 %v1919, %v2079
      %v2081 = vpop.f32.mrb[0].mxu0
      %2082 = vmatprep.mubr.bf16.mxu0 %v1093
      %2083 = vmatmul.mubr.bf16.gmra.mrb[0].mxu0 %v1092
      %v2084 = vpop.f32.mrb[0].mxu0
      %v2085 = vadd.f32 %v1924, %v2084
      %v2086 = vpop.f32.mrb[0].mxu0
      %v2087 = vpop.f32.mrb[0].mxu0
      %v2088 = vadd.f32 %v1927, %v2087
      %v2089 = vpop.f32.mrb[0].mxu0
      %2090 = vmatprep.mubr.bf16.mxu0 %v1101
      %2091 = vmatmul.mubr.bf16.gmra.mrb[0].mxu0 %v1100
      %v2092 = vpop.f32.mrb[0].mxu0
      %v2093 = vadd.f32 %v1932, %v2092
      %v2094 = vpop.f32.mrb[0].mxu0
      %v2095 = vpop.f32.mrb[0].mxu0
      %v2096 = vadd.f32 %v1935, %v2095
      %v2097 = vpop.f32.mrb[0].mxu0
      %2098 = vdwg.mxu0
      %2099 = vmatprep.subr.bf16.mxu0 0
      %2100 = vmatpush1.bf16.msra.mxu0 %v1536
      %2101 = vmatprep.subr.bf16.mxu0 0
      %2102 = vmatpush1.bf16.msra.mxu0 %v1537
      %2103 = vmatprep.subr.bf16.mxu0 0
      %2104 = vmatpush1.bf16.msra.mxu0 %v1538
      %2105 = vmatprep.subr.bf16.mxu0 0
      %2106 = vmatpush1.bf16.msra.mxu0 %v1539
      %2107 = vmatprep.subr.bf16.mxu0 0
      %2108 = vmatpush1.bf16.msra.mxu0 %v1540
      %2109 = vmatprep.subr.bf16.mxu0 0
      %2110 = vmatpush1.bf16.msra.mxu0 %v1541
      %2111 = vmatprep.subr.bf16.mxu0 0
      %2112 = vmatpush1.bf16.msra.mxu0 %v1542
      %2113 = vmatprep.subr.bf16.mxu0 0
      %2114 = vmatpush1.bf16.msra.mxu0 %v1543
      %2115 = vmatprep.subr.bf16.mxu0 0
      %2116 = vmatpush1.bf16.msra.mxu0 %v1544
      %2117 = vmatprep.subr.bf16.mxu0 0
      %2118 = vmatpush1.bf16.msra.mxu0 %v1545
      %2119 = vmatprep.subr.bf16.mxu0 0
      %2120 = vmatpush1.bf16.msra.mxu0 %v1546
      %2121 = vmatprep.subr.bf16.mxu0 0
      %2122 = vmatpush1.bf16.msra.mxu0 %v1547
      %2123 = vmatprep.subr.bf16.mxu0 0
      %2124 = vmatpush1.bf16.msra.mxu0 %v1548
      %2125 = vmatprep.subr.bf16.mxu0 0
      %2126 = vmatpush1.bf16.msra.mxu0 %v1549
      %2127 = vmatprep.subr.bf16.mxu0 0
      %2128 = vmatpush1.bf16.msra.mxu0 %v1550
      %2129 = vmatprep.subr.bf16.mxu0 0
      %2130 = vmatpush1.bf16.msra.mxu0 %v1551
      %2131 = vmatprep.mubr.bf16.mxu0 %v983
      %2132 = vmatmul.mubr.bf16.gmra.mrb[0].mxu0 %v982
      %v2133 = vpop.f32.mrb[0].mxu0
      %v2134 = vadd.f32 %v1973, %v2133
      %v2135 = vpop.f32.mrb[0].mxu0
      %v2136 = vpop.f32.mrb[0].mxu0
      %v2137 = vadd.f32 %v1976, %v2136
      %v2138 = vpop.f32.mrb[0].mxu0
      %2139 = vmatprep.mubr.bf16.mxu0 %v991
      %2140 = vmatmul.mubr.bf16.gmra.mrb[0].mxu0 %v990
      %v2141 = vpop.f32.mrb[0].mxu0
      %v2142 = vadd.f32 %v1981, %v2141
      %v2143 = vpop.f32.mrb[0].mxu0
      %v2144 = vpop.f32.mrb[0].mxu0
      %v2145 = vadd.f32 %v1984, %v2144
      %v2146 = vpop.f32.mrb[0].mxu0
      %2147 = vmatprep.mubr.bf16.mxu0 %v999
      %2148 = vmatmul.mubr.bf16.gmra.mrb[0].mxu0 %v998
      %v2149 = vpop.f32.mrb[0].mxu0
      %v2150 = vadd.f32 %v1989, %v2149
      %v2151 = vpop.f32.mrb[0].mxu0
      %v2152 = vpop.f32.mrb[0].mxu0
      %v2153 = vadd.f32 %v1992, %v2152
      %v2154 = vpop.f32.mrb[0].mxu0
      %2155 = vmatprep.mubr.bf16.mxu0 %v1007
      %2156 = vmatmul.mubr.bf16.gmra.mrb[0].mxu0 %v1006
      %v2157 = vpop.f32.mrb[0].mxu0
      %v2158 = vadd.f32 %v1997, %v2157
      %v2159 = vpop.f32.mrb[0].mxu0
      %v2160 = vpop.f32.mrb[0].mxu0
      %v2161 = vadd.f32 %v2000, %v2160
      %v2162 = vpop.f32.mrb[0].mxu0
      %2163 = vmatprep.mubr.bf16.mxu0 %v1015
      %2164 = vmatmul.mubr.bf16.gmra.mrb[0].mxu0 %v1014
      %v2165 = vpop.f32.mrb[0].mxu0
      %v2166 = vadd.f32 %v2005, %v2165
      %v2167 = vpop.f32.mrb[0].mxu0
      %v2168 = vpop.f32.mrb[0].mxu0
      %v2169 = vadd.f32 %v2008, %v2168
      %v2170 = vpop.f32.mrb[0].mxu0
      %2171 = vmatprep.mubr.bf16.mxu0 %v1023
      %2172 = vmatmul.mubr.bf16.gmra.mrb[0].mxu0 %v1022
      %v2173 = vpop.f32.mrb[0].mxu0
      %v2174 = vadd.f32 %v2013, %v2173
      %v2175 = vpop.f32.mrb[0].mxu0
      %v2176 = vpop.f32.mrb[0].mxu0
      %v2177 = vadd.f32 %v2016, %v2176
      %v2178 = vpop.f32.mrb[0].mxu0
      %2179 = vmatprep.mubr.bf16.mxu0 %v1031
      %2180 = vmatmul.mubr.bf16.gmra.mrb[0].mxu0 %v1030
      %v2181 = vpop.f32.mrb[0].mxu0
      %v2182 = vadd.f32 %v2021, %v2181
      %v2183 = vpop.f32.mrb[0].mxu0
      %v2184 = vpop.f32.mrb[0].mxu0
      %v2185 = vadd.f32 %v2024, %v2184
      %v2186 = vpop.f32.mrb[0].mxu0
      %2187 = vmatprep.mubr.bf16.mxu0 %v1039
      %2188 = vmatmul.mubr.bf16.gmra.mrb[0].mxu0 %v1038
      %v2189 = vpop.f32.mrb[0].mxu0
      %v2190 = vadd.f32 %v2029, %v2189
      %v2191 = vpop.f32.mrb[0].mxu0
      %v2192 = vpop.f32.mrb[0].mxu0
      %v2193 = vadd.f32 %v2032, %v2192
      %v2194 = vpop.f32.mrb[0].mxu0
      %2195 = vmatprep.mubr.bf16.mxu0 %v1047
      %2196 = vmatmul.mubr.bf16.gmra.mrb[0].mxu0 %v1046
      %v2197 = vpop.f32.mrb[0].mxu0
      %v2198 = vadd.f32 %v2037, %v2197
      %v2199 = vpop.f32.mrb[0].mxu0
      %v2200 = vpop.f32.mrb[0].mxu0
      %v2201 = vadd.f32 %v2040, %v2200
      %v2202 = vpop.f32.mrb[0].mxu0
      %2203 = vmatprep.mubr.bf16.mxu0 %v1055
      %2204 = vmatmul.mubr.bf16.gmra.mrb[0].mxu0 %v1054
      %v2205 = vpop.f32.mrb[0].mxu0
      %v2206 = vadd.f32 %v2045, %v2205
      %v2207 = vpop.f32.mrb[0].mxu0
      %v2208 = vpop.f32.mrb[0].mxu0
      %v2209 = vadd.f32 %v2048, %v2208
      %v2210 = vpop.f32.mrb[0].mxu0
      %2211 = vmatprep.mubr.bf16.mxu0 %v1063
      %2212 = vmatmul.mubr.bf16.gmra.mrb[0].mxu0 %v1062
      %v2213 = vpop.f32.mrb[0].mxu0
      %v2214 = vadd.f32 %v2053, %v2213
      %v2215 = vpop.f32.mrb[0].mxu0
      %v2216 = vpop.f32.mrb[0].mxu0
      %v2217 = vadd.f32 %v2056, %v2216
      %v2218 = vpop.f32.mrb[0].mxu0
      %2219 = vmatprep.mubr.bf16.mxu0 %v1071
      %2220 = vmatmul.mubr.bf16.gmra.mrb[0].mxu0 %v1070
      %v2221 = vpop.f32.mrb[0].mxu0
      %v2222 = vadd.f32 %v2061, %v2221
      %v2223 = vpop.f32.mrb[0].mxu0
      %v2224 = vpop.f32.mrb[0].mxu0
      %v2225 = vadd.f32 %v2064, %v2224
      %v2226 = vpop.f32.mrb[0].mxu0
      %2227 = vmatprep.mubr.bf16.mxu0 %v1079
      %2228 = vmatmul.mubr.bf16.gmra.mrb[0].mxu0 %v1078
      %v2229 = vpop.f32.mrb[0].mxu0
      %v2230 = vadd.f32 %v2069, %v2229
      %v2231 = vpop.f32.mrb[0].mxu0
      %v2232 = vpop.f32.mrb[0].mxu0
      %v2233 = vadd.f32 %v2072, %v2232
      %v2234 = vpop.f32.mrb[0].mxu0
      %2235 = vmatprep.mubr.bf16.mxu0 %v1087
      %2236 = vmatmul.mubr.bf16.gmra.mrb[0].mxu0 %v1086
      %v2237 = vpop.f32.mrb[0].mxu0
      %v2238 = vadd.f32 %v2077, %v2237
      %v2239 = vpop.f32.mrb[0].mxu0
      %v2240 = vpop.f32.mrb[0].mxu0
      %v2241 = vadd.f32 %v2080, %v2240
      %v2242 = vpop.f32.mrb[0].mxu0
      %2243 = vmatprep.mubr.bf16.mxu0 %v1095
      %2244 = vmatmul.mubr.bf16.gmra.mrb[0].mxu0 %v1094
      %v2245 = vpop.f32.mrb[0].mxu0
      %v2246 = vadd.f32 %v2085, %v2245
      %v2247 = vpop.f32.mrb[0].mxu0
      %v2248 = vpop.f32.mrb[0].mxu0
      %v2249 = vadd.f32 %v2088, %v2248
      %v2250 = vpop.f32.mrb[0].mxu0
      %2251 = vmatprep.mubr.bf16.mxu0 %v1103
      %2252 = vmatmul.mubr.bf16.gmra.mrb[0].mxu0 %v1102
      %v2253 = vpop.f32.mrb[0].mxu0
      %v2254 = vadd.f32 %v2093, %v2253
      %v2255 = vpop.f32.mrb[0].mxu0
      %v2256 = vpop.f32.mrb[0].mxu0
      %v2257 = vadd.f32 %v2096, %v2256
      %v2258 = vpop.f32.mrb[0].mxu0
      %2259 = vdwg.mxu0
      %v2260 = vadd.f32 %v304, %v2134
      %v2261 = vadd.f32 %v305, %v2137
      %v2262 = vadd.f32 %v306, %v2142
      %v2263 = vadd.f32 %v307, %v2145
      %v2264 = vadd.f32 %v308, %v2150
      %v2265 = vadd.f32 %v309, %v2153
      %v2266 = vadd.f32 %v310, %v2158
      %v2267 = vadd.f32 %v311, %v2161
      %v2268 = vadd.f32 %v312, %v2166
      %v2269 = vadd.f32 %v313, %v2169
      %v2270 = vadd.f32 %v314, %v2174
      %v2271 = vadd.f32 %v315, %v2177
      %v2272 = vadd.f32 %v316, %v2182
      %v2273 = vadd.f32 %v317, %v2185
      %v2274 = vadd.f32 %v318, %v2190
      %v2275 = vadd.f32 %v319, %v2193
      %v2276 = vadd.f32 %v320, %v2198
      %v2277 = vadd.f32 %v321, %v2201
      %v2278 = vadd.f32 %v322, %v2206
      %v2279 = vadd.f32 %v323, %v2209
      %v2280 = vadd.f32 %v324, %v2214
      %v2281 = vadd.f32 %v325, %v2217
      %v2282 = vadd.f32 %v326, %v2222
      %v2283 = vadd.f32 %v327, %v2225
      %v2284 = vadd.f32 %v328, %v2230
      %v2285 = vadd.f32 %v329, %v2233
      %v2286 = vadd.f32 %v330, %v2238
      %v2287 = vadd.f32 %v331, %v2241
      %v2288 = vadd.f32 %v332, %v2246
      %v2289 = vadd.f32 %v333, %v2249
      %v2290 = vadd.f32 %v334, %v2254
      %v2291 = vadd.f32 %v335, %v2257
      %2292 = vst [vmem:[#allocation2] sm:$0xff] %v2260
      %2293 = vst [vmem:[#allocation2 + $0x8] sm:$0xff] %v2261
      %2294 = vst [vmem:[#allocation2 + $0x10] sm:$0xff] %v2262
      %2295 = vst [vmem:[#allocation2 + $0x18] sm:$0xff] %v2263
      %2296 = vst [vmem:[#allocation2 + $0x20] sm:$0xff] %v2264
      %2297 = vst [vmem:[#allocation2 + $0x28] sm:$0xff] %v2265
      %2298 = vst [vmem:[#allocation2 + $0x30] sm:$0xff] %v2266
      %2299 = vst [vmem:[#allocation2 + $0x38] sm:$0xff] %v2267
      %2300 = vst [vmem:[#allocation2 + $0x40] sm:$0xff] %v2268
      %2301 = vst [vmem:[#allocation2 + $0x48] sm:$0xff] %v2269
      %2302 = vst [vmem:[#allocation2 + $0x50] sm:$0xff] %v2270
      %2303 = vst [vmem:[#allocation2 + $0x58] sm:$0xff] %v2271
      %2304 = vst [vmem:[#allocation2 + $0x60] sm:$0xff] %v2272
      %2305 = vst [vmem:[#allocation2 + $0x68] sm:$0xff] %v2273
      %2306 = vst [vmem:[#allocation2 + $0x70] sm:$0xff] %v2274
      %2307 = vst [vmem:[#allocation2 + $0x78] sm:$0xff] %v2275
      %2308 = vst [vmem:[#allocation2 + $0x80] sm:$0xff] %v2276
      %2309 = vst [vmem:[#allocation2 + $0x88] sm:$0xff] %v2277
      %2310 = vst [vmem:[#allocation2 + $0x90] sm:$0xff] %v2278
      %2311 = vst [vmem:[#allocation2 + $0x98] sm:$0xff] %v2279
      %2312 = vst [vmem:[#allocation2 + $0xa0] sm:$0xff] %v2280
      %2313 = vst [vmem:[#allocation2 + $0xa8] sm:$0xff] %v2281
      %2314 = vst [vmem:[#allocation2 + $0xb0] sm:$0xff] %v2282
      %2315 = vst [vmem:[#allocation2 + $0xb8] sm:$0xff] %v2283
      %2316 = vst [vmem:[#allocation2 + $0xc0] sm:$0xff] %v2284
      %2317 = vst [vmem:[#allocation2 + $0xc8] sm:$0xff] %v2285
      %2318 = vst [vmem:[#allocation2 + $0xd0] sm:$0xff] %v2286
      %2319 = vst [vmem:[#allocation2 + $0xd8] sm:$0xff] %v2287
      %2320 = vst [vmem:[#allocation2 + $0xe0] sm:$0xff] %v2288
      %2321 = vst [vmem:[#allocation2 + $0xe8] sm:$0xff] %v2289
      %2322 = vst [vmem:[#allocation2 + $0xf0] sm:$0xff] %v2290
      %2323 = vst [vmem:[#allocation2 + $0xf8] sm:$0xff] %v2291
      // Predicated region
      $region37: #{_lambda_.31} parent=31 // pred_check
        %p2324 = pneg %p268
      $region38: #{_lambda_.31} parent=31 // pred_check_branch
        %2326 = sbr.rel (%p2324) target = $region40
      $region39: #{_lambda_.31} parent=31 // pred_region
        %v2327 = vld [vmem:[#allocation2] sm:$0xff]
        %v2328 = vld [vmem:[#allocation2 + $0x8] sm:$0xff]
        %v2329 = vld [vmem:[#allocation2 + $0x10] sm:$0xff]
        %v2330 = vld [vmem:[#allocation2 + $0x18] sm:$0xff]
        %v2331 = vld [vmem:[#allocation2 + $0x20] sm:$0xff]
        %v2332 = vld [vmem:[#allocation2 + $0x28] sm:$0xff]
        %v2333 = vld [vmem:[#allocation2 + $0x30] sm:$0xff]
        %v2334 = vld [vmem:[#allocation2 + $0x38] sm:$0xff]
        %v2335 = vld [vmem:[#allocation2 + $0x40] sm:$0xff]
        %v2336 = vld [vmem:[#allocation2 + $0x48] sm:$0xff]
        %v2337 = vld [vmem:[#allocation2 + $0x50] sm:$0xff]
        %v2338 = vld [vmem:[#allocation2 + $0x58] sm:$0xff]
        %v2339 = vld [vmem:[#allocation2 + $0x60] sm:$0xff]
        %v2340 = vld [vmem:[#allocation2 + $0x68] sm:$0xff]
        %v2341 = vld [vmem:[#allocation2 + $0x70] sm:$0xff]
        %v2342 = vld [vmem:[#allocation2 + $0x78] sm:$0xff]
        %v2343 = vld [vmem:[#allocation2 + $0x80] sm:$0xff]
        %v2344 = vld [vmem:[#allocation2 + $0x88] sm:$0xff]
        %v2345 = vld [vmem:[#allocation2 + $0x90] sm:$0xff]
        %v2346 = vld [vmem:[#allocation2 + $0x98] sm:$0xff]
        %v2347 = vld [vmem:[#allocation2 + $0xa0] sm:$0xff]
        %v2348 = vld [vmem:[#allocation2 + $0xa8] sm:$0xff]
        %v2349 = vld [vmem:[#allocation2 + $0xb0] sm:$0xff]
        %v2350 = vld [vmem:[#allocation2 + $0xb8] sm:$0xff]
        %v2351 = vld [vmem:[#allocation2 + $0xc0] sm:$0xff]
        %v2352 = vld [vmem:[#allocation2 + $0xc8] sm:$0xff]
        %v2353 = vld [vmem:[#allocation2 + $0xd0] sm:$0xff]
        %v2354 = vld [vmem:[#allocation2 + $0xd8] sm:$0xff]
        %v2355 = vld [vmem:[#allocation2 + $0xe0] sm:$0xff]
        %v2356 = vld [vmem:[#allocation2 + $0xe8] sm:$0xff]
        %v2357 = vld [vmem:[#allocation2 + $0xf0] sm:$0xff]
        %v2358 = vld [vmem:[#allocation2 + $0xf8] sm:$0xff]
        %v2359 = vld [vmem:[%s257] sm:$0x1]
        %v2361 = vlaneseq
        %v2362 = vshrl.u32 %v2361, 7
        %v2363 = vsub.s32 0, %v2362
        %v2364 = vrot.slane %v2359, %v2363
        %v2366 = vadd.f32 %v2327, %v2364
        %v2367 = vadd.f32 %v2328, %v2364
        %v2368 = vadd.f32 %v2329, %v2364
        %v2369 = vadd.f32 %v2330, %v2364
        %v2370 = vadd.f32 %v2331, %v2364
        %v2371 = vadd.f32 %v2332, %v2364
        %v2372 = vadd.f32 %v2333, %v2364
        %v2373 = vadd.f32 %v2334, %v2364
        %v2374 = vadd.f32 %v2335, %v2364
        %v2375 = vadd.f32 %v2336, %v2364
        %v2376 = vadd.f32 %v2337, %v2364
        %v2377 = vadd.f32 %v2338, %v2364
        %v2378 = vadd.f32 %v2339, %v2364
        %v2379 = vadd.f32 %v2340, %v2364
        %v2380 = vadd.f32 %v2341, %v2364
        %v2381 = vadd.f32 %v2342, %v2364
        %v2382 = vadd.f32 %v2343, %v2364
        %v2383 = vadd.f32 %v2344, %v2364
        %v2384 = vadd.f32 %v2345, %v2364
        %v2385 = vadd.f32 %v2346, %v2364
        %v2386 = vadd.f32 %v2347, %v2364
        %v2387 = vadd.f32 %v2348, %v2364
        %v2388 = vadd.f32 %v2349, %v2364
        %v2389 = vadd.f32 %v2350, %v2364
        %v2390 = vadd.f32 %v2351, %v2364
        %v2391 = vadd.f32 %v2352, %v2364
        %v2392 = vadd.f32 %v2353, %v2364
        %v2393 = vadd.f32 %v2354, %v2364
        %v2394 = vadd.f32 %v2355, %v2364
        %v2395 = vadd.f32 %v2356, %v2364
        %v2396 = vadd.f32 %v2357, %v2364
        %v2397 = vadd.f32 %v2358, %v2364
        %v2398 = vtanh.pop %v2366
        %v2399 = vtanh.pop %v2367
        %v2400 = vtanh.pop %v2368
        %v2401 = vtanh.pop %v2369
        %v2402 = vtanh.pop %v2370
        %v2403 = vtanh.pop %v2371
        %v2404 = vtanh.pop %v2372
        %v2405 = vtanh.pop %v2373
        %v2406 = vtanh.pop %v2374
        %v2407 = vtanh.pop %v2375
        %v2408 = vtanh.pop %v2376
        %v2409 = vtanh.pop %v2377
        %v2410 = vtanh.pop %v2378
        %v2411 = vtanh.pop %v2379
        %v2412 = vtanh.pop %v2380
        %v2413 = vtanh.pop %v2381
        %v2414 = vtanh.pop %v2382
        %v2415 = vtanh.pop %v2383
        %v2416 = vtanh.pop %v2384
        %v2417 = vtanh.pop %v2385
        %v2418 = vtanh.pop %v2386
        %v2419 = vtanh.pop %v2387
        %v2420 = vtanh.pop %v2388
        %v2421 = vtanh.pop %v2389
        %v2422 = vtanh.pop %v2390
        %v2423 = vtanh.pop %v2391
        %v2424 = vtanh.pop %v2392
        %v2425 = vtanh.pop %v2393
        %v2426 = vtanh.pop %v2394
        %v2427 = vtanh.pop %v2395
        %v2428 = vtanh.pop %v2396
        %v2429 = vtanh.pop %v2397
        %2430 = vst [vmem:[%s265] sm:$0xff] %v2398
        %2431 = vst [vmem:[%s265 + $0x8] sm:$0xff] %v2399
        %2432 = vst [vmem:[%s265 + $0x10] sm:$0xff] %v2400
        %2433 = vst [vmem:[%s265 + $0x18] sm:$0xff] %v2401
        %2434 = vst [vmem:[%s265 + $0x20] sm:$0xff] %v2402
        %2435 = vst [vmem:[%s265 + $0x28] sm:$0xff] %v2403
        %2436 = vst [vmem:[%s265 + $0x30] sm:$0xff] %v2404
        %2437 = vst [vmem:[%s265 + $0x38] sm:$0xff] %v2405
        %2438 = vst [vmem:[%s265 + $0x40] sm:$0xff] %v2406
        %2439 = vst [vmem:[%s265 + $0x48] sm:$0xff] %v2407
        %2440 = vst [vmem:[%s265 + $0x50] sm:$0xff] %v2408
        %2441 = vst [vmem:[%s265 + $0x58] sm:$0xff] %v2409
        %2442 = vst [vmem:[%s265 + $0x60] sm:$0xff] %v2410
        %2443 = vst [vmem:[%s265 + $0x68] sm:$0xff] %v2411
        %2444 = vst [vmem:[%s265 + $0x70] sm:$0xff] %v2412
        %2445 = vst [vmem:[%s265 + $0x78] sm:$0xff] %v2413
        %2446 = vst [vmem:[%s265 + $0x80] sm:$0xff] %v2414
        %2447 = vst [vmem:[%s265 + $0x88] sm:$0xff] %v2415
        %2448 = vst [vmem:[%s265 + $0x90] sm:$0xff] %v2416
        %2449 = vst [vmem:[%s265 + $0x98] sm:$0xff] %v2417
        %2450 = vst [vmem:[%s265 + $0xa0] sm:$0xff] %v2418
        %2451 = vst [vmem:[%s265 + $0xa8] sm:$0xff] %v2419
        %2452 = vst [vmem:[%s265 + $0xb0] sm:$0xff] %v2420
        %2453 = vst [vmem:[%s265 + $0xb8] sm:$0xff] %v2421
        %2454 = vst [vmem:[%s265 + $0xc0] sm:$0xff] %v2422
        %2455 = vst [vmem:[%s265 + $0xc8] sm:$0xff] %v2423
        %2456 = vst [vmem:[%s265 + $0xd0] sm:$0xff] %v2424
        %2457 = vst [vmem:[%s265 + $0xd8] sm:$0xff] %v2425
        %2458 = vst [vmem:[%s265 + $0xe0] sm:$0xff] %v2426
        %2459 = vst [vmem:[%s265 + $0xe8] sm:$0xff] %v2427
        %2460 = vst [vmem:[%s265 + $0xf0] sm:$0xff] %v2428
        %2461 = vst [vmem:[%s265 + $0xf8] sm:$0xff] %v2429
      $region40: #{_lambda_.31} parent=31 // pred_fallthru
        _
      %s2462 = smul.u32 32, %s19
      %p2463 = scmp.lt.s32.totalorder %s2462, 63
      %s2464 = scalar_select %p2463, %s2462, 63
      %p2465 = scmp.lt.s32.totalorder %s20, 0
      %s2466 = scalar_select %p2465, %s20, 0
      %s2467 = sadd.s32 %s2466, %s2464
      %s2468 = smul.addr %s2467, 8
      %s2469 = scalar_lea.vmem %s3, %s2468
      // Predicated region
      $region41: #{_lambda_.31} parent=31 // pred_check
        %p2470 = pneg %p135
      $region42: #{_lambda_.31} parent=31 // pred_check_branch
        %2472 = sbr.rel (%p2470) target = $region44
      $region43: #{_lambda_.31} parent=31 // pred_region
        %s2473 = smul.u32 32, %s19
      $region44: #{_lambda_.31} parent=31 // pred_fallthru
        _
    $region32: #{_lambda_.31} parent=5 // pred_fallthru
      _
    %p2474 = scmp.le.s32.totalorder 2, %s9
    // Predicated region
    $region45: #{_lambda_.31} parent=5 // pred_check
      %p2475 = pneg %p2474
    $region46: #{_lambda_.31} parent=5 // pred_check_branch
      %2477 = sbr.rel (%p2475) target = $region48
    $region47: #{_lambda_.31} parent=5 // pred_region
      %s2478 = ssub.s32 %s9, 2
      // Predicated region
      $region49: #{_lambda_.31} parent=47 // pred_check
        %p2479 = pneg %p141
      $region50: #{_lambda_.31} parent=47 // pred_check_branch
        %2481 = sbr.rel (%p2479) target = $region52
      $region51: #{_lambda_.31} parent=47 // pred_region
        %s2482 = smul.u32 32, %s22
        %p2483 = scmp.lt.s32.totalorder %s2482, 63
        %s2484 = scalar_select %p2483, %s2482, 63
        %p2485 = scmp.lt.s32.totalorder %s23, 0
        %s2486 = scalar_select %p2485, %s23, 0
        %s2487 = sadd.s32 %s2486, %s2484
        %s2488 = smul.addr %s2487, 8
        %s2489 = scalar_lea.vmem %s3, %s2488
      $region52: #{_lambda_.31} parent=47 // pred_fallthru
        _
    $region48: #{_lambda_.31} parent=5 // pred_fallthru
      _
  $region6: #{_lambda_.31} parent=0 // loop_footer
    %s13 = sadd.s32 1, %s9
  $region7: #{_lambda_.31} parent=0 // loop_footer_branch
    %8 = sbr.rel target = $region3
  $region8: #{_lambda_.31} parent=0 // loop_exit
    _

</llo_original>
